<compile_context>
chip_gen: v6e
topology: v6e:2x2x1
jax: 0.10.0
libtpu: 0.0.40
codegen_flags: <defaults>
</compile_context>

<pallas_src>
import functools

import jax
import jax.numpy as jnp
from jax.experimental import pallas as pl
from jax.experimental.pallas import tpu as pltpu


def bilstm_crf_kernel(xin_ref, wx_ref, bx_ref, whh_ref,
                      wthf_ref, wthb_ref, wtx_ref, bt_ref,
                      preds_ref,
                      gxf_ref, gxb_ref, hf_ref, hb_ref,
                      *, num_tags):
    """[we|ft] -> fused BiLSTM recurrence -> hidden2tag -> argmax."""
    S, TB, Dx = xin_ref.shape
    Hp = hf_ref.shape[-1]          # lane-padded hidden size (multiple of 128)
    G = 4 * Hp                     # gate columns per direction
    Tp = bt_ref.shape[-1]          # lane-padded tag count

    xin = xin_ref[...].reshape(S * TB, Dx)                     # bf16

    # Prologue: ONE MXU pass computes the input-to-hidden gate pre-activations
    # for BOTH directions (feature_mapping already folded into wx by wrapper).
    gx = (jnp.dot(xin, wx_ref[...], preferred_element_type=jnp.float32)
          + bx_ref[...])                                       # (S*TB, 8*Hp) f32
    gxf_ref[...] = gx[:, :G].reshape(S, TB, G).astype(jnp.bfloat16)
    gxb_ref[...] = gx[:, G:].reshape(S, TB, G).astype(jnp.bfloat16)

    whh = whh_ref[...]             # (2*Hp, 8*Hp) bf16, read once before loop

    def sigmoid(x):
        # Exact: logistic(x) == 0.5*tanh(0.5*x) + 0.5; single EUP op per gate.
        return 0.5 * jnp.tanh(0.5 * x) + 0.5

    def cell(gates, c):
        # PyTorch gate order i, f, g, o; every slice is 128-lane aligned.
        i = sigmoid(gates[:, 0 * Hp:1 * Hp])
        f = sigmoid(gates[:, 1 * Hp:2 * Hp])
        g = jnp.tanh(gates[:, 2 * Hp:3 * Hp])
        o = sigmoid(gates[:, 3 * Hp:4 * Hp])
        c_new = f * c + i * g
        return o * jnp.tanh(c_new), c_new

    zero = jnp.zeros((TB, Hp), jnp.float32)

    def step(t, carry):
        h_f, c_f, h_b, c_b = carry
        tr = S - 1 - t
        # Single block-diagonal recurrent matmul for both directions; the
        # concat is at a 128-lane boundary (free vreg placement).
        h_cat = jnp.concatenate([h_f, h_b], axis=1).astype(jnp.bfloat16)
        gh = jnp.dot(h_cat, whh, preferred_element_type=jnp.float32)  # (TB, 8*Hp)
        g_f = gxf_ref[t].astype(jnp.float32) + gh[:, :G]
        g_b = gxb_ref[tr].astype(jnp.float32) + gh[:, G:]
        h_f, c_f = cell(g_f, c_f)
        h_b, c_b = cell(g_b, c_b)
        hf_ref[t] = h_f.astype(jnp.bfloat16)                   # full-lane store
        hb_ref[tr] = h_b.astype(jnp.bfloat16)
        return (h_f, c_f, h_b, c_b)

    jax.lax.fori_loop(0, S, step, (zero, zero, zero, zero), unroll=min(S, 8))

    # hidden2tag(cat([h_fwd, h_bwd, fv], -1)) as split matmuls (no concat);
    # the fv term rides on xin via wtx (feature_mapping folded in the wrapper).
    hf = hf_ref[...].reshape(S * TB, Hp)
    hb = hb_ref[...].reshape(S * TB, Hp)
    feats = (jnp.dot(hf, wthf_ref[...], preferred_element_type=jnp.float32)
             + jnp.dot(hb, wthb_ref[...], preferred_element_type=jnp.float32)
             + jnp.dot(xin, wtx_ref[...], preferred_element_type=jnp.float32)
             + bt_ref[...]).reshape(S, TB, Tp)

    # argmax(softmax(x), -1) == argmax(x, -1): first-max index on raw logits.
    # Padded tag columns carry -1e30 logits so they can never win.
    m = jnp.max(feats, axis=-1, keepdims=True)
    idx = jax.lax.broadcasted_iota(jnp.int32, feats.shape, 2).astype(jnp.float32)
    cand = jnp.where(feats >= m, idx, float(Tp))
    pred = jnp.min(cand, axis=-1)                              # (S, TB)
    pred = jnp.minimum(pred, float(num_tags - 1))              # NaN / pad safety
    preds_ref[...] = jnp.transpose(pred).astype(jnp.int32)     # (TB, S) batch-major


def _tensorcores_per_chip():
    """Best-effort TensorCores-per-chip count (2 on v7x, 1 on v5e/v6e)."""
    try:
        info = pltpu.get_tpu_info()
    except Exception:
        return 1
    for attr in ("num_tensorcores", "tensorcore_count", "num_cores",
                 "cores_per_chip", "num_cores_per_chip"):
        v = getattr(info, attr, None)
        if isinstance(v, int) and 1 <= v <= 8:
            return v
    return 1


def _round_up(x, m):
    return (x + m - 1) // m * m


def bilstm_crf_forward(params, words2ix, features, attention_mask=None):
    """PyTorch-equivalent forward: returns (crf_output, predicted_tags).

    words2ix: (B, S) int32; features: (B, feature_size, S) float32.
    With use_crf disabled crf_output is None (attention_mask unused)."""
    B, S = words2ix.shape
    Ew = params["word_embedding"].shape[1]
    H = params["whh_f"].shape[0]
    F = params["wfm"].shape[0]
    T = params["wht"].shape[1]
    Hp = _round_up(H, 128)
    Tp = _round_up(T, 128)
    f32 = jnp.float32

    wih_f = params["wih_f"].astype(f32)          # (Ew + H/2, 4H)
    wih_b = params["wih_b"].astype(f32)
    wfm = params["wfm"].astype(f32)              # (F, H/2)
    bfm = params["bfm"].astype(f32)              # (1, H/2)
    wht = params["wht"].astype(f32)              # (2H + H/2, T)
    bht = params["bht"].astype(f32)              # (1, T)

    def pad_gate_cols(w):
        # (rows, 4H) -> (rows, 4*Hp): gate block g starts at lane g*Hp.
        return jnp.concatenate(
            [jnp.pad(w[:, g * H:(g + 1) * H], ((0, 0), (0, Hp - H)))
             for g in range(4)], axis=1)

    # feature_mapping folded into the input-to-hidden weights (exact, linear):
    #   fv @ Wg = ft @ (wfm @ Wg) + bfm @ Wg
    wx_f = jnp.concatenate([wih_f[:Ew], wfm @ wih_f[Ew:]], axis=0)   # (Ew+F, 4H)
    wx_b = jnp.concatenate([wih_b[:Ew], wfm @ wih_b[Ew:]], axis=0)
    wx = jnp.concatenate([pad_gate_cols(wx_f), pad_gate_cols(wx_b)],
                         axis=1).astype(jnp.bfloat16)                # (Ew+F, 8*Hp)
    bx = jnp.concatenate(
        [pad_gate_cols(params["b_f"].astype(f32) + bfm @ wih_f[Ew:]),
         pad_gate_cols(params["b_b"].astype(f32) + bfm @ wih_b[Ew:])],
        axis=1).astype(f32)                                          # (1, 8*Hp)

    # Block-diagonal recurrent weights: [h_f | h_b] @ [[whh_f, 0], [0, whh_b]].
    whh_f_p = jnp.pad(pad_gate_cols(params["whh_f"].astype(f32)),
                      ((0, Hp - H), (0, 0)))                         # (Hp, 4*Hp)
    whh_b_p = jnp.pad(pad_gate_cols(params["whh_b"].astype(f32)),
                      ((0, Hp - H), (0, 0)))
    zeros_g = jnp.zeros((Hp, 4 * Hp), f32)
    whh = jnp.concatenate(
        [jnp.concatenate([whh_f_p, zeros_g], axis=1),
         jnp.concatenate([zeros_g, whh_b_p], axis=1)],
        axis=0).astype(jnp.bfloat16)                                 # (2*Hp, 8*Hp)

    # hidden2tag split at the concat boundaries; fv folded onto xin's ft rows.
    wth_f = jnp.pad(wht[:H], ((0, Hp - H), (0, Tp - T))).astype(jnp.bfloat16)
    wth_b = jnp.pad(wht[H:2 * H], ((0, Hp - H), (0, Tp - T))).astype(jnp.bfloat16)
    wtx = jnp.pad(jnp.concatenate([jnp.zeros((Ew, T), f32), wfm @ wht[2 * H:]],
                                  axis=0),
                  ((0, 0), (0, Tp - T))).astype(jnp.bfloat16)        # (Ew+F, Tp)
    bt = jnp.pad(bht + bfm @ wht[2 * H:], ((0, 0), (0, Tp - T)),
                 constant_values=-1e30).astype(f32)                  # (1, Tp)

    # Glue (XLA): time-major embedding gather, one feature transpose, concat.
    we_sb = params["word_embedding"][words2ix.T].astype(f32)         # (S, B, Ew)
    ft_sb = jnp.transpose(features, (2, 0, 1)).astype(f32)           # (S, B, F)
    xin = jnp.concatenate([we_sb, ft_sb], axis=-1).astype(jnp.bfloat16)
    Dx = Ew + F

    # Batch tiling: split only when the chip has >1 TensorCore (v7x megacore);
    # on single-TC v5e/v6e the grid is a sequential loop -> pure overhead.
    n_tc = _tensorcores_per_chip()
    tb = B // n_tc if (n_tc > 1 and B % (8 * n_tc) == 0) else B
    grid = (B // tb,)

    def full_spec(a):
        nd = a.ndim
        return pl.BlockSpec(a.shape, lambda b, nd=nd: (0,) * nd)

    kernel = functools.partial(bilstm_crf_kernel, num_tags=T)

    preds = pl.pallas_call(
        kernel,
        out_shape=jax.ShapeDtypeStruct((B, S), jnp.int32),
        grid=grid,
        in_specs=[
            pl.BlockSpec((S, tb, Dx), lambda b: (0, b, 0)),
            full_spec(wx), full_spec(bx), full_spec(whh),
            full_spec(wth_f), full_spec(wth_b), full_spec(wtx), full_spec(bt),
        ],
        out_specs=pl.BlockSpec((tb, S), lambda b: (b, 0)),
        scratch_shapes=[
            pltpu.VMEM((S, tb, 4 * Hp), jnp.bfloat16),   # fwd gate pre-activations
            pltpu.VMEM((S, tb, 4 * Hp), jnp.bfloat16),   # bwd gate pre-activations
            pltpu.VMEM((S, tb, Hp), jnp.bfloat16),       # fwd hidden states
            pltpu.VMEM((S, tb, Hp), jnp.bfloat16),       # bwd hidden states
        ],
        compiler_params=pltpu.CompilerParams(
            dimension_semantics=("parallel",),
            vmem_limit_bytes=32 * 1024 * 1024),
    )(xin, wx, bx, whh, wth_f, wth_b, wtx, bt)

    # TODO(synk): torch returns int64 predictions; int32 here.
    return None, preds


if __name__ == "__main__":
    # Small, module-consistent shapes.
    B, S = 16, 8                   # batch, sentence_max_len
    Ew = 16                        # word_embedding_dim
    H = 32                         # hidden_dim
    H2 = H // 2
    F = 2                          # feature_size (features = ['POS', 'NER'])
    T = 5                          # tagset_size (use_crf=False -> target_size == tagset_size)
    Din = Ew + H2                  # input_to_lstm_dim
    L = 2 * H + H2                 # lstm_to_fc_dim
    vocab = 50                     # word_vocab_size

    key = jax.random.PRNGKey(0)
    keys = jax.random.split(key, 16)

    def init(k, shape, scale=0.1):
        return (scale * jax.random.normal(k, shape)).astype(jnp.float32)

    word_emb = init(keys[0], (vocab, Ew)).at[0].set(0.0)   # padding_idx=0

    # Weights stored transposed (in, out) relative to nn.Linear / nn.LSTM;
    # LSTM biases combined (b_ih + b_hh) into a single (1, 4H) row.
    params = {
        "word_embedding": word_emb,
        "wfm": init(keys[1], (F, H2)),   "bfm": init(keys[2], (1, H2)),
        "wih_f": init(keys[3], (Din, 4 * H)), "whh_f": init(keys[4], (H, 4 * H)),
        "b_f": init(keys[5], (1, 4 * H)),
        "wih_b": init(keys[6], (Din, 4 * H)), "whh_b": init(keys[7], (H, 4 * H)),
        "b_b": init(keys[8], (1, 4 * H)),
        "wht": init(keys[9], (L, T)),    "bht": init(keys[10], (1, T)),
    }

    words2ix = jax.random.randint(keys[11], (B, S), 1, vocab, dtype=jnp.int32)
    features = init(keys[12], (B, F, S), scale=1.0)        # input['features']
    attention_mask = jnp.ones((B, S), jnp.int32)           # unused (no CRF)

    crf_out, preds = bilstm_crf_forward(params, words2ix, features, attention_mask)
    preds = jax.block_until_ready(preds)
    assert crf_out is None and preds.shape == (B, S) and preds.dtype == jnp.int32
    assert bool(jnp.all((preds >= 0) & (preds < T)))
    print("KERNEL_OK")
</pallas_src>

<mosaic_0001>
module attributes {stable_mosaic.version = 11 : i64} {
  func.func @bilstm_crf_kernel(%arg0: i32, %arg1: memref<8x16x18xbf16, #tpu.memory_space<vmem>>, %arg2: memref<18x1024xbf16, #tpu.memory_space<vmem>>, %arg3: memref<1x1024xf32, #tpu.memory_space<vmem>>, %arg4: memref<256x1024xbf16, #tpu.memory_space<vmem>>, %arg5: memref<128x128xbf16, #tpu.memory_space<vmem>>, %arg6: memref<128x128xbf16, #tpu.memory_space<vmem>>, %arg7: memref<18x128xbf16, #tpu.memory_space<vmem>>, %arg8: memref<1x128xf32, #tpu.memory_space<vmem>>, %arg9: memref<16x8xi32, #tpu.memory_space<vmem>>, %arg10: memref<8x16x512xbf16, #tpu.memory_space<vmem>>, %arg11: memref<8x16x512xbf16, #tpu.memory_space<vmem>>, %arg12: memref<8x16x128xbf16, #tpu.memory_space<vmem>>, %arg13: memref<8x16x128xbf16, #tpu.memory_space<vmem>>) attributes {dimension_semantics = [#tpu.dimension_semantics<parallel>], iteration_bounds = array<i64: 1>, scalar_prefetch = 0 : i64, scratch_operands = 4 : i64, tpu.core_type = #tpu.core_type<tc>, window_params = [{transform_indices = @transform_0, window_bounds = array<i64: 8, 16, 18>}, {pipeline_mode = #tpu.pipeline_mode<synchronous>, transform_indices = @transform_1, window_bounds = array<i64: 18, 1024>}, {pipeline_mode = #tpu.pipeline_mode<synchronous>, transform_indices = @transform_2, window_bounds = array<i64: 1, 1024>}, {pipeline_mode = #tpu.pipeline_mode<synchronous>, transform_indices = @transform_3, window_bounds = array<i64: 256, 1024>}, {pipeline_mode = #tpu.pipeline_mode<synchronous>, transform_indices = @transform_4, window_bounds = array<i64: 128, 128>}, {pipeline_mode = #tpu.pipeline_mode<synchronous>, transform_indices = @transform_5, window_bounds = array<i64: 128, 128>}, {pipeline_mode = #tpu.pipeline_mode<synchronous>, transform_indices = @transform_6, window_bounds = array<i64: 18, 128>}, {pipeline_mode = #tpu.pipeline_mode<synchronous>, transform_indices = @transform_7, window_bounds = array<i64: 1, 128>}, {transform_indices = @transform_8, window_bounds = array<i64: 16, 8>}]} {
    %c0 = arith.constant 0 : index
    %c0_0 = arith.constant 0 : index
    %c0_1 = arith.constant 0 : index
    %0 = vector.load %arg1[%c0, %c0_0, %c0_1] : memref<8x16x18xbf16, #tpu.memory_space<vmem>>, vector<8x16x18xbf16>
    %1 = vector.shape_cast %0 : vector<8x16x18xbf16> to vector<128x18xbf16>
    %c0_2 = arith.constant 0 : index
    %c0_3 = arith.constant 0 : index
    %2 = vector.load %arg2[%c0_2, %c0_3] : memref<18x1024xbf16, #tpu.memory_space<vmem>>, vector<18x1024xbf16>
    %cst = arith.constant dense<0.000000e+00> : vector<128x1024xf32>
    %3 = tpu.matmul %1, %2, %cst {dimension_numbers = #tpu.dot_dimension_numbers<[1], [0], [0], [1], [0, 0, 1, 1], [], []>} : vector<128x18xbf16>, vector<18x1024xbf16>, vector<128x1024xf32> -> vector<128x1024xf32>
    %c0_4 = arith.constant 0 : index
    %c0_5 = arith.constant 0 : index
    %4 = vector.load %arg3[%c0_4, %c0_5] : memref<1x1024xf32, #tpu.memory_space<vmem>>, vector<1x1024xf32>
    %5 = vector.broadcast %4 : vector<1x1024xf32> to vector<128x1024xf32>
    %6 = arith.addf %3, %5 : vector<128x1024xf32>
    %7 = vector.extract_strided_slice %6 {offsets = [0, 0], sizes = [128, 512], strides = [1, 1]} : vector<128x1024xf32> to vector<128x512xf32>
    %8 = vector.shape_cast %7 : vector<128x512xf32> to vector<8x16x512xf32>
    %9 = arith.truncf %8 : vector<8x16x512xf32> to vector<8x16x512xbf16>
    %c0_6 = arith.constant 0 : index
    %c0_7 = arith.constant 0 : index
    %c0_8 = arith.constant 0 : index
    %10 = vector.load %arg10[%c0_6, %c0_7, %c0_8] : memref<8x16x512xbf16, #tpu.memory_space<vmem>>, vector<8x16x512xbf16>
    tpu.vector_store %arg10[%c0_6, %c0_7, %c0_8], %9 {strides = array<i32>} : memref<8x16x512xbf16, #tpu.memory_space<vmem>>, vector<8x16x512xbf16>,
    %11 = vector.extract_strided_slice %6 {offsets = [0, 512], sizes = [128, 512], strides = [1, 1]} : vector<128x1024xf32> to vector<128x512xf32>
    %12 = vector.shape_cast %11 : vector<128x512xf32> to vector<8x16x512xf32>
    %13 = arith.truncf %12 : vector<8x16x512xf32> to vector<8x16x512xbf16>
    %c0_9 = arith.constant 0 : index
    %c0_10 = arith.constant 0 : index
    %c0_11 = arith.constant 0 : index
    %14 = vector.load %arg11[%c0_9, %c0_10, %c0_11] : memref<8x16x512xbf16, #tpu.memory_space<vmem>>, vector<8x16x512xbf16>
    tpu.vector_store %arg11[%c0_9, %c0_10, %c0_11], %13 {strides = array<i32>} : memref<8x16x512xbf16, #tpu.memory_space<vmem>>, vector<8x16x512xbf16>,
    %c0_12 = arith.constant 0 : index
    %c0_13 = arith.constant 0 : index
    %15 = vector.load %arg4[%c0_12, %c0_13] : memref<256x1024xbf16, #tpu.memory_space<vmem>>, vector<256x1024xbf16>
    %cst_14 = arith.constant 0.000000e+00 : f32
    %16 = vector.broadcast %cst_14 : f32 to vector<16x128xf32>
    %c0_i32 = arith.constant 0 : i32
    %c7_i32 = arith.constant 7 : i32
    %17 = arith.subi %c7_i32, %c0_i32 : i32
    %18 = tpu.concatenate %16, %16 in 1 : vector<16x128xf32>, vector<16x128xf32> -> vector<16x256xf32>
    %19 = arith.truncf %18 : vector<16x256xf32> to vector<16x256xbf16>
    %cst_15 = arith.constant dense<0.000000e+00> : vector<16x1024xf32>
    %20 = tpu.matmul %19, %15, %cst_15 {dimension_numbers = #tpu.dot_dimension_numbers<[1], [0], [0], [1], [0, 0, 1, 1], [], []>} : vector<16x256xbf16>, vector<256x1024xbf16>, vector<16x1024xf32> -> vector<16x1024xf32>
    %21 = arith.index_cast %c0_i32 : i32 to index
    %c0_16 = arith.constant 0 : index
    %c0_17 = arith.constant 0 : index
    %22 = vector.load %arg10[%21, %c0_16, %c0_17] : memref<8x16x512xbf16, #tpu.memory_space<vmem>>, vector<1x16x512xbf16>
    %23 = vector.shape_cast %22 : vector<1x16x512xbf16> to vector<16x512xbf16>
    %24 = arith.extf %23 : vector<16x512xbf16> to vector<16x512xf32>
    %25 = vector.extract_strided_slice %20 {offsets = [0, 0], sizes = [16, 512], strides = [1, 1]} : vector<16x1024xf32> to vector<16x512xf32>
    %26 = arith.addf %24, %25 : vector<16x512xf32>
    %27 = arith.index_cast %17 : i32 to index
    %c0_18 = arith.constant 0 : index
    %c0_19 = arith.constant 0 : index
    %28 = vector.load %arg11[%27, %c0_18, %c0_19] : memref<8x16x512xbf16, #tpu.memory_space<vmem>>, vector<1x16x512xbf16>
    %29 = vector.shape_cast %28 : vector<1x16x512xbf16> to vector<16x512xbf16>
    %30 = arith.extf %29 : vector<16x512xbf16> to vector<16x512xf32>
    %31 = vector.extract_strided_slice %20 {offsets = [0, 512], sizes = [16, 512], strides = [1, 1]} : vector<16x1024xf32> to vector<16x512xf32>
    %32 = arith.addf %30, %31 : vector<16x512xf32>
    %33 = vector.extract_strided_slice %26 {offsets = [0, 0], sizes = [16, 128], strides = [1, 1]} : vector<16x512xf32> to vector<16x128xf32>
    %cst_20 = arith.constant 5.000000e-01 : f32
    %34 = vector.broadcast %cst_20 : f32 to vector<16x128xf32>
    %35 = arith.mulf %34, %33 : vector<16x128xf32>
    %36 = math.tanh %35 : vector<16x128xf32>
    %cst_21 = arith.constant 5.000000e-01 : f32
    %37 = vector.broadcast %cst_21 : f32 to vector<16x128xf32>
    %38 = arith.mulf %37, %36 : vector<16x128xf32>
    %cst_22 = arith.constant 5.000000e-01 : f32
    %39 = vector.broadcast %cst_22 : f32 to vector<16x128xf32>
    %40 = arith.addf %38, %39 : vector<16x128xf32>
    %41 = vector.extract_strided_slice %26 {offsets = [0, 128], sizes = [16, 128], strides = [1, 1]} : vector<16x512xf32> to vector<16x128xf32>
    %cst_23 = arith.constant 5.000000e-01 : f32
    %42 = vector.broadcast %cst_23 : f32 to vector<16x128xf32>
    %43 = arith.mulf %42, %41 : vector<16x128xf32>
    %44 = math.tanh %43 : vector<16x128xf32>
    %cst_24 = arith.constant 5.000000e-01 : f32
    %45 = vector.broadcast %cst_24 : f32 to vector<16x128xf32>
    %46 = arith.mulf %45, %44 : vector<16x128xf32>
    %cst_25 = arith.constant 5.000000e-01 : f32
    %47 = vector.broadcast %cst_25 : f32 to vector<16x128xf32>
    %48 = arith.addf %46, %47 : vector<16x128xf32>
    %49 = vector.extract_strided_slice %26 {offsets = [0, 256], sizes = [16, 128], strides = [1, 1]} : vector<16x512xf32> to vector<16x128xf32>
    %50 = math.tanh %49 : vector<16x128xf32>
    %51 = vector.extract_strided_slice %26 {offsets = [0, 384], sizes = [16, 128], strides = [1, 1]} : vector<16x512xf32> to vector<16x128xf32>
    %cst_26 = arith.constant 5.000000e-01 : f32
    %52 = vector.broadcast %cst_26 : f32 to vector<16x128xf32>
    %53 = arith.mulf %52, %51 : vector<16x128xf32>
    %54 = math.tanh %53 : vector<16x128xf32>
    %cst_27 = arith.constant 5.000000e-01 : f32
    %55 = vector.broadcast %cst_27 : f32 to vector<16x128xf32>
    %56 = arith.mulf %55, %54 : vector<16x128xf32>
    %cst_28 = arith.constant 5.000000e-01 : f32
    %57 = vector.broadcast %cst_28 : f32 to vector<16x128xf32>
    %58 = arith.addf %56, %57 : vector<16x128xf32>
    %59 = arith.mulf %48, %16 : vector<16x128xf32>
    %60 = arith.mulf %40, %50 : vector<16x128xf32>
    %61 = arith.addf %59, %60 : vector<16x128xf32>
    %62 = math.tanh %61 : vector<16x128xf32>
    %63 = arith.mulf %58, %62 : vector<16x128xf32>
    %64 = vector.extract_strided_slice %32 {offsets = [0, 0], sizes = [16, 128], strides = [1, 1]} : vector<16x512xf32> to vector<16x128xf32>
    %cst_29 = arith.constant 5.000000e-01 : f32
    %65 = vector.broadcast %cst_29 : f32 to vector<16x128xf32>
    %66 = arith.mulf %65, %64 : vector<16x128xf32>
    %67 = math.tanh %66 : vector<16x128xf32>
    %cst_30 = arith.constant 5.000000e-01 : f32
    %68 = vector.broadcast %cst_30 : f32 to vector<16x128xf32>
    %69 = arith.mulf %68, %67 : vector<16x128xf32>
    %cst_31 = arith.constant 5.000000e-01 : f32
    %70 = vector.broadcast %cst_31 : f32 to vector<16x128xf32>
    %71 = arith.addf %69, %70 : vector<16x128xf32>
    %72 = vector.extract_strided_slice %32 {offsets = [0, 128], sizes = [16, 128], strides = [1, 1]} : vector<16x512xf32> to vector<16x128xf32>
    %cst_32 = arith.constant 5.000000e-01 : f32
    %73 = vector.broadcast %cst_32 : f32 to vector<16x128xf32>
    %74 = arith.mulf %73, %72 : vector<16x128xf32>
    %75 = math.tanh %74 : vector<16x128xf32>
    %cst_33 = arith.constant 5.000000e-01 : f32
    %76 = vector.broadcast %cst_33 : f32 to vector<16x128xf32>
    %77 = arith.mulf %76, %75 : vector<16x128xf32>
    %cst_34 = arith.constant 5.000000e-01 : f32
    %78 = vector.broadcast %cst_34 : f32 to vector<16x128xf32>
    %79 = arith.addf %77, %78 : vector<16x128xf32>
    %80 = vector.extract_strided_slice %32 {offsets = [0, 256], sizes = [16, 128], strides = [1, 1]} : vector<16x512xf32> to vector<16x128xf32>
    %81 = math.tanh %80 : vector<16x128xf32>
    %82 = vector.extract_strided_slice %32 {offsets = [0, 384], sizes = [16, 128], strides = [1, 1]} : vector<16x512xf32> to vector<16x128xf32>
    %cst_35 = arith.constant 5.000000e-01 : f32
    %83 = vector.broadcast %cst_35 : f32 to vector<16x128xf32>
    %84 = arith.mulf %83, %82 : vector<16x128xf32>
    %85 = math.tanh %84 : vector<16x128xf32>
    %cst_36 = arith.constant 5.000000e-01 : f32
    %86 = vector.broadcast %cst_36 : f32 to vector<16x128xf32>
    %87 = arith.mulf %86, %85 : vector<16x128xf32>
    %cst_37 = arith.constant 5.000000e-01 : f32
    %88 = vector.broadcast %cst_37 : f32 to vector<16x128xf32>
    %89 = arith.addf %87, %88 : vector<16x128xf32>
    %90 = arith.mulf %79, %16 : vector<16x128xf32>
    %91 = arith.mulf %71, %81 : vector<16x128xf32>
    %92 = arith.addf %90, %91 : vector<16x128xf32>
    %93 = math.tanh %92 : vector<16x128xf32>
    %94 = arith.mulf %89, %93 : vector<16x128xf32>
    %95 = arith.truncf %63 : vector<16x128xf32> to vector<16x128xbf16>
    %96 = arith.index_cast %c0_i32 : i32 to index
    %c0_38 = arith.constant 0 : index
    %c0_39 = arith.constant 0 : index
    %97 = vector.load %arg12[%96, %c0_38, %c0_39] : memref<8x16x128xbf16, #tpu.memory_space<vmem>>, vector<1x16x128xbf16>
    %98 = vector.shape_cast %97 : vector<1x16x128xbf16> to vector<16x128xbf16>
    %99 = vector.shape_cast %95 : vector<16x128xbf16> to vector<1x16x128xbf16>
    tpu.vector_store %arg12[%96, %c0_38, %c0_39], %99 {strides = array<i32>} : memref<8x16x128xbf16, #tpu.memory_space<vmem>>, vector<1x16x128xbf16>,
    %100 = arith.truncf %94 : vector<16x128xf32> to vector<16x128xbf16>
    %101 = arith.index_cast %17 : i32 to index
    %c0_40 = arith.constant 0 : index
    %c0_41 = arith.constant 0 : index
    %102 = vector.load %arg13[%101, %c0_40, %c0_41] : memref<8x16x128xbf16, #tpu.memory_space<vmem>>, vector<1x16x128xbf16>
    %103 = vector.shape_cast %102 : vector<1x16x128xbf16> to vector<16x128xbf16>
    %104 = vector.shape_cast %100 : vector<16x128xbf16> to vector<1x16x128xbf16>
    tpu.vector_store %arg13[%101, %c0_40, %c0_41], %104 {strides = array<i32>} : memref<8x16x128xbf16, #tpu.memory_space<vmem>>, vector<1x16x128xbf16>,
    %c1_i32 = arith.constant 1 : i32
    %c7_i32_42 = arith.constant 7 : i32
    %105 = arith.subi %c7_i32_42, %c1_i32 : i32
    %106 = tpu.concatenate %63, %94 in 1 : vector<16x128xf32>, vector<16x128xf32> -> vector<16x256xf32>
    %107 = arith.truncf %106 : vector<16x256xf32> to vector<16x256xbf16>
    %cst_43 = arith.constant dense<0.000000e+00> : vector<16x1024xf32>
    %108 = tpu.matmul %107, %15, %cst_43 {dimension_numbers = #tpu.dot_dimension_numbers<[1], [0], [0], [1], [0, 0, 1, 1], [], []>} : vector<16x256xbf16>, vector<256x1024xbf16>, vector<16x1024xf32> -> vector<16x1024xf32>
    %109 = arith.index_cast %c1_i32 : i32 to index
    %c0_44 = arith.constant 0 : index
    %c0_45 = arith.constant 0 : index
    %110 = vector.load %arg10[%109, %c0_44, %c0_45] : memref<8x16x512xbf16, #tpu.memory_space<vmem>>, vector<1x16x512xbf16>
    %111 = vector.shape_cast %110 : vector<1x16x512xbf16> to vector<16x512xbf16>
    %112 = arith.extf %111 : vector<16x512xbf16> to vector<16x512xf32>
    %113 = vector.extract_strided_slice %108 {offsets = [0, 0], sizes = [16, 512], strides = [1, 1]} : vector<16x1024xf32> to vector<16x512xf32>
    %114 = arith.addf %112, %113 : vector<16x512xf32>
    %115 = arith.index_cast %105 : i32 to index
    %c0_46 = arith.constant 0 : index
    %c0_47 = arith.constant 0 : index
    %116 = vector.load %arg11[%115, %c0_46, %c0_47] : memref<8x16x512xbf16, #tpu.memory_space<vmem>>, vector<1x16x512xbf16>
    %117 = vector.shape_cast %116 : vector<1x16x512xbf16> to vector<16x512xbf16>
    %118 = arith.extf %117 : vector<16x512xbf16> to vector<16x512xf32>
    %119 = vector.extract_strided_slice %108 {offsets = [0, 512], sizes = [16, 512], strides = [1, 1]} : vector<16x1024xf32> to vector<16x512xf32>
    %120 = arith.addf %118, %119 : vector<16x512xf32>
    %121 = vector.extract_strided_slice %114 {offsets = [0, 0], sizes = [16, 128], strides = [1, 1]} : vector<16x512xf32> to vector<16x128xf32>
    %cst_48 = arith.constant 5.000000e-01 : f32
    %122 = vector.broadcast %cst_48 : f32 to vector<16x128xf32>
    %123 = arith.mulf %122, %121 : vector<16x128xf32>
    %124 = math.tanh %123 : vector<16x128xf32>
    %cst_49 = arith.constant 5.000000e-01 : f32
    %125 = vector.broadcast %cst_49 : f32 to vector<16x128xf32>
    %126 = arith.mulf %125, %124 : vector<16x128xf32>
    %cst_50 = arith.constant 5.000000e-01 : f32
    %127 = vector.broadcast %cst_50 : f32 to vector<16x128xf32>
    %128 = arith.addf %126, %127 : vector<16x128xf32>
    %129 = vector.extract_strided_slice %114 {offsets = [0, 128], sizes = [16, 128], strides = [1, 1]} : vector<16x512xf32> to vector<16x128xf32>
    %cst_51 = arith.constant 5.000000e-01 : f32
    %130 = vector.broadcast %cst_51 : f32 to vector<16x128xf32>
    %131 = arith.mulf %130, %129 : vector<16x128xf32>
    %132 = math.tanh %131 : vector<16x128xf32>
    %cst_52 = arith.constant 5.000000e-01 : f32
    %133 = vector.broadcast %cst_52 : f32 to vector<16x128xf32>
    %134 = arith.mulf %133, %132 : vector<16x128xf32>
    %cst_53 = arith.constant 5.000000e-01 : f32
    %135 = vector.broadcast %cst_53 : f32 to vector<16x128xf32>
    %136 = arith.addf %134, %135 : vector<16x128xf32>
    %137 = vector.extract_strided_slice %114 {offsets = [0, 256], sizes = [16, 128], strides = [1, 1]} : vector<16x512xf32> to vector<16x128xf32>
    %138 = math.tanh %137 : vector<16x128xf32>
    %139 = vector.extract_strided_slice %114 {offsets = [0, 384], sizes = [16, 128], strides = [1, 1]} : vector<16x512xf32> to vector<16x128xf32>
    %cst_54 = arith.constant 5.000000e-01 : f32
    %140 = vector.broadcast %cst_54 : f32 to vector<16x128xf32>
    %141 = arith.mulf %140, %139 : vector<16x128xf32>
    %142 = math.tanh %141 : vector<16x128xf32>
    %cst_55 = arith.constant 5.000000e-01 : f32
    %143 = vector.broadcast %cst_55 : f32 to vector<16x128xf32>
    %144 = arith.mulf %143, %142 : vector<16x128xf32>
    %cst_56 = arith.constant 5.000000e-01 : f32
    %145 = vector.broadcast %cst_56 : f32 to vector<16x128xf32>
    %146 = arith.addf %144, %145 : vector<16x128xf32>
    %147 = arith.mulf %136, %61 : vector<16x128xf32>
    %148 = arith.mulf %128, %138 : vector<16x128xf32>
    %149 = arith.addf %147, %148 : vector<16x128xf32>
    %150 = math.tanh %149 : vector<16x128xf32>
    %151 = arith.mulf %146, %150 : vector<16x128xf32>
    %152 = vector.extract_strided_slice %120 {offsets = [0, 0], sizes = [16, 128], strides = [1, 1]} : vector<16x512xf32> to vector<16x128xf32>
    %cst_57 = arith.constant 5.000000e-01 : f32
    %153 = vector.broadcast %cst_57 : f32 to vector<16x128xf32>
    %154 = arith.mulf %153, %152 : vector<16x128xf32>
    %155 = math.tanh %154 : vector<16x128xf32>
    %cst_58 = arith.constant 5.000000e-01 : f32
    %156 = vector.broadcast %cst_58 : f32 to vector<16x128xf32>
    %157 = arith.mulf %156, %155 : vector<16x128xf32>
    %cst_59 = arith.constant 5.000000e-01 : f32
    %158 = vector.broadcast %cst_59 : f32 to vector<16x128xf32>
    %159 = arith.addf %157, %158 : vector<16x128xf32>
    %160 = vector.extract_strided_slice %120 {offsets = [0, 128], sizes = [16, 128], strides = [1, 1]} : vector<16x512xf32> to vector<16x128xf32>
    %cst_60 = arith.constant 5.000000e-01 : f32
    %161 = vector.broadcast %cst_60 : f32 to vector<16x128xf32>
    %162 = arith.mulf %161, %160 : vector<16x128xf32>
    %163 = math.tanh %162 : vector<16x128xf32>
    %cst_61 = arith.constant 5.000000e-01 : f32
    %164 = vector.broadcast %cst_61 : f32 to vector<16x128xf32>
    %165 = arith.mulf %164, %163 : vector<16x128xf32>
    %cst_62 = arith.constant 5.000000e-01 : f32
    %166 = vector.broadcast %cst_62 : f32 to vector<16x128xf32>
    %167 = arith.addf %165, %166 : vector<16x128xf32>
    %168 = vector.extract_strided_slice %120 {offsets = [0, 256], sizes = [16, 128], strides = [1, 1]} : vector<16x512xf32> to vector<16x128xf32>
    %169 = math.tanh %168 : vector<16x128xf32>
    %170 = vector.extract_strided_slice %120 {offsets = [0, 384], sizes = [16, 128], strides = [1, 1]} : vector<16x512xf32> to vector<16x128xf32>
    %cst_63 = arith.constant 5.000000e-01 : f32
    %171 = vector.broadcast %cst_63 : f32 to vector<16x128xf32>
    %172 = arith.mulf %171, %170 : vector<16x128xf32>
    %173 = math.tanh %172 : vector<16x128xf32>
    %cst_64 = arith.constant 5.000000e-01 : f32
    %174 = vector.broadcast %cst_64 : f32 to vector<16x128xf32>
    %175 = arith.mulf %174, %173 : vector<16x128xf32>
    %cst_65 = arith.constant 5.000000e-01 : f32
    %176 = vector.broadcast %cst_65 : f32 to vector<16x128xf32>
    %177 = arith.addf %175, %176 : vector<16x128xf32>
    %178 = arith.mulf %167, %92 : vector<16x128xf32>
    %179 = arith.mulf %159, %169 : vector<16x128xf32>
    %180 = arith.addf %178, %179 : vector<16x128xf32>
    %181 = math.tanh %180 : vector<16x128xf32>
    %182 = arith.mulf %177, %181 : vector<16x128xf32>
    %183 = arith.truncf %151 : vector<16x128xf32> to vector<16x128xbf16>
    %184 = arith.index_cast %c1_i32 : i32 to index
    %c0_66 = arith.constant 0 : index
    %c0_67 = arith.constant 0 : index
    %185 = vector.load %arg12[%184, %c0_66, %c0_67] : memref<8x16x128xbf16, #tpu.memory_space<vmem>>, vector<1x16x128xbf16>
    %186 = vector.shape_cast %185 : vector<1x16x128xbf16> to vector<16x128xbf16>
    %187 = vector.shape_cast %183 : vector<16x128xbf16> to vector<1x16x128xbf16>
    tpu.vector_store %arg12[%184, %c0_66, %c0_67], %187 {strides = array<i32>} : memref<8x16x128xbf16, #tpu.memory_space<vmem>>, vector<1x16x128xbf16>,
    %188 = arith.truncf %182 : vector<16x128xf32> to vector<16x128xbf16>
    %189 = arith.index_cast %105 : i32 to index
    %c0_68 = arith.constant 0 : index
    %c0_69 = arith.constant 0 : index
    %190 = vector.load %arg13[%189, %c0_68, %c0_69] : memref<8x16x128xbf16, #tpu.memory_space<vmem>>, vector<1x16x128xbf16>
    %191 = vector.shape_cast %190 : vector<1x16x128xbf16> to vector<16x128xbf16>
    %192 = vector.shape_cast %188 : vector<16x128xbf16> to vector<1x16x128xbf16>
    tpu.vector_store %arg13[%189, %c0_68, %c0_69], %192 {strides = array<i32>} : memref<8x16x128xbf16, #tpu.memory_space<vmem>>, vector<1x16x128xbf16>,
    %c2_i32 = arith.constant 2 : i32
    %c7_i32_70 = arith.constant 7 : i32
    %193 = arith.subi %c7_i32_70, %c2_i32 : i32
    %194 = tpu.concatenate %151, %182 in 1 : vector<16x128xf32>, vector<16x128xf32> -> vector<16x256xf32>
    %195 = arith.truncf %194 : vector<16x256xf32> to vector<16x256xbf16>
    %cst_71 = arith.constant dense<0.000000e+00> : vector<16x1024xf32>
    %196 = tpu.matmul %195, %15, %cst_71 {dimension_numbers = #tpu.dot_dimension_numbers<[1], [0], [0], [1], [0, 0, 1, 1], [], []>} : vector<16x256xbf16>, vector<256x1024xbf16>, vector<16x1024xf32> -> vector<16x1024xf32>
    %197 = arith.index_cast %c2_i32 : i32 to index
    %c0_72 = arith.constant 0 : index
    %c0_73 = arith.constant 0 : index
    %198 = vector.load %arg10[%197, %c0_72, %c0_73] : memref<8x16x512xbf16, #tpu.memory_space<vmem>>, vector<1x16x512xbf16>
    %199 = vector.shape_cast %198 : vector<1x16x512xbf16> to vector<16x512xbf16>
    %200 = arith.extf %199 : vector<16x512xbf16> to vector<16x512xf32>
    %201 = vector.extract_strided_slice %196 {offsets = [0, 0], sizes = [16, 512], strides = [1, 1]} : vector<16x1024xf32> to vector<16x512xf32>
    %202 = arith.addf %200, %201 : vector<16x512xf32>
    %203 = arith.index_cast %193 : i32 to index
    %c0_74 = arith.constant 0 : index
    %c0_75 = arith.constant 0 : index
    %204 = vector.load %arg11[%203, %c0_74, %c0_75] : memref<8x16x512xbf16, #tpu.memory_space<vmem>>, vector<1x16x512xbf16>
    %205 = vector.shape_cast %204 : vector<1x16x512xbf16> to vector<16x512xbf16>
    %206 = arith.extf %205 : vector<16x512xbf16> to vector<16x512xf32>
    %207 = vector.extract_strided_slice %196 {offsets = [0, 512], sizes = [16, 512], strides = [1, 1]} : vector<16x1024xf32> to vector<16x512xf32>
    %208 = arith.addf %206, %207 : vector<16x512xf32>
    %209 = vector.extract_strided_slice %202 {offsets = [0, 0], sizes = [16, 128], strides = [1, 1]} : vector<16x512xf32> to vector<16x128xf32>
    %cst_76 = arith.constant 5.000000e-01 : f32
    %210 = vector.broadcast %cst_76 : f32 to vector<16x128xf32>
    %211 = arith.mulf %210, %209 : vector<16x128xf32>
    %212 = math.tanh %211 : vector<16x128xf32>
    %cst_77 = arith.constant 5.000000e-01 : f32
    %213 = vector.broadcast %cst_77 : f32 to vector<16x128xf32>
    %214 = arith.mulf %213, %212 : vector<16x128xf32>
    %cst_78 = arith.constant 5.000000e-01 : f32
    %215 = vector.broadcast %cst_78 : f32 to vector<16x128xf32>
    %216 = arith.addf %214, %215 : vector<16x128xf32>
    %217 = vector.extract_strided_slice %202 {offsets = [0, 128], sizes = [16, 128], strides = [1, 1]} : vector<16x512xf32> to vector<16x128xf32>
    %cst_79 = arith.constant 5.000000e-01 : f32
    %218 = vector.broadcast %cst_79 : f32 to vector<16x128xf32>
    %219 = arith.mulf %218, %217 : vector<16x128xf32>
    %220 = math.tanh %219 : vector<16x128xf32>
    %cst_80 = arith.constant 5.000000e-01 : f32
    %221 = vector.broadcast %cst_80 : f32 to vector<16x128xf32>
    %222 = arith.mulf %221, %220 : vector<16x128xf32>
    %cst_81 = arith.constant 5.000000e-01 : f32
    %223 = vector.broadcast %cst_81 : f32 to vector<16x128xf32>
    %224 = arith.addf %222, %223 : vector<16x128xf32>
    %225 = vector.extract_strided_slice %202 {offsets = [0, 256], sizes = [16, 128], strides = [1, 1]} : vector<16x512xf32> to vector<16x128xf32>
    %226 = math.tanh %225 : vector<16x128xf32>
    %227 = vector.extract_strided_slice %202 {offsets = [0, 384], sizes = [16, 128], strides = [1, 1]} : vector<16x512xf32> to vector<16x128xf32>
    %cst_82 = arith.constant 5.000000e-01 : f32
    %228 = vector.broadcast %cst_82 : f32 to vector<16x128xf32>
    %229 = arith.mulf %228, %227 : vector<16x128xf32>
    %230 = math.tanh %229 : vector<16x128xf32>
    %cst_83 = arith.constant 5.000000e-01 : f32
    %231 = vector.broadcast %cst_83 : f32 to vector<16x128xf32>
    %232 = arith.mulf %231, %230 : vector<16x128xf32>
    %cst_84 = arith.constant 5.000000e-01 : f32
    %233 = vector.broadcast %cst_84 : f32 to vector<16x128xf32>
    %234 = arith.addf %232, %233 : vector<16x128xf32>
    %235 = arith.mulf %224, %149 : vector<16x128xf32>
    %236 = arith.mulf %216, %226 : vector<16x128xf32>
    %237 = arith.addf %235, %236 : vector<16x128xf32>
    %238 = math.tanh %237 : vector<16x128xf32>
    %239 = arith.mulf %234, %238 : vector<16x128xf32>
    %240 = vector.extract_strided_slice %208 {offsets = [0, 0], sizes = [16, 128], strides = [1, 1]} : vector<16x512xf32> to vector<16x128xf32>
    %cst_85 = arith.constant 5.000000e-01 : f32
    %241 = vector.broadcast %cst_85 : f32 to vector<16x128xf32>
    %242 = arith.mulf %241, %240 : vector<16x128xf32>
    %243 = math.tanh %242 : vector<16x128xf32>
    %cst_86 = arith.constant 5.000000e-01 : f32
    %244 = vector.broadcast %cst_86 : f32 to vector<16x128xf32>
    %245 = arith.mulf %244, %243 : vector<16x128xf32>
    %cst_87 = arith.constant 5.000000e-01 : f32
    %246 = vector.broadcast %cst_87 : f32 to vector<16x128xf32>
    %247 = arith.addf %245, %246 : vector<16x128xf32>
    %248 = vector.extract_strided_slice %208 {offsets = [0, 128], sizes = [16, 128], strides = [1, 1]} : vector<16x512xf32> to vector<16x128xf32>
    %cst_88 = arith.constant 5.000000e-01 : f32
    %249 = vector.broadcast %cst_88 : f32 to vector<16x128xf32>
    %250 = arith.mulf %249, %248 : vector<16x128xf32>
    %251 = math.tanh %250 : vector<16x128xf32>
    %cst_89 = arith.constant 5.000000e-01 : f32
    %252 = vector.broadcast %cst_89 : f32 to vector<16x128xf32>
    %253 = arith.mulf %252, %251 : vector<16x128xf32>
    %cst_90 = arith.constant 5.000000e-01 : f32
    %254 = vector.broadcast %cst_90 : f32 to vector<16x128xf32>
    %255 = arith.addf %253, %254 : vector<16x128xf32>
    %256 = vector.extract_strided_slice %208 {offsets = [0, 256], sizes = [16, 128], strides = [1, 1]} : vector<16x512xf32> to vector<16x128xf32>
    %257 = math.tanh %256 : vector<16x128xf32>
    %258 = vector.extract_strided_slice %208 {offsets = [0, 384], sizes = [16, 128], strides = [1, 1]} : vector<16x512xf32> to vector<16x128xf32>
    %cst_91 = arith.constant 5.000000e-01 : f32
    %259 = vector.broadcast %cst_91 : f32 to vector<16x128xf32>
    %260 = arith.mulf %259, %258 : vector<16x128xf32>
    %261 = math.tanh %260 : vector<16x128xf32>
    %cst_92 = arith.constant 5.000000e-01 : f32
    %262 = vector.broadcast %cst_92 : f32 to vector<16x128xf32>
    %263 = arith.mulf %262, %261 : vector<16x128xf32>
    %cst_93 = arith.constant 5.000000e-01 : f32
    %264 = vector.broadcast %cst_93 : f32 to vector<16x128xf32>
    %265 = arith.addf %263, %264 : vector<16x128xf32>
    %266 = arith.mulf %255, %180 : vector<16x128xf32>
    %267 = arith.mulf %247, %257 : vector<16x128xf32>
    %268 = arith.addf %266, %267 : vector<16x128xf32>
    %269 = math.tanh %268 : vector<16x128xf32>
    %270 = arith.mulf %265, %269 : vector<16x128xf32>
    %271 = arith.truncf %239 : vector<16x128xf32> to vector<16x128xbf16>
    %272 = arith.index_cast %c2_i32 : i32 to index
    %c0_94 = arith.constant 0 : index
    %c0_95 = arith.constant 0 : index
    %273 = vector.load %arg12[%272, %c0_94, %c0_95] : memref<8x16x128xbf16, #tpu.memory_space<vmem>>, vector<1x16x128xbf16>
    %274 = vector.shape_cast %273 : vector<1x16x128xbf16> to vector<16x128xbf16>
    %275 = vector.shape_cast %271 : vector<16x128xbf16> to vector<1x16x128xbf16>
    tpu.vector_store %arg12[%272, %c0_94, %c0_95], %275 {strides = array<i32>} : memref<8x16x128xbf16, #tpu.memory_space<vmem>>, vector<1x16x128xbf16>,
    %276 = arith.truncf %270 : vector<16x128xf32> to vector<16x128xbf16>
    %277 = arith.index_cast %193 : i32 to index
    %c0_96 = arith.constant 0 : index
    %c0_97 = arith.constant 0 : index
    %278 = vector.load %arg13[%277, %c0_96, %c0_97] : memref<8x16x128xbf16, #tpu.memory_space<vmem>>, vector<1x16x128xbf16>
    %279 = vector.shape_cast %278 : vector<1x16x128xbf16> to vector<16x128xbf16>
    %280 = vector.shape_cast %276 : vector<16x128xbf16> to vector<1x16x128xbf16>
    tpu.vector_store %arg13[%277, %c0_96, %c0_97], %280 {strides = array<i32>} : memref<8x16x128xbf16, #tpu.memory_space<vmem>>, vector<1x16x128xbf16>,
    %c3_i32 = arith.constant 3 : i32
    %c7_i32_98 = arith.constant 7 : i32
    %281 = arith.subi %c7_i32_98, %c3_i32 : i32
    %282 = tpu.concatenate %239, %270 in 1 : vector<16x128xf32>, vector<16x128xf32> -> vector<16x256xf32>
    %283 = arith.truncf %282 : vector<16x256xf32> to vector<16x256xbf16>
    %cst_99 = arith.constant dense<0.000000e+00> : vector<16x1024xf32>
    %284 = tpu.matmul %283, %15, %cst_99 {dimension_numbers = #tpu.dot_dimension_numbers<[1], [0], [0], [1], [0, 0, 1, 1], [], []>} : vector<16x256xbf16>, vector<256x1024xbf16>, vector<16x1024xf32> -> vector<16x1024xf32>
    %285 = arith.index_cast %c3_i32 : i32 to index
    %c0_100 = arith.constant 0 : index
    %c0_101 = arith.constant 0 : index
    %286 = vector.load %arg10[%285, %c0_100, %c0_101] : memref<8x16x512xbf16, #tpu.memory_space<vmem>>, vector<1x16x512xbf16>
    %287 = vector.shape_cast %286 : vector<1x16x512xbf16> to vector<16x512xbf16>
    %288 = arith.extf %287 : vector<16x512xbf16> to vector<16x512xf32>
    %289 = vector.extract_strided_slice %284 {offsets = [0, 0], sizes = [16, 512], strides = [1, 1]} : vector<16x1024xf32> to vector<16x512xf32>
    %290 = arith.addf %288, %289 : vector<16x512xf32>
    %291 = arith.index_cast %281 : i32 to index
    %c0_102 = arith.constant 0 : index
    %c0_103 = arith.constant 0 : index
    %292 = vector.load %arg11[%291, %c0_102, %c0_103] : memref<8x16x512xbf16, #tpu.memory_space<vmem>>, vector<1x16x512xbf16>
    %293 = vector.shape_cast %292 : vector<1x16x512xbf16> to vector<16x512xbf16>
    %294 = arith.extf %293 : vector<16x512xbf16> to vector<16x512xf32>
    %295 = vector.extract_strided_slice %284 {offsets = [0, 512], sizes = [16, 512], strides = [1, 1]} : vector<16x1024xf32> to vector<16x512xf32>
    %296 = arith.addf %294, %295 : vector<16x512xf32>
    %297 = vector.extract_strided_slice %290 {offsets = [0, 0], sizes = [16, 128], strides = [1, 1]} : vector<16x512xf32> to vector<16x128xf32>
    %cst_104 = arith.constant 5.000000e-01 : f32
    %298 = vector.broadcast %cst_104 : f32 to vector<16x128xf32>
    %299 = arith.mulf %298, %297 : vector<16x128xf32>
    %300 = math.tanh %299 : vector<16x128xf32>
    %cst_105 = arith.constant 5.000000e-01 : f32
    %301 = vector.broadcast %cst_105 : f32 to vector<16x128xf32>
    %302 = arith.mulf %301, %300 : vector<16x128xf32>
    %cst_106 = arith.constant 5.000000e-01 : f32
    %303 = vector.broadcast %cst_106 : f32 to vector<16x128xf32>
    %304 = arith.addf %302, %303 : vector<16x128xf32>
    %305 = vector.extract_strided_slice %290 {offsets = [0, 128], sizes = [16, 128], strides = [1, 1]} : vector<16x512xf32> to vector<16x128xf32>
    %cst_107 = arith.constant 5.000000e-01 : f32
    %306 = vector.broadcast %cst_107 : f32 to vector<16x128xf32>
    %307 = arith.mulf %306, %305 : vector<16x128xf32>
    %308 = math.tanh %307 : vector<16x128xf32>
    %cst_108 = arith.constant 5.000000e-01 : f32
    %309 = vector.broadcast %cst_108 : f32 to vector<16x128xf32>
    %310 = arith.mulf %309, %308 : vector<16x128xf32>
    %cst_109 = arith.constant 5.000000e-01 : f32
    %311 = vector.broadcast %cst_109 : f32 to vector<16x128xf32>
    %312 = arith.addf %310, %311 : vector<16x128xf32>
    %313 = vector.extract_strided_slice %290 {offsets = [0, 256], sizes = [16, 128], strides = [1, 1]} : vector<16x512xf32> to vector<16x128xf32>
    %314 = math.tanh %313 : vector<16x128xf32>
    %315 = vector.extract_strided_slice %290 {offsets = [0, 384], sizes = [16, 128], strides = [1, 1]} : vector<16x512xf32> to vector<16x128xf32>
    %cst_110 = arith.constant 5.000000e-01 : f32
    %316 = vector.broadcast %cst_110 : f32 to vector<16x128xf32>
    %317 = arith.mulf %316, %315 : vector<16x128xf32>
    %318 = math.tanh %317 : vector<16x128xf32>
    %cst_111 = arith.constant 5.000000e-01 : f32
    %319 = vector.broadcast %cst_111 : f32 to vector<16x128xf32>
    %320 = arith.mulf %319, %318 : vector<16x128xf32>
    %cst_112 = arith.constant 5.000000e-01 : f32
    %321 = vector.broadcast %cst_112 : f32 to vector<16x128xf32>
    %322 = arith.addf %320, %321 : vector<16x128xf32>
    %323 = arith.mulf %312, %237 : vector<16x128xf32>
    %324 = arith.mulf %304, %314 : vector<16x128xf32>
    %325 = arith.addf %323, %324 : vector<16x128xf32>
    %326 = math.tanh %325 : vector<16x128xf32>
    %327 = arith.mulf %322, %326 : vector<16x128xf32>
    %328 = vector.extract_strided_slice %296 {offsets = [0, 0], sizes = [16, 128], strides = [1, 1]} : vector<16x512xf32> to vector<16x128xf32>
    %cst_113 = arith.constant 5.000000e-01 : f32
    %329 = vector.broadcast %cst_113 : f32 to vector<16x128xf32>
    %330 = arith.mulf %329, %328 : vector<16x128xf32>
    %331 = math.tanh %330 : vector<16x128xf32>
    %cst_114 = arith.constant 5.000000e-01 : f32
    %332 = vector.broadcast %cst_114 : f32 to vector<16x128xf32>
    %333 = arith.mulf %332, %331 : vector<16x128xf32>
    %cst_115 = arith.constant 5.000000e-01 : f32
    %334 = vector.broadcast %cst_115 : f32 to vector<16x128xf32>
    %335 = arith.addf %333, %334 : vector<16x128xf32>
    %336 = vector.extract_strided_slice %296 {offsets = [0, 128], sizes = [16, 128], strides = [1, 1]} : vector<16x512xf32> to vector<16x128xf32>
    %cst_116 = arith.constant 5.000000e-01 : f32
    %337 = vector.broadcast %cst_116 : f32 to vector<16x128xf32>
    %338 = arith.mulf %337, %336 : vector<16x128xf32>
    %339 = math.tanh %338 : vector<16x128xf32>
    %cst_117 = arith.constant 5.000000e-01 : f32
    %340 = vector.broadcast %cst_117 : f32 to vector<16x128xf32>
    %341 = arith.mulf %340, %339 : vector<16x128xf32>
    %cst_118 = arith.constant 5.000000e-01 : f32
    %342 = vector.broadcast %cst_118 : f32 to vector<16x128xf32>
    %343 = arith.addf %341, %342 : vector<16x128xf32>
    %344 = vector.extract_strided_slice %296 {offsets = [0, 256], sizes = [16, 128], strides = [1, 1]} : vector<16x512xf32> to vector<16x128xf32>
    %345 = math.tanh %344 : vector<16x128xf32>
    %346 = vector.extract_strided_slice %296 {offsets = [0, 384], sizes = [16, 128], strides = [1, 1]} : vector<16x512xf32> to vector<16x128xf32>
    %cst_119 = arith.constant 5.000000e-01 : f32
    %347 = vector.broadcast %cst_119 : f32 to vector<16x128xf32>
    %348 = arith.mulf %347, %346 : vector<16x128xf32>
    %349 = math.tanh %348 : vector<16x128xf32>
    %cst_120 = arith.constant 5.000000e-01 : f32
    %350 = vector.broadcast %cst_120 : f32 to vector<16x128xf32>
    %351 = arith.mulf %350, %349 : vector<16x128xf32>
    %cst_121 = arith.constant 5.000000e-01 : f32
    %352 = vector.broadcast %cst_121 : f32 to vector<16x128xf32>
    %353 = arith.addf %351, %352 : vector<16x128xf32>
    %354 = arith.mulf %343, %268 : vector<16x128xf32>
    %355 = arith.mulf %335, %345 : vector<16x128xf32>
    %356 = arith.addf %354, %355 : vector<16x128xf32>
    %357 = math.tanh %356 : vector<16x128xf32>
    %358 = arith.mulf %353, %357 : vector<16x128xf32>
    %359 = arith.truncf %327 : vector<16x128xf32> to vector<16x128xbf16>
    %360 = arith.index_cast %c3_i32 : i32 to index
    %c0_122 = arith.constant 0 : index
    %c0_123 = arith.constant 0 : index
    %361 = vector.load %arg12[%360, %c0_122, %c0_123] : memref<8x16x128xbf16, #tpu.memory_space<vmem>>, vector<1x16x128xbf16>
    %362 = vector.shape_cast %361 : vector<1x16x128xbf16> to vector<16x128xbf16>
    %363 = vector.shape_cast %359 : vector<16x128xbf16> to vector<1x16x128xbf16>
    tpu.vector_store %arg12[%360, %c0_122, %c0_123], %363 {strides = array<i32>} : memref<8x16x128xbf16, #tpu.memory_space<vmem>>, vector<1x16x128xbf16>,
    %364 = arith.truncf %358 : vector<16x128xf32> to vector<16x128xbf16>
    %365 = arith.index_cast %281 : i32 to index
    %c0_124 = arith.constant 0 : index
    %c0_125 = arith.constant 0 : index
    %366 = vector.load %arg13[%365, %c0_124, %c0_125] : memref<8x16x128xbf16, #tpu.memory_space<vmem>>, vector<1x16x128xbf16>
    %367 = vector.shape_cast %366 : vector<1x16x128xbf16> to vector<16x128xbf16>
    %368 = vector.shape_cast %364 : vector<16x128xbf16> to vector<1x16x128xbf16>
    tpu.vector_store %arg13[%365, %c0_124, %c0_125], %368 {strides = array<i32>} : memref<8x16x128xbf16, #tpu.memory_space<vmem>>, vector<1x16x128xbf16>,
    %c4_i32 = arith.constant 4 : i32
    %c7_i32_126 = arith.constant 7 : i32
    %369 = arith.subi %c7_i32_126, %c4_i32 : i32
    %370 = tpu.concatenate %327, %358 in 1 : vector<16x128xf32>, vector<16x128xf32> -> vector<16x256xf32>
    %371 = arith.truncf %370 : vector<16x256xf32> to vector<16x256xbf16>
    %cst_127 = arith.constant dense<0.000000e+00> : vector<16x1024xf32>
    %372 = tpu.matmul %371, %15, %cst_127 {dimension_numbers = #tpu.dot_dimension_numbers<[1], [0], [0], [1], [0, 0, 1, 1], [], []>} : vector<16x256xbf16>, vector<256x1024xbf16>, vector<16x1024xf32> -> vector<16x1024xf32>
    %373 = arith.index_cast %c4_i32 : i32 to index
    %c0_128 = arith.constant 0 : index
    %c0_129 = arith.constant 0 : index
    %374 = vector.load %arg10[%373, %c0_128, %c0_129] : memref<8x16x512xbf16, #tpu.memory_space<vmem>>, vector<1x16x512xbf16>
    %375 = vector.shape_cast %374 : vector<1x16x512xbf16> to vector<16x512xbf16>
    %376 = arith.extf %375 : vector<16x512xbf16> to vector<16x512xf32>
    %377 = vector.extract_strided_slice %372 {offsets = [0, 0], sizes = [16, 512], strides = [1, 1]} : vector<16x1024xf32> to vector<16x512xf32>
    %378 = arith.addf %376, %377 : vector<16x512xf32>
    %379 = arith.index_cast %369 : i32 to index
    %c0_130 = arith.constant 0 : index
    %c0_131 = arith.constant 0 : index
    %380 = vector.load %arg11[%379, %c0_130, %c0_131] : memref<8x16x512xbf16, #tpu.memory_space<vmem>>, vector<1x16x512xbf16>
    %381 = vector.shape_cast %380 : vector<1x16x512xbf16> to vector<16x512xbf16>
    %382 = arith.extf %381 : vector<16x512xbf16> to vector<16x512xf32>
    %383 = vector.extract_strided_slice %372 {offsets = [0, 512], sizes = [16, 512], strides = [1, 1]} : vector<16x1024xf32> to vector<16x512xf32>
    %384 = arith.addf %382, %383 : vector<16x512xf32>
    %385 = vector.extract_strided_slice %378 {offsets = [0, 0], sizes = [16, 128], strides = [1, 1]} : vector<16x512xf32> to vector<16x128xf32>
    %cst_132 = arith.constant 5.000000e-01 : f32
    %386 = vector.broadcast %cst_132 : f32 to vector<16x128xf32>
    %387 = arith.mulf %386, %385 : vector<16x128xf32>
    %388 = math.tanh %387 : vector<16x128xf32>
    %cst_133 = arith.constant 5.000000e-01 : f32
    %389 = vector.broadcast %cst_133 : f32 to vector<16x128xf32>
    %390 = arith.mulf %389, %388 : vector<16x128xf32>
    %cst_134 = arith.constant 5.000000e-01 : f32
    %391 = vector.broadcast %cst_134 : f32 to vector<16x128xf32>
    %392 = arith.addf %390, %391 : vector<16x128xf32>
    %393 = vector.extract_strided_slice %378 {offsets = [0, 128], sizes = [16, 128], strides = [1, 1]} : vector<16x512xf32> to vector<16x128xf32>
    %cst_135 = arith.constant 5.000000e-01 : f32
    %394 = vector.broadcast %cst_135 : f32 to vector<16x128xf32>
    %395 = arith.mulf %394, %393 : vector<16x128xf32>
    %396 = math.tanh %395 : vector<16x128xf32>
    %cst_136 = arith.constant 5.000000e-01 : f32
    %397 = vector.broadcast %cst_136 : f32 to vector<16x128xf32>
    %398 = arith.mulf %397, %396 : vector<16x128xf32>
    %cst_137 = arith.constant 5.000000e-01 : f32
    %399 = vector.broadcast %cst_137 : f32 to vector<16x128xf32>
    %400 = arith.addf %398, %399 : vector<16x128xf32>
    %401 = vector.extract_strided_slice %378 {offsets = [0, 256], sizes = [16, 128], strides = [1, 1]} : vector<16x512xf32> to vector<16x128xf32>
    %402 = math.tanh %401 : vector<16x128xf32>
    %403 = vector.extract_strided_slice %378 {offsets = [0, 384], sizes = [16, 128], strides = [1, 1]} : vector<16x512xf32> to vector<16x128xf32>
    %cst_138 = arith.constant 5.000000e-01 : f32
    %404 = vector.broadcast %cst_138 : f32 to vector<16x128xf32>
    %405 = arith.mulf %404, %403 : vector<16x128xf32>
    %406 = math.tanh %405 : vector<16x128xf32>
    %cst_139 = arith.constant 5.000000e-01 : f32
    %407 = vector.broadcast %cst_139 : f32 to vector<16x128xf32>
    %408 = arith.mulf %407, %406 : vector<16x128xf32>
    %cst_140 = arith.constant 5.000000e-01 : f32
    %409 = vector.broadcast %cst_140 : f32 to vector<16x128xf32>
    %410 = arith.addf %408, %409 : vector<16x128xf32>
    %411 = arith.mulf %400, %325 : vector<16x128xf32>
    %412 = arith.mulf %392, %402 : vector<16x128xf32>
    %413 = arith.addf %411, %412 : vector<16x128xf32>
    %414 = math.tanh %413 : vector<16x128xf32>
    %415 = arith.mulf %410, %414 : vector<16x128xf32>
    %416 = vector.extract_strided_slice %384 {offsets = [0, 0], sizes = [16, 128], strides = [1, 1]} : vector<16x512xf32> to vector<16x128xf32>
    %cst_141 = arith.constant 5.000000e-01 : f32
    %417 = vector.broadcast %cst_141 : f32 to vector<16x128xf32>
    %418 = arith.mulf %417, %416 : vector<16x128xf32>
    %419 = math.tanh %418 : vector<16x128xf32>
    %cst_142 = arith.constant 5.000000e-01 : f32
    %420 = vector.broadcast %cst_142 : f32 to vector<16x128xf32>
    %421 = arith.mulf %420, %419 : vector<16x128xf32>
    %cst_143 = arith.constant 5.000000e-01 : f32
    %422 = vector.broadcast %cst_143 : f32 to vector<16x128xf32>
    %423 = arith.addf %421, %422 : vector<16x128xf32>
    %424 = vector.extract_strided_slice %384 {offsets = [0, 128], sizes = [16, 128], strides = [1, 1]} : vector<16x512xf32> to vector<16x128xf32>
    %cst_144 = arith.constant 5.000000e-01 : f32
    %425 = vector.broadcast %cst_144 : f32 to vector<16x128xf32>
    %426 = arith.mulf %425, %424 : vector<16x128xf32>
    %427 = math.tanh %426 : vector<16x128xf32>
    %cst_145 = arith.constant 5.000000e-01 : f32
    %428 = vector.broadcast %cst_145 : f32 to vector<16x128xf32>
    %429 = arith.mulf %428, %427 : vector<16x128xf32>
    %cst_146 = arith.constant 5.000000e-01 : f32
    %430 = vector.broadcast %cst_146 : f32 to vector<16x128xf32>
    %431 = arith.addf %429, %430 : vector<16x128xf32>
    %432 = vector.extract_strided_slice %384 {offsets = [0, 256], sizes = [16, 128], strides = [1, 1]} : vector<16x512xf32> to vector<16x128xf32>
    %433 = math.tanh %432 : vector<16x128xf32>
    %434 = vector.extract_strided_slice %384 {offsets = [0, 384], sizes = [16, 128], strides = [1, 1]} : vector<16x512xf32> to vector<16x128xf32>
    %cst_147 = arith.constant 5.000000e-01 : f32
    %435 = vector.broadcast %cst_147 : f32 to vector<16x128xf32>
    %436 = arith.mulf %435, %434 : vector<16x128xf32>
    %437 = math.tanh %436 : vector<16x128xf32>
    %cst_148 = arith.constant 5.000000e-01 : f32
    %438 = vector.broadcast %cst_148 : f32 to vector<16x128xf32>
    %439 = arith.mulf %438, %437 : vector<16x128xf32>
    %cst_149 = arith.constant 5.000000e-01 : f32
    %440 = vector.broadcast %cst_149 : f32 to vector<16x128xf32>
    %441 = arith.addf %439, %440 : vector<16x128xf32>
    %442 = arith.mulf %431, %356 : vector<16x128xf32>
    %443 = arith.mulf %423, %433 : vector<16x128xf32>
    %444 = arith.addf %442, %443 : vector<16x128xf32>
    %445 = math.tanh %444 : vector<16x128xf32>
    %446 = arith.mulf %441, %445 : vector<16x128xf32>
    %447 = arith.truncf %415 : vector<16x128xf32> to vector<16x128xbf16>
    %448 = arith.index_cast %c4_i32 : i32 to index
    %c0_150 = arith.constant 0 : index
    %c0_151 = arith.constant 0 : index
    %449 = vector.load %arg12[%448, %c0_150, %c0_151] : memref<8x16x128xbf16, #tpu.memory_space<vmem>>, vector<1x16x128xbf16>
    %450 = vector.shape_cast %449 : vector<1x16x128xbf16> to vector<16x128xbf16>
    %451 = vector.shape_cast %447 : vector<16x128xbf16> to vector<1x16x128xbf16>
    tpu.vector_store %arg12[%448, %c0_150, %c0_151], %451 {strides = array<i32>} : memref<8x16x128xbf16, #tpu.memory_space<vmem>>, vector<1x16x128xbf16>,
    %452 = arith.truncf %446 : vector<16x128xf32> to vector<16x128xbf16>
    %453 = arith.index_cast %369 : i32 to index
    %c0_152 = arith.constant 0 : index
    %c0_153 = arith.constant 0 : index
    %454 = vector.load %arg13[%453, %c0_152, %c0_153] : memref<8x16x128xbf16, #tpu.memory_space<vmem>>, vector<1x16x128xbf16>
    %455 = vector.shape_cast %454 : vector<1x16x128xbf16> to vector<16x128xbf16>
    %456 = vector.shape_cast %452 : vector<16x128xbf16> to vector<1x16x128xbf16>
    tpu.vector_store %arg13[%453, %c0_152, %c0_153], %456 {strides = array<i32>} : memref<8x16x128xbf16, #tpu.memory_space<vmem>>, vector<1x16x128xbf16>,
    %c5_i32 = arith.constant 5 : i32
    %c7_i32_154 = arith.constant 7 : i32
    %457 = arith.subi %c7_i32_154, %c5_i32 : i32
    %458 = tpu.concatenate %415, %446 in 1 : vector<16x128xf32>, vector<16x128xf32> -> vector<16x256xf32>
    %459 = arith.truncf %458 : vector<16x256xf32> to vector<16x256xbf16>
    %cst_155 = arith.constant dense<0.000000e+00> : vector<16x1024xf32>
    %460 = tpu.matmul %459, %15, %cst_155 {dimension_numbers = #tpu.dot_dimension_numbers<[1], [0], [0], [1], [0, 0, 1, 1], [], []>} : vector<16x256xbf16>, vector<256x1024xbf16>, vector<16x1024xf32> -> vector<16x1024xf32>
    %461 = arith.index_cast %c5_i32 : i32 to index
    %c0_156 = arith.constant 0 : index
    %c0_157 = arith.constant 0 : index
    %462 = vector.load %arg10[%461, %c0_156, %c0_157] : memref<8x16x512xbf16, #tpu.memory_space<vmem>>, vector<1x16x512xbf16>
    %463 = vector.shape_cast %462 : vector<1x16x512xbf16> to vector<16x512xbf16>
    %464 = arith.extf %463 : vector<16x512xbf16> to vector<16x512xf32>
    %465 = vector.extract_strided_slice %460 {offsets = [0, 0], sizes = [16, 512], strides = [1, 1]} : vector<16x1024xf32> to vector<16x512xf32>
    %466 = arith.addf %464, %465 : vector<16x512xf32>
    %467 = arith.index_cast %457 : i32 to index
    %c0_158 = arith.constant 0 : index
    %c0_159 = arith.constant 0 : index
    %468 = vector.load %arg11[%467, %c0_158, %c0_159] : memref<8x16x512xbf16, #tpu.memory_space<vmem>>, vector<1x16x512xbf16>
    %469 = vector.shape_cast %468 : vector<1x16x512xbf16> to vector<16x512xbf16>
    %470 = arith.extf %469 : vector<16x512xbf16> to vector<16x512xf32>
    %471 = vector.extract_strided_slice %460 {offsets = [0, 512], sizes = [16, 512], strides = [1, 1]} : vector<16x1024xf32> to vector<16x512xf32>
    %472 = arith.addf %470, %471 : vector<16x512xf32>
    %473 = vector.extract_strided_slice %466 {offsets = [0, 0], sizes = [16, 128], strides = [1, 1]} : vector<16x512xf32> to vector<16x128xf32>
    %cst_160 = arith.constant 5.000000e-01 : f32
    %474 = vector.broadcast %cst_160 : f32 to vector<16x128xf32>
    %475 = arith.mulf %474, %473 : vector<16x128xf32>
    %476 = math.tanh %475 : vector<16x128xf32>
    %cst_161 = arith.constant 5.000000e-01 : f32
    %477 = vector.broadcast %cst_161 : f32 to vector<16x128xf32>
    %478 = arith.mulf %477, %476 : vector<16x128xf32>
    %cst_162 = arith.constant 5.000000e-01 : f32
    %479 = vector.broadcast %cst_162 : f32 to vector<16x128xf32>
    %480 = arith.addf %478, %479 : vector<16x128xf32>
    %481 = vector.extract_strided_slice %466 {offsets = [0, 128], sizes = [16, 128], strides = [1, 1]} : vector<16x512xf32> to vector<16x128xf32>
    %cst_163 = arith.constant 5.000000e-01 : f32
    %482 = vector.broadcast %cst_163 : f32 to vector<16x128xf32>
    %483 = arith.mulf %482, %481 : vector<16x128xf32>
    %484 = math.tanh %483 : vector<16x128xf32>
    %cst_164 = arith.constant 5.000000e-01 : f32
    %485 = vector.broadcast %cst_164 : f32 to vector<16x128xf32>
    %486 = arith.mulf %485, %484 : vector<16x128xf32>
    %cst_165 = arith.constant 5.000000e-01 : f32
    %487 = vector.broadcast %cst_165 : f32 to vector<16x128xf32>
    %488 = arith.addf %486, %487 : vector<16x128xf32>
    %489 = vector.extract_strided_slice %466 {offsets = [0, 256], sizes = [16, 128], strides = [1, 1]} : vector<16x512xf32> to vector<16x128xf32>
    %490 = math.tanh %489 : vector<16x128xf32>
    %491 = vector.extract_strided_slice %466 {offsets = [0, 384], sizes = [16, 128], strides = [1, 1]} : vector<16x512xf32> to vector<16x128xf32>
    %cst_166 = arith.constant 5.000000e-01 : f32
    %492 = vector.broadcast %cst_166 : f32 to vector<16x128xf32>
    %493 = arith.mulf %492, %491 : vector<16x128xf32>
    %494 = math.tanh %493 : vector<16x128xf32>
    %cst_167 = arith.constant 5.000000e-01 : f32
    %495 = vector.broadcast %cst_167 : f32 to vector<16x128xf32>
    %496 = arith.mulf %495, %494 : vector<16x128xf32>
    %cst_168 = arith.constant 5.000000e-01 : f32
    %497 = vector.broadcast %cst_168 : f32 to vector<16x128xf32>
    %498 = arith.addf %496, %497 : vector<16x128xf32>
    %499 = arith.mulf %488, %413 : vector<16x128xf32>
    %500 = arith.mulf %480, %490 : vector<16x128xf32>
    %501 = arith.addf %499, %500 : vector<16x128xf32>
    %502 = math.tanh %501 : vector<16x128xf32>
    %503 = arith.mulf %498, %502 : vector<16x128xf32>
    %504 = vector.extract_strided_slice %472 {offsets = [0, 0], sizes = [16, 128], strides = [1, 1]} : vector<16x512xf32> to vector<16x128xf32>
    %cst_169 = arith.constant 5.000000e-01 : f32
    %505 = vector.broadcast %cst_169 : f32 to vector<16x128xf32>
    %506 = arith.mulf %505, %504 : vector<16x128xf32>
    %507 = math.tanh %506 : vector<16x128xf32>
    %cst_170 = arith.constant 5.000000e-01 : f32
    %508 = vector.broadcast %cst_170 : f32 to vector<16x128xf32>
    %509 = arith.mulf %508, %507 : vector<16x128xf32>
    %cst_171 = arith.constant 5.000000e-01 : f32
    %510 = vector.broadcast %cst_171 : f32 to vector<16x128xf32>
    %511 = arith.addf %509, %510 : vector<16x128xf32>
    %512 = vector.extract_strided_slice %472 {offsets = [0, 128], sizes = [16, 128], strides = [1, 1]} : vector<16x512xf32> to vector<16x128xf32>
    %cst_172 = arith.constant 5.000000e-01 : f32
    %513 = vector.broadcast %cst_172 : f32 to vector<16x128xf32>
    %514 = arith.mulf %513, %512 : vector<16x128xf32>
    %515 = math.tanh %514 : vector<16x128xf32>
    %cst_173 = arith.constant 5.000000e-01 : f32
    %516 = vector.broadcast %cst_173 : f32 to vector<16x128xf32>
    %517 = arith.mulf %516, %515 : vector<16x128xf32>
    %cst_174 = arith.constant 5.000000e-01 : f32
    %518 = vector.broadcast %cst_174 : f32 to vector<16x128xf32>
    %519 = arith.addf %517, %518 : vector<16x128xf32>
    %520 = vector.extract_strided_slice %472 {offsets = [0, 256], sizes = [16, 128], strides = [1, 1]} : vector<16x512xf32> to vector<16x128xf32>
    %521 = math.tanh %520 : vector<16x128xf32>
    %522 = vector.extract_strided_slice %472 {offsets = [0, 384], sizes = [16, 128], strides = [1, 1]} : vector<16x512xf32> to vector<16x128xf32>
    %cst_175 = arith.constant 5.000000e-01 : f32
    %523 = vector.broadcast %cst_175 : f32 to vector<16x128xf32>
    %524 = arith.mulf %523, %522 : vector<16x128xf32>
    %525 = math.tanh %524 : vector<16x128xf32>
    %cst_176 = arith.constant 5.000000e-01 : f32
    %526 = vector.broadcast %cst_176 : f32 to vector<16x128xf32>
    %527 = arith.mulf %526, %525 : vector<16x128xf32>
    %cst_177 = arith.constant 5.000000e-01 : f32
    %528 = vector.broadcast %cst_177 : f32 to vector<16x128xf32>
    %529 = arith.addf %527, %528 : vector<16x128xf32>
    %530 = arith.mulf %519, %444 : vector<16x128xf32>
    %531 = arith.mulf %511, %521 : vector<16x128xf32>
    %532 = arith.addf %530, %531 : vector<16x128xf32>
    %533 = math.tanh %532 : vector<16x128xf32>
    %534 = arith.mulf %529, %533 : vector<16x128xf32>
    %535 = arith.truncf %503 : vector<16x128xf32> to vector<16x128xbf16>
    %536 = arith.index_cast %c5_i32 : i32 to index
    %c0_178 = arith.constant 0 : index
    %c0_179 = arith.constant 0 : index
    %537 = vector.load %arg12[%536, %c0_178, %c0_179] : memref<8x16x128xbf16, #tpu.memory_space<vmem>>, vector<1x16x128xbf16>
    %538 = vector.shape_cast %537 : vector<1x16x128xbf16> to vector<16x128xbf16>
    %539 = vector.shape_cast %535 : vector<16x128xbf16> to vector<1x16x128xbf16>
    tpu.vector_store %arg12[%536, %c0_178, %c0_179], %539 {strides = array<i32>} : memref<8x16x128xbf16, #tpu.memory_space<vmem>>, vector<1x16x128xbf16>,
    %540 = arith.truncf %534 : vector<16x128xf32> to vector<16x128xbf16>
    %541 = arith.index_cast %457 : i32 to index
    %c0_180 = arith.constant 0 : index
    %c0_181 = arith.constant 0 : index
    %542 = vector.load %arg13[%541, %c0_180, %c0_181] : memref<8x16x128xbf16, #tpu.memory_space<vmem>>, vector<1x16x128xbf16>
    %543 = vector.shape_cast %542 : vector<1x16x128xbf16> to vector<16x128xbf16>
    %544 = vector.shape_cast %540 : vector<16x128xbf16> to vector<1x16x128xbf16>
    tpu.vector_store %arg13[%541, %c0_180, %c0_181], %544 {strides = array<i32>} : memref<8x16x128xbf16, #tpu.memory_space<vmem>>, vector<1x16x128xbf16>,
    %c6_i32 = arith.constant 6 : i32
    %c7_i32_182 = arith.constant 7 : i32
    %545 = arith.subi %c7_i32_182, %c6_i32 : i32
    %546 = tpu.concatenate %503, %534 in 1 : vector<16x128xf32>, vector<16x128xf32> -> vector<16x256xf32>
    %547 = arith.truncf %546 : vector<16x256xf32> to vector<16x256xbf16>
    %cst_183 = arith.constant dense<0.000000e+00> : vector<16x1024xf32>
    %548 = tpu.matmul %547, %15, %cst_183 {dimension_numbers = #tpu.dot_dimension_numbers<[1], [0], [0], [1], [0, 0, 1, 1], [], []>} : vector<16x256xbf16>, vector<256x1024xbf16>, vector<16x1024xf32> -> vector<16x1024xf32>
    %549 = arith.index_cast %c6_i32 : i32 to index
    %c0_184 = arith.constant 0 : index
    %c0_185 = arith.constant 0 : index
    %550 = vector.load %arg10[%549, %c0_184, %c0_185] : memref<8x16x512xbf16, #tpu.memory_space<vmem>>, vector<1x16x512xbf16>
    %551 = vector.shape_cast %550 : vector<1x16x512xbf16> to vector<16x512xbf16>
    %552 = arith.extf %551 : vector<16x512xbf16> to vector<16x512xf32>
    %553 = vector.extract_strided_slice %548 {offsets = [0, 0], sizes = [16, 512], strides = [1, 1]} : vector<16x1024xf32> to vector<16x512xf32>
    %554 = arith.addf %552, %553 : vector<16x512xf32>
    %555 = arith.index_cast %545 : i32 to index
    %c0_186 = arith.constant 0 : index
    %c0_187 = arith.constant 0 : index
    %556 = vector.load %arg11[%555, %c0_186, %c0_187] : memref<8x16x512xbf16, #tpu.memory_space<vmem>>, vector<1x16x512xbf16>
    %557 = vector.shape_cast %556 : vector<1x16x512xbf16> to vector<16x512xbf16>
    %558 = arith.extf %557 : vector<16x512xbf16> to vector<16x512xf32>
    %559 = vector.extract_strided_slice %548 {offsets = [0, 512], sizes = [16, 512], strides = [1, 1]} : vector<16x1024xf32> to vector<16x512xf32>
    %560 = arith.addf %558, %559 : vector<16x512xf32>
    %561 = vector.extract_strided_slice %554 {offsets = [0, 0], sizes = [16, 128], strides = [1, 1]} : vector<16x512xf32> to vector<16x128xf32>
    %cst_188 = arith.constant 5.000000e-01 : f32
    %562 = vector.broadcast %cst_188 : f32 to vector<16x128xf32>
    %563 = arith.mulf %562, %561 : vector<16x128xf32>
    %564 = math.tanh %563 : vector<16x128xf32>
    %cst_189 = arith.constant 5.000000e-01 : f32
    %565 = vector.broadcast %cst_189 : f32 to vector<16x128xf32>
    %566 = arith.mulf %565, %564 : vector<16x128xf32>
    %cst_190 = arith.constant 5.000000e-01 : f32
    %567 = vector.broadcast %cst_190 : f32 to vector<16x128xf32>
    %568 = arith.addf %566, %567 : vector<16x128xf32>
    %569 = vector.extract_strided_slice %554 {offsets = [0, 128], sizes = [16, 128], strides = [1, 1]} : vector<16x512xf32> to vector<16x128xf32>
    %cst_191 = arith.constant 5.000000e-01 : f32
    %570 = vector.broadcast %cst_191 : f32 to vector<16x128xf32>
    %571 = arith.mulf %570, %569 : vector<16x128xf32>
    %572 = math.tanh %571 : vector<16x128xf32>
    %cst_192 = arith.constant 5.000000e-01 : f32
    %573 = vector.broadcast %cst_192 : f32 to vector<16x128xf32>
    %574 = arith.mulf %573, %572 : vector<16x128xf32>
    %cst_193 = arith.constant 5.000000e-01 : f32
    %575 = vector.broadcast %cst_193 : f32 to vector<16x128xf32>
    %576 = arith.addf %574, %575 : vector<16x128xf32>
    %577 = vector.extract_strided_slice %554 {offsets = [0, 256], sizes = [16, 128], strides = [1, 1]} : vector<16x512xf32> to vector<16x128xf32>
    %578 = math.tanh %577 : vector<16x128xf32>
    %579 = vector.extract_strided_slice %554 {offsets = [0, 384], sizes = [16, 128], strides = [1, 1]} : vector<16x512xf32> to vector<16x128xf32>
    %cst_194 = arith.constant 5.000000e-01 : f32
    %580 = vector.broadcast %cst_194 : f32 to vector<16x128xf32>
    %581 = arith.mulf %580, %579 : vector<16x128xf32>
    %582 = math.tanh %581 : vector<16x128xf32>
    %cst_195 = arith.constant 5.000000e-01 : f32
    %583 = vector.broadcast %cst_195 : f32 to vector<16x128xf32>
    %584 = arith.mulf %583, %582 : vector<16x128xf32>
    %cst_196 = arith.constant 5.000000e-01 : f32
    %585 = vector.broadcast %cst_196 : f32 to vector<16x128xf32>
    %586 = arith.addf %584, %585 : vector<16x128xf32>
    %587 = arith.mulf %576, %501 : vector<16x128xf32>
    %588 = arith.mulf %568, %578 : vector<16x128xf32>
    %589 = arith.addf %587, %588 : vector<16x128xf32>
    %590 = math.tanh %589 : vector<16x128xf32>
    %591 = arith.mulf %586, %590 : vector<16x128xf32>
    %592 = vector.extract_strided_slice %560 {offsets = [0, 0], sizes = [16, 128], strides = [1, 1]} : vector<16x512xf32> to vector<16x128xf32>
    %cst_197 = arith.constant 5.000000e-01 : f32
    %593 = vector.broadcast %cst_197 : f32 to vector<16x128xf32>
    %594 = arith.mulf %593, %592 : vector<16x128xf32>
    %595 = math.tanh %594 : vector<16x128xf32>
    %cst_198 = arith.constant 5.000000e-01 : f32
    %596 = vector.broadcast %cst_198 : f32 to vector<16x128xf32>
    %597 = arith.mulf %596, %595 : vector<16x128xf32>
    %cst_199 = arith.constant 5.000000e-01 : f32
    %598 = vector.broadcast %cst_199 : f32 to vector<16x128xf32>
    %599 = arith.addf %597, %598 : vector<16x128xf32>
    %600 = vector.extract_strided_slice %560 {offsets = [0, 128], sizes = [16, 128], strides = [1, 1]} : vector<16x512xf32> to vector<16x128xf32>
    %cst_200 = arith.constant 5.000000e-01 : f32
    %601 = vector.broadcast %cst_200 : f32 to vector<16x128xf32>
    %602 = arith.mulf %601, %600 : vector<16x128xf32>
    %603 = math.tanh %602 : vector<16x128xf32>
    %cst_201 = arith.constant 5.000000e-01 : f32
    %604 = vector.broadcast %cst_201 : f32 to vector<16x128xf32>
    %605 = arith.mulf %604, %603 : vector<16x128xf32>
    %cst_202 = arith.constant 5.000000e-01 : f32
    %606 = vector.broadcast %cst_202 : f32 to vector<16x128xf32>
    %607 = arith.addf %605, %606 : vector<16x128xf32>
    %608 = vector.extract_strided_slice %560 {offsets = [0, 256], sizes = [16, 128], strides = [1, 1]} : vector<16x512xf32> to vector<16x128xf32>
    %609 = math.tanh %608 : vector<16x128xf32>
    %610 = vector.extract_strided_slice %560 {offsets = [0, 384], sizes = [16, 128], strides = [1, 1]} : vector<16x512xf32> to vector<16x128xf32>
    %cst_203 = arith.constant 5.000000e-01 : f32
    %611 = vector.broadcast %cst_203 : f32 to vector<16x128xf32>
    %612 = arith.mulf %611, %610 : vector<16x128xf32>
    %613 = math.tanh %612 : vector<16x128xf32>
    %cst_204 = arith.constant 5.000000e-01 : f32
    %614 = vector.broadcast %cst_204 : f32 to vector<16x128xf32>
    %615 = arith.mulf %614, %613 : vector<16x128xf32>
    %cst_205 = arith.constant 5.000000e-01 : f32
    %616 = vector.broadcast %cst_205 : f32 to vector<16x128xf32>
    %617 = arith.addf %615, %616 : vector<16x128xf32>
    %618 = arith.mulf %607, %532 : vector<16x128xf32>
    %619 = arith.mulf %599, %609 : vector<16x128xf32>
    %620 = arith.addf %618, %619 : vector<16x128xf32>
    %621 = math.tanh %620 : vector<16x128xf32>
    %622 = arith.mulf %617, %621 : vector<16x128xf32>
    %623 = arith.truncf %591 : vector<16x128xf32> to vector<16x128xbf16>
    %624 = arith.index_cast %c6_i32 : i32 to index
    %c0_206 = arith.constant 0 : index
    %c0_207 = arith.constant 0 : index
    %625 = vector.load %arg12[%624, %c0_206, %c0_207] : memref<8x16x128xbf16, #tpu.memory_space<vmem>>, vector<1x16x128xbf16>
    %626 = vector.shape_cast %625 : vector<1x16x128xbf16> to vector<16x128xbf16>
    %627 = vector.shape_cast %623 : vector<16x128xbf16> to vector<1x16x128xbf16>
    tpu.vector_store %arg12[%624, %c0_206, %c0_207], %627 {strides = array<i32>} : memref<8x16x128xbf16, #tpu.memory_space<vmem>>, vector<1x16x128xbf16>,
    %628 = arith.truncf %622 : vector<16x128xf32> to vector<16x128xbf16>
    %629 = arith.index_cast %545 : i32 to index
    %c0_208 = arith.constant 0 : index
    %c0_209 = arith.constant 0 : index
    %630 = vector.load %arg13[%629, %c0_208, %c0_209] : memref<8x16x128xbf16, #tpu.memory_space<vmem>>, vector<1x16x128xbf16>
    %631 = vector.shape_cast %630 : vector<1x16x128xbf16> to vector<16x128xbf16>
    %632 = vector.shape_cast %628 : vector<16x128xbf16> to vector<1x16x128xbf16>
    tpu.vector_store %arg13[%629, %c0_208, %c0_209], %632 {strides = array<i32>} : memref<8x16x128xbf16, #tpu.memory_space<vmem>>, vector<1x16x128xbf16>,
    %c7_i32_210 = arith.constant 7 : i32
    %c7_i32_211 = arith.constant 7 : i32
    %633 = arith.subi %c7_i32_211, %c7_i32_210 : i32
    %634 = tpu.concatenate %591, %622 in 1 : vector<16x128xf32>, vector<16x128xf32> -> vector<16x256xf32>
    %635 = arith.truncf %634 : vector<16x256xf32> to vector<16x256xbf16>
    %cst_212 = arith.constant dense<0.000000e+00> : vector<16x1024xf32>
    %636 = tpu.matmul %635, %15, %cst_212 {dimension_numbers = #tpu.dot_dimension_numbers<[1], [0], [0], [1], [0, 0, 1, 1], [], []>} : vector<16x256xbf16>, vector<256x1024xbf16>, vector<16x1024xf32> -> vector<16x1024xf32>
    %637 = arith.index_cast %c7_i32_210 : i32 to index
    %c0_213 = arith.constant 0 : index
    %c0_214 = arith.constant 0 : index
    %638 = vector.load %arg10[%637, %c0_213, %c0_214] : memref<8x16x512xbf16, #tpu.memory_space<vmem>>, vector<1x16x512xbf16>
    %639 = vector.shape_cast %638 : vector<1x16x512xbf16> to vector<16x512xbf16>
    %640 = arith.extf %639 : vector<16x512xbf16> to vector<16x512xf32>
    %641 = vector.extract_strided_slice %636 {offsets = [0, 0], sizes = [16, 512], strides = [1, 1]} : vector<16x1024xf32> to vector<16x512xf32>
    %642 = arith.addf %640, %641 : vector<16x512xf32>
    %643 = arith.index_cast %633 : i32 to index
    %c0_215 = arith.constant 0 : index
    %c0_216 = arith.constant 0 : index
    %644 = vector.load %arg11[%643, %c0_215, %c0_216] : memref<8x16x512xbf16, #tpu.memory_space<vmem>>, vector<1x16x512xbf16>
    %645 = vector.shape_cast %644 : vector<1x16x512xbf16> to vector<16x512xbf16>
    %646 = arith.extf %645 : vector<16x512xbf16> to vector<16x512xf32>
    %647 = vector.extract_strided_slice %636 {offsets = [0, 512], sizes = [16, 512], strides = [1, 1]} : vector<16x1024xf32> to vector<16x512xf32>
    %648 = arith.addf %646, %647 : vector<16x512xf32>
    %649 = vector.extract_strided_slice %642 {offsets = [0, 0], sizes = [16, 128], strides = [1, 1]} : vector<16x512xf32> to vector<16x128xf32>
    %cst_217 = arith.constant 5.000000e-01 : f32
    %650 = vector.broadcast %cst_217 : f32 to vector<16x128xf32>
    %651 = arith.mulf %650, %649 : vector<16x128xf32>
    %652 = math.tanh %651 : vector<16x128xf32>
    %cst_218 = arith.constant 5.000000e-01 : f32
    %653 = vector.broadcast %cst_218 : f32 to vector<16x128xf32>
    %654 = arith.mulf %653, %652 : vector<16x128xf32>
    %cst_219 = arith.constant 5.000000e-01 : f32
    %655 = vector.broadcast %cst_219 : f32 to vector<16x128xf32>
    %656 = arith.addf %654, %655 : vector<16x128xf32>
    %657 = vector.extract_strided_slice %642 {offsets = [0, 128], sizes = [16, 128], strides = [1, 1]} : vector<16x512xf32> to vector<16x128xf32>
    %cst_220 = arith.constant 5.000000e-01 : f32
    %658 = vector.broadcast %cst_220 : f32 to vector<16x128xf32>
    %659 = arith.mulf %658, %657 : vector<16x128xf32>
    %660 = math.tanh %659 : vector<16x128xf32>
    %cst_221 = arith.constant 5.000000e-01 : f32
    %661 = vector.broadcast %cst_221 : f32 to vector<16x128xf32>
    %662 = arith.mulf %661, %660 : vector<16x128xf32>
    %cst_222 = arith.constant 5.000000e-01 : f32
    %663 = vector.broadcast %cst_222 : f32 to vector<16x128xf32>
    %664 = arith.addf %662, %663 : vector<16x128xf32>
    %665 = vector.extract_strided_slice %642 {offsets = [0, 256], sizes = [16, 128], strides = [1, 1]} : vector<16x512xf32> to vector<16x128xf32>
    %666 = math.tanh %665 : vector<16x128xf32>
    %667 = vector.extract_strided_slice %642 {offsets = [0, 384], sizes = [16, 128], strides = [1, 1]} : vector<16x512xf32> to vector<16x128xf32>
    %cst_223 = arith.constant 5.000000e-01 : f32
    %668 = vector.broadcast %cst_223 : f32 to vector<16x128xf32>
    %669 = arith.mulf %668, %667 : vector<16x128xf32>
    %670 = math.tanh %669 : vector<16x128xf32>
    %cst_224 = arith.constant 5.000000e-01 : f32
    %671 = vector.broadcast %cst_224 : f32 to vector<16x128xf32>
    %672 = arith.mulf %671, %670 : vector<16x128xf32>
    %cst_225 = arith.constant 5.000000e-01 : f32
    %673 = vector.broadcast %cst_225 : f32 to vector<16x128xf32>
    %674 = arith.addf %672, %673 : vector<16x128xf32>
    %675 = arith.mulf %664, %589 : vector<16x128xf32>
    %676 = arith.mulf %656, %666 : vector<16x128xf32>
    %677 = arith.addf %675, %676 : vector<16x128xf32>
    %678 = math.tanh %677 : vector<16x128xf32>
    %679 = arith.mulf %674, %678 : vector<16x128xf32>
    %680 = vector.extract_strided_slice %648 {offsets = [0, 0], sizes = [16, 128], strides = [1, 1]} : vector<16x512xf32> to vector<16x128xf32>
    %cst_226 = arith.constant 5.000000e-01 : f32
    %681 = vector.broadcast %cst_226 : f32 to vector<16x128xf32>
    %682 = arith.mulf %681, %680 : vector<16x128xf32>
    %683 = math.tanh %682 : vector<16x128xf32>
    %cst_227 = arith.constant 5.000000e-01 : f32
    %684 = vector.broadcast %cst_227 : f32 to vector<16x128xf32>
    %685 = arith.mulf %684, %683 : vector<16x128xf32>
    %cst_228 = arith.constant 5.000000e-01 : f32
    %686 = vector.broadcast %cst_228 : f32 to vector<16x128xf32>
    %687 = arith.addf %685, %686 : vector<16x128xf32>
    %688 = vector.extract_strided_slice %648 {offsets = [0, 128], sizes = [16, 128], strides = [1, 1]} : vector<16x512xf32> to vector<16x128xf32>
    %cst_229 = arith.constant 5.000000e-01 : f32
    %689 = vector.broadcast %cst_229 : f32 to vector<16x128xf32>
    %690 = arith.mulf %689, %688 : vector<16x128xf32>
    %691 = math.tanh %690 : vector<16x128xf32>
    %cst_230 = arith.constant 5.000000e-01 : f32
    %692 = vector.broadcast %cst_230 : f32 to vector<16x128xf32>
    %693 = arith.mulf %692, %691 : vector<16x128xf32>
    %cst_231 = arith.constant 5.000000e-01 : f32
    %694 = vector.broadcast %cst_231 : f32 to vector<16x128xf32>
    %695 = arith.addf %693, %694 : vector<16x128xf32>
    %696 = vector.extract_strided_slice %648 {offsets = [0, 256], sizes = [16, 128], strides = [1, 1]} : vector<16x512xf32> to vector<16x128xf32>
    %697 = math.tanh %696 : vector<16x128xf32>
    %698 = vector.extract_strided_slice %648 {offsets = [0, 384], sizes = [16, 128], strides = [1, 1]} : vector<16x512xf32> to vector<16x128xf32>
    %cst_232 = arith.constant 5.000000e-01 : f32
    %699 = vector.broadcast %cst_232 : f32 to vector<16x128xf32>
    %700 = arith.mulf %699, %698 : vector<16x128xf32>
    %701 = math.tanh %700 : vector<16x128xf32>
    %cst_233 = arith.constant 5.000000e-01 : f32
    %702 = vector.broadcast %cst_233 : f32 to vector<16x128xf32>
    %703 = arith.mulf %702, %701 : vector<16x128xf32>
    %cst_234 = arith.constant 5.000000e-01 : f32
    %704 = vector.broadcast %cst_234 : f32 to vector<16x128xf32>
    %705 = arith.addf %703, %704 : vector<16x128xf32>
    %706 = arith.mulf %695, %620 : vector<16x128xf32>
    %707 = arith.mulf %687, %697 : vector<16x128xf32>
    %708 = arith.addf %706, %707 : vector<16x128xf32>
    %709 = math.tanh %708 : vector<16x128xf32>
    %710 = arith.mulf %705, %709 : vector<16x128xf32>
    %711 = arith.truncf %679 : vector<16x128xf32> to vector<16x128xbf16>
    %712 = arith.index_cast %c7_i32_210 : i32 to index
    %c0_235 = arith.constant 0 : index
    %c0_236 = arith.constant 0 : index
    %713 = vector.load %arg12[%712, %c0_235, %c0_236] : memref<8x16x128xbf16, #tpu.memory_space<vmem>>, vector<1x16x128xbf16>
    %714 = vector.shape_cast %713 : vector<1x16x128xbf16> to vector<16x128xbf16>
    %715 = vector.shape_cast %711 : vector<16x128xbf16> to vector<1x16x128xbf16>
    tpu.vector_store %arg12[%712, %c0_235, %c0_236], %715 {strides = array<i32>} : memref<8x16x128xbf16, #tpu.memory_space<vmem>>, vector<1x16x128xbf16>,
    %716 = arith.truncf %710 : vector<16x128xf32> to vector<16x128xbf16>
    %717 = arith.index_cast %633 : i32 to index
    %c0_237 = arith.constant 0 : index
    %c0_238 = arith.constant 0 : index
    %718 = vector.load %arg13[%717, %c0_237, %c0_238] : memref<8x16x128xbf16, #tpu.memory_space<vmem>>, vector<1x16x128xbf16>
    %719 = vector.shape_cast %718 : vector<1x16x128xbf16> to vector<16x128xbf16>
    %720 = vector.shape_cast %716 : vector<16x128xbf16> to vector<1x16x128xbf16>
    tpu.vector_store %arg13[%717, %c0_237, %c0_238], %720 {strides = array<i32>} : memref<8x16x128xbf16, #tpu.memory_space<vmem>>, vector<1x16x128xbf16>,
    %c8_i32 = arith.constant 8 : i32
    %c0_239 = arith.constant 0 : index
    %c0_240 = arith.constant 0 : index
    %c0_241 = arith.constant 0 : index
    %721 = vector.load %arg12[%c0_239, %c0_240, %c0_241] : memref<8x16x128xbf16, #tpu.memory_space<vmem>>, vector<8x16x128xbf16>
    %722 = vector.shape_cast %721 : vector<8x16x128xbf16> to vector<128x128xbf16>
    %c0_242 = arith.constant 0 : index
    %c0_243 = arith.constant 0 : index
    %c0_244 = arith.constant 0 : index
    %723 = vector.load %arg13[%c0_242, %c0_243, %c0_244] : memref<8x16x128xbf16, #tpu.memory_space<vmem>>, vector<8x16x128xbf16>
    %724 = vector.shape_cast %723 : vector<8x16x128xbf16> to vector<128x128xbf16>
    %c0_245 = arith.constant 0 : index
    %c0_246 = arith.constant 0 : index
    %725 = vector.load %arg5[%c0_245, %c0_246] : memref<128x128xbf16, #tpu.memory_space<vmem>>, vector<128x128xbf16>
    %cst_247 = arith.constant dense<0.000000e+00> : vector<128x128xf32>
    %726 = tpu.matmul %722, %725, %cst_247 {dimension_numbers = #tpu.dot_dimension_numbers<[1], [0], [0], [1], [0, 0, 1, 1], [], []>} : vector<128x128xbf16>, vector<128x128xbf16>, vector<128x128xf32> -> vector<128x128xf32>
    %c0_248 = arith.constant 0 : index
    %c0_249 = arith.constant 0 : index
    %727 = vector.load %arg6[%c0_248, %c0_249] : memref<128x128xbf16, #tpu.memory_space<vmem>>, vector<128x128xbf16>
    %cst_250 = arith.constant dense<0.000000e+00> : vector<128x128xf32>
    %728 = tpu.matmul %724, %727, %cst_250 {dimension_numbers = #tpu.dot_dimension_numbers<[1], [0], [0], [1], [0, 0, 1, 1], [], []>} : vector<128x128xbf16>, vector<128x128xbf16>, vector<128x128xf32> -> vector<128x128xf32>
    %729 = arith.addf %726, %728 : vector<128x128xf32>
    %c0_251 = arith.constant 0 : index
    %c0_252 = arith.constant 0 : index
    %730 = vector.load %arg7[%c0_251, %c0_252] : memref<18x128xbf16, #tpu.memory_space<vmem>>, vector<18x128xbf16>
    %cst_253 = arith.constant dense<0.000000e+00> : vector<128x128xf32>
    %731 = tpu.matmul %1, %730, %cst_253 {dimension_numbers = #tpu.dot_dimension_numbers<[1], [0], [0], [1], [0, 0, 1, 1], [], []>} : vector<128x18xbf16>, vector<18x128xbf16>, vector<128x128xf32> -> vector<128x128xf32>
    %732 = arith.addf %729, %731 : vector<128x128xf32>
    %c0_254 = arith.constant 0 : index
    %c0_255 = arith.constant 0 : index
    %733 = vector.load %arg8[%c0_254, %c0_255] : memref<1x128xf32, #tpu.memory_space<vmem>>, vector<1x128xf32>
    %734 = vector.broadcast %733 : vector<1x128xf32> to vector<128x128xf32>
    %735 = arith.addf %732, %734 : vector<128x128xf32>
    %736 = vector.shape_cast %735 : vector<128x128xf32> to vector<8x16x128xf32>
    %cst_256 = arith.constant dense<0xFF800000> : vector<8x16xf32>
    %737 = vector.multi_reduction <maximumf>, %736, %cst_256 [2] : vector<8x16x128xf32> to vector<8x16xf32>
    %738 = vector.shape_cast %737 : vector<8x16xf32> to vector<8x16x1xf32>
    %739 = tpu.iota {dimensions = array<i32: 2>} : vector<8x16x128xi32>
    %740 = arith.sitofp %739 : vector<8x16x128xi32> to vector<8x16x128xf32>
    %741 = vector.broadcast %738 : vector<8x16x1xf32> to vector<8x16x128xf32>
    %742 = arith.cmpf oge, %736, %741 : vector<8x16x128xf32>
    %cst_257 = arith.constant 1.280000e+02 : f32
    %743 = vector.broadcast %cst_257 : f32 to vector<8x16x128xf32>
    %744 = arith.select %742, %740, %743 : vector<8x16x128xi1>, vector<8x16x128xf32>
    %cst_258 = arith.constant dense<0x7F800000> : vector<8x16xf32>
    %745 = vector.multi_reduction <minimumf>, %744, %cst_258 [2] : vector<8x16x128xf32> to vector<8x16xf32>
    %cst_259 = arith.constant 4.000000e+00 : f32
    %746 = vector.broadcast %cst_259 : f32 to vector<8x16xf32>
    %747 = arith.minimumf %745, %746 : vector<8x16xf32>
    %748 = tpu.transpose %747, [1, 0] : vector<8x16xf32> -> vector<16x8xf32>
    %749 = arith.fptosi %748 : vector<16x8xf32> to vector<16x8xi32>
    %c0_260 = arith.constant 0 : index
    %c0_261 = arith.constant 0 : index
    %750 = vector.load %arg9[%c0_260, %c0_261] : memref<16x8xi32, #tpu.memory_space<vmem>>, vector<16x8xi32>
    tpu.vector_store %arg9[%c0_260, %c0_261], %749 {strides = array<i32>} : memref<16x8xi32, #tpu.memory_space<vmem>>, vector<16x8xi32>,
    return
  }
  func.func @transform_0(%arg0: i32) -> (i32, i32, i32) {
    %c0_i32 = arith.constant 0 : i32
    %c0_i32_0 = arith.constant 0 : i32
    %c0_i32_1 = arith.constant 0 : i32
    return %c0_i32, %arg0, %c0_i32_0 : i32, i32, i32
  }
  func.func @transform_1(%arg0: i32) -> (i32, i32) {
    %c0_i32 = arith.constant 0 : i32
    %c0_i32_0 = arith.constant 0 : i32
    %c0_i32_1 = arith.constant 0 : i32
    return %c0_i32, %c0_i32_0 : i32, i32
  }
  func.func @transform_2(%arg0: i32) -> (i32, i32) {
    %c0_i32 = arith.constant 0 : i32
    %c0_i32_0 = arith.constant 0 : i32
    %c0_i32_1 = arith.constant 0 : i32
    return %c0_i32, %c0_i32_0 : i32, i32
  }
  func.func @transform_3(%arg0: i32) -> (i32, i32) {
    %c0_i32 = arith.constant 0 : i32
    %c0_i32_0 = arith.constant 0 : i32
    %c0_i32_1 = arith.constant 0 : i32
    return %c0_i32, %c0_i32_0 : i32, i32
  }
  func.func @transform_4(%arg0: i32) -> (i32, i32) {
    %c0_i32 = arith.constant 0 : i32
    %c0_i32_0 = arith.constant 0 : i32
    %c0_i32_1 = arith.constant 0 : i32
    return %c0_i32, %c0_i32_0 : i32, i32
  }
  func.func @transform_5(%arg0: i32) -> (i32, i32) {
    %c0_i32 = arith.constant 0 : i32
    %c0_i32_0 = arith.constant 0 : i32
    %c0_i32_1 = arith.constant 0 : i32
    return %c0_i32, %c0_i32_0 : i32, i32
  }
  func.func @transform_6(%arg0: i32) -> (i32, i32) {
    %c0_i32 = arith.constant 0 : i32
    %c0_i32_0 = arith.constant 0 : i32
    %c0_i32_1 = arith.constant 0 : i32
    return %c0_i32, %c0_i32_0 : i32, i32
  }
  func.func @transform_7(%arg0: i32) -> (i32, i32) {
    %c0_i32 = arith.constant 0 : i32
    %c0_i32_0 = arith.constant 0 : i32
    %c0_i32_1 = arith.constant 0 : i32
    return %c0_i32, %c0_i32_0 : i32, i32
  }
  func.func @transform_8(%arg0: i32) -> (i32, i32) {
    %c0_i32 = arith.constant 0 : i32
    %c0_i32_0 = arith.constant 0 : i32
    return %arg0, %c0_i32 : i32, i32
  }
}

</mosaic_0001>

<llo_original>
// kernel: tpu_custom_call.1
$region0: #{tpu_custom_call.1}
  #allocation0 [shape = 'u32[]', space=smem, size = 0x4, offset = 0x4, fixed_abs, tag = 'smem constant byte address 0x4 - core index']
  #allocation1 [shape = 'u32[144,128]{1,0:T(1,128)}', space=vmem, size = 0x12000, scoped, tag = 'internal scratch']
  #allocation2 [shape = 'bf16[8,16,512]{2,1,0:T(8,128)(2,1)}', space=vmem, size = 0x20000, scoped, tag = 'scratch operand']
  #allocation3 [shape = 'bf16[8,16,512]{2,1,0:T(8,128)(2,1)}', space=vmem, size = 0x20000, scoped, tag = 'scratch operand']
  #allocation4 [shape = 'bf16[8,16,128]{2,1,0:T(8,128)(2,1)}', space=vmem, size = 0x8000, scoped, tag = 'scratch operand']
  #allocation5 [shape = 'bf16[8,16,128]{2,1,0:T(8,128)(2,1)}', space=vmem, size = 0x8000, scoped, tag = 'scratch operand']
  %s0 = inlined_call_operand.hbm [shape: bf16[8,16,18], index: 0, kind: input, shape index: {}]
  %s1 = inlined_call_operand.hbm [shape: bf16[18,1024], index: 1, kind: input, shape index: {}]
  %s2 = inlined_call_operand.hbm [shape: f32[1,1024], index: 2, kind: input, shape index: {}]
  %s3 = inlined_call_operand.hbm [shape: bf16[256,1024], index: 3, kind: input, shape index: {}]
  %s4 = inlined_call_operand.hbm [shape: bf16[128,128], index: 4, kind: input, shape index: {}]
  %s5 = inlined_call_operand.hbm [shape: bf16[128,128], index: 5, kind: input, shape index: {}]
  %s6 = inlined_call_operand.hbm [shape: bf16[18,128], index: 6, kind: input, shape index: {}]
  %s7 = inlined_call_operand.vmem [shape: f32[1,128], index: 7, kind: input, shape index: {}]
  %s8 = inlined_call_operand.vmem [shape: s32[16,8], index: 8, kind: output, shape index: {}]
  %s9 = sld [smem:[#allocation0]]
  $region70: #{tpu_custom_call.1} parent=0
    _
  %s11 = ssub.s32 1, %s9
  %s12 = scalar_select 0, %s11, %s9
  $region1: #{tpu_custom_call.1} parent=0
    #allocation6 [shape = 'u8[32768]{0}', space=vmem, size = 0x8000, scoped, tag = 'input window, operand 0, single buffered']
    #allocation7 [shape = 's32[1]{0}', space=sflag, size = 0x4, scoped, tag = 'scoped memory for tpu_custom_call.1']
    #allocation8 [shape = 'u8[49152]{0}', space=vmem, size = 0xc000, scoped, tag = 'input window, operand 1, single buffered']
    #allocation9 [shape = 's32[1]{0}', space=sflag, size = 0x4, scoped, tag = 'scoped memory for tpu_custom_call.1']
    #allocation10 [shape = 'u8[4096]{0}', space=vmem, size = 0x1000, scoped, tag = 'input window, operand 2, single buffered']
    #allocation11 [shape = 'u8[524288]{0}', space=vmem, size = 0x80000, scoped, tag = 'input window, operand 3, single buffered']
    #allocation12 [shape = 's32[1]{0}', space=sflag, size = 0x4, scoped, tag = 'scoped memory for tpu_custom_call.1']
    #allocation13 [shape = 'u8[32768]{0}', space=vmem, size = 0x8000, scoped, tag = 'input window, operand 4, single buffered']
    #allocation14 [shape = 'u8[32768]{0}', space=vmem, size = 0x8000, scoped, tag = 'input window, operand 5, single buffered']
    #allocation15 [shape = 's32[1]{0}', space=sflag, size = 0x4, scoped, tag = 'scoped memory for tpu_custom_call.1']
    #allocation16 [shape = 'u8[6144]{0}', space=vmem, size = 0x1800, scoped, tag = 'input window, operand 6, single buffered']
    %13 = vsyncpa [#allocation7], 0
    %14 = vsyncpa [#allocation9], 0
    %15 = vsyncpa [#allocation12], 0
    %16 = vsyncpa [#allocation15], 0
    // Predicated region
    $region2: #{tpu_custom_call.1} parent=1 // pred_check
      _
    $region3: #{tpu_custom_call.1} parent=1 // pred_check_branch
      %18 = sbr.rel (0) target = $region5
    $region4: #{tpu_custom_call.1} parent=1 // pred_region
      %s20 = ssub.s32 1024, 1024
      %21 = vsyncadd [#allocation7], %s20
      %s22 = sshll.u32 [#allocation6], 4
      %s23 = int_to_ptr.vmem [resolvable:$true] %s22
      %28 = dma.hbm_to_vmem [thread:$0]  %s0, 1024, %s23, [#allocation7], 64, 64, 4
    $region5: #{tpu_custom_call.1} parent=1 // pred_fallthru
      _
    // Predicated region
    $region6: #{tpu_custom_call.1} parent=1 // pred_check
      _
    $region7: #{tpu_custom_call.1} parent=1 // pred_check_branch
      %30 = sbr.rel (0) target = $region9
    $region8: #{tpu_custom_call.1} parent=1 // pred_region
      %s32 = ssub.s32 1536, 1536
      %33 = vsyncadd [#allocation9], %s32
      %s34 = sshll.u32 [#allocation8], 4
      %s35 = int_to_ptr.vmem [resolvable:$true] %s34
      %40 = dma.hbm_to_vmem [thread:$0]  %s1, 1536, %s35, [#allocation9], 512, 512, 32
    $region9: #{tpu_custom_call.1} parent=1 // pred_fallthru
      _
    // Predicated region
    $region10: #{tpu_custom_call.1} parent=1 // pred_check
      _
    $region11: #{tpu_custom_call.1} parent=1 // pred_check_branch
      %42 = sbr.rel (0) target = $region13
    $region12: #{tpu_custom_call.1} parent=1 // pred_region
      %s44 = ssub.s32 128, 128
      %45 = vsyncadd [#allocation9], %s44
      %s47 = sshll.u32 [#allocation10], 4
      %s48 = int_to_ptr.vmem [resolvable:$true] %s47
      %50 = dma.hbm_to_vmem [thread:$0]  %s2, 128, %s48, [#allocation9]
    $region13: #{tpu_custom_call.1} parent=1 // pred_fallthru
      _
    // Predicated region
    $region14: #{tpu_custom_call.1} parent=1 // pred_check
      _
    $region15: #{tpu_custom_call.1} parent=1 // pred_check_branch
      %52 = sbr.rel (0) target = $region17
    $region16: #{tpu_custom_call.1} parent=1 // pred_region
      %s54 = ssub.s32 16384, 16384
      %55 = vsyncadd [#allocation12], %s54
      %s56 = sshll.u32 [#allocation11], 4
      %s57 = int_to_ptr.vmem [resolvable:$true] %s56
      %62 = dma.hbm_to_vmem [thread:$0]  %s3, 16384, %s57, [#allocation12], 512, 512, 32
    $region17: #{tpu_custom_call.1} parent=1 // pred_fallthru
      _
    // Predicated region
    $region18: #{tpu_custom_call.1} parent=1 // pred_check
      _
    $region19: #{tpu_custom_call.1} parent=1 // pred_check_branch
      %64 = sbr.rel (0) target = $region21
    $region20: #{tpu_custom_call.1} parent=1 // pred_region
      %s66 = ssub.s32 1024, 1024
      %67 = vsyncadd [#allocation12], %s66
      %s68 = sshll.u32 [#allocation13], 4
      %s69 = int_to_ptr.vmem [resolvable:$true] %s68
      %74 = dma.hbm_to_vmem [thread:$0]  %s4, 1024, %s69, [#allocation12], 64, 64, 4
    $region21: #{tpu_custom_call.1} parent=1 // pred_fallthru
      _
    // Predicated region
    $region22: #{tpu_custom_call.1} parent=1 // pred_check
      _
    $region23: #{tpu_custom_call.1} parent=1 // pred_check_branch
      %76 = sbr.rel (0) target = $region25
    $region24: #{tpu_custom_call.1} parent=1 // pred_region
      %s78 = ssub.s32 1024, 1024
      %79 = vsyncadd [#allocation15], %s78
      %s80 = sshll.u32 [#allocation14], 4
      %s81 = int_to_ptr.vmem [resolvable:$true] %s80
      %86 = dma.hbm_to_vmem [thread:$0]  %s5, 1024, %s81, [#allocation15], 64, 64, 4
    $region25: #{tpu_custom_call.1} parent=1 // pred_fallthru
      _
    // Predicated region
    $region26: #{tpu_custom_call.1} parent=1 // pred_check
      _
    $region27: #{tpu_custom_call.1} parent=1 // pred_check_branch
      %88 = sbr.rel (0) target = $region29
    $region28: #{tpu_custom_call.1} parent=1 // pred_region
      %s90 = ssub.s32 192, 192
      %91 = vsyncadd [#allocation15], %s90
      %s92 = sshll.u32 [#allocation16], 4
      %s93 = int_to_ptr.vmem [resolvable:$true] %s92
      %98 = dma.hbm_to_vmem [thread:$0]  %s6, 192, %s93, [#allocation15], 64, 64, 4
    $region29: #{tpu_custom_call.1} parent=1 // pred_fallthru
      _
    // Predicated region
    $region30: #{tpu_custom_call.1} parent=1 // pred_check
      _
    $region31: #{tpu_custom_call.1} parent=1 // pred_check_branch
      %100 = sbr.rel (0) target = $region33
    $region32: #{tpu_custom_call.1} parent=1 // pred_region
      _
    $region33: #{tpu_custom_call.1} parent=1 // pred_fallthru
      _
    // Predicated region
    $region34: #{tpu_custom_call.1} parent=1 // pred_check
      _
    $region35: #{tpu_custom_call.1} parent=1 // pred_check_branch
      %102 = sbr.rel (0) target = $region37
    $region36: #{tpu_custom_call.1} parent=1 // pred_region
      %103 = dma.done [#allocation7], 1024
    $region37: #{tpu_custom_call.1} parent=1 // pred_fallthru
      _
    // Predicated region
    $region38: #{tpu_custom_call.1} parent=1 // pred_check
      _
    $region39: #{tpu_custom_call.1} parent=1 // pred_check_branch
      %105 = sbr.rel (0) target = $region41
    $region40: #{tpu_custom_call.1} parent=1 // pred_region
      %106 = dma.done [#allocation9], 1536
    $region41: #{tpu_custom_call.1} parent=1 // pred_fallthru
      _
    // Predicated region
    $region42: #{tpu_custom_call.1} parent=1 // pred_check
      _
    $region43: #{tpu_custom_call.1} parent=1 // pred_check_branch
      %108 = sbr.rel (0) target = $region45
    $region44: #{tpu_custom_call.1} parent=1 // pred_region
      %109 = dma.done [#allocation9], 128
    $region45: #{tpu_custom_call.1} parent=1 // pred_fallthru
      _
    // Predicated region
    $region46: #{tpu_custom_call.1} parent=1 // pred_check
      _
    $region47: #{tpu_custom_call.1} parent=1 // pred_check_branch
      %111 = sbr.rel (0) target = $region49
    $region48: #{tpu_custom_call.1} parent=1 // pred_region
      %112 = dma.done [#allocation12], 16384
    $region49: #{tpu_custom_call.1} parent=1 // pred_fallthru
      _
    // Predicated region
    $region50: #{tpu_custom_call.1} parent=1 // pred_check
      _
    $region51: #{tpu_custom_call.1} parent=1 // pred_check_branch
      %114 = sbr.rel (0) target = $region53
    $region52: #{tpu_custom_call.1} parent=1 // pred_region
      %115 = dma.done [#allocation12], 1024
    $region53: #{tpu_custom_call.1} parent=1 // pred_fallthru
      _
    // Predicated region
    $region54: #{tpu_custom_call.1} parent=1 // pred_check
      _
    $region55: #{tpu_custom_call.1} parent=1 // pred_check_branch
      %117 = sbr.rel (0) target = $region57
    $region56: #{tpu_custom_call.1} parent=1 // pred_region
      %118 = dma.done [#allocation15], 1024
    $region57: #{tpu_custom_call.1} parent=1 // pred_fallthru
      _
    // Predicated region
    $region58: #{tpu_custom_call.1} parent=1 // pred_check
      _
    $region59: #{tpu_custom_call.1} parent=1 // pred_check_branch
      %120 = sbr.rel (0) target = $region61
    $region60: #{tpu_custom_call.1} parent=1 // pred_region
      %121 = dma.done [#allocation15], 192
    $region61: #{tpu_custom_call.1} parent=1 // pred_fallthru
      _
    %v123 = vld [vmem:[#allocation6] sm:$0xf]
    %v124 = vld [vmem:[#allocation6 + $0x4] sm:$0xf]
    %v125 = vld [vmem:[#allocation6 + $0x8] sm:$0xf]
    %v126 = vld [vmem:[#allocation6 + $0xc] sm:$0xf]
    %v127 = vld [vmem:[#allocation6 + $0x10] sm:$0xf]
    %v128 = vld [vmem:[#allocation6 + $0x14] sm:$0xf]
    %v129 = vld [vmem:[#allocation6 + $0x18] sm:$0xf]
    %v130 = vld [vmem:[#allocation6 + $0x1c] sm:$0xf]
    %v131 = vld [vmem:[#allocation6 + $0x20] sm:$0xf]
    %v132 = vld [vmem:[#allocation6 + $0x24] sm:$0xf]
    %v133 = vld [vmem:[#allocation6 + $0x28] sm:$0xf]
    %v134 = vld [vmem:[#allocation6 + $0x2c] sm:$0xf]
    %v135 = vld [vmem:[#allocation6 + $0x30] sm:$0xf]
    %v136 = vld [vmem:[#allocation6 + $0x34] sm:$0xf]
    %v137 = vld [vmem:[#allocation6 + $0x38] sm:$0xf]
    %v138 = vld [vmem:[#allocation6 + $0x3c] sm:$0xf]
    %v139 = vld [vmem:[#allocation8] sm:$0xff]
    %v140 = vld [vmem:[#allocation8 + $0x8] sm:$0xff]
    %v141 = vld [vmem:[#allocation8 + $0x10] sm:$0xff]
    %v142 = vld [vmem:[#allocation8 + $0x18] sm:$0xff]
    %v143 = vld [vmem:[#allocation8 + $0x20] sm:$0xff]
    %v144 = vld [vmem:[#allocation8 + $0x28] sm:$0xff]
    %v145 = vld [vmem:[#allocation8 + $0x30] sm:$0xff]
    %v146 = vld [vmem:[#allocation8 + $0x38] sm:$0xff]
    %v147 = vld [vmem:[#allocation8 + $0x40] sm:$0x11]
    %v148 = vld [vmem:[#allocation8 + $0x48] sm:$0x11]
    %v149 = vld [vmem:[#allocation8 + $0x50] sm:$0x11]
    %v150 = vld [vmem:[#allocation8 + $0x58] sm:$0x11]
    %v151 = vld [vmem:[#allocation10] sm:$0xff]
    %v153 = vlaneseq
    %v154 = vshrl.u32 %v153, 7
    %v155 = vsub.s32 0, %v154
    %v156 = vrot.slane %v151, %v155
    %v157 = vlaneseq
    %v158 = vshrl.u32 %v157, 7
    %v159 = vsub.s32 1, %v158
    %v160 = vrot.slane %v151, %v159
    %v161 = vlaneseq
    %v162 = vshrl.u32 %v161, 7
    %v163 = vsub.s32 2, %v162
    %v164 = vrot.slane %v151, %v163
    %v165 = vlaneseq
    %v166 = vshrl.u32 %v165, 7
    %v167 = vsub.s32 3, %v166
    %v168 = vrot.slane %v151, %v167
    %v169 = vlaneseq
    %v170 = vshrl.u32 %v169, 7
    %v171 = vsub.s32 4, %v170
    %v172 = vrot.slane %v151, %v171
    %v173 = vlaneseq
    %v174 = vshrl.u32 %v173, 7
    %v175 = vsub.s32 5, %v174
    %v176 = vrot.slane %v151, %v175
    %v177 = vlaneseq
    %v178 = vshrl.u32 %v177, 7
    %v179 = vsub.s32 6, %v178
    %v180 = vrot.slane %v151, %v179
    %v181 = vlaneseq
    %v182 = vshrl.u32 %v181, 7
    %v183 = vsub.s32 7, %v182
    %v184 = vrot.slane %v151, %v183
    %v209 = vunpack.c.l.b16 %v123
    %v210 = vunpack.c.l.b16 %v124
    %v211 = vunpack.c.l.b16 %v125
    %v212 = vunpack.c.l.b16 %v126
    %v213 = vunpack.c.l.b16 %v127
    %v214 = vunpack.c.l.b16 %v128
    %v215 = vunpack.c.l.b16 %v129
    %v216 = vunpack.c.l.b16 %v130
    %v217 = vunpack.c.l.b16 %v131
    %v218 = vunpack.c.l.b16 %v132
    %v219 = vunpack.c.l.b16 %v133
    %v220 = vunpack.c.l.b16 %v134
    %v221 = vunpack.c.l.b16 %v135
    %v222 = vunpack.c.l.b16 %v136
    %v223 = vunpack.c.l.b16 %v137
    %v224 = vunpack.c.l.b16 %v138
    %v225 = vpack.c.b16 %v210, %v209
    %v226 = vpack.c.b16 %v212, %v211
    %v227 = vpack.c.b16 %v214, %v213
    %v228 = vpack.c.b16 %v216, %v215
    %v229 = vpack.c.b16 %v218, %v217
    %v230 = vpack.c.b16 %v220, %v219
    %v231 = vpack.c.b16 %v222, %v221
    %v232 = vpack.c.b16 %v224, %v223
    %v245 = vunpack.c.l.b16 %v139
    %v246 = vunpack.c.h.b16 %v139
    %v247 = vunpack.c.l.b16 %v140
    %v248 = vunpack.c.h.b16 %v140
    %v249 = vunpack.c.l.b16 %v141
    %v250 = vunpack.c.h.b16 %v141
    %v251 = vunpack.c.l.b16 %v142
    %v252 = vunpack.c.h.b16 %v142
    %v253 = vunpack.c.l.b16 %v143
    %v254 = vunpack.c.h.b16 %v143
    %v255 = vunpack.c.l.b16 %v144
    %v256 = vunpack.c.h.b16 %v144
    %v257 = vunpack.c.l.b16 %v145
    %v258 = vunpack.c.h.b16 %v145
    %v259 = vunpack.c.l.b16 %v146
    %v260 = vunpack.c.h.b16 %v146
    %v261 = vunpack.c.l.b16 %v147
    %v262 = vunpack.c.h.b16 %v147
    %v263 = vunpack.c.l.b16 %v148
    %v264 = vunpack.c.h.b16 %v148
    %v265 = vunpack.c.l.b16 %v149
    %v266 = vunpack.c.h.b16 %v149
    %v267 = vunpack.c.l.b16 %v150
    %v268 = vunpack.c.h.b16 %v150
    %v269 = vpack.c.b16 %v253, %v245
    %v270 = vpack.c.b16 %v254, %v246
    %v271 = vpack.c.b16 %v255, %v247
    %v272 = vpack.c.b16 %v256, %v248
    %v273 = vpack.c.b16 %v257, %v249
    %v274 = vpack.c.b16 %v258, %v250
    %v275 = vpack.c.b16 %v259, %v251
    %v276 = vpack.c.b16 %v260, %v252
    %v277 = vpack.c.b16 %v261, %v261
    %v278 = vpack.c.b16 %v262, %v262
    %v279 = vpack.c.b16 %v263, %v263
    %v280 = vpack.c.b16 %v264, %v264
    %v281 = vpack.c.b16 %v265, %v265
    %v282 = vpack.c.b16 %v266, %v266
    %v283 = vpack.c.b16 %v267, %v267
    %v284 = vpack.c.b16 %v268, %v268
    %vm293 = vcmask 146432
    %v295 = vsel %vm293, %v225, 0
    %v298 = vsel %vm293, %v226, 0
    %v301 = vsel %vm293, %v227, 0
    %v304 = vsel %vm293, %v228, 0
    %v307 = vsel %vm293, %v229, 0
    %v310 = vsel %vm293, %v230, 0
    %v313 = vsel %vm293, %v231, 0
    %v316 = vsel %vm293, %v232, 0
    %vm318 = vcmask 1040384
    %v320 = vsel %vm318, %v277, 0
    %v323 = vsel %vm318, %v278, 0
    %v326 = vsel %vm318, %v279, 0
    %v329 = vsel %vm318, %v280, 0
    %v332 = vsel %vm318, %v281, 0
    %v335 = vsel %vm318, %v282, 0
    %v338 = vsel %vm318, %v283, 0
    %v341 = vsel %vm318, %v284, 0
    %343 = vmatprep.subr.bf16.mxu0 0
    %344 = vmatpush1.bf16.msra.mxu0 0
    %345 = vmatprep.subr.bf16.mxu0 0
    %346 = vmatpush1.bf16.msra.mxu0 0
    %347 = vmatprep.subr.bf16.mxu0 0
    %348 = vmatpush1.bf16.msra.mxu0 0
    %349 = vmatprep.subr.bf16.mxu0 0
    %350 = vmatpush1.bf16.msra.mxu0 0
    %351 = vmatprep.subr.bf16.mxu0 0
    %352 = vmatpush1.bf16.msra.mxu0 0
    %353 = vmatprep.subr.bf16.mxu0 0
    %354 = vmatpush1.bf16.msra.mxu0 0
    %355 = vmatprep.subr.bf16.mxu0 %v323
    %356 = vmatpush1.bf16.msra.mxu0 %v320
    %357 = vmatprep.subr.bf16.mxu0 %v270
    %358 = vmatpush1.bf16.msra.mxu0 %v269
    %359 = vmatprep.subr.bf16.mxu0 0
    %360 = vmatpush2.bf16.msra.mxu0 0
    %361 = vmatprep.subr.bf16.mxu0 0
    %362 = vmatpush2.bf16.msra.mxu0 0
    %363 = vmatprep.subr.bf16.mxu0 0
    %364 = vmatpush2.bf16.msra.mxu0 0
    %365 = vmatprep.subr.bf16.mxu0 0
    %366 = vmatpush2.bf16.msra.mxu0 0
    %367 = vmatprep.subr.bf16.mxu0 0
    %368 = vmatpush2.bf16.msra.mxu0 0
    %369 = vmatprep.subr.bf16.mxu0 0
    %370 = vmatpush2.bf16.msra.mxu0 0
    %371 = vmatprep.subr.bf16.mxu0 0
    %372 = vmatpush2.bf16.msra.mxu0 0
    %373 = vmatprep.subr.bf16.mxu0 0
    %374 = vmatpush2.bf16.msra.mxu0 0
    %375 = vmatprep.mubr.bf16.mxu0 0
    %376 = vmatmul.mubr.bf16.gmra.mxu0 %v295
    %v377 = vpop.f32.mrf.mxu0
    %v378 = vadd.f32 %v156, %v377
    %v379 = vpop.f32.mrf.mxu0
    %v380 = vadd.f32 %v160, %v379
    %v381 = vpop.f32.mrf.mxu0
    %v382 = vadd.f32 %v156, %v381
    %v383 = vpop.f32.mrf.mxu0
    %v384 = vadd.f32 %v160, %v383
    %385 = vmatprep.mubr.bf16.mxu0 0
    %386 = vmatmul.mubr.bf16.gmra.mxu0 %v298
    %v387 = vpop.f32.mrf.mxu0
    %v388 = vadd.f32 %v156, %v387
    %v389 = vpop.f32.mrf.mxu0
    %v390 = vadd.f32 %v160, %v389
    %v391 = vpop.f32.mrf.mxu0
    %v392 = vadd.f32 %v156, %v391
    %v393 = vpop.f32.mrf.mxu0
    %v394 = vadd.f32 %v160, %v393
    %395 = vmatprep.mubr.bf16.mxu0 0
    %396 = vmatmul.mubr.bf16.gmra.mxu0 %v301
    %v397 = vpop.f32.mrf.mxu0
    %v398 = vadd.f32 %v156, %v397
    %v399 = vpop.f32.mrf.mxu0
    %v400 = vadd.f32 %v160, %v399
    %v401 = vpop.f32.mrf.mxu0
    %v402 = vadd.f32 %v156, %v401
    %v403 = vpop.f32.mrf.mxu0
    %v404 = vadd.f32 %v160, %v403
    %405 = vmatprep.mubr.bf16.mxu0 0
    %406 = vmatmul.mubr.bf16.gmra.mxu0 %v304
    %v407 = vpop.f32.mrf.mxu0
    %v408 = vadd.f32 %v156, %v407
    %v409 = vpop.f32.mrf.mxu0
    %v410 = vadd.f32 %v160, %v409
    %v411 = vpop.f32.mrf.mxu0
    %v412 = vadd.f32 %v156, %v411
    %v413 = vpop.f32.mrf.mxu0
    %v414 = vadd.f32 %v160, %v413
    %415 = vmatprep.mubr.bf16.mxu0 0
    %416 = vmatmul.mubr.bf16.gmra.mxu0 %v307
    %v417 = vpop.f32.mrf.mxu0
    %v418 = vadd.f32 %v156, %v417
    %v419 = vpop.f32.mrf.mxu0
    %v420 = vadd.f32 %v160, %v419
    %v421 = vpop.f32.mrf.mxu0
    %v422 = vadd.f32 %v156, %v421
    %v423 = vpop.f32.mrf.mxu0
    %v424 = vadd.f32 %v160, %v423
    %425 = vmatprep.mubr.bf16.mxu0 0
    %426 = vmatmul.mubr.bf16.gmra.mxu0 %v310
    %v427 = vpop.f32.mrf.mxu0
    %v428 = vadd.f32 %v156, %v427
    %v429 = vpop.f32.mrf.mxu0
    %v430 = vadd.f32 %v160, %v429
    %v431 = vpop.f32.mrf.mxu0
    %v432 = vadd.f32 %v156, %v431
    %v433 = vpop.f32.mrf.mxu0
    %v434 = vadd.f32 %v160, %v433
    %435 = vmatprep.mubr.bf16.mxu0 0
    %436 = vmatmul.mubr.bf16.gmra.mxu0 %v313
    %v437 = vpop.f32.mrf.mxu0
    %v438 = vadd.f32 %v156, %v437
    %v439 = vpop.f32.mrf.mxu0
    %v440 = vadd.f32 %v160, %v439
    %v441 = vpop.f32.mrf.mxu0
    %v442 = vadd.f32 %v156, %v441
    %v443 = vpop.f32.mrf.mxu0
    %v444 = vadd.f32 %v160, %v443
    %445 = vmatprep.mubr.bf16.mxu0 0
    %446 = vmatmul.mubr.bf16.gmra.mxu0 %v316
    %v447 = vpop.f32.mrf.mxu0
    %v448 = vadd.f32 %v156, %v447
    %v449 = vpop.f32.mrf.mxu0
    %v450 = vadd.f32 %v160, %v449
    %v451 = vpop.f32.mrf.mxu0
    %v452 = vadd.f32 %v156, %v451
    %v453 = vpop.f32.mrf.mxu0
    %v454 = vadd.f32 %v160, %v453
    %455 = vdwg.mxu0
    %456 = vmatprep.subr.bf16.mxu0 0
    %457 = vmatpush1.bf16.msra.mxu0 0
    %458 = vmatprep.subr.bf16.mxu0 0
    %459 = vmatpush1.bf16.msra.mxu0 0
    %460 = vmatprep.subr.bf16.mxu0 0
    %461 = vmatpush1.bf16.msra.mxu0 0
    %462 = vmatprep.subr.bf16.mxu0 0
    %463 = vmatpush1.bf16.msra.mxu0 0
    %464 = vmatprep.subr.bf16.mxu0 0
    %465 = vmatpush1.bf16.msra.mxu0 0
    %466 = vmatprep.subr.bf16.mxu0 0
    %467 = vmatpush1.bf16.msra.mxu0 0
    %468 = vmatprep.subr.bf16.mxu0 %v329
    %469 = vmatpush1.bf16.msra.mxu0 %v326
    %470 = vmatprep.subr.bf16.mxu0 %v272
    %471 = vmatpush1.bf16.msra.mxu0 %v271
    %472 = vmatprep.subr.bf16.mxu0 0
    %473 = vmatpush2.bf16.msra.mxu0 0
    %474 = vmatprep.subr.bf16.mxu0 0
    %475 = vmatpush2.bf16.msra.mxu0 0
    %476 = vmatprep.subr.bf16.mxu0 0
    %477 = vmatpush2.bf16.msra.mxu0 0
    %478 = vmatprep.subr.bf16.mxu0 0
    %479 = vmatpush2.bf16.msra.mxu0 0
    %480 = vmatprep.subr.bf16.mxu0 0
    %481 = vmatpush2.bf16.msra.mxu0 0
    %482 = vmatprep.subr.bf16.mxu0 0
    %483 = vmatpush2.bf16.msra.mxu0 0
    %484 = vmatprep.subr.bf16.mxu0 0
    %485 = vmatpush2.bf16.msra.mxu0 0
    %486 = vmatprep.subr.bf16.mxu0 0
    %487 = vmatpush2.bf16.msra.mxu0 0
    %488 = vmatprep.mubr.bf16.mxu0 0
    %489 = vmatmul.mubr.bf16.gmra.mxu0 %v295
    %v490 = vpop.f32.mrf.mxu0
    %v491 = vadd.f32 %v164, %v490
    %v492 = vpop.f32.mrf.mxu0
    %v493 = vadd.f32 %v168, %v492
    %v494 = vpop.f32.mrf.mxu0
    %v495 = vadd.f32 %v164, %v494
    %v496 = vpop.f32.mrf.mxu0
    %v497 = vadd.f32 %v168, %v496
    %498 = vmatprep.mubr.bf16.mxu0 0
    %499 = vmatmul.mubr.bf16.gmra.mxu0 %v298
    %v500 = vpop.f32.mrf.mxu0
    %v501 = vadd.f32 %v164, %v500
    %v502 = vpop.f32.mrf.mxu0
    %v503 = vadd.f32 %v168, %v502
    %v504 = vpop.f32.mrf.mxu0
    %v505 = vadd.f32 %v164, %v504
    %v506 = vpop.f32.mrf.mxu0
    %v507 = vadd.f32 %v168, %v506
    %508 = vmatprep.mubr.bf16.mxu0 0
    %509 = vmatmul.mubr.bf16.gmra.mxu0 %v301
    %v510 = vpop.f32.mrf.mxu0
    %v511 = vadd.f32 %v164, %v510
    %v512 = vpop.f32.mrf.mxu0
    %v513 = vadd.f32 %v168, %v512
    %v514 = vpop.f32.mrf.mxu0
    %v515 = vadd.f32 %v164, %v514
    %v516 = vpop.f32.mrf.mxu0
    %v517 = vadd.f32 %v168, %v516
    %518 = vmatprep.mubr.bf16.mxu0 0
    %519 = vmatmul.mubr.bf16.gmra.mxu0 %v304
    %v520 = vpop.f32.mrf.mxu0
    %v521 = vadd.f32 %v164, %v520
    %v522 = vpop.f32.mrf.mxu0
    %v523 = vadd.f32 %v168, %v522
    %v524 = vpop.f32.mrf.mxu0
    %v525 = vadd.f32 %v164, %v524
    %v526 = vpop.f32.mrf.mxu0
    %v527 = vadd.f32 %v168, %v526
    %528 = vmatprep.mubr.bf16.mxu0 0
    %529 = vmatmul.mubr.bf16.gmra.mxu0 %v307
    %v530 = vpop.f32.mrf.mxu0
    %v531 = vadd.f32 %v164, %v530
    %v532 = vpop.f32.mrf.mxu0
    %v533 = vadd.f32 %v168, %v532
    %v534 = vpop.f32.mrf.mxu0
    %v535 = vadd.f32 %v164, %v534
    %v536 = vpop.f32.mrf.mxu0
    %v537 = vadd.f32 %v168, %v536
    %538 = vmatprep.mubr.bf16.mxu0 0
    %539 = vmatmul.mubr.bf16.gmra.mxu0 %v310
    %v540 = vpop.f32.mrf.mxu0
    %v541 = vadd.f32 %v164, %v540
    %v542 = vpop.f32.mrf.mxu0
    %v543 = vadd.f32 %v168, %v542
    %v544 = vpop.f32.mrf.mxu0
    %v545 = vadd.f32 %v164, %v544
    %v546 = vpop.f32.mrf.mxu0
    %v547 = vadd.f32 %v168, %v546
    %548 = vmatprep.mubr.bf16.mxu0 0
    %549 = vmatmul.mubr.bf16.gmra.mxu0 %v313
    %v550 = vpop.f32.mrf.mxu0
    %v551 = vadd.f32 %v164, %v550
    %v552 = vpop.f32.mrf.mxu0
    %v553 = vadd.f32 %v168, %v552
    %v554 = vpop.f32.mrf.mxu0
    %v555 = vadd.f32 %v164, %v554
    %v556 = vpop.f32.mrf.mxu0
    %v557 = vadd.f32 %v168, %v556
    %558 = vmatprep.mubr.bf16.mxu0 0
    %559 = vmatmul.mubr.bf16.gmra.mxu0 %v316
    %v560 = vpop.f32.mrf.mxu0
    %v561 = vadd.f32 %v164, %v560
    %v562 = vpop.f32.mrf.mxu0
    %v563 = vadd.f32 %v168, %v562
    %v564 = vpop.f32.mrf.mxu0
    %v565 = vadd.f32 %v164, %v564
    %v566 = vpop.f32.mrf.mxu0
    %v567 = vadd.f32 %v168, %v566
    %568 = vdwg.mxu0
    %569 = vmatprep.subr.bf16.mxu0 0
    %570 = vmatpush1.bf16.msra.mxu0 0
    %571 = vmatprep.subr.bf16.mxu0 0
    %572 = vmatpush1.bf16.msra.mxu0 0
    %573 = vmatprep.subr.bf16.mxu0 0
    %574 = vmatpush1.bf16.msra.mxu0 0
    %575 = vmatprep.subr.bf16.mxu0 0
    %576 = vmatpush1.bf16.msra.mxu0 0
    %577 = vmatprep.subr.bf16.mxu0 0
    %578 = vmatpush1.bf16.msra.mxu0 0
    %579 = vmatprep.subr.bf16.mxu0 0
    %580 = vmatpush1.bf16.msra.mxu0 0
    %581 = vmatprep.subr.bf16.mxu0 %v335
    %582 = vmatpush1.bf16.msra.mxu0 %v332
    %583 = vmatprep.subr.bf16.mxu0 %v274
    %584 = vmatpush1.bf16.msra.mxu0 %v273
    %585 = vmatprep.subr.bf16.mxu0 0
    %586 = vmatpush2.bf16.msra.mxu0 0
    %587 = vmatprep.subr.bf16.mxu0 0
    %588 = vmatpush2.bf16.msra.mxu0 0
    %589 = vmatprep.subr.bf16.mxu0 0
    %590 = vmatpush2.bf16.msra.mxu0 0
    %591 = vmatprep.subr.bf16.mxu0 0
    %592 = vmatpush2.bf16.msra.mxu0 0
    %593 = vmatprep.subr.bf16.mxu0 0
    %594 = vmatpush2.bf16.msra.mxu0 0
    %595 = vmatprep.subr.bf16.mxu0 0
    %596 = vmatpush2.bf16.msra.mxu0 0
    %597 = vmatprep.subr.bf16.mxu0 0
    %598 = vmatpush2.bf16.msra.mxu0 0
    %599 = vmatprep.subr.bf16.mxu0 0
    %600 = vmatpush2.bf16.msra.mxu0 0
    %601 = vmatprep.mubr.bf16.mxu0 0
    %602 = vmatmul.mubr.bf16.gmra.mxu0 %v295
    %v603 = vpop.f32.mrf.mxu0
    %v604 = vadd.f32 %v172, %v603
    %v605 = vpop.f32.mrf.mxu0
    %v606 = vadd.f32 %v176, %v605
    %v607 = vpop.f32.mrf.mxu0
    %v608 = vadd.f32 %v172, %v607
    %v609 = vpop.f32.mrf.mxu0
    %v610 = vadd.f32 %v176, %v609
    %611 = vmatprep.mubr.bf16.mxu0 0
    %612 = vmatmul.mubr.bf16.gmra.mxu0 %v298
    %v613 = vpop.f32.mrf.mxu0
    %v614 = vadd.f32 %v172, %v613
    %v615 = vpop.f32.mrf.mxu0
    %v616 = vadd.f32 %v176, %v615
    %v617 = vpop.f32.mrf.mxu0
    %v618 = vadd.f32 %v172, %v617
    %v619 = vpop.f32.mrf.mxu0
    %v620 = vadd.f32 %v176, %v619
    %621 = vmatprep.mubr.bf16.mxu0 0
    %622 = vmatmul.mubr.bf16.gmra.mxu0 %v301
    %v623 = vpop.f32.mrf.mxu0
    %v624 = vadd.f32 %v172, %v623
    %v625 = vpop.f32.mrf.mxu0
    %v626 = vadd.f32 %v176, %v625
    %v627 = vpop.f32.mrf.mxu0
    %v628 = vadd.f32 %v172, %v627
    %v629 = vpop.f32.mrf.mxu0
    %v630 = vadd.f32 %v176, %v629
    %631 = vmatprep.mubr.bf16.mxu0 0
    %632 = vmatmul.mubr.bf16.gmra.mxu0 %v304
    %v633 = vpop.f32.mrf.mxu0
    %v634 = vadd.f32 %v172, %v633
    %v635 = vpop.f32.mrf.mxu0
    %v636 = vadd.f32 %v176, %v635
    %v637 = vpop.f32.mrf.mxu0
    %v638 = vadd.f32 %v172, %v637
    %v639 = vpop.f32.mrf.mxu0
    %v640 = vadd.f32 %v176, %v639
    %641 = vmatprep.mubr.bf16.mxu0 0
    %642 = vmatmul.mubr.bf16.gmra.mxu0 %v307
    %v643 = vpop.f32.mrf.mxu0
    %v644 = vadd.f32 %v172, %v643
    %v645 = vpop.f32.mrf.mxu0
    %v646 = vadd.f32 %v176, %v645
    %v647 = vpop.f32.mrf.mxu0
    %v648 = vadd.f32 %v172, %v647
    %v649 = vpop.f32.mrf.mxu0
    %v650 = vadd.f32 %v176, %v649
    %651 = vmatprep.mubr.bf16.mxu0 0
    %652 = vmatmul.mubr.bf16.gmra.mxu0 %v310
    %v653 = vpop.f32.mrf.mxu0
    %v654 = vadd.f32 %v172, %v653
    %v655 = vpop.f32.mrf.mxu0
    %v656 = vadd.f32 %v176, %v655
    %v657 = vpop.f32.mrf.mxu0
    %v658 = vadd.f32 %v172, %v657
    %v659 = vpop.f32.mrf.mxu0
    %v660 = vadd.f32 %v176, %v659
    %661 = vmatprep.mubr.bf16.mxu0 0
    %662 = vmatmul.mubr.bf16.gmra.mxu0 %v313
    %v663 = vpop.f32.mrf.mxu0
    %v664 = vadd.f32 %v172, %v663
    %v665 = vpop.f32.mrf.mxu0
    %v666 = vadd.f32 %v176, %v665
    %v667 = vpop.f32.mrf.mxu0
    %v668 = vadd.f32 %v172, %v667
    %v669 = vpop.f32.mrf.mxu0
    %v670 = vadd.f32 %v176, %v669
    %671 = vmatprep.mubr.bf16.mxu0 0
    %672 = vmatmul.mubr.bf16.gmra.mxu0 %v316
    %v673 = vpop.f32.mrf.mxu0
    %v674 = vadd.f32 %v172, %v673
    %v675 = vpop.f32.mrf.mxu0
    %v676 = vadd.f32 %v176, %v675
    %v677 = vpop.f32.mrf.mxu0
    %v678 = vadd.f32 %v172, %v677
    %v679 = vpop.f32.mrf.mxu0
    %v680 = vadd.f32 %v176, %v679
    %681 = vdwg.mxu0
    %682 = vmatprep.subr.bf16.mxu0 0
    %683 = vmatpush1.bf16.msra.mxu0 0
    %684 = vmatprep.subr.bf16.mxu0 0
    %685 = vmatpush1.bf16.msra.mxu0 0
    %686 = vmatprep.subr.bf16.mxu0 0
    %687 = vmatpush1.bf16.msra.mxu0 0
    %688 = vmatprep.subr.bf16.mxu0 0
    %689 = vmatpush1.bf16.msra.mxu0 0
    %690 = vmatprep.subr.bf16.mxu0 0
    %691 = vmatpush1.bf16.msra.mxu0 0
    %692 = vmatprep.subr.bf16.mxu0 0
    %693 = vmatpush1.bf16.msra.mxu0 0
    %694 = vmatprep.subr.bf16.mxu0 %v341
    %695 = vmatpush1.bf16.msra.mxu0 %v338
    %696 = vmatprep.subr.bf16.mxu0 %v276
    %697 = vmatpush1.bf16.msra.mxu0 %v275
    %698 = vmatprep.subr.bf16.mxu0 0
    %699 = vmatpush2.bf16.msra.mxu0 0
    %700 = vmatprep.subr.bf16.mxu0 0
    %701 = vmatpush2.bf16.msra.mxu0 0
    %702 = vmatprep.subr.bf16.mxu0 0
    %703 = vmatpush2.bf16.msra.mxu0 0
    %704 = vmatprep.subr.bf16.mxu0 0
    %705 = vmatpush2.bf16.msra.mxu0 0
    %706 = vmatprep.subr.bf16.mxu0 0
    %707 = vmatpush2.bf16.msra.mxu0 0
    %708 = vmatprep.subr.bf16.mxu0 0
    %709 = vmatpush2.bf16.msra.mxu0 0
    %710 = vmatprep.subr.bf16.mxu0 0
    %711 = vmatpush2.bf16.msra.mxu0 0
    %712 = vmatprep.subr.bf16.mxu0 0
    %713 = vmatpush2.bf16.msra.mxu0 0
    %714 = vmatprep.mubr.bf16.mxu0 0
    %715 = vmatmul.mubr.bf16.gmra.mxu0 %v295
    %v716 = vpop.f32.mrf.mxu0
    %v717 = vadd.f32 %v180, %v716
    %v718 = vpop.f32.mrf.mxu0
    %v719 = vadd.f32 %v184, %v718
    %v720 = vpop.f32.mrf.mxu0
    %v721 = vadd.f32 %v180, %v720
    %v722 = vpop.f32.mrf.mxu0
    %v723 = vadd.f32 %v184, %v722
    %724 = vmatprep.mubr.bf16.mxu0 0
    %725 = vmatmul.mubr.bf16.gmra.mxu0 %v298
    %v726 = vpop.f32.mrf.mxu0
    %v727 = vadd.f32 %v180, %v726
    %v728 = vpop.f32.mrf.mxu0
    %v729 = vadd.f32 %v184, %v728
    %v730 = vpop.f32.mrf.mxu0
    %v731 = vadd.f32 %v180, %v730
    %v732 = vpop.f32.mrf.mxu0
    %v733 = vadd.f32 %v184, %v732
    %734 = vmatprep.mubr.bf16.mxu0 0
    %735 = vmatmul.mubr.bf16.gmra.mxu0 %v301
    %v736 = vpop.f32.mrf.mxu0
    %v737 = vadd.f32 %v180, %v736
    %v738 = vpop.f32.mrf.mxu0
    %v739 = vadd.f32 %v184, %v738
    %v740 = vpop.f32.mrf.mxu0
    %v741 = vadd.f32 %v180, %v740
    %v742 = vpop.f32.mrf.mxu0
    %v743 = vadd.f32 %v184, %v742
    %744 = vmatprep.mubr.bf16.mxu0 0
    %745 = vmatmul.mubr.bf16.gmra.mxu0 %v304
    %v746 = vpop.f32.mrf.mxu0
    %v747 = vadd.f32 %v180, %v746
    %v748 = vpop.f32.mrf.mxu0
    %v749 = vadd.f32 %v184, %v748
    %v750 = vpop.f32.mrf.mxu0
    %v751 = vadd.f32 %v180, %v750
    %v752 = vpop.f32.mrf.mxu0
    %v753 = vadd.f32 %v184, %v752
    %754 = vmatprep.mubr.bf16.mxu0 0
    %755 = vmatmul.mubr.bf16.gmra.mxu0 %v307
    %v756 = vpop.f32.mrf.mxu0
    %v757 = vadd.f32 %v180, %v756
    %v758 = vpop.f32.mrf.mxu0
    %v759 = vadd.f32 %v184, %v758
    %v760 = vpop.f32.mrf.mxu0
    %v761 = vadd.f32 %v180, %v760
    %v762 = vpop.f32.mrf.mxu0
    %v763 = vadd.f32 %v184, %v762
    %764 = vmatprep.mubr.bf16.mxu0 0
    %765 = vmatmul.mubr.bf16.gmra.mxu0 %v310
    %v766 = vpop.f32.mrf.mxu0
    %v767 = vadd.f32 %v180, %v766
    %v768 = vpop.f32.mrf.mxu0
    %v769 = vadd.f32 %v184, %v768
    %v770 = vpop.f32.mrf.mxu0
    %v771 = vadd.f32 %v180, %v770
    %v772 = vpop.f32.mrf.mxu0
    %v773 = vadd.f32 %v184, %v772
    %774 = vmatprep.mubr.bf16.mxu0 0
    %775 = vmatmul.mubr.bf16.gmra.mxu0 %v313
    %v776 = vpop.f32.mrf.mxu0
    %v777 = vadd.f32 %v180, %v776
    %v778 = vpop.f32.mrf.mxu0
    %v779 = vadd.f32 %v184, %v778
    %v780 = vpop.f32.mrf.mxu0
    %v781 = vadd.f32 %v180, %v780
    %v782 = vpop.f32.mrf.mxu0
    %v783 = vadd.f32 %v184, %v782
    %784 = vmatprep.mubr.bf16.mxu0 0
    %785 = vmatmul.mubr.bf16.gmra.mxu0 %v316
    %v786 = vpop.f32.mrf.mxu0
    %v787 = vadd.f32 %v180, %v786
    %v788 = vpop.f32.mrf.mxu0
    %v789 = vadd.f32 %v184, %v788
    %v790 = vpop.f32.mrf.mxu0
    %v791 = vadd.f32 %v180, %v790
    %v792 = vpop.f32.mrf.mxu0
    %v793 = vadd.f32 %v184, %v792
    %794 = vdwg.mxu0
    %v795 = vpack.c.bf16 %v382, %v378
    %v796 = vpack.c.bf16 %v384, %v380
    %v797 = vpack.c.bf16 %v495, %v491
    %v798 = vpack.c.bf16 %v497, %v493
    %v799 = vpack.c.bf16 %v392, %v388
    %v800 = vpack.c.bf16 %v394, %v390
    %v801 = vpack.c.bf16 %v505, %v501
    %v802 = vpack.c.bf16 %v507, %v503
    %v803 = vpack.c.bf16 %v402, %v398
    %v804 = vpack.c.bf16 %v404, %v400
    %v805 = vpack.c.bf16 %v515, %v511
    %v806 = vpack.c.bf16 %v517, %v513
    %v807 = vpack.c.bf16 %v412, %v408
    %v808 = vpack.c.bf16 %v414, %v410
    %v809 = vpack.c.bf16 %v525, %v521
    %v810 = vpack.c.bf16 %v527, %v523
    %v811 = vpack.c.bf16 %v422, %v418
    %v812 = vpack.c.bf16 %v424, %v420
    %v813 = vpack.c.bf16 %v535, %v531
    %v814 = vpack.c.bf16 %v537, %v533
    %v815 = vpack.c.bf16 %v432, %v428
    %v816 = vpack.c.bf16 %v434, %v430
    %v817 = vpack.c.bf16 %v545, %v541
    %v818 = vpack.c.bf16 %v547, %v543
    %v819 = vpack.c.bf16 %v442, %v438
    %v820 = vpack.c.bf16 %v444, %v440
    %v821 = vpack.c.bf16 %v555, %v551
    %v822 = vpack.c.bf16 %v557, %v553
    %v823 = vpack.c.bf16 %v452, %v448
    %v824 = vpack.c.bf16 %v454, %v450
    %v825 = vpack.c.bf16 %v565, %v561
    %v826 = vpack.c.bf16 %v567, %v563
    %v859 = vunpack.c.l.b16 %v795
    %v860 = vunpack.c.l.b16 %v796
    %v861 = vunpack.c.l.b16 %v797
    %v862 = vunpack.c.l.b16 %v798
    %v863 = vunpack.c.h.b16 %v795
    %v864 = vunpack.c.h.b16 %v796
    %v865 = vunpack.c.h.b16 %v797
    %v866 = vunpack.c.h.b16 %v798
    %v867 = vunpack.c.l.b16 %v799
    %v868 = vunpack.c.l.b16 %v800
    %v869 = vunpack.c.l.b16 %v801
    %v870 = vunpack.c.l.b16 %v802
    %v871 = vunpack.c.h.b16 %v799
    %v872 = vunpack.c.h.b16 %v800
    %v873 = vunpack.c.h.b16 %v801
    %v874 = vunpack.c.h.b16 %v802
    %v875 = vunpack.c.l.b16 %v803
    %v876 = vunpack.c.l.b16 %v804
    %v877 = vunpack.c.l.b16 %v805
    %v878 = vunpack.c.l.b16 %v806
    %v879 = vunpack.c.h.b16 %v803
    %v880 = vunpack.c.h.b16 %v804
    %v881 = vunpack.c.h.b16 %v805
    %v882 = vunpack.c.h.b16 %v806
    %v883 = vunpack.c.l.b16 %v807
    %v884 = vunpack.c.l.b16 %v808
    %v885 = vunpack.c.l.b16 %v809
    %v886 = vunpack.c.l.b16 %v810
    %v887 = vunpack.c.h.b16 %v807
    %v888 = vunpack.c.h.b16 %v808
    %v889 = vunpack.c.h.b16 %v809
    %v890 = vunpack.c.h.b16 %v810
    %v891 = vunpack.c.l.b16 %v811
    %v892 = vunpack.c.l.b16 %v812
    %v893 = vunpack.c.l.b16 %v813
    %v894 = vunpack.c.l.b16 %v814
    %v895 = vunpack.c.h.b16 %v811
    %v896 = vunpack.c.h.b16 %v812
    %v897 = vunpack.c.h.b16 %v813
    %v898 = vunpack.c.h.b16 %v814
    %v899 = vunpack.c.l.b16 %v815
    %v900 = vunpack.c.l.b16 %v816
    %v901 = vunpack.c.l.b16 %v817
    %v902 = vunpack.c.l.b16 %v818
    %v903 = vunpack.c.h.b16 %v815
    %v904 = vunpack.c.h.b16 %v816
    %v905 = vunpack.c.h.b16 %v817
    %v906 = vunpack.c.h.b16 %v818
    %v907 = vunpack.c.l.b16 %v819
    %v908 = vunpack.c.l.b16 %v820
    %v909 = vunpack.c.l.b16 %v821
    %v910 = vunpack.c.l.b16 %v822
    %v911 = vunpack.c.h.b16 %v819
    %v912 = vunpack.c.h.b16 %v820
    %v913 = vunpack.c.h.b16 %v821
    %v914 = vunpack.c.h.b16 %v822
    %v915 = vunpack.c.l.b16 %v823
    %v916 = vunpack.c.l.b16 %v824
    %v917 = vunpack.c.l.b16 %v825
    %v918 = vunpack.c.l.b16 %v826
    %v919 = vunpack.c.h.b16 %v823
    %v920 = vunpack.c.h.b16 %v824
    %v921 = vunpack.c.h.b16 %v825
    %v922 = vunpack.c.h.b16 %v826
    %v923 = vpack.c.b16 %v860, %v859
    %v924 = vpack.c.b16 %v862, %v861
    %v925 = vpack.c.b16 %v864, %v863
    %v926 = vpack.c.b16 %v866, %v865
    %v927 = vpack.c.b16 %v868, %v867
    %v928 = vpack.c.b16 %v870, %v869
    %v929 = vpack.c.b16 %v872, %v871
    %v930 = vpack.c.b16 %v874, %v873
    %v931 = vpack.c.b16 %v876, %v875
    %v932 = vpack.c.b16 %v878, %v877
    %v933 = vpack.c.b16 %v880, %v879
    %v934 = vpack.c.b16 %v882, %v881
    %v935 = vpack.c.b16 %v884, %v883
    %v936 = vpack.c.b16 %v886, %v885
    %v937 = vpack.c.b16 %v888, %v887
    %v938 = vpack.c.b16 %v890, %v889
    %v939 = vpack.c.b16 %v892, %v891
    %v940 = vpack.c.b16 %v894, %v893
    %v941 = vpack.c.b16 %v896, %v895
    %v942 = vpack.c.b16 %v898, %v897
    %v943 = vpack.c.b16 %v900, %v899
    %v944 = vpack.c.b16 %v902, %v901
    %v945 = vpack.c.b16 %v904, %v903
    %v946 = vpack.c.b16 %v906, %v905
    %v947 = vpack.c.b16 %v908, %v907
    %v948 = vpack.c.b16 %v910, %v909
    %v949 = vpack.c.b16 %v912, %v911
    %v950 = vpack.c.b16 %v914, %v913
    %v951 = vpack.c.b16 %v916, %v915
    %v952 = vpack.c.b16 %v918, %v917
    %v953 = vpack.c.b16 %v920, %v919
    %v954 = vpack.c.b16 %v922, %v921
    %987 = vst [vmem:[#allocation2] sm:$0xff] %v923
    %988 = vst [vmem:[#allocation2 + $0x8] sm:$0xff] %v924
    %989 = vst [vmem:[#allocation2 + $0x10] sm:$0xff] %v925
    %990 = vst [vmem:[#allocation2 + $0x18] sm:$0xff] %v926
    %991 = vst [vmem:[#allocation2 + $0x20] sm:$0xff] %v927
    %992 = vst [vmem:[#allocation2 + $0x28] sm:$0xff] %v928
    %993 = vst [vmem:[#allocation2 + $0x30] sm:$0xff] %v929
    %994 = vst [vmem:[#allocation2 + $0x38] sm:$0xff] %v930
    %995 = vst [vmem:[#allocation2 + $0x40] sm:$0xff] %v931
    %996 = vst [vmem:[#allocation2 + $0x48] sm:$0xff] %v932
    %997 = vst [vmem:[#allocation2 + $0x50] sm:$0xff] %v933
    %998 = vst [vmem:[#allocation2 + $0x58] sm:$0xff] %v934
    %999 = vst [vmem:[#allocation2 + $0x60] sm:$0xff] %v935
    %1000 = vst [vmem:[#allocation2 + $0x68] sm:$0xff] %v936
    %1001 = vst [vmem:[#allocation2 + $0x70] sm:$0xff] %v937
    %1002 = vst [vmem:[#allocation2 + $0x78] sm:$0xff] %v938
    %1003 = vst [vmem:[#allocation2 + $0x80] sm:$0xff] %v939
    %1004 = vst [vmem:[#allocation2 + $0x88] sm:$0xff] %v940
    %1005 = vst [vmem:[#allocation2 + $0x90] sm:$0xff] %v941
    %1006 = vst [vmem:[#allocation2 + $0x98] sm:$0xff] %v942
    %1007 = vst [vmem:[#allocation2 + $0xa0] sm:$0xff] %v943
    %1008 = vst [vmem:[#allocation2 + $0xa8] sm:$0xff] %v944
    %1009 = vst [vmem:[#allocation2 + $0xb0] sm:$0xff] %v945
    %1010 = vst [vmem:[#allocation2 + $0xb8] sm:$0xff] %v946
    %1011 = vst [vmem:[#allocation2 + $0xc0] sm:$0xff] %v947
    %1012 = vst [vmem:[#allocation2 + $0xc8] sm:$0xff] %v948
    %1013 = vst [vmem:[#allocation2 + $0xd0] sm:$0xff] %v949
    %1014 = vst [vmem:[#allocation2 + $0xd8] sm:$0xff] %v950
    %1015 = vst [vmem:[#allocation2 + $0xe0] sm:$0xff] %v951
    %1016 = vst [vmem:[#allocation2 + $0xe8] sm:$0xff] %v952
    %1017 = vst [vmem:[#allocation2 + $0xf0] sm:$0xff] %v953
    %1018 = vst [vmem:[#allocation2 + $0xf8] sm:$0xff] %v954
    %v1019 = vpack.c.bf16 %v608, %v604
    %v1020 = vpack.c.bf16 %v610, %v606
    %v1021 = vpack.c.bf16 %v721, %v717
    %v1022 = vpack.c.bf16 %v723, %v719
    %v1023 = vpack.c.bf16 %v618, %v614
    %v1024 = vpack.c.bf16 %v620, %v616
    %v1025 = vpack.c.bf16 %v731, %v727
    %v1026 = vpack.c.bf16 %v733, %v729
    %v1027 = vpack.c.bf16 %v628, %v624
    %v1028 = vpack.c.bf16 %v630, %v626
    %v1029 = vpack.c.bf16 %v741, %v737
    %v1030 = vpack.c.bf16 %v743, %v739
    %v1031 = vpack.c.bf16 %v638, %v634
    %v1032 = vpack.c.bf16 %v640, %v636
    %v1033 = vpack.c.bf16 %v751, %v747
    %v1034 = vpack.c.bf16 %v753, %v749
    %v1035 = vpack.c.bf16 %v648, %v644
    %v1036 = vpack.c.bf16 %v650, %v646
    %v1037 = vpack.c.bf16 %v761, %v757
    %v1038 = vpack.c.bf16 %v763, %v759
    %v1039 = vpack.c.bf16 %v658, %v654
    %v1040 = vpack.c.bf16 %v660, %v656
    %v1041 = vpack.c.bf16 %v771, %v767
    %v1042 = vpack.c.bf16 %v773, %v769
    %v1043 = vpack.c.bf16 %v668, %v664
    %v1044 = vpack.c.bf16 %v670, %v666
    %v1045 = vpack.c.bf16 %v781, %v777
    %v1046 = vpack.c.bf16 %v783, %v779
    %v1047 = vpack.c.bf16 %v678, %v674
    %v1048 = vpack.c.bf16 %v680, %v676
    %v1049 = vpack.c.bf16 %v791, %v787
    %v1050 = vpack.c.bf16 %v793, %v789
    %v1083 = vunpack.c.l.b16 %v1019
    %v1084 = vunpack.c.l.b16 %v1020
    %v1085 = vunpack.c.l.b16 %v1021
    %v1086 = vunpack.c.l.b16 %v1022
    %v1087 = vunpack.c.h.b16 %v1019
    %v1088 = vunpack.c.h.b16 %v1020
    %v1089 = vunpack.c.h.b16 %v1021
    %v1090 = vunpack.c.h.b16 %v1022
    %v1091 = vunpack.c.l.b16 %v1023
    %v1092 = vunpack.c.l.b16 %v1024
    %v1093 = vunpack.c.l.b16 %v1025
    %v1094 = vunpack.c.l.b16 %v1026
    %v1095 = vunpack.c.h.b16 %v1023
    %v1096 = vunpack.c.h.b16 %v1024
    %v1097 = vunpack.c.h.b16 %v1025
    %v1098 = vunpack.c.h.b16 %v1026
    %v1099 = vunpack.c.l.b16 %v1027
    %v1100 = vunpack.c.l.b16 %v1028
    %v1101 = vunpack.c.l.b16 %v1029
    %v1102 = vunpack.c.l.b16 %v1030
    %v1103 = vunpack.c.h.b16 %v1027
    %v1104 = vunpack.c.h.b16 %v1028
    %v1105 = vunpack.c.h.b16 %v1029
    %v1106 = vunpack.c.h.b16 %v1030
    %v1107 = vunpack.c.l.b16 %v1031
    %v1108 = vunpack.c.l.b16 %v1032
    %v1109 = vunpack.c.l.b16 %v1033
    %v1110 = vunpack.c.l.b16 %v1034
    %v1111 = vunpack.c.h.b16 %v1031
    %v1112 = vunpack.c.h.b16 %v1032
    %v1113 = vunpack.c.h.b16 %v1033
    %v1114 = vunpack.c.h.b16 %v1034
    %v1115 = vunpack.c.l.b16 %v1035
    %v1116 = vunpack.c.l.b16 %v1036
    %v1117 = vunpack.c.l.b16 %v1037
    %v1118 = vunpack.c.l.b16 %v1038
    %v1119 = vunpack.c.h.b16 %v1035
    %v1120 = vunpack.c.h.b16 %v1036
    %v1121 = vunpack.c.h.b16 %v1037
    %v1122 = vunpack.c.h.b16 %v1038
    %v1123 = vunpack.c.l.b16 %v1039
    %v1124 = vunpack.c.l.b16 %v1040
    %v1125 = vunpack.c.l.b16 %v1041
    %v1126 = vunpack.c.l.b16 %v1042
    %v1127 = vunpack.c.h.b16 %v1039
    %v1128 = vunpack.c.h.b16 %v1040
    %v1129 = vunpack.c.h.b16 %v1041
    %v1130 = vunpack.c.h.b16 %v1042
    %v1131 = vunpack.c.l.b16 %v1043
    %v1132 = vunpack.c.l.b16 %v1044
    %v1133 = vunpack.c.l.b16 %v1045
    %v1134 = vunpack.c.l.b16 %v1046
    %v1135 = vunpack.c.h.b16 %v1043
    %v1136 = vunpack.c.h.b16 %v1044
    %v1137 = vunpack.c.h.b16 %v1045
    %v1138 = vunpack.c.h.b16 %v1046
    %v1139 = vunpack.c.l.b16 %v1047
    %v1140 = vunpack.c.l.b16 %v1048
    %v1141 = vunpack.c.l.b16 %v1049
    %v1142 = vunpack.c.l.b16 %v1050
    %v1143 = vunpack.c.h.b16 %v1047
    %v1144 = vunpack.c.h.b16 %v1048
    %v1145 = vunpack.c.h.b16 %v1049
    %v1146 = vunpack.c.h.b16 %v1050
    %v1147 = vpack.c.b16 %v1084, %v1083
    %v1148 = vpack.c.b16 %v1086, %v1085
    %v1149 = vpack.c.b16 %v1088, %v1087
    %v1150 = vpack.c.b16 %v1090, %v1089
    %v1151 = vpack.c.b16 %v1092, %v1091
    %v1152 = vpack.c.b16 %v1094, %v1093
    %v1153 = vpack.c.b16 %v1096, %v1095
    %v1154 = vpack.c.b16 %v1098, %v1097
    %v1155 = vpack.c.b16 %v1100, %v1099
    %v1156 = vpack.c.b16 %v1102, %v1101
    %v1157 = vpack.c.b16 %v1104, %v1103
    %v1158 = vpack.c.b16 %v1106, %v1105
    %v1159 = vpack.c.b16 %v1108, %v1107
    %v1160 = vpack.c.b16 %v1110, %v1109
    %v1161 = vpack.c.b16 %v1112, %v1111
    %v1162 = vpack.c.b16 %v1114, %v1113
    %v1163 = vpack.c.b16 %v1116, %v1115
    %v1164 = vpack.c.b16 %v1118, %v1117
    %v1165 = vpack.c.b16 %v1120, %v1119
    %v1166 = vpack.c.b16 %v1122, %v1121
    %v1167 = vpack.c.b16 %v1124, %v1123
    %v1168 = vpack.c.b16 %v1126, %v1125
    %v1169 = vpack.c.b16 %v1128, %v1127
    %v1170 = vpack.c.b16 %v1130, %v1129
    %v1171 = vpack.c.b16 %v1132, %v1131
    %v1172 = vpack.c.b16 %v1134, %v1133
    %v1173 = vpack.c.b16 %v1136, %v1135
    %v1174 = vpack.c.b16 %v1138, %v1137
    %v1175 = vpack.c.b16 %v1140, %v1139
    %v1176 = vpack.c.b16 %v1142, %v1141
    %v1177 = vpack.c.b16 %v1144, %v1143
    %v1178 = vpack.c.b16 %v1146, %v1145
    %1211 = vst [vmem:[#allocation3] sm:$0xff] %v1147
    %1212 = vst [vmem:[#allocation3 + $0x8] sm:$0xff] %v1148
    %1213 = vst [vmem:[#allocation3 + $0x10] sm:$0xff] %v1149
    %1214 = vst [vmem:[#allocation3 + $0x18] sm:$0xff] %v1150
    %1215 = vst [vmem:[#allocation3 + $0x20] sm:$0xff] %v1151
    %1216 = vst [vmem:[#allocation3 + $0x28] sm:$0xff] %v1152
    %1217 = vst [vmem:[#allocation3 + $0x30] sm:$0xff] %v1153
    %1218 = vst [vmem:[#allocation3 + $0x38] sm:$0xff] %v1154
    %1219 = vst [vmem:[#allocation3 + $0x40] sm:$0xff] %v1155
    %1220 = vst [vmem:[#allocation3 + $0x48] sm:$0xff] %v1156
    %1221 = vst [vmem:[#allocation3 + $0x50] sm:$0xff] %v1157
    %1222 = vst [vmem:[#allocation3 + $0x58] sm:$0xff] %v1158
    %1223 = vst [vmem:[#allocation3 + $0x60] sm:$0xff] %v1159
    %1224 = vst [vmem:[#allocation3 + $0x68] sm:$0xff] %v1160
    %1225 = vst [vmem:[#allocation3 + $0x70] sm:$0xff] %v1161
    %1226 = vst [vmem:[#allocation3 + $0x78] sm:$0xff] %v1162
    %1227 = vst [vmem:[#allocation3 + $0x80] sm:$0xff] %v1163
    %1228 = vst [vmem:[#allocation3 + $0x88] sm:$0xff] %v1164
    %1229 = vst [vmem:[#allocation3 + $0x90] sm:$0xff] %v1165
    %1230 = vst [vmem:[#allocation3 + $0x98] sm:$0xff] %v1166
    %1231 = vst [vmem:[#allocation3 + $0xa0] sm:$0xff] %v1167
    %1232 = vst [vmem:[#allocation3 + $0xa8] sm:$0xff] %v1168
    %1233 = vst [vmem:[#allocation3 + $0xb0] sm:$0xff] %v1169
    %1234 = vst [vmem:[#allocation3 + $0xb8] sm:$0xff] %v1170
    %1235 = vst [vmem:[#allocation3 + $0xc0] sm:$0xff] %v1171
    %1236 = vst [vmem:[#allocation3 + $0xc8] sm:$0xff] %v1172
    %1237 = vst [vmem:[#allocation3 + $0xd0] sm:$0xff] %v1173
    %1238 = vst [vmem:[#allocation3 + $0xd8] sm:$0xff] %v1174
    %1239 = vst [vmem:[#allocation3 + $0xe0] sm:$0xff] %v1175
    %1240 = vst [vmem:[#allocation3 + $0xe8] sm:$0xff] %v1176
    %1241 = vst [vmem:[#allocation3 + $0xf0] sm:$0xff] %v1177
    %1242 = vst [vmem:[#allocation3 + $0xf8] sm:$0xff] %v1178
    %v1243 = vld [vmem:[#allocation11] sm:$0xff]
    %v1244 = vld [vmem:[#allocation11 + $0x8] sm:$0xff]
    %v1245 = vld [vmem:[#allocation11 + $0x10] sm:$0xff]
    %v1246 = vld [vmem:[#allocation11 + $0x18] sm:$0xff]
    %v1247 = vld [vmem:[#allocation11 + $0x20] sm:$0xff]
    %v1248 = vld [vmem:[#allocation11 + $0x28] sm:$0xff]
    %v1249 = vld [vmem:[#allocation11 + $0x30] sm:$0xff]
    %v1250 = vld [vmem:[#allocation11 + $0x38] sm:$0xff]
    %v1251 = vld [vmem:[#allocation11 + $0x40] sm:$0xff]
    %v1252 = vld [vmem:[#allocation11 + $0x48] sm:$0xff]
    %v1253 = vld [vmem:[#allocation11 + $0x50] sm:$0xff]
    %v1254 = vld [vmem:[#allocation11 + $0x58] sm:$0xff]
    %v1255 = vld [vmem:[#allocation11 + $0x60] sm:$0xff]
    %v1256 = vld [vmem:[#allocation11 + $0x68] sm:$0xff]
    %v1257 = vld [vmem:[#allocation11 + $0x70] sm:$0xff]
    %v1258 = vld [vmem:[#allocation11 + $0x78] sm:$0xff]
    %v1259 = vld [vmem:[#allocation11 + $0x80] sm:$0xff]
    %v1260 = vld [vmem:[#allocation11 + $0x88] sm:$0xff]
    %v1261 = vld [vmem:[#allocation11 + $0x90] sm:$0xff]
    %v1262 = vld [vmem:[#allocation11 + $0x98] sm:$0xff]
    %v1263 = vld [vmem:[#allocation11 + $0xa0] sm:$0xff]
    %v1264 = vld [vmem:[#allocation11 + $0xa8] sm:$0xff]
    %v1265 = vld [vmem:[#allocation11 + $0xb0] sm:$0xff]
    %v1266 = vld [vmem:[#allocation11 + $0xb8] sm:$0xff]
    %v1267 = vld [vmem:[#allocation11 + $0xc0] sm:$0xff]
    %v1268 = vld [vmem:[#allocation11 + $0xc8] sm:$0xff]
    %v1269 = vld [vmem:[#allocation11 + $0xd0] sm:$0xff]
    %v1270 = vld [vmem:[#allocation11 + $0xd8] sm:$0xff]
    %v1271 = vld [vmem:[#allocation11 + $0xe0] sm:$0xff]
    %v1272 = vld [vmem:[#allocation11 + $0xe8] sm:$0xff]
    %v1273 = vld [vmem:[#allocation11 + $0xf0] sm:$0xff]
    %v1274 = vld [vmem:[#allocation11 + $0xf8] sm:$0xff]
    %v1275 = vld [vmem:[#allocation11 + $0x100] sm:$0xff]
    %v1276 = vld [vmem:[#allocation11 + $0x108] sm:$0xff]
    %v1277 = vld [vmem:[#allocation11 + $0x110] sm:$0xff]
    %v1278 = vld [vmem:[#allocation11 + $0x118] sm:$0xff]
    %v1279 = vld [vmem:[#allocation11 + $0x120] sm:$0xff]
    %v1280 = vld [vmem:[#allocation11 + $0x128] sm:$0xff]
    %v1281 = vld [vmem:[#allocation11 + $0x130] sm:$0xff]
    %v1282 = vld [vmem:[#allocation11 + $0x138] sm:$0xff]
    %v1283 = vld [vmem:[#allocation11 + $0x140] sm:$0xff]
    %v1284 = vld [vmem:[#allocation11 + $0x148] sm:$0xff]
    %v1285 = vld [vmem:[#allocation11 + $0x150] sm:$0xff]
    %v1286 = vld [vmem:[#allocation11 + $0x158] sm:$0xff]
    %v1287 = vld [vmem:[#allocation11 + $0x160] sm:$0xff]
    %v1288 = vld [vmem:[#allocation11 + $0x168] sm:$0xff]
    %v1289 = vld [vmem:[#allocation11 + $0x170] sm:$0xff]
    %v1290 = vld [vmem:[#allocation11 + $0x178] sm:$0xff]
    %v1291 = vld [vmem:[#allocation11 + $0x180] sm:$0xff]
    %v1292 = vld [vmem:[#allocation11 + $0x188] sm:$0xff]
    %v1293 = vld [vmem:[#allocation11 + $0x190] sm:$0xff]
    %v1294 = vld [vmem:[#allocation11 + $0x198] sm:$0xff]
    %v1295 = vld [vmem:[#allocation11 + $0x1a0] sm:$0xff]
    %v1296 = vld [vmem:[#allocation11 + $0x1a8] sm:$0xff]
    %v1297 = vld [vmem:[#allocation11 + $0x1b0] sm:$0xff]
    %v1298 = vld [vmem:[#allocation11 + $0x1b8] sm:$0xff]
    %v1299 = vld [vmem:[#allocation11 + $0x1c0] sm:$0xff]
    %v1300 = vld [vmem:[#allocation11 + $0x1c8] sm:$0xff]
    %v1301 = vld [vmem:[#allocation11 + $0x1d0] sm:$0xff]
    %v1302 = vld [vmem:[#allocation11 + $0x1d8] sm:$0xff]
    %v1303 = vld [vmem:[#allocation11 + $0x1e0] sm:$0xff]
    %v1304 = vld [vmem:[#allocation11 + $0x1e8] sm:$0xff]
    %v1305 = vld [vmem:[#allocation11 + $0x1f0] sm:$0xff]
    %v1306 = vld [vmem:[#allocation11 + $0x1f8] sm:$0xff]
    %v1307 = vld [vmem:[#allocation11 + $0x200] sm:$0xff]
    %v1308 = vld [vmem:[#allocation11 + $0x208] sm:$0xff]
    %v1309 = vld [vmem:[#allocation11 + $0x210] sm:$0xff]
    %v1310 = vld [vmem:[#allocation11 + $0x218] sm:$0xff]
    %v1311 = vld [vmem:[#allocation11 + $0x220] sm:$0xff]
    %v1312 = vld [vmem:[#allocation11 + $0x228] sm:$0xff]
    %v1313 = vld [vmem:[#allocation11 + $0x230] sm:$0xff]
    %v1314 = vld [vmem:[#allocation11 + $0x238] sm:$0xff]
    %v1315 = vld [vmem:[#allocation11 + $0x240] sm:$0xff]
    %v1316 = vld [vmem:[#allocation11 + $0x248] sm:$0xff]
    %v1317 = vld [vmem:[#allocation11 + $0x250] sm:$0xff]
    %v1318 = vld [vmem:[#allocation11 + $0x258] sm:$0xff]
    %v1319 = vld [vmem:[#allocation11 + $0x260] sm:$0xff]
    %v1320 = vld [vmem:[#allocation11 + $0x268] sm:$0xff]
    %v1321 = vld [vmem:[#allocation11 + $0x270] sm:$0xff]
    %v1322 = vld [vmem:[#allocation11 + $0x278] sm:$0xff]
    %v1323 = vld [vmem:[#allocation11 + $0x280] sm:$0xff]
    %v1324 = vld [vmem:[#allocation11 + $0x288] sm:$0xff]
    %v1325 = vld [vmem:[#allocation11 + $0x290] sm:$0xff]
    %v1326 = vld [vmem:[#allocation11 + $0x298] sm:$0xff]
    %v1327 = vld [vmem:[#allocation11 + $0x2a0] sm:$0xff]
    %v1328 = vld [vmem:[#allocation11 + $0x2a8] sm:$0xff]
    %v1329 = vld [vmem:[#allocation11 + $0x2b0] sm:$0xff]
    %v1330 = vld [vmem:[#allocation11 + $0x2b8] sm:$0xff]
    %v1331 = vld [vmem:[#allocation11 + $0x2c0] sm:$0xff]
    %v1332 = vld [vmem:[#allocation11 + $0x2c8] sm:$0xff]
    %v1333 = vld [vmem:[#allocation11 + $0x2d0] sm:$0xff]
    %v1334 = vld [vmem:[#allocation11 + $0x2d8] sm:$0xff]
    %v1335 = vld [vmem:[#allocation11 + $0x2e0] sm:$0xff]
    %v1336 = vld [vmem:[#allocation11 + $0x2e8] sm:$0xff]
    %v1337 = vld [vmem:[#allocation11 + $0x2f0] sm:$0xff]
    %v1338 = vld [vmem:[#allocation11 + $0x2f8] sm:$0xff]
    %v1339 = vld [vmem:[#allocation11 + $0x300] sm:$0xff]
    %v1340 = vld [vmem:[#allocation11 + $0x308] sm:$0xff]
    %v1341 = vld [vmem:[#allocation11 + $0x310] sm:$0xff]
    %v1342 = vld [vmem:[#allocation11 + $0x318] sm:$0xff]
    %v1343 = vld [vmem:[#allocation11 + $0x320] sm:$0xff]
    %v1344 = vld [vmem:[#allocation11 + $0x328] sm:$0xff]
    %v1345 = vld [vmem:[#allocation11 + $0x330] sm:$0xff]
    %v1346 = vld [vmem:[#allocation11 + $0x338] sm:$0xff]
    %v1347 = vld [vmem:[#allocation11 + $0x340] sm:$0xff]
    %v1348 = vld [vmem:[#allocation11 + $0x348] sm:$0xff]
    %v1349 = vld [vmem:[#allocation11 + $0x350] sm:$0xff]
    %v1350 = vld [vmem:[#allocation11 + $0x358] sm:$0xff]
    %v1351 = vld [vmem:[#allocation11 + $0x360] sm:$0xff]
    %v1352 = vld [vmem:[#allocation11 + $0x368] sm:$0xff]
    %v1353 = vld [vmem:[#allocation11 + $0x370] sm:$0xff]
    %v1354 = vld [vmem:[#allocation11 + $0x378] sm:$0xff]
    %v1355 = vld [vmem:[#allocation11 + $0x380] sm:$0xff]
    %v1356 = vld [vmem:[#allocation11 + $0x388] sm:$0xff]
    %v1357 = vld [vmem:[#allocation11 + $0x390] sm:$0xff]
    %v1358 = vld [vmem:[#allocation11 + $0x398] sm:$0xff]
    %v1359 = vld [vmem:[#allocation11 + $0x3a0] sm:$0xff]
    %v1360 = vld [vmem:[#allocation11 + $0x3a8] sm:$0xff]
    %v1361 = vld [vmem:[#allocation11 + $0x3b0] sm:$0xff]
    %v1362 = vld [vmem:[#allocation11 + $0x3b8] sm:$0xff]
    %v1363 = vld [vmem:[#allocation11 + $0x3c0] sm:$0xff]
    %v1364 = vld [vmem:[#allocation11 + $0x3c8] sm:$0xff]
    %v1365 = vld [vmem:[#allocation11 + $0x3d0] sm:$0xff]
    %v1366 = vld [vmem:[#allocation11 + $0x3d8] sm:$0xff]
    %v1367 = vld [vmem:[#allocation11 + $0x3e0] sm:$0xff]
    %v1368 = vld [vmem:[#allocation11 + $0x3e8] sm:$0xff]
    %v1369 = vld [vmem:[#allocation11 + $0x3f0] sm:$0xff]
    %v1370 = vld [vmem:[#allocation11 + $0x3f8] sm:$0xff]
    %v1371 = vpack.c.bf16 0.0, 0.0
    %v1500 = vunpack.c.l.b16 %v1243
    %v1501 = vunpack.c.h.b16 %v1243
    %v1502 = vunpack.c.l.b16 %v1244
    %v1503 = vunpack.c.h.b16 %v1244
    %v1504 = vunpack.c.l.b16 %v1245
    %v1505 = vunpack.c.h.b16 %v1245
    %v1506 = vunpack.c.l.b16 %v1246
    %v1507 = vunpack.c.h.b16 %v1246
    %v1508 = vunpack.c.l.b16 %v1247
    %v1509 = vunpack.c.h.b16 %v1247
    %v1510 = vunpack.c.l.b16 %v1248
    %v1511 = vunpack.c.h.b16 %v1248
    %v1512 = vunpack.c.l.b16 %v1249
    %v1513 = vunpack.c.h.b16 %v1249
    %v1514 = vunpack.c.l.b16 %v1250
    %v1515 = vunpack.c.h.b16 %v1250
    %v1516 = vunpack.c.l.b16 %v1251
    %v1517 = vunpack.c.h.b16 %v1251
    %v1518 = vunpack.c.l.b16 %v1252
    %v1519 = vunpack.c.h.b16 %v1252
    %v1520 = vunpack.c.l.b16 %v1253
    %v1521 = vunpack.c.h.b16 %v1253
    %v1522 = vunpack.c.l.b16 %v1254
    %v1523 = vunpack.c.h.b16 %v1254
    %v1524 = vunpack.c.l.b16 %v1255
    %v1525 = vunpack.c.h.b16 %v1255
    %v1526 = vunpack.c.l.b16 %v1256
    %v1527 = vunpack.c.h.b16 %v1256
    %v1528 = vunpack.c.l.b16 %v1257
    %v1529 = vunpack.c.h.b16 %v1257
    %v1530 = vunpack.c.l.b16 %v1258
    %v1531 = vunpack.c.h.b16 %v1258
    %v1532 = vunpack.c.l.b16 %v1259
    %v1533 = vunpack.c.h.b16 %v1259
    %v1534 = vunpack.c.l.b16 %v1260
    %v1535 = vunpack.c.h.b16 %v1260
    %v1536 = vunpack.c.l.b16 %v1261
    %v1537 = vunpack.c.h.b16 %v1261
    %v1538 = vunpack.c.l.b16 %v1262
    %v1539 = vunpack.c.h.b16 %v1262
    %v1540 = vunpack.c.l.b16 %v1263
    %v1541 = vunpack.c.h.b16 %v1263
    %v1542 = vunpack.c.l.b16 %v1264
    %v1543 = vunpack.c.h.b16 %v1264
    %v1544 = vunpack.c.l.b16 %v1265
    %v1545 = vunpack.c.h.b16 %v1265
    %v1546 = vunpack.c.l.b16 %v1266
    %v1547 = vunpack.c.h.b16 %v1266
    %v1548 = vunpack.c.l.b16 %v1267
    %v1549 = vunpack.c.h.b16 %v1267
    %v1550 = vunpack.c.l.b16 %v1268
    %v1551 = vunpack.c.h.b16 %v1268
    %v1552 = vunpack.c.l.b16 %v1269
    %v1553 = vunpack.c.h.b16 %v1269
    %v1554 = vunpack.c.l.b16 %v1270
    %v1555 = vunpack.c.h.b16 %v1270
    %v1556 = vunpack.c.l.b16 %v1271
    %v1557 = vunpack.c.h.b16 %v1271
    %v1558 = vunpack.c.l.b16 %v1272
    %v1559 = vunpack.c.h.b16 %v1272
    %v1560 = vunpack.c.l.b16 %v1273
    %v1561 = vunpack.c.h.b16 %v1273
    %v1562 = vunpack.c.l.b16 %v1274
    %v1563 = vunpack.c.h.b16 %v1274
    %v1564 = vunpack.c.l.b16 %v1275
    %v1565 = vunpack.c.h.b16 %v1275
    %v1566 = vunpack.c.l.b16 %v1276
    %v1567 = vunpack.c.h.b16 %v1276
    %v1568 = vunpack.c.l.b16 %v1277
    %v1569 = vunpack.c.h.b16 %v1277
    %v1570 = vunpack.c.l.b16 %v1278
    %v1571 = vunpack.c.h.b16 %v1278
    %v1572 = vunpack.c.l.b16 %v1279
    %v1573 = vunpack.c.h.b16 %v1279
    %v1574 = vunpack.c.l.b16 %v1280
    %v1575 = vunpack.c.h.b16 %v1280
    %v1576 = vunpack.c.l.b16 %v1281
    %v1577 = vunpack.c.h.b16 %v1281
    %v1578 = vunpack.c.l.b16 %v1282
    %v1579 = vunpack.c.h.b16 %v1282
    %v1580 = vunpack.c.l.b16 %v1283
    %v1581 = vunpack.c.h.b16 %v1283
    %v1582 = vunpack.c.l.b16 %v1284
    %v1583 = vunpack.c.h.b16 %v1284
    %v1584 = vunpack.c.l.b16 %v1285
    %v1585 = vunpack.c.h.b16 %v1285
    %v1586 = vunpack.c.l.b16 %v1286
    %v1587 = vunpack.c.h.b16 %v1286
    %v1588 = vunpack.c.l.b16 %v1287
    %v1589 = vunpack.c.h.b16 %v1287
    %v1590 = vunpack.c.l.b16 %v1288
    %v1591 = vunpack.c.h.b16 %v1288
    %v1592 = vunpack.c.l.b16 %v1289
    %v1593 = vunpack.c.h.b16 %v1289
    %v1594 = vunpack.c.l.b16 %v1290
    %v1595 = vunpack.c.h.b16 %v1290
    %v1596 = vunpack.c.l.b16 %v1291
    %v1597 = vunpack.c.h.b16 %v1291
    %v1598 = vunpack.c.l.b16 %v1292
    %v1599 = vunpack.c.h.b16 %v1292
    %v1600 = vunpack.c.l.b16 %v1293
    %v1601 = vunpack.c.h.b16 %v1293
    %v1602 = vunpack.c.l.b16 %v1294
    %v1603 = vunpack.c.h.b16 %v1294
    %v1604 = vunpack.c.l.b16 %v1295
    %v1605 = vunpack.c.h.b16 %v1295
    %v1606 = vunpack.c.l.b16 %v1296
    %v1607 = vunpack.c.h.b16 %v1296
    %v1608 = vunpack.c.l.b16 %v1297
    %v1609 = vunpack.c.h.b16 %v1297
    %v1610 = vunpack.c.l.b16 %v1298
    %v1611 = vunpack.c.h.b16 %v1298
    %v1612 = vunpack.c.l.b16 %v1299
    %v1613 = vunpack.c.h.b16 %v1299
    %v1614 = vunpack.c.l.b16 %v1300
    %v1615 = vunpack.c.h.b16 %v1300
    %v1616 = vunpack.c.l.b16 %v1301
    %v1617 = vunpack.c.h.b16 %v1301
    %v1618 = vunpack.c.l.b16 %v1302
    %v1619 = vunpack.c.h.b16 %v1302
    %v1620 = vunpack.c.l.b16 %v1303
    %v1621 = vunpack.c.h.b16 %v1303
    %v1622 = vunpack.c.l.b16 %v1304
    %v1623 = vunpack.c.h.b16 %v1304
    %v1624 = vunpack.c.l.b16 %v1305
    %v1625 = vunpack.c.h.b16 %v1305
    %v1626 = vunpack.c.l.b16 %v1306
    %v1627 = vunpack.c.h.b16 %v1306
    %v1628 = vunpack.c.l.b16 %v1307
    %v1629 = vunpack.c.h.b16 %v1307
    %v1630 = vunpack.c.l.b16 %v1308
    %v1631 = vunpack.c.h.b16 %v1308
    %v1632 = vunpack.c.l.b16 %v1309
    %v1633 = vunpack.c.h.b16 %v1309
    %v1634 = vunpack.c.l.b16 %v1310
    %v1635 = vunpack.c.h.b16 %v1310
    %v1636 = vunpack.c.l.b16 %v1311
    %v1637 = vunpack.c.h.b16 %v1311
    %v1638 = vunpack.c.l.b16 %v1312
    %v1639 = vunpack.c.h.b16 %v1312
    %v1640 = vunpack.c.l.b16 %v1313
    %v1641 = vunpack.c.h.b16 %v1313
    %v1642 = vunpack.c.l.b16 %v1314
    %v1643 = vunpack.c.h.b16 %v1314
    %v1644 = vunpack.c.l.b16 %v1315
    %v1645 = vunpack.c.h.b16 %v1315
    %v1646 = vunpack.c.l.b16 %v1316
    %v1647 = vunpack.c.h.b16 %v1316
    %v1648 = vunpack.c.l.b16 %v1317
    %v1649 = vunpack.c.h.b16 %v1317
    %v1650 = vunpack.c.l.b16 %v1318
    %v1651 = vunpack.c.h.b16 %v1318
    %v1652 = vunpack.c.l.b16 %v1319
    %v1653 = vunpack.c.h.b16 %v1319
    %v1654 = vunpack.c.l.b16 %v1320
    %v1655 = vunpack.c.h.b16 %v1320
    %v1656 = vunpack.c.l.b16 %v1321
    %v1657 = vunpack.c.h.b16 %v1321
    %v1658 = vunpack.c.l.b16 %v1322
    %v1659 = vunpack.c.h.b16 %v1322
    %v1660 = vunpack.c.l.b16 %v1323
    %v1661 = vunpack.c.h.b16 %v1323
    %v1662 = vunpack.c.l.b16 %v1324
    %v1663 = vunpack.c.h.b16 %v1324
    %v1664 = vunpack.c.l.b16 %v1325
    %v1665 = vunpack.c.h.b16 %v1325
    %v1666 = vunpack.c.l.b16 %v1326
    %v1667 = vunpack.c.h.b16 %v1326
    %v1668 = vunpack.c.l.b16 %v1327
    %v1669 = vunpack.c.h.b16 %v1327
    %v1670 = vunpack.c.l.b16 %v1328
    %v1671 = vunpack.c.h.b16 %v1328
    %v1672 = vunpack.c.l.b16 %v1329
    %v1673 = vunpack.c.h.b16 %v1329
    %v1674 = vunpack.c.l.b16 %v1330
    %v1675 = vunpack.c.h.b16 %v1330
    %v1676 = vunpack.c.l.b16 %v1331
    %v1677 = vunpack.c.h.b16 %v1331
    %v1678 = vunpack.c.l.b16 %v1332
    %v1679 = vunpack.c.h.b16 %v1332
    %v1680 = vunpack.c.l.b16 %v1333
    %v1681 = vunpack.c.h.b16 %v1333
    %v1682 = vunpack.c.l.b16 %v1334
    %v1683 = vunpack.c.h.b16 %v1334
    %v1684 = vunpack.c.l.b16 %v1335
    %v1685 = vunpack.c.h.b16 %v1335
    %v1686 = vunpack.c.l.b16 %v1336
    %v1687 = vunpack.c.h.b16 %v1336
    %v1688 = vunpack.c.l.b16 %v1337
    %v1689 = vunpack.c.h.b16 %v1337
    %v1690 = vunpack.c.l.b16 %v1338
    %v1691 = vunpack.c.h.b16 %v1338
    %v1692 = vunpack.c.l.b16 %v1339
    %v1693 = vunpack.c.h.b16 %v1339
    %v1694 = vunpack.c.l.b16 %v1340
    %v1695 = vunpack.c.h.b16 %v1340
    %v1696 = vunpack.c.l.b16 %v1341
    %v1697 = vunpack.c.h.b16 %v1341
    %v1698 = vunpack.c.l.b16 %v1342
    %v1699 = vunpack.c.h.b16 %v1342
    %v1700 = vunpack.c.l.b16 %v1343
    %v1701 = vunpack.c.h.b16 %v1343
    %v1702 = vunpack.c.l.b16 %v1344
    %v1703 = vunpack.c.h.b16 %v1344
    %v1704 = vunpack.c.l.b16 %v1345
    %v1705 = vunpack.c.h.b16 %v1345
    %v1706 = vunpack.c.l.b16 %v1346
    %v1707 = vunpack.c.h.b16 %v1346
    %v1708 = vunpack.c.l.b16 %v1347
    %v1709 = vunpack.c.h.b16 %v1347
    %v1710 = vunpack.c.l.b16 %v1348
    %v1711 = vunpack.c.h.b16 %v1348
    %v1712 = vunpack.c.l.b16 %v1349
    %v1713 = vunpack.c.h.b16 %v1349
    %v1714 = vunpack.c.l.b16 %v1350
    %v1715 = vunpack.c.h.b16 %v1350
    %v1716 = vunpack.c.l.b16 %v1351
    %v1717 = vunpack.c.h.b16 %v1351
    %v1718 = vunpack.c.l.b16 %v1352
    %v1719 = vunpack.c.h.b16 %v1352
    %v1720 = vunpack.c.l.b16 %v1353
    %v1721 = vunpack.c.h.b16 %v1353
    %v1722 = vunpack.c.l.b16 %v1354
    %v1723 = vunpack.c.h.b16 %v1354
    %v1724 = vunpack.c.l.b16 %v1355
    %v1725 = vunpack.c.h.b16 %v1355
    %v1726 = vunpack.c.l.b16 %v1356
    %v1727 = vunpack.c.h.b16 %v1356
    %v1728 = vunpack.c.l.b16 %v1357
    %v1729 = vunpack.c.h.b16 %v1357
    %v1730 = vunpack.c.l.b16 %v1358
    %v1731 = vunpack.c.h.b16 %v1358
    %v1732 = vunpack.c.l.b16 %v1359
    %v1733 = vunpack.c.h.b16 %v1359
    %v1734 = vunpack.c.l.b16 %v1360
    %v1735 = vunpack.c.h.b16 %v1360
    %v1736 = vunpack.c.l.b16 %v1361
    %v1737 = vunpack.c.h.b16 %v1361
    %v1738 = vunpack.c.l.b16 %v1362
    %v1739 = vunpack.c.h.b16 %v1362
    %v1740 = vunpack.c.l.b16 %v1363
    %v1741 = vunpack.c.h.b16 %v1363
    %v1742 = vunpack.c.l.b16 %v1364
    %v1743 = vunpack.c.h.b16 %v1364
    %v1744 = vunpack.c.l.b16 %v1365
    %v1745 = vunpack.c.h.b16 %v1365
    %v1746 = vunpack.c.l.b16 %v1366
    %v1747 = vunpack.c.h.b16 %v1366
    %v1748 = vunpack.c.l.b16 %v1367
    %v1749 = vunpack.c.h.b16 %v1367
    %v1750 = vunpack.c.l.b16 %v1368
    %v1751 = vunpack.c.h.b16 %v1368
    %v1752 = vunpack.c.l.b16 %v1369
    %v1753 = vunpack.c.h.b16 %v1369
    %v1754 = vunpack.c.l.b16 %v1370
    %v1755 = vunpack.c.h.b16 %v1370
    %v1756 = vpack.c.b16 %v1508, %v1500
    %v1757 = vpack.c.b16 %v1509, %v1501
    %v1758 = vpack.c.b16 %v1510, %v1502
    %v1759 = vpack.c.b16 %v1511, %v1503
    %v1760 = vpack.c.b16 %v1512, %v1504
    %v1761 = vpack.c.b16 %v1513, %v1505
    %v1762 = vpack.c.b16 %v1514, %v1506
    %v1763 = vpack.c.b16 %v1515, %v1507
    %v1764 = vpack.c.b16 %v1524, %v1516
    %v1765 = vpack.c.b16 %v1525, %v1517
    %v1766 = vpack.c.b16 %v1526, %v1518
    %v1767 = vpack.c.b16 %v1527, %v1519
    %v1768 = vpack.c.b16 %v1528, %v1520
    %v1769 = vpack.c.b16 %v1529, %v1521
    %v1770 = vpack.c.b16 %v1530, %v1522
    %v1771 = vpack.c.b16 %v1531, %v1523
    %v1772 = vpack.c.b16 %v1540, %v1532
    %v1773 = vpack.c.b16 %v1541, %v1533
    %v1774 = vpack.c.b16 %v1542, %v1534
    %v1775 = vpack.c.b16 %v1543, %v1535
    %v1776 = vpack.c.b16 %v1544, %v1536
    %v1777 = vpack.c.b16 %v1545, %v1537
    %v1778 = vpack.c.b16 %v1546, %v1538
    %v1779 = vpack.c.b16 %v1547, %v1539
    %v1780 = vpack.c.b16 %v1556, %v1548
    %v1781 = vpack.c.b16 %v1557, %v1549
    %v1782 = vpack.c.b16 %v1558, %v1550
    %v1783 = vpack.c.b16 %v1559, %v1551
    %v1784 = vpack.c.b16 %v1560, %v1552
    %v1785 = vpack.c.b16 %v1561, %v1553
    %v1786 = vpack.c.b16 %v1562, %v1554
    %v1787 = vpack.c.b16 %v1563, %v1555
    %v1788 = vpack.c.b16 %v1572, %v1564
    %v1789 = vpack.c.b16 %v1573, %v1565
    %v1790 = vpack.c.b16 %v1574, %v1566
    %v1791 = vpack.c.b16 %v1575, %v1567
    %v1792 = vpack.c.b16 %v1576, %v1568
    %v1793 = vpack.c.b16 %v1577, %v1569
    %v1794 = vpack.c.b16 %v1578, %v1570
    %v1795 = vpack.c.b16 %v1579, %v1571
    %v1796 = vpack.c.b16 %v1588, %v1580
    %v1797 = vpack.c.b16 %v1589, %v1581
    %v1798 = vpack.c.b16 %v1590, %v1582
    %v1799 = vpack.c.b16 %v1591, %v1583
    %v1800 = vpack.c.b16 %v1592, %v1584
    %v1801 = vpack.c.b16 %v1593, %v1585
    %v1802 = vpack.c.b16 %v1594, %v1586
    %v1803 = vpack.c.b16 %v1595, %v1587
    %v1804 = vpack.c.b16 %v1604, %v1596
    %v1805 = vpack.c.b16 %v1605, %v1597
    %v1806 = vpack.c.b16 %v1606, %v1598
    %v1807 = vpack.c.b16 %v1607, %v1599
    %v1808 = vpack.c.b16 %v1608, %v1600
    %v1809 = vpack.c.b16 %v1609, %v1601
    %v1810 = vpack.c.b16 %v1610, %v1602
    %v1811 = vpack.c.b16 %v1611, %v1603
    %v1812 = vpack.c.b16 %v1620, %v1612
    %v1813 = vpack.c.b16 %v1621, %v1613
    %v1814 = vpack.c.b16 %v1622, %v1614
    %v1815 = vpack.c.b16 %v1623, %v1615
    %v1816 = vpack.c.b16 %v1624, %v1616
    %v1817 = vpack.c.b16 %v1625, %v1617
    %v1818 = vpack.c.b16 %v1626, %v1618
    %v1819 = vpack.c.b16 %v1627, %v1619
    %v1820 = vpack.c.b16 %v1636, %v1628
    %v1821 = vpack.c.b16 %v1637, %v1629
    %v1822 = vpack.c.b16 %v1638, %v1630
    %v1823 = vpack.c.b16 %v1639, %v1631
    %v1824 = vpack.c.b16 %v1640, %v1632
    %v1825 = vpack.c.b16 %v1641, %v1633
    %v1826 = vpack.c.b16 %v1642, %v1634
    %v1827 = vpack.c.b16 %v1643, %v1635
    %v1828 = vpack.c.b16 %v1652, %v1644
    %v1829 = vpack.c.b16 %v1653, %v1645
    %v1830 = vpack.c.b16 %v1654, %v1646
    %v1831 = vpack.c.b16 %v1655, %v1647
    %v1832 = vpack.c.b16 %v1656, %v1648
    %v1833 = vpack.c.b16 %v1657, %v1649
    %v1834 = vpack.c.b16 %v1658, %v1650
    %v1835 = vpack.c.b16 %v1659, %v1651
    %v1836 = vpack.c.b16 %v1668, %v1660
    %v1837 = vpack.c.b16 %v1669, %v1661
    %v1838 = vpack.c.b16 %v1670, %v1662
    %v1839 = vpack.c.b16 %v1671, %v1663
    %v1840 = vpack.c.b16 %v1672, %v1664
    %v1841 = vpack.c.b16 %v1673, %v1665
    %v1842 = vpack.c.b16 %v1674, %v1666
    %v1843 = vpack.c.b16 %v1675, %v1667
    %v1844 = vpack.c.b16 %v1684, %v1676
    %v1845 = vpack.c.b16 %v1685, %v1677
    %v1846 = vpack.c.b16 %v1686, %v1678
    %v1847 = vpack.c.b16 %v1687, %v1679
    %v1848 = vpack.c.b16 %v1688, %v1680
    %v1849 = vpack.c.b16 %v1689, %v1681
    %v1850 = vpack.c.b16 %v1690, %v1682
    %v1851 = vpack.c.b16 %v1691, %v1683
    %v1852 = vpack.c.b16 %v1700, %v1692
    %v1853 = vpack.c.b16 %v1701, %v1693
    %v1854 = vpack.c.b16 %v1702, %v1694
    %v1855 = vpack.c.b16 %v1703, %v1695
    %v1856 = vpack.c.b16 %v1704, %v1696
    %v1857 = vpack.c.b16 %v1705, %v1697
    %v1858 = vpack.c.b16 %v1706, %v1698
    %v1859 = vpack.c.b16 %v1707, %v1699
    %v1860 = vpack.c.b16 %v1716, %v1708
    %v1861 = vpack.c.b16 %v1717, %v1709
    %v1862 = vpack.c.b16 %v1718, %v1710
    %v1863 = vpack.c.b16 %v1719, %v1711
    %v1864 = vpack.c.b16 %v1720, %v1712
    %v1865 = vpack.c.b16 %v1721, %v1713
    %v1866 = vpack.c.b16 %v1722, %v1714
    %v1867 = vpack.c.b16 %v1723, %v1715
    %v1868 = vpack.c.b16 %v1732, %v1724
    %v1869 = vpack.c.b16 %v1733, %v1725
    %v1870 = vpack.c.b16 %v1734, %v1726
    %v1871 = vpack.c.b16 %v1735, %v1727
    %v1872 = vpack.c.b16 %v1736, %v1728
    %v1873 = vpack.c.b16 %v1737, %v1729
    %v1874 = vpack.c.b16 %v1738, %v1730
    %v1875 = vpack.c.b16 %v1739, %v1731
    %v1876 = vpack.c.b16 %v1748, %v1740
    %v1877 = vpack.c.b16 %v1749, %v1741
    %v1878 = vpack.c.b16 %v1750, %v1742
    %v1879 = vpack.c.b16 %v1751, %v1743
    %v1880 = vpack.c.b16 %v1752, %v1744
    %v1881 = vpack.c.b16 %v1753, %v1745
    %v1882 = vpack.c.b16 %v1754, %v1746
    %v1883 = vpack.c.b16 %v1755, %v1747
    %2012 = vmatprep.subr.bf16.mxu0 %v1813
    %2013 = vmatpush1.bf16.msra.mxu0 %v1812
    %2014 = vmatprep.subr.bf16.mxu0 %v1805
    %2015 = vmatpush1.bf16.msra.mxu0 %v1804
    %2016 = vmatprep.subr.bf16.mxu0 %v1797
    %2017 = vmatpush1.bf16.msra.mxu0 %v1796
    %2018 = vmatprep.subr.bf16.mxu0 %v1789
    %2019 = vmatpush1.bf16.msra.mxu0 %v1788
    %2020 = vmatprep.subr.bf16.mxu0 %v1781
    %2021 = vmatpush1.bf16.msra.mxu0 %v1780
    %2022 = vmatprep.subr.bf16.mxu0 %v1773
    %2023 = vmatpush1.bf16.msra.mxu0 %v1772
    %2024 = vmatprep.subr.bf16.mxu0 %v1765
    %2025 = vmatpush1.bf16.msra.mxu0 %v1764
    %2026 = vmatprep.subr.bf16.mxu0 %v1757
    %2027 = vmatpush1.bf16.msra.mxu0 %v1756
    %2028 = vmatprep.subr.bf16.mxu0 %v1877
    %2029 = vmatpush2.bf16.msra.mxu0 %v1876
    %2030 = vmatprep.subr.bf16.mxu0 %v1869
    %2031 = vmatpush2.bf16.msra.mxu0 %v1868
    %2032 = vmatprep.subr.bf16.mxu0 %v1861
    %2033 = vmatpush2.bf16.msra.mxu0 %v1860
    %2034 = vmatprep.subr.bf16.mxu0 %v1853
    %2035 = vmatpush2.bf16.msra.mxu0 %v1852
    %2036 = vmatprep.subr.bf16.mxu0 %v1845
    %2037 = vmatpush2.bf16.msra.mxu0 %v1844
    %2038 = vmatprep.subr.bf16.mxu0 %v1837
    %2039 = vmatpush2.bf16.msra.mxu0 %v1836
    %2040 = vmatprep.subr.bf16.mxu0 %v1829
    %2041 = vmatpush2.bf16.msra.mxu0 %v1828
    %2042 = vmatprep.subr.bf16.mxu0 %v1821
    %2043 = vmatpush2.bf16.msra.mxu0 %v1820
    %2044 = vmatprep.mubr.bf16.mxu0 %v1371
    %2045 = vmatmul.mubr.bf16.gmra.mxu0 %v1371
    %v2046 = vpop.f32.mrf.mxu0
    %v2047 = vadd.f32 0.0, %v2046
    %v2048 = vpop.f32.mrf.mxu0
    %v2049 = vadd.f32 0.0, %v2048
    %v2050 = vpop.f32.mrf.mxu0
    %v2051 = vadd.f32 0.0, %v2050
    %v2052 = vpop.f32.mrf.mxu0
    %v2053 = vadd.f32 0.0, %v2052
    %2054 = vdwg.mxu0
    %2055 = vmatprep.subr.bf16.mxu0 %v1815
    %2056 = vmatpush1.bf16.msra.mxu0 %v1814
    %2057 = vmatprep.subr.bf16.mxu0 %v1807
    %2058 = vmatpush1.bf16.msra.mxu0 %v1806
    %2059 = vmatprep.subr.bf16.mxu0 %v1799
    %2060 = vmatpush1.bf16.msra.mxu0 %v1798
    %2061 = vmatprep.subr.bf16.mxu0 %v1791
    %2062 = vmatpush1.bf16.msra.mxu0 %v1790
    %2063 = vmatprep.subr.bf16.mxu0 %v1783
    %2064 = vmatpush1.bf16.msra.mxu0 %v1782
    %2065 = vmatprep.subr.bf16.mxu0 %v1775
    %2066 = vmatpush1.bf16.msra.mxu0 %v1774
    %2067 = vmatprep.subr.bf16.mxu0 %v1767
    %2068 = vmatpush1.bf16.msra.mxu0 %v1766
    %2069 = vmatprep.subr.bf16.mxu0 %v1759
    %2070 = vmatpush1.bf16.msra.mxu0 %v1758
    %2071 = vmatprep.subr.bf16.mxu0 %v1879
    %2072 = vmatpush2.bf16.msra.mxu0 %v1878
    %2073 = vmatprep.subr.bf16.mxu0 %v1871
    %2074 = vmatpush2.bf16.msra.mxu0 %v1870
    %2075 = vmatprep.subr.bf16.mxu0 %v1863
    %2076 = vmatpush2.bf16.msra.mxu0 %v1862
    %2077 = vmatprep.subr.bf16.mxu0 %v1855
    %2078 = vmatpush2.bf16.msra.mxu0 %v1854
    %2079 = vmatprep.subr.bf16.mxu0 %v1847
    %2080 = vmatpush2.bf16.msra.mxu0 %v1846
    %2081 = vmatprep.subr.bf16.mxu0 %v1839
    %2082 = vmatpush2.bf16.msra.mxu0 %v1838
    %2083 = vmatprep.subr.bf16.mxu0 %v1831
    %2084 = vmatpush2.bf16.msra.mxu0 %v1830
    %2085 = vmatprep.subr.bf16.mxu0 %v1823
    %2086 = vmatpush2.bf16.msra.mxu0 %v1822
    %2087 = vmatprep.mubr.bf16.mxu0 %v1371
    %2088 = vmatmul.mubr.bf16.gmra.mxu0 %v1371
    %v2089 = vpop.f32.mrf.mxu0
    %v2090 = vadd.f32 0.0, %v2089
    %v2091 = vpop.f32.mrf.mxu0
    %v2092 = vadd.f32 0.0, %v2091
    %v2093 = vpop.f32.mrf.mxu0
    %v2094 = vadd.f32 0.0, %v2093
    %v2095 = vpop.f32.mrf.mxu0
    %v2096 = vadd.f32 0.0, %v2095
    %2097 = vdwg.mxu0
    %2098 = vmatprep.subr.bf16.mxu0 %v1817
    %2099 = vmatpush1.bf16.msra.mxu0 %v1816
    %2100 = vmatprep.subr.bf16.mxu0 %v1809
    %2101 = vmatpush1.bf16.msra.mxu0 %v1808
    %2102 = vmatprep.subr.bf16.mxu0 %v1801
    %2103 = vmatpush1.bf16.msra.mxu0 %v1800
    %2104 = vmatprep.subr.bf16.mxu0 %v1793
    %2105 = vmatpush1.bf16.msra.mxu0 %v1792
    %2106 = vmatprep.subr.bf16.mxu0 %v1785
    %2107 = vmatpush1.bf16.msra.mxu0 %v1784
    %2108 = vmatprep.subr.bf16.mxu0 %v1777
    %2109 = vmatpush1.bf16.msra.mxu0 %v1776
    %2110 = vmatprep.subr.bf16.mxu0 %v1769
    %2111 = vmatpush1.bf16.msra.mxu0 %v1768
    %2112 = vmatprep.subr.bf16.mxu0 %v1761
    %2113 = vmatpush1.bf16.msra.mxu0 %v1760
    %2114 = vmatprep.subr.bf16.mxu0 %v1881
    %2115 = vmatpush2.bf16.msra.mxu0 %v1880
    %2116 = vmatprep.subr.bf16.mxu0 %v1873
    %2117 = vmatpush2.bf16.msra.mxu0 %v1872
    %2118 = vmatprep.subr.bf16.mxu0 %v1865
    %2119 = vmatpush2.bf16.msra.mxu0 %v1864
    %2120 = vmatprep.subr.bf16.mxu0 %v1857
    %2121 = vmatpush2.bf16.msra.mxu0 %v1856
    %2122 = vmatprep.subr.bf16.mxu0 %v1849
    %2123 = vmatpush2.bf16.msra.mxu0 %v1848
    %2124 = vmatprep.subr.bf16.mxu0 %v1841
    %2125 = vmatpush2.bf16.msra.mxu0 %v1840
    %2126 = vmatprep.subr.bf16.mxu0 %v1833
    %2127 = vmatpush2.bf16.msra.mxu0 %v1832
    %2128 = vmatprep.subr.bf16.mxu0 %v1825
    %2129 = vmatpush2.bf16.msra.mxu0 %v1824
    %2130 = vmatprep.mubr.bf16.mxu0 %v1371
    %2131 = vmatmul.mubr.bf16.gmra.mxu0 %v1371
    %v2132 = vpop.f32.mrf.mxu0
    %v2133 = vadd.f32 0.0, %v2132
    %v2134 = vpop.f32.mrf.mxu0
    %v2135 = vadd.f32 0.0, %v2134
    %v2136 = vpop.f32.mrf.mxu0
    %v2137 = vadd.f32 0.0, %v2136
    %v2138 = vpop.f32.mrf.mxu0
    %v2139 = vadd.f32 0.0, %v2138
    %2140 = vdwg.mxu0
    %2141 = vmatprep.subr.bf16.mxu0 %v1819
    %2142 = vmatpush1.bf16.msra.mxu0 %v1818
    %2143 = vmatprep.subr.bf16.mxu0 %v1811
    %2144 = vmatpush1.bf16.msra.mxu0 %v1810
    %2145 = vmatprep.subr.bf16.mxu0 %v1803
    %2146 = vmatpush1.bf16.msra.mxu0 %v1802
    %2147 = vmatprep.subr.bf16.mxu0 %v1795
    %2148 = vmatpush1.bf16.msra.mxu0 %v1794
    %2149 = vmatprep.subr.bf16.mxu0 %v1787
    %2150 = vmatpush1.bf16.msra.mxu0 %v1786
    %2151 = vmatprep.subr.bf16.mxu0 %v1779
    %2152 = vmatpush1.bf16.msra.mxu0 %v1778
    %2153 = vmatprep.subr.bf16.mxu0 %v1771
    %2154 = vmatpush1.bf16.msra.mxu0 %v1770
    %2155 = vmatprep.subr.bf16.mxu0 %v1763
    %2156 = vmatpush1.bf16.msra.mxu0 %v1762
    %2157 = vmatprep.subr.bf16.mxu0 %v1883
    %2158 = vmatpush2.bf16.msra.mxu0 %v1882
    %2159 = vmatprep.subr.bf16.mxu0 %v1875
    %2160 = vmatpush2.bf16.msra.mxu0 %v1874
    %2161 = vmatprep.subr.bf16.mxu0 %v1867
    %2162 = vmatpush2.bf16.msra.mxu0 %v1866
    %2163 = vmatprep.subr.bf16.mxu0 %v1859
    %2164 = vmatpush2.bf16.msra.mxu0 %v1858
    %2165 = vmatprep.subr.bf16.mxu0 %v1851
    %2166 = vmatpush2.bf16.msra.mxu0 %v1850
    %2167 = vmatprep.subr.bf16.mxu0 %v1843
    %2168 = vmatpush2.bf16.msra.mxu0 %v1842
    %2169 = vmatprep.subr.bf16.mxu0 %v1835
    %2170 = vmatpush2.bf16.msra.mxu0 %v1834
    %2171 = vmatprep.subr.bf16.mxu0 %v1827
    %2172 = vmatpush2.bf16.msra.mxu0 %v1826
    %2173 = vmatprep.mubr.bf16.mxu0 %v1371
    %2174 = vmatmul.mubr.bf16.gmra.mxu0 %v1371
    %v2175 = vpop.f32.mrf.mxu0
    %v2176 = vadd.f32 0.0, %v2175
    %v2177 = vpop.f32.mrf.mxu0
    %v2178 = vadd.f32 0.0, %v2177
    %v2179 = vpop.f32.mrf.mxu0
    %v2180 = vadd.f32 0.0, %v2179
    %v2181 = vpop.f32.mrf.mxu0
    %v2182 = vadd.f32 0.0, %v2181
    %2183 = vdwg.mxu0
    %v2184 = vld [vmem:[#allocation2] sm:$0xff]
    %v2185 = vld [vmem:[#allocation2 + $0x8] sm:$0xff]
    %v2186 = vld [vmem:[#allocation2 + $0x10] sm:$0xff]
    %v2187 = vld [vmem:[#allocation2 + $0x18] sm:$0xff]
    %v2188 = vunpack.c.l.bf16 %v2184
    %v2189 = vunpack.c.h.bf16 %v2184
    %v2190 = vunpack.c.l.bf16 %v2185
    %v2191 = vunpack.c.h.bf16 %v2185
    %v2192 = vunpack.c.l.bf16 %v2186
    %v2193 = vunpack.c.h.bf16 %v2186
    %v2194 = vunpack.c.l.bf16 %v2187
    %v2195 = vunpack.c.h.bf16 %v2187
    %v2196 = vadd.f32 %v2188, %v2047
    %v2197 = vadd.f32 %v2189, %v2049
    %v2198 = vadd.f32 %v2190, %v2090
    %v2199 = vadd.f32 %v2191, %v2092
    %v2200 = vadd.f32 %v2192, %v2051
    %v2201 = vadd.f32 %v2193, %v2053
    %v2202 = vadd.f32 %v2194, %v2094
    %v2203 = vadd.f32 %v2195, %v2096
    %s2204 = scalar_lea.vmem [#allocation3], 224
    %v2205 = vld [vmem:[%s2204] sm:$0xff]
    %v2206 = vld [vmem:[%s2204 + $0x8] sm:$0xff]
    %v2207 = vld [vmem:[%s2204 + $0x10] sm:$0xff]
    %v2208 = vld [vmem:[%s2204 + $0x18] sm:$0xff]
    %v2209 = vunpack.c.l.bf16 %v2205
    %v2210 = vunpack.c.h.bf16 %v2205
    %v2211 = vunpack.c.l.bf16 %v2206
    %v2212 = vunpack.c.h.bf16 %v2206
    %v2213 = vunpack.c.l.bf16 %v2207
    %v2214 = vunpack.c.h.bf16 %v2207
    %v2215 = vunpack.c.l.bf16 %v2208
    %v2216 = vunpack.c.h.bf16 %v2208
    %v2217 = vadd.f32 %v2209, %v2133
    %v2218 = vadd.f32 %v2210, %v2135
    %v2219 = vadd.f32 %v2211, %v2176
    %v2220 = vadd.f32 %v2212, %v2178
    %v2221 = vadd.f32 %v2213, %v2137
    %v2222 = vadd.f32 %v2214, %v2139
    %v2223 = vadd.f32 %v2215, %v2180
    %v2224 = vadd.f32 %v2216, %v2182
    %v2225 = vmul.f32 %v2196, 0.5
    %v2226 = vmul.f32 %v2200, 0.5
    %v2227 = vtanh.pop %v2225
    %v2228 = vtanh.pop %v2226
    %v2229 = vmul.f32 %v2227, 0.5
    %v2230 = vmul.f32 %v2228, 0.5
    %v2231 = vadd.f32 %v2229, 0.5
    %v2232 = vadd.f32 %v2230, 0.5
    %v2233 = vmul.f32 %v2197, 0.5
    %v2234 = vmul.f32 %v2201, 0.5
    %v2235 = vtanh.pop %v2233
    %v2236 = vtanh.pop %v2234
    %v2237 = vmul.f32 %v2235, 0.5
    %v2238 = vmul.f32 %v2236, 0.5
    %v2239 = vadd.f32 %v2237, 0.5
    %v2240 = vadd.f32 %v2238, 0.5
    %v2241 = vtanh.pop %v2198
    %v2242 = vtanh.pop %v2202
    %v2243 = vmul.f32 %v2199, 0.5
    %v2244 = vmul.f32 %v2203, 0.5
    %v2245 = vtanh.pop %v2243
    %v2246 = vtanh.pop %v2244
    %v2247 = vmul.f32 %v2245, 0.5
    %v2248 = vmul.f32 %v2246, 0.5
    %v2249 = vadd.f32 %v2247, 0.5
    %v2250 = vadd.f32 %v2248, 0.5
    %v2251 = vmul.f32 %v2239, 0.0
    %v2252 = vmul.f32 %v2240, 0.0
    %v2253 = vmul.f32 %v2231, %v2241
    %v2254 = vmul.f32 %v2232, %v2242
    %v2255 = vadd.f32 %v2251, %v2253
    %v2256 = vadd.f32 %v2252, %v2254
    %v2257 = vtanh.pop %v2255
    %v2258 = vtanh.pop %v2256
    %v2259 = vmul.f32 %v2249, %v2257
    %v2260 = vmul.f32 %v2250, %v2258
    %v2261 = vmul.f32 %v2217, 0.5
    %v2262 = vmul.f32 %v2221, 0.5
    %v2263 = vtanh.pop %v2261
    %v2264 = vtanh.pop %v2262
    %v2265 = vmul.f32 %v2263, 0.5
    %v2266 = vmul.f32 %v2264, 0.5
    %v2267 = vadd.f32 %v2265, 0.5
    %v2268 = vadd.f32 %v2266, 0.5
    %v2269 = vmul.f32 %v2218, 0.5
    %v2270 = vmul.f32 %v2222, 0.5
    %v2271 = vtanh.pop %v2269
    %v2272 = vtanh.pop %v2270
    %v2273 = vmul.f32 %v2271, 0.5
    %v2274 = vmul.f32 %v2272, 0.5
    %v2275 = vadd.f32 %v2273, 0.5
    %v2276 = vadd.f32 %v2274, 0.5
    %v2277 = vtanh.pop %v2219
    %v2278 = vtanh.pop %v2223
    %v2279 = vmul.f32 %v2220, 0.5
    %v2280 = vmul.f32 %v2224, 0.5
    %v2281 = vtanh.pop %v2279
    %v2282 = vtanh.pop %v2280
    %v2283 = vmul.f32 %v2281, 0.5
    %v2284 = vmul.f32 %v2282, 0.5
    %v2285 = vadd.f32 %v2283, 0.5
    %v2286 = vadd.f32 %v2284, 0.5
    %v2287 = vmul.f32 %v2275, 0.0
    %v2288 = vmul.f32 %v2276, 0.0
    %v2289 = vmul.f32 %v2267, %v2277
    %v2290 = vmul.f32 %v2268, %v2278
    %v2291 = vadd.f32 %v2287, %v2289
    %v2292 = vadd.f32 %v2288, %v2290
    %v2293 = vtanh.pop %v2291
    %v2294 = vtanh.pop %v2292
    %v2295 = vmul.f32 %v2285, %v2293
    %v2296 = vmul.f32 %v2286, %v2294
    %v2297 = vpack.c.bf16 %v2260, %v2259
    %v2299 = vunpack.c.l.b16 %v2297
    %v2300 = vunpack.c.h.b16 %v2297
    %v2301 = vpack.c.b16 %v2299, %v2299
    %v2302 = vpack.c.b16 %v2300, %v2300
    %2305 = vst [vmem:[#allocation4] sm:$0xf] %v2301
    %2306 = vst [vmem:[#allocation4 + $0x4] sm:$0xf] %v2302
    %v2307 = vpack.c.bf16 %v2296, %v2295
    %v2309 = vunpack.c.l.b16 %v2307
    %v2310 = vunpack.c.h.b16 %v2307
    %v2311 = vpack.c.b16 %v2309, %v2309
    %v2312 = vpack.c.b16 %v2310, %v2310
    %s2315 = scalar_lea.vmem [#allocation5], 56
    %2316 = vst [vmem:[%s2315] sm:$0xf] %v2311
    %2317 = vst [vmem:[%s2315 + $0x4] sm:$0xf] %v2312
    %2318 = vmatprep.subr.bf16.mxu0 %v1813
    %2319 = vmatpush1.bf16.msra.mxu0 %v1812
    %2320 = vmatprep.subr.bf16.mxu0 %v1805
    %2321 = vmatpush1.bf16.msra.mxu0 %v1804
    %2322 = vmatprep.subr.bf16.mxu0 %v1797
    %2323 = vmatpush1.bf16.msra.mxu0 %v1796
    %2324 = vmatprep.subr.bf16.mxu0 %v1789
    %2325 = vmatpush1.bf16.msra.mxu0 %v1788
    %2326 = vmatprep.subr.bf16.mxu0 %v1781
    %2327 = vmatpush1.bf16.msra.mxu0 %v1780
    %2328 = vmatprep.subr.bf16.mxu0 %v1773
    %2329 = vmatpush1.bf16.msra.mxu0 %v1772
    %2330 = vmatprep.subr.bf16.mxu0 %v1765
    %2331 = vmatpush1.bf16.msra.mxu0 %v1764
    %2332 = vmatprep.subr.bf16.mxu0 %v1757
    %2333 = vmatpush1.bf16.msra.mxu0 %v1756
    %2334 = vmatprep.subr.bf16.mxu0 %v1877
    %2335 = vmatpush2.bf16.msra.mxu0 %v1876
    %2336 = vmatprep.subr.bf16.mxu0 %v1869
    %2337 = vmatpush2.bf16.msra.mxu0 %v1868
    %2338 = vmatprep.subr.bf16.mxu0 %v1861
    %2339 = vmatpush2.bf16.msra.mxu0 %v1860
    %2340 = vmatprep.subr.bf16.mxu0 %v1853
    %2341 = vmatpush2.bf16.msra.mxu0 %v1852
    %2342 = vmatprep.subr.bf16.mxu0 %v1845
    %2343 = vmatpush2.bf16.msra.mxu0 %v1844
    %2344 = vmatprep.subr.bf16.mxu0 %v1837
    %2345 = vmatpush2.bf16.msra.mxu0 %v1836
    %2346 = vmatprep.subr.bf16.mxu0 %v1829
    %2347 = vmatpush2.bf16.msra.mxu0 %v1828
    %2348 = vmatprep.subr.bf16.mxu0 %v1821
    %2349 = vmatpush2.bf16.msra.mxu0 %v1820
    %2350 = vmatprep.mubr.bf16.mxu0 %v2307
    %2351 = vmatmul.mubr.bf16.gmra.mxu0 %v2297
    %v2352 = vpop.f32.mrf.mxu0
    %v2353 = vadd.f32 0.0, %v2352
    %v2354 = vpop.f32.mrf.mxu0
    %v2355 = vadd.f32 0.0, %v2354
    %v2356 = vpop.f32.mrf.mxu0
    %v2357 = vadd.f32 0.0, %v2356
    %v2358 = vpop.f32.mrf.mxu0
    %v2359 = vadd.f32 0.0, %v2358
    %2360 = vdwg.mxu0
    %2361 = vmatprep.subr.bf16.mxu0 %v1815
    %2362 = vmatpush1.bf16.msra.mxu0 %v1814
    %2363 = vmatprep.subr.bf16.mxu0 %v1807
    %2364 = vmatpush1.bf16.msra.mxu0 %v1806
    %2365 = vmatprep.subr.bf16.mxu0 %v1799
    %2366 = vmatpush1.bf16.msra.mxu0 %v1798
    %2367 = vmatprep.subr.bf16.mxu0 %v1791
    %2368 = vmatpush1.bf16.msra.mxu0 %v1790
    %2369 = vmatprep.subr.bf16.mxu0 %v1783
    %2370 = vmatpush1.bf16.msra.mxu0 %v1782
    %2371 = vmatprep.subr.bf16.mxu0 %v1775
    %2372 = vmatpush1.bf16.msra.mxu0 %v1774
    %2373 = vmatprep.subr.bf16.mxu0 %v1767
    %2374 = vmatpush1.bf16.msra.mxu0 %v1766
    %2375 = vmatprep.subr.bf16.mxu0 %v1759
    %2376 = vmatpush1.bf16.msra.mxu0 %v1758
    %2377 = vmatprep.subr.bf16.mxu0 %v1879
    %2378 = vmatpush2.bf16.msra.mxu0 %v1878
    %2379 = vmatprep.subr.bf16.mxu0 %v1871
    %2380 = vmatpush2.bf16.msra.mxu0 %v1870
    %2381 = vmatprep.subr.bf16.mxu0 %v1863
    %2382 = vmatpush2.bf16.msra.mxu0 %v1862
    %2383 = vmatprep.subr.bf16.mxu0 %v1855
    %2384 = vmatpush2.bf16.msra.mxu0 %v1854
    %2385 = vmatprep.subr.bf16.mxu0 %v1847
    %2386 = vmatpush2.bf16.msra.mxu0 %v1846
    %2387 = vmatprep.subr.bf16.mxu0 %v1839
    %2388 = vmatpush2.bf16.msra.mxu0 %v1838
    %2389 = vmatprep.subr.bf16.mxu0 %v1831
    %2390 = vmatpush2.bf16.msra.mxu0 %v1830
    %2391 = vmatprep.subr.bf16.mxu0 %v1823
    %2392 = vmatpush2.bf16.msra.mxu0 %v1822
    %2393 = vmatprep.mubr.bf16.mxu0 %v2307
    %2394 = vmatmul.mubr.bf16.gmra.mxu0 %v2297
    %v2395 = vpop.f32.mrf.mxu0
    %v2396 = vadd.f32 0.0, %v2395
    %v2397 = vpop.f32.mrf.mxu0
    %v2398 = vadd.f32 0.0, %v2397
    %v2399 = vpop.f32.mrf.mxu0
    %v2400 = vadd.f32 0.0, %v2399
    %v2401 = vpop.f32.mrf.mxu0
    %v2402 = vadd.f32 0.0, %v2401
    %2403 = vdwg.mxu0
    %2404 = vmatprep.subr.bf16.mxu0 %v1817
    %2405 = vmatpush1.bf16.msra.mxu0 %v1816
    %2406 = vmatprep.subr.bf16.mxu0 %v1809
    %2407 = vmatpush1.bf16.msra.mxu0 %v1808
    %2408 = vmatprep.subr.bf16.mxu0 %v1801
    %2409 = vmatpush1.bf16.msra.mxu0 %v1800
    %2410 = vmatprep.subr.bf16.mxu0 %v1793
    %2411 = vmatpush1.bf16.msra.mxu0 %v1792
    %2412 = vmatprep.subr.bf16.mxu0 %v1785
    %2413 = vmatpush1.bf16.msra.mxu0 %v1784
    %2414 = vmatprep.subr.bf16.mxu0 %v1777
    %2415 = vmatpush1.bf16.msra.mxu0 %v1776
    %2416 = vmatprep.subr.bf16.mxu0 %v1769
    %2417 = vmatpush1.bf16.msra.mxu0 %v1768
    %2418 = vmatprep.subr.bf16.mxu0 %v1761
    %2419 = vmatpush1.bf16.msra.mxu0 %v1760
    %2420 = vmatprep.subr.bf16.mxu0 %v1881
    %2421 = vmatpush2.bf16.msra.mxu0 %v1880
    %2422 = vmatprep.subr.bf16.mxu0 %v1873
    %2423 = vmatpush2.bf16.msra.mxu0 %v1872
    %2424 = vmatprep.subr.bf16.mxu0 %v1865
    %2425 = vmatpush2.bf16.msra.mxu0 %v1864
    %2426 = vmatprep.subr.bf16.mxu0 %v1857
    %2427 = vmatpush2.bf16.msra.mxu0 %v1856
    %2428 = vmatprep.subr.bf16.mxu0 %v1849
    %2429 = vmatpush2.bf16.msra.mxu0 %v1848
    %2430 = vmatprep.subr.bf16.mxu0 %v1841
    %2431 = vmatpush2.bf16.msra.mxu0 %v1840
    %2432 = vmatprep.subr.bf16.mxu0 %v1833
    %2433 = vmatpush2.bf16.msra.mxu0 %v1832
    %2434 = vmatprep.subr.bf16.mxu0 %v1825
    %2435 = vmatpush2.bf16.msra.mxu0 %v1824
    %2436 = vmatprep.mubr.bf16.mxu0 %v2307
    %2437 = vmatmul.mubr.bf16.gmra.mxu0 %v2297
    %v2438 = vpop.f32.mrf.mxu0
    %v2439 = vadd.f32 0.0, %v2438
    %v2440 = vpop.f32.mrf.mxu0
    %v2441 = vadd.f32 0.0, %v2440
    %v2442 = vpop.f32.mrf.mxu0
    %v2443 = vadd.f32 0.0, %v2442
    %v2444 = vpop.f32.mrf.mxu0
    %v2445 = vadd.f32 0.0, %v2444
    %2446 = vdwg.mxu0
    %2447 = vmatprep.subr.bf16.mxu0 %v1819
    %2448 = vmatpush1.bf16.msra.mxu0 %v1818
    %2449 = vmatprep.subr.bf16.mxu0 %v1811
    %2450 = vmatpush1.bf16.msra.mxu0 %v1810
    %2451 = vmatprep.subr.bf16.mxu0 %v1803
    %2452 = vmatpush1.bf16.msra.mxu0 %v1802
    %2453 = vmatprep.subr.bf16.mxu0 %v1795
    %2454 = vmatpush1.bf16.msra.mxu0 %v1794
    %2455 = vmatprep.subr.bf16.mxu0 %v1787
    %2456 = vmatpush1.bf16.msra.mxu0 %v1786
    %2457 = vmatprep.subr.bf16.mxu0 %v1779
    %2458 = vmatpush1.bf16.msra.mxu0 %v1778
    %2459 = vmatprep.subr.bf16.mxu0 %v1771
    %2460 = vmatpush1.bf16.msra.mxu0 %v1770
    %2461 = vmatprep.subr.bf16.mxu0 %v1763
    %2462 = vmatpush1.bf16.msra.mxu0 %v1762
    %2463 = vmatprep.subr.bf16.mxu0 %v1883
    %2464 = vmatpush2.bf16.msra.mxu0 %v1882
    %2465 = vmatprep.subr.bf16.mxu0 %v1875
    %2466 = vmatpush2.bf16.msra.mxu0 %v1874
    %2467 = vmatprep.subr.bf16.mxu0 %v1867
    %2468 = vmatpush2.bf16.msra.mxu0 %v1866
    %2469 = vmatprep.subr.bf16.mxu0 %v1859
    %2470 = vmatpush2.bf16.msra.mxu0 %v1858
    %2471 = vmatprep.subr.bf16.mxu0 %v1851
    %2472 = vmatpush2.bf16.msra.mxu0 %v1850
    %2473 = vmatprep.subr.bf16.mxu0 %v1843
    %2474 = vmatpush2.bf16.msra.mxu0 %v1842
    %2475 = vmatprep.subr.bf16.mxu0 %v1835
    %2476 = vmatpush2.bf16.msra.mxu0 %v1834
    %2477 = vmatprep.subr.bf16.mxu0 %v1827
    %2478 = vmatpush2.bf16.msra.mxu0 %v1826
    %2479 = vmatprep.mubr.bf16.mxu0 %v2307
    %2480 = vmatmul.mubr.bf16.gmra.mxu0 %v2297
    %v2481 = vpop.f32.mrf.mxu0
    %v2482 = vadd.f32 0.0, %v2481
    %v2483 = vpop.f32.mrf.mxu0
    %v2484 = vadd.f32 0.0, %v2483
    %v2485 = vpop.f32.mrf.mxu0
    %v2486 = vadd.f32 0.0, %v2485
    %v2487 = vpop.f32.mrf.mxu0
    %v2488 = vadd.f32 0.0, %v2487
    %2489 = vdwg.mxu0
    %s2490 = scalar_lea.vmem [#allocation2], 32
    %v2491 = vld [vmem:[%s2490] sm:$0xff]
    %v2492 = vld [vmem:[%s2490 + $0x8] sm:$0xff]
    %v2493 = vld [vmem:[%s2490 + $0x10] sm:$0xff]
    %v2494 = vld [vmem:[%s2490 + $0x18] sm:$0xff]
    %v2495 = vunpack.c.l.bf16 %v2491
    %v2496 = vunpack.c.h.bf16 %v2491
    %v2497 = vunpack.c.l.bf16 %v2492
    %v2498 = vunpack.c.h.bf16 %v2492
    %v2499 = vunpack.c.l.bf16 %v2493
    %v2500 = vunpack.c.h.bf16 %v2493
    %v2501 = vunpack.c.l.bf16 %v2494
    %v2502 = vunpack.c.h.bf16 %v2494
    %v2503 = vadd.f32 %v2495, %v2353
    %v2504 = vadd.f32 %v2496, %v2355
    %v2505 = vadd.f32 %v2497, %v2396
    %v2506 = vadd.f32 %v2498, %v2398
    %v2507 = vadd.f32 %v2499, %v2357
    %v2508 = vadd.f32 %v2500, %v2359
    %v2509 = vadd.f32 %v2501, %v2400
    %v2510 = vadd.f32 %v2502, %v2402
    %s2511 = scalar_lea.vmem [#allocation3], 192
    %v2512 = vld [vmem:[%s2511] sm:$0xff]
    %v2513 = vld [vmem:[%s2511 + $0x8] sm:$0xff]
    %v2514 = vld [vmem:[%s2511 + $0x10] sm:$0xff]
    %v2515 = vld [vmem:[%s2511 + $0x18] sm:$0xff]
    %v2516 = vunpack.c.l.bf16 %v2512
    %v2517 = vunpack.c.h.bf16 %v2512
    %v2518 = vunpack.c.l.bf16 %v2513
    %v2519 = vunpack.c.h.bf16 %v2513
    %v2520 = vunpack.c.l.bf16 %v2514
    %v2521 = vunpack.c.h.bf16 %v2514
    %v2522 = vunpack.c.l.bf16 %v2515
    %v2523 = vunpack.c.h.bf16 %v2515
    %v2524 = vadd.f32 %v2516, %v2439
    %v2525 = vadd.f32 %v2517, %v2441
    %v2526 = vadd.f32 %v2518, %v2482
    %v2527 = vadd.f32 %v2519, %v2484
    %v2528 = vadd.f32 %v2520, %v2443
    %v2529 = vadd.f32 %v2521, %v2445
    %v2530 = vadd.f32 %v2522, %v2486
    %v2531 = vadd.f32 %v2523, %v2488
    %v2532 = vmul.f32 %v2503, 0.5
    %v2533 = vmul.f32 %v2507, 0.5
    %v2534 = vtanh.pop %v2532
    %v2535 = vtanh.pop %v2533
    %v2536 = vmul.f32 %v2534, 0.5
    %v2537 = vmul.f32 %v2535, 0.5
    %v2538 = vadd.f32 %v2536, 0.5
    %v2539 = vadd.f32 %v2537, 0.5
    %v2540 = vmul.f32 %v2504, 0.5
    %v2541 = vmul.f32 %v2508, 0.5
    %v2542 = vtanh.pop %v2540
    %v2543 = vtanh.pop %v2541
    %v2544 = vmul.f32 %v2542, 0.5
    %v2545 = vmul.f32 %v2543, 0.5
    %v2546 = vadd.f32 %v2544, 0.5
    %v2547 = vadd.f32 %v2545, 0.5
    %v2548 = vtanh.pop %v2505
    %v2549 = vtanh.pop %v2509
    %v2550 = vmul.f32 %v2506, 0.5
    %v2551 = vmul.f32 %v2510, 0.5
    %v2552 = vtanh.pop %v2550
    %v2553 = vtanh.pop %v2551
    %v2554 = vmul.f32 %v2552, 0.5
    %v2555 = vmul.f32 %v2553, 0.5
    %v2556 = vadd.f32 %v2554, 0.5
    %v2557 = vadd.f32 %v2555, 0.5
    %v2558 = vmul.f32 %v2546, %v2255
    %v2559 = vmul.f32 %v2547, %v2256
    %v2560 = vmul.f32 %v2538, %v2548
    %v2561 = vmul.f32 %v2539, %v2549
    %v2562 = vadd.f32 %v2558, %v2560
    %v2563 = vadd.f32 %v2559, %v2561
    %v2564 = vtanh.pop %v2562
    %v2565 = vtanh.pop %v2563
    %v2566 = vmul.f32 %v2556, %v2564
    %v2567 = vmul.f32 %v2557, %v2565
    %v2568 = vmul.f32 %v2524, 0.5
    %v2569 = vmul.f32 %v2528, 0.5
    %v2570 = vtanh.pop %v2568
    %v2571 = vtanh.pop %v2569
    %v2572 = vmul.f32 %v2570, 0.5
    %v2573 = vmul.f32 %v2571, 0.5
    %v2574 = vadd.f32 %v2572, 0.5
    %v2575 = vadd.f32 %v2573, 0.5
    %v2576 = vmul.f32 %v2525, 0.5
    %v2577 = vmul.f32 %v2529, 0.5
    %v2578 = vtanh.pop %v2576
    %v2579 = vtanh.pop %v2577
    %v2580 = vmul.f32 %v2578, 0.5
    %v2581 = vmul.f32 %v2579, 0.5
    %v2582 = vadd.f32 %v2580, 0.5
    %v2583 = vadd.f32 %v2581, 0.5
    %v2584 = vtanh.pop %v2526
    %v2585 = vtanh.pop %v2530
    %v2586 = vmul.f32 %v2527, 0.5
    %v2587 = vmul.f32 %v2531, 0.5
    %v2588 = vtanh.pop %v2586
    %v2589 = vtanh.pop %v2587
    %v2590 = vmul.f32 %v2588, 0.5
    %v2591 = vmul.f32 %v2589, 0.5
    %v2592 = vadd.f32 %v2590, 0.5
    %v2593 = vadd.f32 %v2591, 0.5
    %v2594 = vmul.f32 %v2582, %v2291
    %v2595 = vmul.f32 %v2583, %v2292
    %v2596 = vmul.f32 %v2574, %v2584
    %v2597 = vmul.f32 %v2575, %v2585
    %v2598 = vadd.f32 %v2594, %v2596
    %v2599 = vadd.f32 %v2595, %v2597
    %v2600 = vtanh.pop %v2598
    %v2601 = vtanh.pop %v2599
    %v2602 = vmul.f32 %v2592, %v2600
    %v2603 = vmul.f32 %v2593, %v2601
    %v2604 = vpack.c.bf16 %v2567, %v2566
    %v2606 = vunpack.c.l.b16 %v2604
    %v2607 = vunpack.c.h.b16 %v2604
    %v2608 = vpack.c.b16 %v2606, %v2606
    %v2609 = vpack.c.b16 %v2607, %v2607
    %s2612 = scalar_lea.vmem [#allocation4], 8
    %2613 = vst [vmem:[%s2612] sm:$0xf] %v2608
    %2614 = vst [vmem:[%s2612 + $0x4] sm:$0xf] %v2609
    %v2615 = vpack.c.bf16 %v2603, %v2602
    %v2617 = vunpack.c.l.b16 %v2615
    %v2618 = vunpack.c.h.b16 %v2615
    %v2619 = vpack.c.b16 %v2617, %v2617
    %v2620 = vpack.c.b16 %v2618, %v2618
    %s2623 = scalar_lea.vmem [#allocation5], 48
    %2624 = vst [vmem:[%s2623] sm:$0xf] %v2619
    %2625 = vst [vmem:[%s2623 + $0x4] sm:$0xf] %v2620
    %2626 = vmatprep.subr.bf16.mxu0 %v1813
    %2627 = vmatpush1.bf16.msra.mxu0 %v1812
    %2628 = vmatprep.subr.bf16.mxu0 %v1805
    %2629 = vmatpush1.bf16.msra.mxu0 %v1804
    %2630 = vmatprep.subr.bf16.mxu0 %v1797
    %2631 = vmatpush1.bf16.msra.mxu0 %v1796
    %2632 = vmatprep.subr.bf16.mxu0 %v1789
    %2633 = vmatpush1.bf16.msra.mxu0 %v1788
    %2634 = vmatprep.subr.bf16.mxu0 %v1781
    %2635 = vmatpush1.bf16.msra.mxu0 %v1780
    %2636 = vmatprep.subr.bf16.mxu0 %v1773
    %2637 = vmatpush1.bf16.msra.mxu0 %v1772
    %2638 = vmatprep.subr.bf16.mxu0 %v1765
    %2639 = vmatpush1.bf16.msra.mxu0 %v1764
    %2640 = vmatprep.subr.bf16.mxu0 %v1757
    %2641 = vmatpush1.bf16.msra.mxu0 %v1756
    %2642 = vmatprep.subr.bf16.mxu0 %v1877
    %2643 = vmatpush2.bf16.msra.mxu0 %v1876
    %2644 = vmatprep.subr.bf16.mxu0 %v1869
    %2645 = vmatpush2.bf16.msra.mxu0 %v1868
    %2646 = vmatprep.subr.bf16.mxu0 %v1861
    %2647 = vmatpush2.bf16.msra.mxu0 %v1860
    %2648 = vmatprep.subr.bf16.mxu0 %v1853
    %2649 = vmatpush2.bf16.msra.mxu0 %v1852
    %2650 = vmatprep.subr.bf16.mxu0 %v1845
    %2651 = vmatpush2.bf16.msra.mxu0 %v1844
    %2652 = vmatprep.subr.bf16.mxu0 %v1837
    %2653 = vmatpush2.bf16.msra.mxu0 %v1836
    %2654 = vmatprep.subr.bf16.mxu0 %v1829
    %2655 = vmatpush2.bf16.msra.mxu0 %v1828
    %2656 = vmatprep.subr.bf16.mxu0 %v1821
    %2657 = vmatpush2.bf16.msra.mxu0 %v1820
    %2658 = vmatprep.mubr.bf16.mxu0 %v2615
    %2659 = vmatmul.mubr.bf16.gmra.mxu0 %v2604
    %v2660 = vpop.f32.mrf.mxu0
    %v2661 = vadd.f32 0.0, %v2660
    %v2662 = vpop.f32.mrf.mxu0
    %v2663 = vadd.f32 0.0, %v2662
    %v2664 = vpop.f32.mrf.mxu0
    %v2665 = vadd.f32 0.0, %v2664
    %v2666 = vpop.f32.mrf.mxu0
    %v2667 = vadd.f32 0.0, %v2666
    %2668 = vdwg.mxu0
    %2669 = vmatprep.subr.bf16.mxu0 %v1815
    %2670 = vmatpush1.bf16.msra.mxu0 %v1814
    %2671 = vmatprep.subr.bf16.mxu0 %v1807
    %2672 = vmatpush1.bf16.msra.mxu0 %v1806
    %2673 = vmatprep.subr.bf16.mxu0 %v1799
    %2674 = vmatpush1.bf16.msra.mxu0 %v1798
    %2675 = vmatprep.subr.bf16.mxu0 %v1791
    %2676 = vmatpush1.bf16.msra.mxu0 %v1790
    %2677 = vmatprep.subr.bf16.mxu0 %v1783
    %2678 = vmatpush1.bf16.msra.mxu0 %v1782
    %2679 = vmatprep.subr.bf16.mxu0 %v1775
    %2680 = vmatpush1.bf16.msra.mxu0 %v1774
    %2681 = vmatprep.subr.bf16.mxu0 %v1767
    %2682 = vmatpush1.bf16.msra.mxu0 %v1766
    %2683 = vmatprep.subr.bf16.mxu0 %v1759
    %2684 = vmatpush1.bf16.msra.mxu0 %v1758
    %2685 = vmatprep.subr.bf16.mxu0 %v1879
    %2686 = vmatpush2.bf16.msra.mxu0 %v1878
    %2687 = vmatprep.subr.bf16.mxu0 %v1871
    %2688 = vmatpush2.bf16.msra.mxu0 %v1870
    %2689 = vmatprep.subr.bf16.mxu0 %v1863
    %2690 = vmatpush2.bf16.msra.mxu0 %v1862
    %2691 = vmatprep.subr.bf16.mxu0 %v1855
    %2692 = vmatpush2.bf16.msra.mxu0 %v1854
    %2693 = vmatprep.subr.bf16.mxu0 %v1847
    %2694 = vmatpush2.bf16.msra.mxu0 %v1846
    %2695 = vmatprep.subr.bf16.mxu0 %v1839
    %2696 = vmatpush2.bf16.msra.mxu0 %v1838
    %2697 = vmatprep.subr.bf16.mxu0 %v1831
    %2698 = vmatpush2.bf16.msra.mxu0 %v1830
    %2699 = vmatprep.subr.bf16.mxu0 %v1823
    %2700 = vmatpush2.bf16.msra.mxu0 %v1822
    %2701 = vmatprep.mubr.bf16.mxu0 %v2615
    %2702 = vmatmul.mubr.bf16.gmra.mxu0 %v2604
    %v2703 = vpop.f32.mrf.mxu0
    %v2704 = vadd.f32 0.0, %v2703
    %v2705 = vpop.f32.mrf.mxu0
    %v2706 = vadd.f32 0.0, %v2705
    %v2707 = vpop.f32.mrf.mxu0
    %v2708 = vadd.f32 0.0, %v2707
    %v2709 = vpop.f32.mrf.mxu0
    %v2710 = vadd.f32 0.0, %v2709
    %2711 = vdwg.mxu0
    %2712 = vmatprep.subr.bf16.mxu0 %v1817
    %2713 = vmatpush1.bf16.msra.mxu0 %v1816
    %2714 = vmatprep.subr.bf16.mxu0 %v1809
    %2715 = vmatpush1.bf16.msra.mxu0 %v1808
    %2716 = vmatprep.subr.bf16.mxu0 %v1801
    %2717 = vmatpush1.bf16.msra.mxu0 %v1800
    %2718 = vmatprep.subr.bf16.mxu0 %v1793
    %2719 = vmatpush1.bf16.msra.mxu0 %v1792
    %2720 = vmatprep.subr.bf16.mxu0 %v1785
    %2721 = vmatpush1.bf16.msra.mxu0 %v1784
    %2722 = vmatprep.subr.bf16.mxu0 %v1777
    %2723 = vmatpush1.bf16.msra.mxu0 %v1776
    %2724 = vmatprep.subr.bf16.mxu0 %v1769
    %2725 = vmatpush1.bf16.msra.mxu0 %v1768
    %2726 = vmatprep.subr.bf16.mxu0 %v1761
    %2727 = vmatpush1.bf16.msra.mxu0 %v1760
    %2728 = vmatprep.subr.bf16.mxu0 %v1881
    %2729 = vmatpush2.bf16.msra.mxu0 %v1880
    %2730 = vmatprep.subr.bf16.mxu0 %v1873
    %2731 = vmatpush2.bf16.msra.mxu0 %v1872
    %2732 = vmatprep.subr.bf16.mxu0 %v1865
    %2733 = vmatpush2.bf16.msra.mxu0 %v1864
    %2734 = vmatprep.subr.bf16.mxu0 %v1857
    %2735 = vmatpush2.bf16.msra.mxu0 %v1856
    %2736 = vmatprep.subr.bf16.mxu0 %v1849
    %2737 = vmatpush2.bf16.msra.mxu0 %v1848
    %2738 = vmatprep.subr.bf16.mxu0 %v1841
    %2739 = vmatpush2.bf16.msra.mxu0 %v1840
    %2740 = vmatprep.subr.bf16.mxu0 %v1833
    %2741 = vmatpush2.bf16.msra.mxu0 %v1832
    %2742 = vmatprep.subr.bf16.mxu0 %v1825
    %2743 = vmatpush2.bf16.msra.mxu0 %v1824
    %2744 = vmatprep.mubr.bf16.mxu0 %v2615
    %2745 = vmatmul.mubr.bf16.gmra.mxu0 %v2604
    %v2746 = vpop.f32.mrf.mxu0
    %v2747 = vadd.f32 0.0, %v2746
    %v2748 = vpop.f32.mrf.mxu0
    %v2749 = vadd.f32 0.0, %v2748
    %v2750 = vpop.f32.mrf.mxu0
    %v2751 = vadd.f32 0.0, %v2750
    %v2752 = vpop.f32.mrf.mxu0
    %v2753 = vadd.f32 0.0, %v2752
    %2754 = vdwg.mxu0
    %2755 = vmatprep.subr.bf16.mxu0 %v1819
    %2756 = vmatpush1.bf16.msra.mxu0 %v1818
    %2757 = vmatprep.subr.bf16.mxu0 %v1811
    %2758 = vmatpush1.bf16.msra.mxu0 %v1810
    %2759 = vmatprep.subr.bf16.mxu0 %v1803
    %2760 = vmatpush1.bf16.msra.mxu0 %v1802
    %2761 = vmatprep.subr.bf16.mxu0 %v1795
    %2762 = vmatpush1.bf16.msra.mxu0 %v1794
    %2763 = vmatprep.subr.bf16.mxu0 %v1787
    %2764 = vmatpush1.bf16.msra.mxu0 %v1786
    %2765 = vmatprep.subr.bf16.mxu0 %v1779
    %2766 = vmatpush1.bf16.msra.mxu0 %v1778
    %2767 = vmatprep.subr.bf16.mxu0 %v1771
    %2768 = vmatpush1.bf16.msra.mxu0 %v1770
    %2769 = vmatprep.subr.bf16.mxu0 %v1763
    %2770 = vmatpush1.bf16.msra.mxu0 %v1762
    %2771 = vmatprep.subr.bf16.mxu0 %v1883
    %2772 = vmatpush2.bf16.msra.mxu0 %v1882
    %2773 = vmatprep.subr.bf16.mxu0 %v1875
    %2774 = vmatpush2.bf16.msra.mxu0 %v1874
    %2775 = vmatprep.subr.bf16.mxu0 %v1867
    %2776 = vmatpush2.bf16.msra.mxu0 %v1866
    %2777 = vmatprep.subr.bf16.mxu0 %v1859
    %2778 = vmatpush2.bf16.msra.mxu0 %v1858
    %2779 = vmatprep.subr.bf16.mxu0 %v1851
    %2780 = vmatpush2.bf16.msra.mxu0 %v1850
    %2781 = vmatprep.subr.bf16.mxu0 %v1843
    %2782 = vmatpush2.bf16.msra.mxu0 %v1842
    %2783 = vmatprep.subr.bf16.mxu0 %v1835
    %2784 = vmatpush2.bf16.msra.mxu0 %v1834
    %2785 = vmatprep.subr.bf16.mxu0 %v1827
    %2786 = vmatpush2.bf16.msra.mxu0 %v1826
    %2787 = vmatprep.mubr.bf16.mxu0 %v2615
    %2788 = vmatmul.mubr.bf16.gmra.mxu0 %v2604
    %v2789 = vpop.f32.mrf.mxu0
    %v2790 = vadd.f32 0.0, %v2789
    %v2791 = vpop.f32.mrf.mxu0
    %v2792 = vadd.f32 0.0, %v2791
    %v2793 = vpop.f32.mrf.mxu0
    %v2794 = vadd.f32 0.0, %v2793
    %v2795 = vpop.f32.mrf.mxu0
    %v2796 = vadd.f32 0.0, %v2795
    %2797 = vdwg.mxu0
    %s2798 = scalar_lea.vmem [#allocation2], 64
    %v2799 = vld [vmem:[%s2798] sm:$0xff]
    %v2800 = vld [vmem:[%s2798 + $0x8] sm:$0xff]
    %v2801 = vld [vmem:[%s2798 + $0x10] sm:$0xff]
    %v2802 = vld [vmem:[%s2798 + $0x18] sm:$0xff]
    %v2803 = vunpack.c.l.bf16 %v2799
    %v2804 = vunpack.c.h.bf16 %v2799
    %v2805 = vunpack.c.l.bf16 %v2800
    %v2806 = vunpack.c.h.bf16 %v2800
    %v2807 = vunpack.c.l.bf16 %v2801
    %v2808 = vunpack.c.h.bf16 %v2801
    %v2809 = vunpack.c.l.bf16 %v2802
    %v2810 = vunpack.c.h.bf16 %v2802
    %v2811 = vadd.f32 %v2803, %v2661
    %v2812 = vadd.f32 %v2804, %v2663
    %v2813 = vadd.f32 %v2805, %v2704
    %v2814 = vadd.f32 %v2806, %v2706
    %v2815 = vadd.f32 %v2807, %v2665
    %v2816 = vadd.f32 %v2808, %v2667
    %v2817 = vadd.f32 %v2809, %v2708
    %v2818 = vadd.f32 %v2810, %v2710
    %s2819 = scalar_lea.vmem [#allocation3], 160
    %v2820 = vld [vmem:[%s2819] sm:$0xff]
    %v2821 = vld [vmem:[%s2819 + $0x8] sm:$0xff]
    %v2822 = vld [vmem:[%s2819 + $0x10] sm:$0xff]
    %v2823 = vld [vmem:[%s2819 + $0x18] sm:$0xff]
    %v2824 = vunpack.c.l.bf16 %v2820
    %v2825 = vunpack.c.h.bf16 %v2820
    %v2826 = vunpack.c.l.bf16 %v2821
    %v2827 = vunpack.c.h.bf16 %v2821
    %v2828 = vunpack.c.l.bf16 %v2822
    %v2829 = vunpack.c.h.bf16 %v2822
    %v2830 = vunpack.c.l.bf16 %v2823
    %v2831 = vunpack.c.h.bf16 %v2823
    %v2832 = vadd.f32 %v2824, %v2747
    %v2833 = vadd.f32 %v2825, %v2749
    %v2834 = vadd.f32 %v2826, %v2790
    %v2835 = vadd.f32 %v2827, %v2792
    %v2836 = vadd.f32 %v2828, %v2751
    %v2837 = vadd.f32 %v2829, %v2753
    %v2838 = vadd.f32 %v2830, %v2794
    %v2839 = vadd.f32 %v2831, %v2796
    %v2840 = vmul.f32 %v2811, 0.5
    %v2841 = vmul.f32 %v2815, 0.5
    %v2842 = vtanh.pop %v2840
    %v2843 = vtanh.pop %v2841
    %v2844 = vmul.f32 %v2842, 0.5
    %v2845 = vmul.f32 %v2843, 0.5
    %v2846 = vadd.f32 %v2844, 0.5
    %v2847 = vadd.f32 %v2845, 0.5
    %v2848 = vmul.f32 %v2812, 0.5
    %v2849 = vmul.f32 %v2816, 0.5
    %v2850 = vtanh.pop %v2848
    %v2851 = vtanh.pop %v2849
    %v2852 = vmul.f32 %v2850, 0.5
    %v2853 = vmul.f32 %v2851, 0.5
    %v2854 = vadd.f32 %v2852, 0.5
    %v2855 = vadd.f32 %v2853, 0.5
    %v2856 = vtanh.pop %v2813
    %v2857 = vtanh.pop %v2817
    %v2858 = vmul.f32 %v2814, 0.5
    %v2859 = vmul.f32 %v2818, 0.5
    %v2860 = vtanh.pop %v2858
    %v2861 = vtanh.pop %v2859
    %v2862 = vmul.f32 %v2860, 0.5
    %v2863 = vmul.f32 %v2861, 0.5
    %v2864 = vadd.f32 %v2862, 0.5
    %v2865 = vadd.f32 %v2863, 0.5
    %v2866 = vmul.f32 %v2854, %v2562
    %v2867 = vmul.f32 %v2855, %v2563
    %v2868 = vmul.f32 %v2846, %v2856
    %v2869 = vmul.f32 %v2847, %v2857
    %v2870 = vadd.f32 %v2866, %v2868
    %v2871 = vadd.f32 %v2867, %v2869
    %v2872 = vtanh.pop %v2870
    %v2873 = vtanh.pop %v2871
    %v2874 = vmul.f32 %v2864, %v2872
    %v2875 = vmul.f32 %v2865, %v2873
    %v2876 = vmul.f32 %v2832, 0.5
    %v2877 = vmul.f32 %v2836, 0.5
    %v2878 = vtanh.pop %v2876
    %v2879 = vtanh.pop %v2877
    %v2880 = vmul.f32 %v2878, 0.5
    %v2881 = vmul.f32 %v2879, 0.5
    %v2882 = vadd.f32 %v2880, 0.5
    %v2883 = vadd.f32 %v2881, 0.5
    %v2884 = vmul.f32 %v2833, 0.5
    %v2885 = vmul.f32 %v2837, 0.5
    %v2886 = vtanh.pop %v2884
    %v2887 = vtanh.pop %v2885
    %v2888 = vmul.f32 %v2886, 0.5
    %v2889 = vmul.f32 %v2887, 0.5
    %v2890 = vadd.f32 %v2888, 0.5
    %v2891 = vadd.f32 %v2889, 0.5
    %v2892 = vtanh.pop %v2834
    %v2893 = vtanh.pop %v2838
    %v2894 = vmul.f32 %v2835, 0.5
    %v2895 = vmul.f32 %v2839, 0.5
    %v2896 = vtanh.pop %v2894
    %v2897 = vtanh.pop %v2895
    %v2898 = vmul.f32 %v2896, 0.5
    %v2899 = vmul.f32 %v2897, 0.5
    %v2900 = vadd.f32 %v2898, 0.5
    %v2901 = vadd.f32 %v2899, 0.5
    %v2902 = vmul.f32 %v2890, %v2598
    %v2903 = vmul.f32 %v2891, %v2599
    %v2904 = vmul.f32 %v2882, %v2892
    %v2905 = vmul.f32 %v2883, %v2893
    %v2906 = vadd.f32 %v2902, %v2904
    %v2907 = vadd.f32 %v2903, %v2905
    %v2908 = vtanh.pop %v2906
    %v2909 = vtanh.pop %v2907
    %v2910 = vmul.f32 %v2900, %v2908
    %v2911 = vmul.f32 %v2901, %v2909
    %v2912 = vpack.c.bf16 %v2875, %v2874
    %v2914 = vunpack.c.l.b16 %v2912
    %v2915 = vunpack.c.h.b16 %v2912
    %v2916 = vpack.c.b16 %v2914, %v2914
    %v2917 = vpack.c.b16 %v2915, %v2915
    %s2920 = scalar_lea.vmem [#allocation4], 16
    %2921 = vst [vmem:[%s2920] sm:$0xf] %v2916
    %2922 = vst [vmem:[%s2920 + $0x4] sm:$0xf] %v2917
    %v2923 = vpack.c.bf16 %v2911, %v2910
    %v2925 = vunpack.c.l.b16 %v2923
    %v2926 = vunpack.c.h.b16 %v2923
    %v2927 = vpack.c.b16 %v2925, %v2925
    %v2928 = vpack.c.b16 %v2926, %v2926
    %s2931 = scalar_lea.vmem [#allocation5], 40
    %2932 = vst [vmem:[%s2931] sm:$0xf] %v2927
    %2933 = vst [vmem:[%s2931 + $0x4] sm:$0xf] %v2928
    %2934 = vmatprep.subr.bf16.mxu0 %v1813
    %2935 = vmatpush1.bf16.msra.mxu0 %v1812
    %2936 = vmatprep.subr.bf16.mxu0 %v1805
    %2937 = vmatpush1.bf16.msra.mxu0 %v1804
    %2938 = vmatprep.subr.bf16.mxu0 %v1797
    %2939 = vmatpush1.bf16.msra.mxu0 %v1796
    %2940 = vmatprep.subr.bf16.mxu0 %v1789
    %2941 = vmatpush1.bf16.msra.mxu0 %v1788
    %2942 = vmatprep.subr.bf16.mxu0 %v1781
    %2943 = vmatpush1.bf16.msra.mxu0 %v1780
    %2944 = vmatprep.subr.bf16.mxu0 %v1773
    %2945 = vmatpush1.bf16.msra.mxu0 %v1772
    %2946 = vmatprep.subr.bf16.mxu0 %v1765
    %2947 = vmatpush1.bf16.msra.mxu0 %v1764
    %2948 = vmatprep.subr.bf16.mxu0 %v1757
    %2949 = vmatpush1.bf16.msra.mxu0 %v1756
    %2950 = vmatprep.subr.bf16.mxu0 %v1877
    %2951 = vmatpush2.bf16.msra.mxu0 %v1876
    %2952 = vmatprep.subr.bf16.mxu0 %v1869
    %2953 = vmatpush2.bf16.msra.mxu0 %v1868
    %2954 = vmatprep.subr.bf16.mxu0 %v1861
    %2955 = vmatpush2.bf16.msra.mxu0 %v1860
    %2956 = vmatprep.subr.bf16.mxu0 %v1853
    %2957 = vmatpush2.bf16.msra.mxu0 %v1852
    %2958 = vmatprep.subr.bf16.mxu0 %v1845
    %2959 = vmatpush2.bf16.msra.mxu0 %v1844
    %2960 = vmatprep.subr.bf16.mxu0 %v1837
    %2961 = vmatpush2.bf16.msra.mxu0 %v1836
    %2962 = vmatprep.subr.bf16.mxu0 %v1829
    %2963 = vmatpush2.bf16.msra.mxu0 %v1828
    %2964 = vmatprep.subr.bf16.mxu0 %v1821
    %2965 = vmatpush2.bf16.msra.mxu0 %v1820
    %2966 = vmatprep.mubr.bf16.mxu0 %v2923
    %2967 = vmatmul.mubr.bf16.gmra.mxu0 %v2912
    %v2968 = vpop.f32.mrf.mxu0
    %v2969 = vadd.f32 0.0, %v2968
    %v2970 = vpop.f32.mrf.mxu0
    %v2971 = vadd.f32 0.0, %v2970
    %v2972 = vpop.f32.mrf.mxu0
    %v2973 = vadd.f32 0.0, %v2972
    %v2974 = vpop.f32.mrf.mxu0
    %v2975 = vadd.f32 0.0, %v2974
    %2976 = vdwg.mxu0
    %2977 = vmatprep.subr.bf16.mxu0 %v1815
    %2978 = vmatpush1.bf16.msra.mxu0 %v1814
    %2979 = vmatprep.subr.bf16.mxu0 %v1807
    %2980 = vmatpush1.bf16.msra.mxu0 %v1806
    %2981 = vmatprep.subr.bf16.mxu0 %v1799
    %2982 = vmatpush1.bf16.msra.mxu0 %v1798
    %2983 = vmatprep.subr.bf16.mxu0 %v1791
    %2984 = vmatpush1.bf16.msra.mxu0 %v1790
    %2985 = vmatprep.subr.bf16.mxu0 %v1783
    %2986 = vmatpush1.bf16.msra.mxu0 %v1782
    %2987 = vmatprep.subr.bf16.mxu0 %v1775
    %2988 = vmatpush1.bf16.msra.mxu0 %v1774
    %2989 = vmatprep.subr.bf16.mxu0 %v1767
    %2990 = vmatpush1.bf16.msra.mxu0 %v1766
    %2991 = vmatprep.subr.bf16.mxu0 %v1759
    %2992 = vmatpush1.bf16.msra.mxu0 %v1758
    %2993 = vmatprep.subr.bf16.mxu0 %v1879
    %2994 = vmatpush2.bf16.msra.mxu0 %v1878
    %2995 = vmatprep.subr.bf16.mxu0 %v1871
    %2996 = vmatpush2.bf16.msra.mxu0 %v1870
    %2997 = vmatprep.subr.bf16.mxu0 %v1863
    %2998 = vmatpush2.bf16.msra.mxu0 %v1862
    %2999 = vmatprep.subr.bf16.mxu0 %v1855
    %3000 = vmatpush2.bf16.msra.mxu0 %v1854
    %3001 = vmatprep.subr.bf16.mxu0 %v1847
    %3002 = vmatpush2.bf16.msra.mxu0 %v1846
    %3003 = vmatprep.subr.bf16.mxu0 %v1839
    %3004 = vmatpush2.bf16.msra.mxu0 %v1838
    %3005 = vmatprep.subr.bf16.mxu0 %v1831
    %3006 = vmatpush2.bf16.msra.mxu0 %v1830
    %3007 = vmatprep.subr.bf16.mxu0 %v1823
    %3008 = vmatpush2.bf16.msra.mxu0 %v1822
    %3009 = vmatprep.mubr.bf16.mxu0 %v2923
    %3010 = vmatmul.mubr.bf16.gmra.mxu0 %v2912
    %v3011 = vpop.f32.mrf.mxu0
    %v3012 = vadd.f32 0.0, %v3011
    %v3013 = vpop.f32.mrf.mxu0
    %v3014 = vadd.f32 0.0, %v3013
    %v3015 = vpop.f32.mrf.mxu0
    %v3016 = vadd.f32 0.0, %v3015
    %v3017 = vpop.f32.mrf.mxu0
    %v3018 = vadd.f32 0.0, %v3017
    %3019 = vdwg.mxu0
    %3020 = vmatprep.subr.bf16.mxu0 %v1817
    %3021 = vmatpush1.bf16.msra.mxu0 %v1816
    %3022 = vmatprep.subr.bf16.mxu0 %v1809
    %3023 = vmatpush1.bf16.msra.mxu0 %v1808
    %3024 = vmatprep.subr.bf16.mxu0 %v1801
    %3025 = vmatpush1.bf16.msra.mxu0 %v1800
    %3026 = vmatprep.subr.bf16.mxu0 %v1793
    %3027 = vmatpush1.bf16.msra.mxu0 %v1792
    %3028 = vmatprep.subr.bf16.mxu0 %v1785
    %3029 = vmatpush1.bf16.msra.mxu0 %v1784
    %3030 = vmatprep.subr.bf16.mxu0 %v1777
    %3031 = vmatpush1.bf16.msra.mxu0 %v1776
    %3032 = vmatprep.subr.bf16.mxu0 %v1769
    %3033 = vmatpush1.bf16.msra.mxu0 %v1768
    %3034 = vmatprep.subr.bf16.mxu0 %v1761
    %3035 = vmatpush1.bf16.msra.mxu0 %v1760
    %3036 = vmatprep.subr.bf16.mxu0 %v1881
    %3037 = vmatpush2.bf16.msra.mxu0 %v1880
    %3038 = vmatprep.subr.bf16.mxu0 %v1873
    %3039 = vmatpush2.bf16.msra.mxu0 %v1872
    %3040 = vmatprep.subr.bf16.mxu0 %v1865
    %3041 = vmatpush2.bf16.msra.mxu0 %v1864
    %3042 = vmatprep.subr.bf16.mxu0 %v1857
    %3043 = vmatpush2.bf16.msra.mxu0 %v1856
    %3044 = vmatprep.subr.bf16.mxu0 %v1849
    %3045 = vmatpush2.bf16.msra.mxu0 %v1848
    %3046 = vmatprep.subr.bf16.mxu0 %v1841
    %3047 = vmatpush2.bf16.msra.mxu0 %v1840
    %3048 = vmatprep.subr.bf16.mxu0 %v1833
    %3049 = vmatpush2.bf16.msra.mxu0 %v1832
    %3050 = vmatprep.subr.bf16.mxu0 %v1825
    %3051 = vmatpush2.bf16.msra.mxu0 %v1824
    %3052 = vmatprep.mubr.bf16.mxu0 %v2923
    %3053 = vmatmul.mubr.bf16.gmra.mxu0 %v2912
    %v3054 = vpop.f32.mrf.mxu0
    %v3055 = vadd.f32 0.0, %v3054
    %v3056 = vpop.f32.mrf.mxu0
    %v3057 = vadd.f32 0.0, %v3056
    %v3058 = vpop.f32.mrf.mxu0
    %v3059 = vadd.f32 0.0, %v3058
    %v3060 = vpop.f32.mrf.mxu0
    %v3061 = vadd.f32 0.0, %v3060
    %3062 = vdwg.mxu0
    %3063 = vmatprep.subr.bf16.mxu0 %v1819
    %3064 = vmatpush1.bf16.msra.mxu0 %v1818
    %3065 = vmatprep.subr.bf16.mxu0 %v1811
    %3066 = vmatpush1.bf16.msra.mxu0 %v1810
    %3067 = vmatprep.subr.bf16.mxu0 %v1803
    %3068 = vmatpush1.bf16.msra.mxu0 %v1802
    %3069 = vmatprep.subr.bf16.mxu0 %v1795
    %3070 = vmatpush1.bf16.msra.mxu0 %v1794
    %3071 = vmatprep.subr.bf16.mxu0 %v1787
    %3072 = vmatpush1.bf16.msra.mxu0 %v1786
    %3073 = vmatprep.subr.bf16.mxu0 %v1779
    %3074 = vmatpush1.bf16.msra.mxu0 %v1778
    %3075 = vmatprep.subr.bf16.mxu0 %v1771
    %3076 = vmatpush1.bf16.msra.mxu0 %v1770
    %3077 = vmatprep.subr.bf16.mxu0 %v1763
    %3078 = vmatpush1.bf16.msra.mxu0 %v1762
    %3079 = vmatprep.subr.bf16.mxu0 %v1883
    %3080 = vmatpush2.bf16.msra.mxu0 %v1882
    %3081 = vmatprep.subr.bf16.mxu0 %v1875
    %3082 = vmatpush2.bf16.msra.mxu0 %v1874
    %3083 = vmatprep.subr.bf16.mxu0 %v1867
    %3084 = vmatpush2.bf16.msra.mxu0 %v1866
    %3085 = vmatprep.subr.bf16.mxu0 %v1859
    %3086 = vmatpush2.bf16.msra.mxu0 %v1858
    %3087 = vmatprep.subr.bf16.mxu0 %v1851
    %3088 = vmatpush2.bf16.msra.mxu0 %v1850
    %3089 = vmatprep.subr.bf16.mxu0 %v1843
    %3090 = vmatpush2.bf16.msra.mxu0 %v1842
    %3091 = vmatprep.subr.bf16.mxu0 %v1835
    %3092 = vmatpush2.bf16.msra.mxu0 %v1834
    %3093 = vmatprep.subr.bf16.mxu0 %v1827
    %3094 = vmatpush2.bf16.msra.mxu0 %v1826
    %3095 = vmatprep.mubr.bf16.mxu0 %v2923
    %3096 = vmatmul.mubr.bf16.gmra.mxu0 %v2912
    %v3097 = vpop.f32.mrf.mxu0
    %v3098 = vadd.f32 0.0, %v3097
    %v3099 = vpop.f32.mrf.mxu0
    %v3100 = vadd.f32 0.0, %v3099
    %v3101 = vpop.f32.mrf.mxu0
    %v3102 = vadd.f32 0.0, %v3101
    %v3103 = vpop.f32.mrf.mxu0
    %v3104 = vadd.f32 0.0, %v3103
    %3105 = vdwg.mxu0
    %s3106 = scalar_lea.vmem [#allocation2], 96
    %v3107 = vld [vmem:[%s3106] sm:$0xff]
    %v3108 = vld [vmem:[%s3106 + $0x8] sm:$0xff]
    %v3109 = vld [vmem:[%s3106 + $0x10] sm:$0xff]
    %v3110 = vld [vmem:[%s3106 + $0x18] sm:$0xff]
    %v3111 = vunpack.c.l.bf16 %v3107
    %v3112 = vunpack.c.h.bf16 %v3107
    %v3113 = vunpack.c.l.bf16 %v3108
    %v3114 = vunpack.c.h.bf16 %v3108
    %v3115 = vunpack.c.l.bf16 %v3109
    %v3116 = vunpack.c.h.bf16 %v3109
    %v3117 = vunpack.c.l.bf16 %v3110
    %v3118 = vunpack.c.h.bf16 %v3110
    %v3119 = vadd.f32 %v3111, %v2969
    %v3120 = vadd.f32 %v3112, %v2971
    %v3121 = vadd.f32 %v3113, %v3012
    %v3122 = vadd.f32 %v3114, %v3014
    %v3123 = vadd.f32 %v3115, %v2973
    %v3124 = vadd.f32 %v3116, %v2975
    %v3125 = vadd.f32 %v3117, %v3016
    %v3126 = vadd.f32 %v3118, %v3018
    %s3127 = scalar_lea.vmem [#allocation3], 128
    %v3128 = vld [vmem:[%s3127] sm:$0xff]
    %v3129 = vld [vmem:[%s3127 + $0x8] sm:$0xff]
    %v3130 = vld [vmem:[%s3127 + $0x10] sm:$0xff]
    %v3131 = vld [vmem:[%s3127 + $0x18] sm:$0xff]
    %v3132 = vunpack.c.l.bf16 %v3128
    %v3133 = vunpack.c.h.bf16 %v3128
    %v3134 = vunpack.c.l.bf16 %v3129
    %v3135 = vunpack.c.h.bf16 %v3129
    %v3136 = vunpack.c.l.bf16 %v3130
    %v3137 = vunpack.c.h.bf16 %v3130
    %v3138 = vunpack.c.l.bf16 %v3131
    %v3139 = vunpack.c.h.bf16 %v3131
    %v3140 = vadd.f32 %v3132, %v3055
    %v3141 = vadd.f32 %v3133, %v3057
    %v3142 = vadd.f32 %v3134, %v3098
    %v3143 = vadd.f32 %v3135, %v3100
    %v3144 = vadd.f32 %v3136, %v3059
    %v3145 = vadd.f32 %v3137, %v3061
    %v3146 = vadd.f32 %v3138, %v3102
    %v3147 = vadd.f32 %v3139, %v3104
    %v3148 = vmul.f32 %v3119, 0.5
    %v3149 = vmul.f32 %v3123, 0.5
    %v3150 = vtanh.pop %v3148
    %v3151 = vtanh.pop %v3149
    %v3152 = vmul.f32 %v3150, 0.5
    %v3153 = vmul.f32 %v3151, 0.5
    %v3154 = vadd.f32 %v3152, 0.5
    %v3155 = vadd.f32 %v3153, 0.5
    %v3156 = vmul.f32 %v3120, 0.5
    %v3157 = vmul.f32 %v3124, 0.5
    %v3158 = vtanh.pop %v3156
    %v3159 = vtanh.pop %v3157
    %v3160 = vmul.f32 %v3158, 0.5
    %v3161 = vmul.f32 %v3159, 0.5
    %v3162 = vadd.f32 %v3160, 0.5
    %v3163 = vadd.f32 %v3161, 0.5
    %v3164 = vtanh.pop %v3121
    %v3165 = vtanh.pop %v3125
    %v3166 = vmul.f32 %v3122, 0.5
    %v3167 = vmul.f32 %v3126, 0.5
    %v3168 = vtanh.pop %v3166
    %v3169 = vtanh.pop %v3167
    %v3170 = vmul.f32 %v3168, 0.5
    %v3171 = vmul.f32 %v3169, 0.5
    %v3172 = vadd.f32 %v3170, 0.5
    %v3173 = vadd.f32 %v3171, 0.5
    %v3174 = vmul.f32 %v3162, %v2870
    %v3175 = vmul.f32 %v3163, %v2871
    %v3176 = vmul.f32 %v3154, %v3164
    %v3177 = vmul.f32 %v3155, %v3165
    %v3178 = vadd.f32 %v3174, %v3176
    %v3179 = vadd.f32 %v3175, %v3177
    %v3180 = vtanh.pop %v3178
    %v3181 = vtanh.pop %v3179
    %v3182 = vmul.f32 %v3172, %v3180
    %v3183 = vmul.f32 %v3173, %v3181
    %v3184 = vmul.f32 %v3140, 0.5
    %v3185 = vmul.f32 %v3144, 0.5
    %v3186 = vtanh.pop %v3184
    %v3187 = vtanh.pop %v3185
    %v3188 = vmul.f32 %v3186, 0.5
    %v3189 = vmul.f32 %v3187, 0.5
    %v3190 = vadd.f32 %v3188, 0.5
    %v3191 = vadd.f32 %v3189, 0.5
    %v3192 = vmul.f32 %v3141, 0.5
    %v3193 = vmul.f32 %v3145, 0.5
    %v3194 = vtanh.pop %v3192
    %v3195 = vtanh.pop %v3193
    %v3196 = vmul.f32 %v3194, 0.5
    %v3197 = vmul.f32 %v3195, 0.5
    %v3198 = vadd.f32 %v3196, 0.5
    %v3199 = vadd.f32 %v3197, 0.5
    %v3200 = vtanh.pop %v3142
    %v3201 = vtanh.pop %v3146
    %v3202 = vmul.f32 %v3143, 0.5
    %v3203 = vmul.f32 %v3147, 0.5
    %v3204 = vtanh.pop %v3202
    %v3205 = vtanh.pop %v3203
    %v3206 = vmul.f32 %v3204, 0.5
    %v3207 = vmul.f32 %v3205, 0.5
    %v3208 = vadd.f32 %v3206, 0.5
    %v3209 = vadd.f32 %v3207, 0.5
    %v3210 = vmul.f32 %v3198, %v2906
    %v3211 = vmul.f32 %v3199, %v2907
    %v3212 = vmul.f32 %v3190, %v3200
    %v3213 = vmul.f32 %v3191, %v3201
    %v3214 = vadd.f32 %v3210, %v3212
    %v3215 = vadd.f32 %v3211, %v3213
    %v3216 = vtanh.pop %v3214
    %v3217 = vtanh.pop %v3215
    %v3218 = vmul.f32 %v3208, %v3216
    %v3219 = vmul.f32 %v3209, %v3217
    %v3220 = vpack.c.bf16 %v3183, %v3182
    %v3222 = vunpack.c.l.b16 %v3220
    %v3223 = vunpack.c.h.b16 %v3220
    %v3224 = vpack.c.b16 %v3222, %v3222
    %v3225 = vpack.c.b16 %v3223, %v3223
    %s3228 = scalar_lea.vmem [#allocation4], 24
    %3229 = vst [vmem:[%s3228] sm:$0xf] %v3224
    %3230 = vst [vmem:[%s3228 + $0x4] sm:$0xf] %v3225
    %v3231 = vpack.c.bf16 %v3219, %v3218
    %v3233 = vunpack.c.l.b16 %v3231
    %v3234 = vunpack.c.h.b16 %v3231
    %v3235 = vpack.c.b16 %v3233, %v3233
    %v3236 = vpack.c.b16 %v3234, %v3234
    %s3239 = scalar_lea.vmem [#allocation5], 32
    %3240 = vst [vmem:[%s3239] sm:$0xf] %v3235
    %3241 = vst [vmem:[%s3239 + $0x4] sm:$0xf] %v3236
    %3242 = vmatprep.subr.bf16.mxu0 %v1813
    %3243 = vmatpush1.bf16.msra.mxu0 %v1812
    %3244 = vmatprep.subr.bf16.mxu0 %v1805
    %3245 = vmatpush1.bf16.msra.mxu0 %v1804
    %3246 = vmatprep.subr.bf16.mxu0 %v1797
    %3247 = vmatpush1.bf16.msra.mxu0 %v1796
    %3248 = vmatprep.subr.bf16.mxu0 %v1789
    %3249 = vmatpush1.bf16.msra.mxu0 %v1788
    %3250 = vmatprep.subr.bf16.mxu0 %v1781
    %3251 = vmatpush1.bf16.msra.mxu0 %v1780
    %3252 = vmatprep.subr.bf16.mxu0 %v1773
    %3253 = vmatpush1.bf16.msra.mxu0 %v1772
    %3254 = vmatprep.subr.bf16.mxu0 %v1765
    %3255 = vmatpush1.bf16.msra.mxu0 %v1764
    %3256 = vmatprep.subr.bf16.mxu0 %v1757
    %3257 = vmatpush1.bf16.msra.mxu0 %v1756
    %3258 = vmatprep.subr.bf16.mxu0 %v1877
    %3259 = vmatpush2.bf16.msra.mxu0 %v1876
    %3260 = vmatprep.subr.bf16.mxu0 %v1869
    %3261 = vmatpush2.bf16.msra.mxu0 %v1868
    %3262 = vmatprep.subr.bf16.mxu0 %v1861
    %3263 = vmatpush2.bf16.msra.mxu0 %v1860
    %3264 = vmatprep.subr.bf16.mxu0 %v1853
    %3265 = vmatpush2.bf16.msra.mxu0 %v1852
    %3266 = vmatprep.subr.bf16.mxu0 %v1845
    %3267 = vmatpush2.bf16.msra.mxu0 %v1844
    %3268 = vmatprep.subr.bf16.mxu0 %v1837
    %3269 = vmatpush2.bf16.msra.mxu0 %v1836
    %3270 = vmatprep.subr.bf16.mxu0 %v1829
    %3271 = vmatpush2.bf16.msra.mxu0 %v1828
    %3272 = vmatprep.subr.bf16.mxu0 %v1821
    %3273 = vmatpush2.bf16.msra.mxu0 %v1820
    %3274 = vmatprep.mubr.bf16.mxu0 %v3231
    %3275 = vmatmul.mubr.bf16.gmra.mxu0 %v3220
    %v3276 = vpop.f32.mrf.mxu0
    %v3277 = vadd.f32 0.0, %v3276
    %v3278 = vpop.f32.mrf.mxu0
    %v3279 = vadd.f32 0.0, %v3278
    %v3280 = vpop.f32.mrf.mxu0
    %v3281 = vadd.f32 0.0, %v3280
    %v3282 = vpop.f32.mrf.mxu0
    %v3283 = vadd.f32 0.0, %v3282
    %3284 = vdwg.mxu0
    %3285 = vmatprep.subr.bf16.mxu0 %v1815
    %3286 = vmatpush1.bf16.msra.mxu0 %v1814
    %3287 = vmatprep.subr.bf16.mxu0 %v1807
    %3288 = vmatpush1.bf16.msra.mxu0 %v1806
    %3289 = vmatprep.subr.bf16.mxu0 %v1799
    %3290 = vmatpush1.bf16.msra.mxu0 %v1798
    %3291 = vmatprep.subr.bf16.mxu0 %v1791
    %3292 = vmatpush1.bf16.msra.mxu0 %v1790
    %3293 = vmatprep.subr.bf16.mxu0 %v1783
    %3294 = vmatpush1.bf16.msra.mxu0 %v1782
    %3295 = vmatprep.subr.bf16.mxu0 %v1775
    %3296 = vmatpush1.bf16.msra.mxu0 %v1774
    %3297 = vmatprep.subr.bf16.mxu0 %v1767
    %3298 = vmatpush1.bf16.msra.mxu0 %v1766
    %3299 = vmatprep.subr.bf16.mxu0 %v1759
    %3300 = vmatpush1.bf16.msra.mxu0 %v1758
    %3301 = vmatprep.subr.bf16.mxu0 %v1879
    %3302 = vmatpush2.bf16.msra.mxu0 %v1878
    %3303 = vmatprep.subr.bf16.mxu0 %v1871
    %3304 = vmatpush2.bf16.msra.mxu0 %v1870
    %3305 = vmatprep.subr.bf16.mxu0 %v1863
    %3306 = vmatpush2.bf16.msra.mxu0 %v1862
    %3307 = vmatprep.subr.bf16.mxu0 %v1855
    %3308 = vmatpush2.bf16.msra.mxu0 %v1854
    %3309 = vmatprep.subr.bf16.mxu0 %v1847
    %3310 = vmatpush2.bf16.msra.mxu0 %v1846
    %3311 = vmatprep.subr.bf16.mxu0 %v1839
    %3312 = vmatpush2.bf16.msra.mxu0 %v1838
    %3313 = vmatprep.subr.bf16.mxu0 %v1831
    %3314 = vmatpush2.bf16.msra.mxu0 %v1830
    %3315 = vmatprep.subr.bf16.mxu0 %v1823
    %3316 = vmatpush2.bf16.msra.mxu0 %v1822
    %3317 = vmatprep.mubr.bf16.mxu0 %v3231
    %3318 = vmatmul.mubr.bf16.gmra.mxu0 %v3220
    %v3319 = vpop.f32.mrf.mxu0
    %v3320 = vadd.f32 0.0, %v3319
    %v3321 = vpop.f32.mrf.mxu0
    %v3322 = vadd.f32 0.0, %v3321
    %v3323 = vpop.f32.mrf.mxu0
    %v3324 = vadd.f32 0.0, %v3323
    %v3325 = vpop.f32.mrf.mxu0
    %v3326 = vadd.f32 0.0, %v3325
    %3327 = vdwg.mxu0
    %3328 = vmatprep.subr.bf16.mxu0 %v1817
    %3329 = vmatpush1.bf16.msra.mxu0 %v1816
    %3330 = vmatprep.subr.bf16.mxu0 %v1809
    %3331 = vmatpush1.bf16.msra.mxu0 %v1808
    %3332 = vmatprep.subr.bf16.mxu0 %v1801
    %3333 = vmatpush1.bf16.msra.mxu0 %v1800
    %3334 = vmatprep.subr.bf16.mxu0 %v1793
    %3335 = vmatpush1.bf16.msra.mxu0 %v1792
    %3336 = vmatprep.subr.bf16.mxu0 %v1785
    %3337 = vmatpush1.bf16.msra.mxu0 %v1784
    %3338 = vmatprep.subr.bf16.mxu0 %v1777
    %3339 = vmatpush1.bf16.msra.mxu0 %v1776
    %3340 = vmatprep.subr.bf16.mxu0 %v1769
    %3341 = vmatpush1.bf16.msra.mxu0 %v1768
    %3342 = vmatprep.subr.bf16.mxu0 %v1761
    %3343 = vmatpush1.bf16.msra.mxu0 %v1760
    %3344 = vmatprep.subr.bf16.mxu0 %v1881
    %3345 = vmatpush2.bf16.msra.mxu0 %v1880
    %3346 = vmatprep.subr.bf16.mxu0 %v1873
    %3347 = vmatpush2.bf16.msra.mxu0 %v1872
    %3348 = vmatprep.subr.bf16.mxu0 %v1865
    %3349 = vmatpush2.bf16.msra.mxu0 %v1864
    %3350 = vmatprep.subr.bf16.mxu0 %v1857
    %3351 = vmatpush2.bf16.msra.mxu0 %v1856
    %3352 = vmatprep.subr.bf16.mxu0 %v1849
    %3353 = vmatpush2.bf16.msra.mxu0 %v1848
    %3354 = vmatprep.subr.bf16.mxu0 %v1841
    %3355 = vmatpush2.bf16.msra.mxu0 %v1840
    %3356 = vmatprep.subr.bf16.mxu0 %v1833
    %3357 = vmatpush2.bf16.msra.mxu0 %v1832
    %3358 = vmatprep.subr.bf16.mxu0 %v1825
    %3359 = vmatpush2.bf16.msra.mxu0 %v1824
    %3360 = vmatprep.mubr.bf16.mxu0 %v3231
    %3361 = vmatmul.mubr.bf16.gmra.mxu0 %v3220
    %v3362 = vpop.f32.mrf.mxu0
    %v3363 = vadd.f32 0.0, %v3362
    %v3364 = vpop.f32.mrf.mxu0
    %v3365 = vadd.f32 0.0, %v3364
    %v3366 = vpop.f32.mrf.mxu0
    %v3367 = vadd.f32 0.0, %v3366
    %v3368 = vpop.f32.mrf.mxu0
    %v3369 = vadd.f32 0.0, %v3368
    %3370 = vdwg.mxu0
    %3371 = vmatprep.subr.bf16.mxu0 %v1819
    %3372 = vmatpush1.bf16.msra.mxu0 %v1818
    %3373 = vmatprep.subr.bf16.mxu0 %v1811
    %3374 = vmatpush1.bf16.msra.mxu0 %v1810
    %3375 = vmatprep.subr.bf16.mxu0 %v1803
    %3376 = vmatpush1.bf16.msra.mxu0 %v1802
    %3377 = vmatprep.subr.bf16.mxu0 %v1795
    %3378 = vmatpush1.bf16.msra.mxu0 %v1794
    %3379 = vmatprep.subr.bf16.mxu0 %v1787
    %3380 = vmatpush1.bf16.msra.mxu0 %v1786
    %3381 = vmatprep.subr.bf16.mxu0 %v1779
    %3382 = vmatpush1.bf16.msra.mxu0 %v1778
    %3383 = vmatprep.subr.bf16.mxu0 %v1771
    %3384 = vmatpush1.bf16.msra.mxu0 %v1770
    %3385 = vmatprep.subr.bf16.mxu0 %v1763
    %3386 = vmatpush1.bf16.msra.mxu0 %v1762
    %3387 = vmatprep.subr.bf16.mxu0 %v1883
    %3388 = vmatpush2.bf16.msra.mxu0 %v1882
    %3389 = vmatprep.subr.bf16.mxu0 %v1875
    %3390 = vmatpush2.bf16.msra.mxu0 %v1874
    %3391 = vmatprep.subr.bf16.mxu0 %v1867
    %3392 = vmatpush2.bf16.msra.mxu0 %v1866
    %3393 = vmatprep.subr.bf16.mxu0 %v1859
    %3394 = vmatpush2.bf16.msra.mxu0 %v1858
    %3395 = vmatprep.subr.bf16.mxu0 %v1851
    %3396 = vmatpush2.bf16.msra.mxu0 %v1850
    %3397 = vmatprep.subr.bf16.mxu0 %v1843
    %3398 = vmatpush2.bf16.msra.mxu0 %v1842
    %3399 = vmatprep.subr.bf16.mxu0 %v1835
    %3400 = vmatpush2.bf16.msra.mxu0 %v1834
    %3401 = vmatprep.subr.bf16.mxu0 %v1827
    %3402 = vmatpush2.bf16.msra.mxu0 %v1826
    %3403 = vmatprep.mubr.bf16.mxu0 %v3231
    %3404 = vmatmul.mubr.bf16.gmra.mxu0 %v3220
    %v3405 = vpop.f32.mrf.mxu0
    %v3406 = vadd.f32 0.0, %v3405
    %v3407 = vpop.f32.mrf.mxu0
    %v3408 = vadd.f32 0.0, %v3407
    %v3409 = vpop.f32.mrf.mxu0
    %v3410 = vadd.f32 0.0, %v3409
    %v3411 = vpop.f32.mrf.mxu0
    %v3412 = vadd.f32 0.0, %v3411
    %3413 = vdwg.mxu0
    %s3414 = scalar_lea.vmem [#allocation2], 128
    %v3415 = vld [vmem:[%s3414] sm:$0xff]
    %v3416 = vld [vmem:[%s3414 + $0x8] sm:$0xff]
    %v3417 = vld [vmem:[%s3414 + $0x10] sm:$0xff]
    %v3418 = vld [vmem:[%s3414 + $0x18] sm:$0xff]
    %v3419 = vunpack.c.l.bf16 %v3415
    %v3420 = vunpack.c.h.bf16 %v3415
    %v3421 = vunpack.c.l.bf16 %v3416
    %v3422 = vunpack.c.h.bf16 %v3416
    %v3423 = vunpack.c.l.bf16 %v3417
    %v3424 = vunpack.c.h.bf16 %v3417
    %v3425 = vunpack.c.l.bf16 %v3418
    %v3426 = vunpack.c.h.bf16 %v3418
    %v3427 = vadd.f32 %v3419, %v3277
    %v3428 = vadd.f32 %v3420, %v3279
    %v3429 = vadd.f32 %v3421, %v3320
    %v3430 = vadd.f32 %v3422, %v3322
    %v3431 = vadd.f32 %v3423, %v3281
    %v3432 = vadd.f32 %v3424, %v3283
    %v3433 = vadd.f32 %v3425, %v3324
    %v3434 = vadd.f32 %v3426, %v3326
    %s3435 = scalar_lea.vmem [#allocation3], 96
    %v3436 = vld [vmem:[%s3435] sm:$0xff]
    %v3437 = vld [vmem:[%s3435 + $0x8] sm:$0xff]
    %v3438 = vld [vmem:[%s3435 + $0x10] sm:$0xff]
    %v3439 = vld [vmem:[%s3435 + $0x18] sm:$0xff]
    %v3440 = vunpack.c.l.bf16 %v3436
    %v3441 = vunpack.c.h.bf16 %v3436
    %v3442 = vunpack.c.l.bf16 %v3437
    %v3443 = vunpack.c.h.bf16 %v3437
    %v3444 = vunpack.c.l.bf16 %v3438
    %v3445 = vunpack.c.h.bf16 %v3438
    %v3446 = vunpack.c.l.bf16 %v3439
    %v3447 = vunpack.c.h.bf16 %v3439
    %v3448 = vadd.f32 %v3440, %v3363
    %v3449 = vadd.f32 %v3441, %v3365
    %v3450 = vadd.f32 %v3442, %v3406
    %v3451 = vadd.f32 %v3443, %v3408
    %v3452 = vadd.f32 %v3444, %v3367
    %v3453 = vadd.f32 %v3445, %v3369
    %v3454 = vadd.f32 %v3446, %v3410
    %v3455 = vadd.f32 %v3447, %v3412
    %v3456 = vmul.f32 %v3427, 0.5
    %v3457 = vmul.f32 %v3431, 0.5
    %v3458 = vtanh.pop %v3456
    %v3459 = vtanh.pop %v3457
    %v3460 = vmul.f32 %v3458, 0.5
    %v3461 = vmul.f32 %v3459, 0.5
    %v3462 = vadd.f32 %v3460, 0.5
    %v3463 = vadd.f32 %v3461, 0.5
    %v3464 = vmul.f32 %v3428, 0.5
    %v3465 = vmul.f32 %v3432, 0.5
    %v3466 = vtanh.pop %v3464
    %v3467 = vtanh.pop %v3465
    %v3468 = vmul.f32 %v3466, 0.5
    %v3469 = vmul.f32 %v3467, 0.5
    %v3470 = vadd.f32 %v3468, 0.5
    %v3471 = vadd.f32 %v3469, 0.5
    %v3472 = vtanh.pop %v3429
    %v3473 = vtanh.pop %v3433
    %v3474 = vmul.f32 %v3430, 0.5
    %v3475 = vmul.f32 %v3434, 0.5
    %v3476 = vtanh.pop %v3474
    %v3477 = vtanh.pop %v3475
    %v3478 = vmul.f32 %v3476, 0.5
    %v3479 = vmul.f32 %v3477, 0.5
    %v3480 = vadd.f32 %v3478, 0.5
    %v3481 = vadd.f32 %v3479, 0.5
    %v3482 = vmul.f32 %v3470, %v3178
    %v3483 = vmul.f32 %v3471, %v3179
    %v3484 = vmul.f32 %v3462, %v3472
    %v3485 = vmul.f32 %v3463, %v3473
    %v3486 = vadd.f32 %v3482, %v3484
    %v3487 = vadd.f32 %v3483, %v3485
    %v3488 = vtanh.pop %v3486
    %v3489 = vtanh.pop %v3487
    %v3490 = vmul.f32 %v3480, %v3488
    %v3491 = vmul.f32 %v3481, %v3489
    %v3492 = vmul.f32 %v3448, 0.5
    %v3493 = vmul.f32 %v3452, 0.5
    %v3494 = vtanh.pop %v3492
    %v3495 = vtanh.pop %v3493
    %v3496 = vmul.f32 %v3494, 0.5
    %v3497 = vmul.f32 %v3495, 0.5
    %v3498 = vadd.f32 %v3496, 0.5
    %v3499 = vadd.f32 %v3497, 0.5
    %v3500 = vmul.f32 %v3449, 0.5
    %v3501 = vmul.f32 %v3453, 0.5
    %v3502 = vtanh.pop %v3500
    %v3503 = vtanh.pop %v3501
    %v3504 = vmul.f32 %v3502, 0.5
    %v3505 = vmul.f32 %v3503, 0.5
    %v3506 = vadd.f32 %v3504, 0.5
    %v3507 = vadd.f32 %v3505, 0.5
    %v3508 = vtanh.pop %v3450
    %v3509 = vtanh.pop %v3454
    %v3510 = vmul.f32 %v3451, 0.5
    %v3511 = vmul.f32 %v3455, 0.5
    %v3512 = vtanh.pop %v3510
    %v3513 = vtanh.pop %v3511
    %v3514 = vmul.f32 %v3512, 0.5
    %v3515 = vmul.f32 %v3513, 0.5
    %v3516 = vadd.f32 %v3514, 0.5
    %v3517 = vadd.f32 %v3515, 0.5
    %v3518 = vmul.f32 %v3506, %v3214
    %v3519 = vmul.f32 %v3507, %v3215
    %v3520 = vmul.f32 %v3498, %v3508
    %v3521 = vmul.f32 %v3499, %v3509
    %v3522 = vadd.f32 %v3518, %v3520
    %v3523 = vadd.f32 %v3519, %v3521
    %v3524 = vtanh.pop %v3522
    %v3525 = vtanh.pop %v3523
    %v3526 = vmul.f32 %v3516, %v3524
    %v3527 = vmul.f32 %v3517, %v3525
    %v3528 = vpack.c.bf16 %v3491, %v3490
    %v3530 = vunpack.c.l.b16 %v3528
    %v3531 = vunpack.c.h.b16 %v3528
    %v3532 = vpack.c.b16 %v3530, %v3530
    %v3533 = vpack.c.b16 %v3531, %v3531
    %s3536 = scalar_lea.vmem [#allocation4], 32
    %3537 = vst [vmem:[%s3536] sm:$0xf] %v3532
    %3538 = vst [vmem:[%s3536 + $0x4] sm:$0xf] %v3533
    %v3539 = vpack.c.bf16 %v3527, %v3526
    %v3541 = vunpack.c.l.b16 %v3539
    %v3542 = vunpack.c.h.b16 %v3539
    %v3543 = vpack.c.b16 %v3541, %v3541
    %v3544 = vpack.c.b16 %v3542, %v3542
    %s3547 = scalar_lea.vmem [#allocation5], 24
    %3548 = vst [vmem:[%s3547] sm:$0xf] %v3543
    %3549 = vst [vmem:[%s3547 + $0x4] sm:$0xf] %v3544
    %3550 = vmatprep.subr.bf16.mxu0 %v1813
    %3551 = vmatpush1.bf16.msra.mxu0 %v1812
    %3552 = vmatprep.subr.bf16.mxu0 %v1805
    %3553 = vmatpush1.bf16.msra.mxu0 %v1804
    %3554 = vmatprep.subr.bf16.mxu0 %v1797
    %3555 = vmatpush1.bf16.msra.mxu0 %v1796
    %3556 = vmatprep.subr.bf16.mxu0 %v1789
    %3557 = vmatpush1.bf16.msra.mxu0 %v1788
    %3558 = vmatprep.subr.bf16.mxu0 %v1781
    %3559 = vmatpush1.bf16.msra.mxu0 %v1780
    %3560 = vmatprep.subr.bf16.mxu0 %v1773
    %3561 = vmatpush1.bf16.msra.mxu0 %v1772
    %3562 = vmatprep.subr.bf16.mxu0 %v1765
    %3563 = vmatpush1.bf16.msra.mxu0 %v1764
    %3564 = vmatprep.subr.bf16.mxu0 %v1757
    %3565 = vmatpush1.bf16.msra.mxu0 %v1756
    %3566 = vmatprep.subr.bf16.mxu0 %v1877
    %3567 = vmatpush2.bf16.msra.mxu0 %v1876
    %3568 = vmatprep.subr.bf16.mxu0 %v1869
    %3569 = vmatpush2.bf16.msra.mxu0 %v1868
    %3570 = vmatprep.subr.bf16.mxu0 %v1861
    %3571 = vmatpush2.bf16.msra.mxu0 %v1860
    %3572 = vmatprep.subr.bf16.mxu0 %v1853
    %3573 = vmatpush2.bf16.msra.mxu0 %v1852
    %3574 = vmatprep.subr.bf16.mxu0 %v1845
    %3575 = vmatpush2.bf16.msra.mxu0 %v1844
    %3576 = vmatprep.subr.bf16.mxu0 %v1837
    %3577 = vmatpush2.bf16.msra.mxu0 %v1836
    %3578 = vmatprep.subr.bf16.mxu0 %v1829
    %3579 = vmatpush2.bf16.msra.mxu0 %v1828
    %3580 = vmatprep.subr.bf16.mxu0 %v1821
    %3581 = vmatpush2.bf16.msra.mxu0 %v1820
    %3582 = vmatprep.mubr.bf16.mxu0 %v3539
    %3583 = vmatmul.mubr.bf16.gmra.mxu0 %v3528
    %v3584 = vpop.f32.mrf.mxu0
    %v3585 = vadd.f32 0.0, %v3584
    %v3586 = vpop.f32.mrf.mxu0
    %v3587 = vadd.f32 0.0, %v3586
    %v3588 = vpop.f32.mrf.mxu0
    %v3589 = vadd.f32 0.0, %v3588
    %v3590 = vpop.f32.mrf.mxu0
    %v3591 = vadd.f32 0.0, %v3590
    %3592 = vdwg.mxu0
    %3593 = vmatprep.subr.bf16.mxu0 %v1815
    %3594 = vmatpush1.bf16.msra.mxu0 %v1814
    %3595 = vmatprep.subr.bf16.mxu0 %v1807
    %3596 = vmatpush1.bf16.msra.mxu0 %v1806
    %3597 = vmatprep.subr.bf16.mxu0 %v1799
    %3598 = vmatpush1.bf16.msra.mxu0 %v1798
    %3599 = vmatprep.subr.bf16.mxu0 %v1791
    %3600 = vmatpush1.bf16.msra.mxu0 %v1790
    %3601 = vmatprep.subr.bf16.mxu0 %v1783
    %3602 = vmatpush1.bf16.msra.mxu0 %v1782
    %3603 = vmatprep.subr.bf16.mxu0 %v1775
    %3604 = vmatpush1.bf16.msra.mxu0 %v1774
    %3605 = vmatprep.subr.bf16.mxu0 %v1767
    %3606 = vmatpush1.bf16.msra.mxu0 %v1766
    %3607 = vmatprep.subr.bf16.mxu0 %v1759
    %3608 = vmatpush1.bf16.msra.mxu0 %v1758
    %3609 = vmatprep.subr.bf16.mxu0 %v1879
    %3610 = vmatpush2.bf16.msra.mxu0 %v1878
    %3611 = vmatprep.subr.bf16.mxu0 %v1871
    %3612 = vmatpush2.bf16.msra.mxu0 %v1870
    %3613 = vmatprep.subr.bf16.mxu0 %v1863
    %3614 = vmatpush2.bf16.msra.mxu0 %v1862
    %3615 = vmatprep.subr.bf16.mxu0 %v1855
    %3616 = vmatpush2.bf16.msra.mxu0 %v1854
    %3617 = vmatprep.subr.bf16.mxu0 %v1847
    %3618 = vmatpush2.bf16.msra.mxu0 %v1846
    %3619 = vmatprep.subr.bf16.mxu0 %v1839
    %3620 = vmatpush2.bf16.msra.mxu0 %v1838
    %3621 = vmatprep.subr.bf16.mxu0 %v1831
    %3622 = vmatpush2.bf16.msra.mxu0 %v1830
    %3623 = vmatprep.subr.bf16.mxu0 %v1823
    %3624 = vmatpush2.bf16.msra.mxu0 %v1822
    %3625 = vmatprep.mubr.bf16.mxu0 %v3539
    %3626 = vmatmul.mubr.bf16.gmra.mxu0 %v3528
    %v3627 = vpop.f32.mrf.mxu0
    %v3628 = vadd.f32 0.0, %v3627
    %v3629 = vpop.f32.mrf.mxu0
    %v3630 = vadd.f32 0.0, %v3629
    %v3631 = vpop.f32.mrf.mxu0
    %v3632 = vadd.f32 0.0, %v3631
    %v3633 = vpop.f32.mrf.mxu0
    %v3634 = vadd.f32 0.0, %v3633
    %3635 = vdwg.mxu0
    %3636 = vmatprep.subr.bf16.mxu0 %v1817
    %3637 = vmatpush1.bf16.msra.mxu0 %v1816
    %3638 = vmatprep.subr.bf16.mxu0 %v1809
    %3639 = vmatpush1.bf16.msra.mxu0 %v1808
    %3640 = vmatprep.subr.bf16.mxu0 %v1801
    %3641 = vmatpush1.bf16.msra.mxu0 %v1800
    %3642 = vmatprep.subr.bf16.mxu0 %v1793
    %3643 = vmatpush1.bf16.msra.mxu0 %v1792
    %3644 = vmatprep.subr.bf16.mxu0 %v1785
    %3645 = vmatpush1.bf16.msra.mxu0 %v1784
    %3646 = vmatprep.subr.bf16.mxu0 %v1777
    %3647 = vmatpush1.bf16.msra.mxu0 %v1776
    %3648 = vmatprep.subr.bf16.mxu0 %v1769
    %3649 = vmatpush1.bf16.msra.mxu0 %v1768
    %3650 = vmatprep.subr.bf16.mxu0 %v1761
    %3651 = vmatpush1.bf16.msra.mxu0 %v1760
    %3652 = vmatprep.subr.bf16.mxu0 %v1881
    %3653 = vmatpush2.bf16.msra.mxu0 %v1880
    %3654 = vmatprep.subr.bf16.mxu0 %v1873
    %3655 = vmatpush2.bf16.msra.mxu0 %v1872
    %3656 = vmatprep.subr.bf16.mxu0 %v1865
    %3657 = vmatpush2.bf16.msra.mxu0 %v1864
    %3658 = vmatprep.subr.bf16.mxu0 %v1857
    %3659 = vmatpush2.bf16.msra.mxu0 %v1856
    %3660 = vmatprep.subr.bf16.mxu0 %v1849
    %3661 = vmatpush2.bf16.msra.mxu0 %v1848
    %3662 = vmatprep.subr.bf16.mxu0 %v1841
    %3663 = vmatpush2.bf16.msra.mxu0 %v1840
    %3664 = vmatprep.subr.bf16.mxu0 %v1833
    %3665 = vmatpush2.bf16.msra.mxu0 %v1832
    %3666 = vmatprep.subr.bf16.mxu0 %v1825
    %3667 = vmatpush2.bf16.msra.mxu0 %v1824
    %3668 = vmatprep.mubr.bf16.mxu0 %v3539
    %3669 = vmatmul.mubr.bf16.gmra.mxu0 %v3528
    %v3670 = vpop.f32.mrf.mxu0
    %v3671 = vadd.f32 0.0, %v3670
    %v3672 = vpop.f32.mrf.mxu0
    %v3673 = vadd.f32 0.0, %v3672
    %v3674 = vpop.f32.mrf.mxu0
    %v3675 = vadd.f32 0.0, %v3674
    %v3676 = vpop.f32.mrf.mxu0
    %v3677 = vadd.f32 0.0, %v3676
    %3678 = vdwg.mxu0
    %3679 = vmatprep.subr.bf16.mxu0 %v1819
    %3680 = vmatpush1.bf16.msra.mxu0 %v1818
    %3681 = vmatprep.subr.bf16.mxu0 %v1811
    %3682 = vmatpush1.bf16.msra.mxu0 %v1810
    %3683 = vmatprep.subr.bf16.mxu0 %v1803
    %3684 = vmatpush1.bf16.msra.mxu0 %v1802
    %3685 = vmatprep.subr.bf16.mxu0 %v1795
    %3686 = vmatpush1.bf16.msra.mxu0 %v1794
    %3687 = vmatprep.subr.bf16.mxu0 %v1787
    %3688 = vmatpush1.bf16.msra.mxu0 %v1786
    %3689 = vmatprep.subr.bf16.mxu0 %v1779
    %3690 = vmatpush1.bf16.msra.mxu0 %v1778
    %3691 = vmatprep.subr.bf16.mxu0 %v1771
    %3692 = vmatpush1.bf16.msra.mxu0 %v1770
    %3693 = vmatprep.subr.bf16.mxu0 %v1763
    %3694 = vmatpush1.bf16.msra.mxu0 %v1762
    %3695 = vmatprep.subr.bf16.mxu0 %v1883
    %3696 = vmatpush2.bf16.msra.mxu0 %v1882
    %3697 = vmatprep.subr.bf16.mxu0 %v1875
    %3698 = vmatpush2.bf16.msra.mxu0 %v1874
    %3699 = vmatprep.subr.bf16.mxu0 %v1867
    %3700 = vmatpush2.bf16.msra.mxu0 %v1866
    %3701 = vmatprep.subr.bf16.mxu0 %v1859
    %3702 = vmatpush2.bf16.msra.mxu0 %v1858
    %3703 = vmatprep.subr.bf16.mxu0 %v1851
    %3704 = vmatpush2.bf16.msra.mxu0 %v1850
    %3705 = vmatprep.subr.bf16.mxu0 %v1843
    %3706 = vmatpush2.bf16.msra.mxu0 %v1842
    %3707 = vmatprep.subr.bf16.mxu0 %v1835
    %3708 = vmatpush2.bf16.msra.mxu0 %v1834
    %3709 = vmatprep.subr.bf16.mxu0 %v1827
    %3710 = vmatpush2.bf16.msra.mxu0 %v1826
    %3711 = vmatprep.mubr.bf16.mxu0 %v3539
    %3712 = vmatmul.mubr.bf16.gmra.mxu0 %v3528
    %v3713 = vpop.f32.mrf.mxu0
    %v3714 = vadd.f32 0.0, %v3713
    %v3715 = vpop.f32.mrf.mxu0
    %v3716 = vadd.f32 0.0, %v3715
    %v3717 = vpop.f32.mrf.mxu0
    %v3718 = vadd.f32 0.0, %v3717
    %v3719 = vpop.f32.mrf.mxu0
    %v3720 = vadd.f32 0.0, %v3719
    %3721 = vdwg.mxu0
    %s3722 = scalar_lea.vmem [#allocation2], 160
    %v3723 = vld [vmem:[%s3722] sm:$0xff]
    %v3724 = vld [vmem:[%s3722 + $0x8] sm:$0xff]
    %v3725 = vld [vmem:[%s3722 + $0x10] sm:$0xff]
    %v3726 = vld [vmem:[%s3722 + $0x18] sm:$0xff]
    %v3727 = vunpack.c.l.bf16 %v3723
    %v3728 = vunpack.c.h.bf16 %v3723
    %v3729 = vunpack.c.l.bf16 %v3724
    %v3730 = vunpack.c.h.bf16 %v3724
    %v3731 = vunpack.c.l.bf16 %v3725
    %v3732 = vunpack.c.h.bf16 %v3725
    %v3733 = vunpack.c.l.bf16 %v3726
    %v3734 = vunpack.c.h.bf16 %v3726
    %v3735 = vadd.f32 %v3727, %v3585
    %v3736 = vadd.f32 %v3728, %v3587
    %v3737 = vadd.f32 %v3729, %v3628
    %v3738 = vadd.f32 %v3730, %v3630
    %v3739 = vadd.f32 %v3731, %v3589
    %v3740 = vadd.f32 %v3732, %v3591
    %v3741 = vadd.f32 %v3733, %v3632
    %v3742 = vadd.f32 %v3734, %v3634
    %s3743 = scalar_lea.vmem [#allocation3], 64
    %v3744 = vld [vmem:[%s3743] sm:$0xff]
    %v3745 = vld [vmem:[%s3743 + $0x8] sm:$0xff]
    %v3746 = vld [vmem:[%s3743 + $0x10] sm:$0xff]
    %v3747 = vld [vmem:[%s3743 + $0x18] sm:$0xff]
    %v3748 = vunpack.c.l.bf16 %v3744
    %v3749 = vunpack.c.h.bf16 %v3744
    %v3750 = vunpack.c.l.bf16 %v3745
    %v3751 = vunpack.c.h.bf16 %v3745
    %v3752 = vunpack.c.l.bf16 %v3746
    %v3753 = vunpack.c.h.bf16 %v3746
    %v3754 = vunpack.c.l.bf16 %v3747
    %v3755 = vunpack.c.h.bf16 %v3747
    %v3756 = vadd.f32 %v3748, %v3671
    %v3757 = vadd.f32 %v3749, %v3673
    %v3758 = vadd.f32 %v3750, %v3714
    %v3759 = vadd.f32 %v3751, %v3716
    %v3760 = vadd.f32 %v3752, %v3675
    %v3761 = vadd.f32 %v3753, %v3677
    %v3762 = vadd.f32 %v3754, %v3718
    %v3763 = vadd.f32 %v3755, %v3720
    %v3764 = vmul.f32 %v3735, 0.5
    %v3765 = vmul.f32 %v3739, 0.5
    %v3766 = vtanh.pop %v3764
    %v3767 = vtanh.pop %v3765
    %v3768 = vmul.f32 %v3766, 0.5
    %v3769 = vmul.f32 %v3767, 0.5
    %v3770 = vadd.f32 %v3768, 0.5
    %v3771 = vadd.f32 %v3769, 0.5
    %v3772 = vmul.f32 %v3736, 0.5
    %v3773 = vmul.f32 %v3740, 0.5
    %v3774 = vtanh.pop %v3772
    %v3775 = vtanh.pop %v3773
    %v3776 = vmul.f32 %v3774, 0.5
    %v3777 = vmul.f32 %v3775, 0.5
    %v3778 = vadd.f32 %v3776, 0.5
    %v3779 = vadd.f32 %v3777, 0.5
    %v3780 = vtanh.pop %v3737
    %v3781 = vtanh.pop %v3741
    %v3782 = vmul.f32 %v3738, 0.5
    %v3783 = vmul.f32 %v3742, 0.5
    %v3784 = vtanh.pop %v3782
    %v3785 = vtanh.pop %v3783
    %v3786 = vmul.f32 %v3784, 0.5
    %v3787 = vmul.f32 %v3785, 0.5
    %v3788 = vadd.f32 %v3786, 0.5
    %v3789 = vadd.f32 %v3787, 0.5
    %v3790 = vmul.f32 %v3778, %v3486
    %v3791 = vmul.f32 %v3779, %v3487
    %v3792 = vmul.f32 %v3770, %v3780
    %v3793 = vmul.f32 %v3771, %v3781
    %v3794 = vadd.f32 %v3790, %v3792
    %v3795 = vadd.f32 %v3791, %v3793
    %v3796 = vtanh.pop %v3794
    %v3797 = vtanh.pop %v3795
    %v3798 = vmul.f32 %v3788, %v3796
    %v3799 = vmul.f32 %v3789, %v3797
    %v3800 = vmul.f32 %v3756, 0.5
    %v3801 = vmul.f32 %v3760, 0.5
    %v3802 = vtanh.pop %v3800
    %v3803 = vtanh.pop %v3801
    %v3804 = vmul.f32 %v3802, 0.5
    %v3805 = vmul.f32 %v3803, 0.5
    %v3806 = vadd.f32 %v3804, 0.5
    %v3807 = vadd.f32 %v3805, 0.5
    %v3808 = vmul.f32 %v3757, 0.5
    %v3809 = vmul.f32 %v3761, 0.5
    %v3810 = vtanh.pop %v3808
    %v3811 = vtanh.pop %v3809
    %v3812 = vmul.f32 %v3810, 0.5
    %v3813 = vmul.f32 %v3811, 0.5
    %v3814 = vadd.f32 %v3812, 0.5
    %v3815 = vadd.f32 %v3813, 0.5
    %v3816 = vtanh.pop %v3758
    %v3817 = vtanh.pop %v3762
    %v3818 = vmul.f32 %v3759, 0.5
    %v3819 = vmul.f32 %v3763, 0.5
    %v3820 = vtanh.pop %v3818
    %v3821 = vtanh.pop %v3819
    %v3822 = vmul.f32 %v3820, 0.5
    %v3823 = vmul.f32 %v3821, 0.5
    %v3824 = vadd.f32 %v3822, 0.5
    %v3825 = vadd.f32 %v3823, 0.5
    %v3826 = vmul.f32 %v3814, %v3522
    %v3827 = vmul.f32 %v3815, %v3523
    %v3828 = vmul.f32 %v3806, %v3816
    %v3829 = vmul.f32 %v3807, %v3817
    %v3830 = vadd.f32 %v3826, %v3828
    %v3831 = vadd.f32 %v3827, %v3829
    %v3832 = vtanh.pop %v3830
    %v3833 = vtanh.pop %v3831
    %v3834 = vmul.f32 %v3824, %v3832
    %v3835 = vmul.f32 %v3825, %v3833
    %v3836 = vpack.c.bf16 %v3799, %v3798
    %v3838 = vunpack.c.l.b16 %v3836
    %v3839 = vunpack.c.h.b16 %v3836
    %v3840 = vpack.c.b16 %v3838, %v3838
    %v3841 = vpack.c.b16 %v3839, %v3839
    %s3844 = scalar_lea.vmem [#allocation4], 40
    %3845 = vst [vmem:[%s3844] sm:$0xf] %v3840
    %3846 = vst [vmem:[%s3844 + $0x4] sm:$0xf] %v3841
    %v3847 = vpack.c.bf16 %v3835, %v3834
    %v3849 = vunpack.c.l.b16 %v3847
    %v3850 = vunpack.c.h.b16 %v3847
    %v3851 = vpack.c.b16 %v3849, %v3849
    %v3852 = vpack.c.b16 %v3850, %v3850
    %s3855 = scalar_lea.vmem [#allocation5], 16
    %3856 = vst [vmem:[%s3855] sm:$0xf] %v3851
    %3857 = vst [vmem:[%s3855 + $0x4] sm:$0xf] %v3852
    %3858 = vmatprep.subr.bf16.mxu0 %v1813
    %3859 = vmatpush1.bf16.msra.mxu0 %v1812
    %3860 = vmatprep.subr.bf16.mxu0 %v1805
    %3861 = vmatpush1.bf16.msra.mxu0 %v1804
    %3862 = vmatprep.subr.bf16.mxu0 %v1797
    %3863 = vmatpush1.bf16.msra.mxu0 %v1796
    %3864 = vmatprep.subr.bf16.mxu0 %v1789
    %3865 = vmatpush1.bf16.msra.mxu0 %v1788
    %3866 = vmatprep.subr.bf16.mxu0 %v1781
    %3867 = vmatpush1.bf16.msra.mxu0 %v1780
    %3868 = vmatprep.subr.bf16.mxu0 %v1773
    %3869 = vmatpush1.bf16.msra.mxu0 %v1772
    %3870 = vmatprep.subr.bf16.mxu0 %v1765
    %3871 = vmatpush1.bf16.msra.mxu0 %v1764
    %3872 = vmatprep.subr.bf16.mxu0 %v1757
    %3873 = vmatpush1.bf16.msra.mxu0 %v1756
    %3874 = vmatprep.subr.bf16.mxu0 %v1877
    %3875 = vmatpush2.bf16.msra.mxu0 %v1876
    %3876 = vmatprep.subr.bf16.mxu0 %v1869
    %3877 = vmatpush2.bf16.msra.mxu0 %v1868
    %3878 = vmatprep.subr.bf16.mxu0 %v1861
    %3879 = vmatpush2.bf16.msra.mxu0 %v1860
    %3880 = vmatprep.subr.bf16.mxu0 %v1853
    %3881 = vmatpush2.bf16.msra.mxu0 %v1852
    %3882 = vmatprep.subr.bf16.mxu0 %v1845
    %3883 = vmatpush2.bf16.msra.mxu0 %v1844
    %3884 = vmatprep.subr.bf16.mxu0 %v1837
    %3885 = vmatpush2.bf16.msra.mxu0 %v1836
    %3886 = vmatprep.subr.bf16.mxu0 %v1829
    %3887 = vmatpush2.bf16.msra.mxu0 %v1828
    %3888 = vmatprep.subr.bf16.mxu0 %v1821
    %3889 = vmatpush2.bf16.msra.mxu0 %v1820
    %3890 = vmatprep.mubr.bf16.mxu0 %v3847
    %3891 = vmatmul.mubr.bf16.gmra.mxu0 %v3836
    %v3892 = vpop.f32.mrf.mxu0
    %v3893 = vadd.f32 0.0, %v3892
    %v3894 = vpop.f32.mrf.mxu0
    %v3895 = vadd.f32 0.0, %v3894
    %v3896 = vpop.f32.mrf.mxu0
    %v3897 = vadd.f32 0.0, %v3896
    %v3898 = vpop.f32.mrf.mxu0
    %v3899 = vadd.f32 0.0, %v3898
    %3900 = vdwg.mxu0
    %3901 = vmatprep.subr.bf16.mxu0 %v1815
    %3902 = vmatpush1.bf16.msra.mxu0 %v1814
    %3903 = vmatprep.subr.bf16.mxu0 %v1807
    %3904 = vmatpush1.bf16.msra.mxu0 %v1806
    %3905 = vmatprep.subr.bf16.mxu0 %v1799
    %3906 = vmatpush1.bf16.msra.mxu0 %v1798
    %3907 = vmatprep.subr.bf16.mxu0 %v1791
    %3908 = vmatpush1.bf16.msra.mxu0 %v1790
    %3909 = vmatprep.subr.bf16.mxu0 %v1783
    %3910 = vmatpush1.bf16.msra.mxu0 %v1782
    %3911 = vmatprep.subr.bf16.mxu0 %v1775
    %3912 = vmatpush1.bf16.msra.mxu0 %v1774
    %3913 = vmatprep.subr.bf16.mxu0 %v1767
    %3914 = vmatpush1.bf16.msra.mxu0 %v1766
    %3915 = vmatprep.subr.bf16.mxu0 %v1759
    %3916 = vmatpush1.bf16.msra.mxu0 %v1758
    %3917 = vmatprep.subr.bf16.mxu0 %v1879
    %3918 = vmatpush2.bf16.msra.mxu0 %v1878
    %3919 = vmatprep.subr.bf16.mxu0 %v1871
    %3920 = vmatpush2.bf16.msra.mxu0 %v1870
    %3921 = vmatprep.subr.bf16.mxu0 %v1863
    %3922 = vmatpush2.bf16.msra.mxu0 %v1862
    %3923 = vmatprep.subr.bf16.mxu0 %v1855
    %3924 = vmatpush2.bf16.msra.mxu0 %v1854
    %3925 = vmatprep.subr.bf16.mxu0 %v1847
    %3926 = vmatpush2.bf16.msra.mxu0 %v1846
    %3927 = vmatprep.subr.bf16.mxu0 %v1839
    %3928 = vmatpush2.bf16.msra.mxu0 %v1838
    %3929 = vmatprep.subr.bf16.mxu0 %v1831
    %3930 = vmatpush2.bf16.msra.mxu0 %v1830
    %3931 = vmatprep.subr.bf16.mxu0 %v1823
    %3932 = vmatpush2.bf16.msra.mxu0 %v1822
    %3933 = vmatprep.mubr.bf16.mxu0 %v3847
    %3934 = vmatmul.mubr.bf16.gmra.mxu0 %v3836
    %v3935 = vpop.f32.mrf.mxu0
    %v3936 = vadd.f32 0.0, %v3935
    %v3937 = vpop.f32.mrf.mxu0
    %v3938 = vadd.f32 0.0, %v3937
    %v3939 = vpop.f32.mrf.mxu0
    %v3940 = vadd.f32 0.0, %v3939
    %v3941 = vpop.f32.mrf.mxu0
    %v3942 = vadd.f32 0.0, %v3941
    %3943 = vdwg.mxu0
    %3944 = vmatprep.subr.bf16.mxu0 %v1817
    %3945 = vmatpush1.bf16.msra.mxu0 %v1816
    %3946 = vmatprep.subr.bf16.mxu0 %v1809
    %3947 = vmatpush1.bf16.msra.mxu0 %v1808
    %3948 = vmatprep.subr.bf16.mxu0 %v1801
    %3949 = vmatpush1.bf16.msra.mxu0 %v1800
    %3950 = vmatprep.subr.bf16.mxu0 %v1793
    %3951 = vmatpush1.bf16.msra.mxu0 %v1792
    %3952 = vmatprep.subr.bf16.mxu0 %v1785
    %3953 = vmatpush1.bf16.msra.mxu0 %v1784
    %3954 = vmatprep.subr.bf16.mxu0 %v1777
    %3955 = vmatpush1.bf16.msra.mxu0 %v1776
    %3956 = vmatprep.subr.bf16.mxu0 %v1769
    %3957 = vmatpush1.bf16.msra.mxu0 %v1768
    %3958 = vmatprep.subr.bf16.mxu0 %v1761
    %3959 = vmatpush1.bf16.msra.mxu0 %v1760
    %3960 = vmatprep.subr.bf16.mxu0 %v1881
    %3961 = vmatpush2.bf16.msra.mxu0 %v1880
    %3962 = vmatprep.subr.bf16.mxu0 %v1873
    %3963 = vmatpush2.bf16.msra.mxu0 %v1872
    %3964 = vmatprep.subr.bf16.mxu0 %v1865
    %3965 = vmatpush2.bf16.msra.mxu0 %v1864
    %3966 = vmatprep.subr.bf16.mxu0 %v1857
    %3967 = vmatpush2.bf16.msra.mxu0 %v1856
    %3968 = vmatprep.subr.bf16.mxu0 %v1849
    %3969 = vmatpush2.bf16.msra.mxu0 %v1848
    %3970 = vmatprep.subr.bf16.mxu0 %v1841
    %3971 = vmatpush2.bf16.msra.mxu0 %v1840
    %3972 = vmatprep.subr.bf16.mxu0 %v1833
    %3973 = vmatpush2.bf16.msra.mxu0 %v1832
    %3974 = vmatprep.subr.bf16.mxu0 %v1825
    %3975 = vmatpush2.bf16.msra.mxu0 %v1824
    %3976 = vmatprep.mubr.bf16.mxu0 %v3847
    %3977 = vmatmul.mubr.bf16.gmra.mxu0 %v3836
    %v3978 = vpop.f32.mrf.mxu0
    %v3979 = vadd.f32 0.0, %v3978
    %v3980 = vpop.f32.mrf.mxu0
    %v3981 = vadd.f32 0.0, %v3980
    %v3982 = vpop.f32.mrf.mxu0
    %v3983 = vadd.f32 0.0, %v3982
    %v3984 = vpop.f32.mrf.mxu0
    %v3985 = vadd.f32 0.0, %v3984
    %3986 = vdwg.mxu0
    %3987 = vmatprep.subr.bf16.mxu0 %v1819
    %3988 = vmatpush1.bf16.msra.mxu0 %v1818
    %3989 = vmatprep.subr.bf16.mxu0 %v1811
    %3990 = vmatpush1.bf16.msra.mxu0 %v1810
    %3991 = vmatprep.subr.bf16.mxu0 %v1803
    %3992 = vmatpush1.bf16.msra.mxu0 %v1802
    %3993 = vmatprep.subr.bf16.mxu0 %v1795
    %3994 = vmatpush1.bf16.msra.mxu0 %v1794
    %3995 = vmatprep.subr.bf16.mxu0 %v1787
    %3996 = vmatpush1.bf16.msra.mxu0 %v1786
    %3997 = vmatprep.subr.bf16.mxu0 %v1779
    %3998 = vmatpush1.bf16.msra.mxu0 %v1778
    %3999 = vmatprep.subr.bf16.mxu0 %v1771
    %4000 = vmatpush1.bf16.msra.mxu0 %v1770
    %4001 = vmatprep.subr.bf16.mxu0 %v1763
    %4002 = vmatpush1.bf16.msra.mxu0 %v1762
    %4003 = vmatprep.subr.bf16.mxu0 %v1883
    %4004 = vmatpush2.bf16.msra.mxu0 %v1882
    %4005 = vmatprep.subr.bf16.mxu0 %v1875
    %4006 = vmatpush2.bf16.msra.mxu0 %v1874
    %4007 = vmatprep.subr.bf16.mxu0 %v1867
    %4008 = vmatpush2.bf16.msra.mxu0 %v1866
    %4009 = vmatprep.subr.bf16.mxu0 %v1859
    %4010 = vmatpush2.bf16.msra.mxu0 %v1858
    %4011 = vmatprep.subr.bf16.mxu0 %v1851
    %4012 = vmatpush2.bf16.msra.mxu0 %v1850
    %4013 = vmatprep.subr.bf16.mxu0 %v1843
    %4014 = vmatpush2.bf16.msra.mxu0 %v1842
    %4015 = vmatprep.subr.bf16.mxu0 %v1835
    %4016 = vmatpush2.bf16.msra.mxu0 %v1834
    %4017 = vmatprep.subr.bf16.mxu0 %v1827
    %4018 = vmatpush2.bf16.msra.mxu0 %v1826
    %4019 = vmatprep.mubr.bf16.mxu0 %v3847
    %4020 = vmatmul.mubr.bf16.gmra.mxu0 %v3836
    %v4021 = vpop.f32.mrf.mxu0
    %v4022 = vadd.f32 0.0, %v4021
    %v4023 = vpop.f32.mrf.mxu0
    %v4024 = vadd.f32 0.0, %v4023
    %v4025 = vpop.f32.mrf.mxu0
    %v4026 = vadd.f32 0.0, %v4025
    %v4027 = vpop.f32.mrf.mxu0
    %v4028 = vadd.f32 0.0, %v4027
    %4029 = vdwg.mxu0
    %s4030 = scalar_lea.vmem [#allocation2], 192
    %v4031 = vld [vmem:[%s4030] sm:$0xff]
    %v4032 = vld [vmem:[%s4030 + $0x8] sm:$0xff]
    %v4033 = vld [vmem:[%s4030 + $0x10] sm:$0xff]
    %v4034 = vld [vmem:[%s4030 + $0x18] sm:$0xff]
    %v4035 = vunpack.c.l.bf16 %v4031
    %v4036 = vunpack.c.h.bf16 %v4031
    %v4037 = vunpack.c.l.bf16 %v4032
    %v4038 = vunpack.c.h.bf16 %v4032
    %v4039 = vunpack.c.l.bf16 %v4033
    %v4040 = vunpack.c.h.bf16 %v4033
    %v4041 = vunpack.c.l.bf16 %v4034
    %v4042 = vunpack.c.h.bf16 %v4034
    %v4043 = vadd.f32 %v4035, %v3893
    %v4044 = vadd.f32 %v4036, %v3895
    %v4045 = vadd.f32 %v4037, %v3936
    %v4046 = vadd.f32 %v4038, %v3938
    %v4047 = vadd.f32 %v4039, %v3897
    %v4048 = vadd.f32 %v4040, %v3899
    %v4049 = vadd.f32 %v4041, %v3940
    %v4050 = vadd.f32 %v4042, %v3942
    %s4051 = scalar_lea.vmem [#allocation3], 32
    %v4052 = vld [vmem:[%s4051] sm:$0xff]
    %v4053 = vld [vmem:[%s4051 + $0x8] sm:$0xff]
    %v4054 = vld [vmem:[%s4051 + $0x10] sm:$0xff]
    %v4055 = vld [vmem:[%s4051 + $0x18] sm:$0xff]
    %v4056 = vunpack.c.l.bf16 %v4052
    %v4057 = vunpack.c.h.bf16 %v4052
    %v4058 = vunpack.c.l.bf16 %v4053
    %v4059 = vunpack.c.h.bf16 %v4053
    %v4060 = vunpack.c.l.bf16 %v4054
    %v4061 = vunpack.c.h.bf16 %v4054
    %v4062 = vunpack.c.l.bf16 %v4055
    %v4063 = vunpack.c.h.bf16 %v4055
    %v4064 = vadd.f32 %v4056, %v3979
    %v4065 = vadd.f32 %v4057, %v3981
    %v4066 = vadd.f32 %v4058, %v4022
    %v4067 = vadd.f32 %v4059, %v4024
    %v4068 = vadd.f32 %v4060, %v3983
    %v4069 = vadd.f32 %v4061, %v3985
    %v4070 = vadd.f32 %v4062, %v4026
    %v4071 = vadd.f32 %v4063, %v4028
    %v4072 = vmul.f32 %v4043, 0.5
    %v4073 = vmul.f32 %v4047, 0.5
    %v4074 = vtanh.pop %v4072
    %v4075 = vtanh.pop %v4073
    %v4076 = vmul.f32 %v4074, 0.5
    %v4077 = vmul.f32 %v4075, 0.5
    %v4078 = vadd.f32 %v4076, 0.5
    %v4079 = vadd.f32 %v4077, 0.5
    %v4080 = vmul.f32 %v4044, 0.5
    %v4081 = vmul.f32 %v4048, 0.5
    %v4082 = vtanh.pop %v4080
    %v4083 = vtanh.pop %v4081
    %v4084 = vmul.f32 %v4082, 0.5
    %v4085 = vmul.f32 %v4083, 0.5
    %v4086 = vadd.f32 %v4084, 0.5
    %v4087 = vadd.f32 %v4085, 0.5
    %v4088 = vtanh.pop %v4045
    %v4089 = vtanh.pop %v4049
    %v4090 = vmul.f32 %v4046, 0.5
    %v4091 = vmul.f32 %v4050, 0.5
    %v4092 = vtanh.pop %v4090
    %v4093 = vtanh.pop %v4091
    %v4094 = vmul.f32 %v4092, 0.5
    %v4095 = vmul.f32 %v4093, 0.5
    %v4096 = vadd.f32 %v4094, 0.5
    %v4097 = vadd.f32 %v4095, 0.5
    %v4098 = vmul.f32 %v4086, %v3794
    %v4099 = vmul.f32 %v4087, %v3795
    %v4100 = vmul.f32 %v4078, %v4088
    %v4101 = vmul.f32 %v4079, %v4089
    %v4102 = vadd.f32 %v4098, %v4100
    %v4103 = vadd.f32 %v4099, %v4101
    %v4104 = vtanh.pop %v4102
    %v4105 = vtanh.pop %v4103
    %v4106 = vmul.f32 %v4096, %v4104
    %v4107 = vmul.f32 %v4097, %v4105
    %v4108 = vmul.f32 %v4064, 0.5
    %v4109 = vmul.f32 %v4068, 0.5
    %v4110 = vtanh.pop %v4108
    %v4111 = vtanh.pop %v4109
    %v4112 = vmul.f32 %v4110, 0.5
    %v4113 = vmul.f32 %v4111, 0.5
    %v4114 = vadd.f32 %v4112, 0.5
    %v4115 = vadd.f32 %v4113, 0.5
    %v4116 = vmul.f32 %v4065, 0.5
    %v4117 = vmul.f32 %v4069, 0.5
    %v4118 = vtanh.pop %v4116
    %v4119 = vtanh.pop %v4117
    %v4120 = vmul.f32 %v4118, 0.5
    %v4121 = vmul.f32 %v4119, 0.5
    %v4122 = vadd.f32 %v4120, 0.5
    %v4123 = vadd.f32 %v4121, 0.5
    %v4124 = vtanh.pop %v4066
    %v4125 = vtanh.pop %v4070
    %v4126 = vmul.f32 %v4067, 0.5
    %v4127 = vmul.f32 %v4071, 0.5
    %v4128 = vtanh.pop %v4126
    %v4129 = vtanh.pop %v4127
    %v4130 = vmul.f32 %v4128, 0.5
    %v4131 = vmul.f32 %v4129, 0.5
    %v4132 = vadd.f32 %v4130, 0.5
    %v4133 = vadd.f32 %v4131, 0.5
    %v4134 = vmul.f32 %v4122, %v3830
    %v4135 = vmul.f32 %v4123, %v3831
    %v4136 = vmul.f32 %v4114, %v4124
    %v4137 = vmul.f32 %v4115, %v4125
    %v4138 = vadd.f32 %v4134, %v4136
    %v4139 = vadd.f32 %v4135, %v4137
    %v4140 = vtanh.pop %v4138
    %v4141 = vtanh.pop %v4139
    %v4142 = vmul.f32 %v4132, %v4140
    %v4143 = vmul.f32 %v4133, %v4141
    %v4144 = vpack.c.bf16 %v4107, %v4106
    %v4146 = vunpack.c.l.b16 %v4144
    %v4147 = vunpack.c.h.b16 %v4144
    %v4148 = vpack.c.b16 %v4146, %v4146
    %v4149 = vpack.c.b16 %v4147, %v4147
    %s4152 = scalar_lea.vmem [#allocation4], 48
    %4153 = vst [vmem:[%s4152] sm:$0xf] %v4148
    %4154 = vst [vmem:[%s4152 + $0x4] sm:$0xf] %v4149
    %v4155 = vpack.c.bf16 %v4143, %v4142
    %v4157 = vunpack.c.l.b16 %v4155
    %v4158 = vunpack.c.h.b16 %v4155
    %v4159 = vpack.c.b16 %v4157, %v4157
    %v4160 = vpack.c.b16 %v4158, %v4158
    %s4163 = scalar_lea.vmem [#allocation5], 8
    %4164 = vst [vmem:[%s4163] sm:$0xf] %v4159
    %4165 = vst [vmem:[%s4163 + $0x4] sm:$0xf] %v4160
    %4166 = vmatprep.subr.bf16.mxu0 %v1813
    %4167 = vmatpush1.bf16.msra.mxu0 %v1812
    %4168 = vmatprep.subr.bf16.mxu0 %v1805
    %4169 = vmatpush1.bf16.msra.mxu0 %v1804
    %4170 = vmatprep.subr.bf16.mxu0 %v1797
    %4171 = vmatpush1.bf16.msra.mxu0 %v1796
    %4172 = vmatprep.subr.bf16.mxu0 %v1789
    %4173 = vmatpush1.bf16.msra.mxu0 %v1788
    %4174 = vmatprep.subr.bf16.mxu0 %v1781
    %4175 = vmatpush1.bf16.msra.mxu0 %v1780
    %4176 = vmatprep.subr.bf16.mxu0 %v1773
    %4177 = vmatpush1.bf16.msra.mxu0 %v1772
    %4178 = vmatprep.subr.bf16.mxu0 %v1765
    %4179 = vmatpush1.bf16.msra.mxu0 %v1764
    %4180 = vmatprep.subr.bf16.mxu0 %v1757
    %4181 = vmatpush1.bf16.msra.mxu0 %v1756
    %4182 = vmatprep.subr.bf16.mxu0 %v1877
    %4183 = vmatpush2.bf16.msra.mxu0 %v1876
    %4184 = vmatprep.subr.bf16.mxu0 %v1869
    %4185 = vmatpush2.bf16.msra.mxu0 %v1868
    %4186 = vmatprep.subr.bf16.mxu0 %v1861
    %4187 = vmatpush2.bf16.msra.mxu0 %v1860
    %4188 = vmatprep.subr.bf16.mxu0 %v1853
    %4189 = vmatpush2.bf16.msra.mxu0 %v1852
    %4190 = vmatprep.subr.bf16.mxu0 %v1845
    %4191 = vmatpush2.bf16.msra.mxu0 %v1844
    %4192 = vmatprep.subr.bf16.mxu0 %v1837
    %4193 = vmatpush2.bf16.msra.mxu0 %v1836
    %4194 = vmatprep.subr.bf16.mxu0 %v1829
    %4195 = vmatpush2.bf16.msra.mxu0 %v1828
    %4196 = vmatprep.subr.bf16.mxu0 %v1821
    %4197 = vmatpush2.bf16.msra.mxu0 %v1820
    %4198 = vmatprep.mubr.bf16.mxu0 %v4155
    %4199 = vmatmul.mubr.bf16.gmra.mxu0 %v4144
    %v4200 = vpop.f32.mrf.mxu0
    %v4201 = vadd.f32 0.0, %v4200
    %v4202 = vpop.f32.mrf.mxu0
    %v4203 = vadd.f32 0.0, %v4202
    %v4204 = vpop.f32.mrf.mxu0
    %v4205 = vadd.f32 0.0, %v4204
    %v4206 = vpop.f32.mrf.mxu0
    %v4207 = vadd.f32 0.0, %v4206
    %4208 = vdwg.mxu0
    %4209 = vmatprep.subr.bf16.mxu0 %v1815
    %4210 = vmatpush1.bf16.msra.mxu0 %v1814
    %4211 = vmatprep.subr.bf16.mxu0 %v1807
    %4212 = vmatpush1.bf16.msra.mxu0 %v1806
    %4213 = vmatprep.subr.bf16.mxu0 %v1799
    %4214 = vmatpush1.bf16.msra.mxu0 %v1798
    %4215 = vmatprep.subr.bf16.mxu0 %v1791
    %4216 = vmatpush1.bf16.msra.mxu0 %v1790
    %4217 = vmatprep.subr.bf16.mxu0 %v1783
    %4218 = vmatpush1.bf16.msra.mxu0 %v1782
    %4219 = vmatprep.subr.bf16.mxu0 %v1775
    %4220 = vmatpush1.bf16.msra.mxu0 %v1774
    %4221 = vmatprep.subr.bf16.mxu0 %v1767
    %4222 = vmatpush1.bf16.msra.mxu0 %v1766
    %4223 = vmatprep.subr.bf16.mxu0 %v1759
    %4224 = vmatpush1.bf16.msra.mxu0 %v1758
    %4225 = vmatprep.subr.bf16.mxu0 %v1879
    %4226 = vmatpush2.bf16.msra.mxu0 %v1878
    %4227 = vmatprep.subr.bf16.mxu0 %v1871
    %4228 = vmatpush2.bf16.msra.mxu0 %v1870
    %4229 = vmatprep.subr.bf16.mxu0 %v1863
    %4230 = vmatpush2.bf16.msra.mxu0 %v1862
    %4231 = vmatprep.subr.bf16.mxu0 %v1855
    %4232 = vmatpush2.bf16.msra.mxu0 %v1854
    %4233 = vmatprep.subr.bf16.mxu0 %v1847
    %4234 = vmatpush2.bf16.msra.mxu0 %v1846
    %4235 = vmatprep.subr.bf16.mxu0 %v1839
    %4236 = vmatpush2.bf16.msra.mxu0 %v1838
    %4237 = vmatprep.subr.bf16.mxu0 %v1831
    %4238 = vmatpush2.bf16.msra.mxu0 %v1830
    %4239 = vmatprep.subr.bf16.mxu0 %v1823
    %4240 = vmatpush2.bf16.msra.mxu0 %v1822
    %4241 = vmatprep.mubr.bf16.mxu0 %v4155
    %4242 = vmatmul.mubr.bf16.gmra.mxu0 %v4144
    %v4243 = vpop.f32.mrf.mxu0
    %v4244 = vadd.f32 0.0, %v4243
    %v4245 = vpop.f32.mrf.mxu0
    %v4246 = vadd.f32 0.0, %v4245
    %v4247 = vpop.f32.mrf.mxu0
    %v4248 = vadd.f32 0.0, %v4247
    %v4249 = vpop.f32.mrf.mxu0
    %v4250 = vadd.f32 0.0, %v4249
    %4251 = vdwg.mxu0
    %4252 = vmatprep.subr.bf16.mxu0 %v1817
    %4253 = vmatpush1.bf16.msra.mxu0 %v1816
    %4254 = vmatprep.subr.bf16.mxu0 %v1809
    %4255 = vmatpush1.bf16.msra.mxu0 %v1808
    %4256 = vmatprep.subr.bf16.mxu0 %v1801
    %4257 = vmatpush1.bf16.msra.mxu0 %v1800
    %4258 = vmatprep.subr.bf16.mxu0 %v1793
    %4259 = vmatpush1.bf16.msra.mxu0 %v1792
    %4260 = vmatprep.subr.bf16.mxu0 %v1785
    %4261 = vmatpush1.bf16.msra.mxu0 %v1784
    %4262 = vmatprep.subr.bf16.mxu0 %v1777
    %4263 = vmatpush1.bf16.msra.mxu0 %v1776
    %4264 = vmatprep.subr.bf16.mxu0 %v1769
    %4265 = vmatpush1.bf16.msra.mxu0 %v1768
    %4266 = vmatprep.subr.bf16.mxu0 %v1761
    %4267 = vmatpush1.bf16.msra.mxu0 %v1760
    %4268 = vmatprep.subr.bf16.mxu0 %v1881
    %4269 = vmatpush2.bf16.msra.mxu0 %v1880
    %4270 = vmatprep.subr.bf16.mxu0 %v1873
    %4271 = vmatpush2.bf16.msra.mxu0 %v1872
    %4272 = vmatprep.subr.bf16.mxu0 %v1865
    %4273 = vmatpush2.bf16.msra.mxu0 %v1864
    %4274 = vmatprep.subr.bf16.mxu0 %v1857
    %4275 = vmatpush2.bf16.msra.mxu0 %v1856
    %4276 = vmatprep.subr.bf16.mxu0 %v1849
    %4277 = vmatpush2.bf16.msra.mxu0 %v1848
    %4278 = vmatprep.subr.bf16.mxu0 %v1841
    %4279 = vmatpush2.bf16.msra.mxu0 %v1840
    %4280 = vmatprep.subr.bf16.mxu0 %v1833
    %4281 = vmatpush2.bf16.msra.mxu0 %v1832
    %4282 = vmatprep.subr.bf16.mxu0 %v1825
    %4283 = vmatpush2.bf16.msra.mxu0 %v1824
    %4284 = vmatprep.mubr.bf16.mxu0 %v4155
    %4285 = vmatmul.mubr.bf16.gmra.mxu0 %v4144
    %v4286 = vpop.f32.mrf.mxu0
    %v4287 = vadd.f32 0.0, %v4286
    %v4288 = vpop.f32.mrf.mxu0
    %v4289 = vadd.f32 0.0, %v4288
    %v4290 = vpop.f32.mrf.mxu0
    %v4291 = vadd.f32 0.0, %v4290
    %v4292 = vpop.f32.mrf.mxu0
    %v4293 = vadd.f32 0.0, %v4292
    %4294 = vdwg.mxu0
    %4295 = vmatprep.subr.bf16.mxu0 %v1819
    %4296 = vmatpush1.bf16.msra.mxu0 %v1818
    %4297 = vmatprep.subr.bf16.mxu0 %v1811
    %4298 = vmatpush1.bf16.msra.mxu0 %v1810
    %4299 = vmatprep.subr.bf16.mxu0 %v1803
    %4300 = vmatpush1.bf16.msra.mxu0 %v1802
    %4301 = vmatprep.subr.bf16.mxu0 %v1795
    %4302 = vmatpush1.bf16.msra.mxu0 %v1794
    %4303 = vmatprep.subr.bf16.mxu0 %v1787
    %4304 = vmatpush1.bf16.msra.mxu0 %v1786
    %4305 = vmatprep.subr.bf16.mxu0 %v1779
    %4306 = vmatpush1.bf16.msra.mxu0 %v1778
    %4307 = vmatprep.subr.bf16.mxu0 %v1771
    %4308 = vmatpush1.bf16.msra.mxu0 %v1770
    %4309 = vmatprep.subr.bf16.mxu0 %v1763
    %4310 = vmatpush1.bf16.msra.mxu0 %v1762
    %4311 = vmatprep.subr.bf16.mxu0 %v1883
    %4312 = vmatpush2.bf16.msra.mxu0 %v1882
    %4313 = vmatprep.subr.bf16.mxu0 %v1875
    %4314 = vmatpush2.bf16.msra.mxu0 %v1874
    %4315 = vmatprep.subr.bf16.mxu0 %v1867
    %4316 = vmatpush2.bf16.msra.mxu0 %v1866
    %4317 = vmatprep.subr.bf16.mxu0 %v1859
    %4318 = vmatpush2.bf16.msra.mxu0 %v1858
    %4319 = vmatprep.subr.bf16.mxu0 %v1851
    %4320 = vmatpush2.bf16.msra.mxu0 %v1850
    %4321 = vmatprep.subr.bf16.mxu0 %v1843
    %4322 = vmatpush2.bf16.msra.mxu0 %v1842
    %4323 = vmatprep.subr.bf16.mxu0 %v1835
    %4324 = vmatpush2.bf16.msra.mxu0 %v1834
    %4325 = vmatprep.subr.bf16.mxu0 %v1827
    %4326 = vmatpush2.bf16.msra.mxu0 %v1826
    %4327 = vmatprep.mubr.bf16.mxu0 %v4155
    %4328 = vmatmul.mubr.bf16.gmra.mxu0 %v4144
    %v4329 = vpop.f32.mrf.mxu0
    %v4330 = vadd.f32 0.0, %v4329
    %v4331 = vpop.f32.mrf.mxu0
    %v4332 = vadd.f32 0.0, %v4331
    %v4333 = vpop.f32.mrf.mxu0
    %v4334 = vadd.f32 0.0, %v4333
    %v4335 = vpop.f32.mrf.mxu0
    %v4336 = vadd.f32 0.0, %v4335
    %4337 = vdwg.mxu0
    %s4338 = scalar_lea.vmem [#allocation2], 224
    %v4339 = vld [vmem:[%s4338] sm:$0xff]
    %v4340 = vld [vmem:[%s4338 + $0x8] sm:$0xff]
    %v4341 = vld [vmem:[%s4338 + $0x10] sm:$0xff]
    %v4342 = vld [vmem:[%s4338 + $0x18] sm:$0xff]
    %v4343 = vunpack.c.l.bf16 %v4339
    %v4344 = vunpack.c.h.bf16 %v4339
    %v4345 = vunpack.c.l.bf16 %v4340
    %v4346 = vunpack.c.h.bf16 %v4340
    %v4347 = vunpack.c.l.bf16 %v4341
    %v4348 = vunpack.c.h.bf16 %v4341
    %v4349 = vunpack.c.l.bf16 %v4342
    %v4350 = vunpack.c.h.bf16 %v4342
    %v4351 = vadd.f32 %v4343, %v4201
    %v4352 = vadd.f32 %v4344, %v4203
    %v4353 = vadd.f32 %v4345, %v4244
    %v4354 = vadd.f32 %v4346, %v4246
    %v4355 = vadd.f32 %v4347, %v4205
    %v4356 = vadd.f32 %v4348, %v4207
    %v4357 = vadd.f32 %v4349, %v4248
    %v4358 = vadd.f32 %v4350, %v4250
    %v4359 = vld [vmem:[#allocation3] sm:$0xff]
    %v4360 = vld [vmem:[#allocation3 + $0x8] sm:$0xff]
    %v4361 = vld [vmem:[#allocation3 + $0x10] sm:$0xff]
    %v4362 = vld [vmem:[#allocation3 + $0x18] sm:$0xff]
    %v4363 = vunpack.c.l.bf16 %v4359
    %v4364 = vunpack.c.h.bf16 %v4359
    %v4365 = vunpack.c.l.bf16 %v4360
    %v4366 = vunpack.c.h.bf16 %v4360
    %v4367 = vunpack.c.l.bf16 %v4361
    %v4368 = vunpack.c.h.bf16 %v4361
    %v4369 = vunpack.c.l.bf16 %v4362
    %v4370 = vunpack.c.h.bf16 %v4362
    %v4371 = vadd.f32 %v4363, %v4287
    %v4372 = vadd.f32 %v4364, %v4289
    %v4373 = vadd.f32 %v4365, %v4330
    %v4374 = vadd.f32 %v4366, %v4332
    %v4375 = vadd.f32 %v4367, %v4291
    %v4376 = vadd.f32 %v4368, %v4293
    %v4377 = vadd.f32 %v4369, %v4334
    %v4378 = vadd.f32 %v4370, %v4336
    %v4379 = vmul.f32 %v4351, 0.5
    %v4380 = vmul.f32 %v4355, 0.5
    %v4381 = vtanh.pop %v4379
    %v4382 = vtanh.pop %v4380
    %v4383 = vmul.f32 %v4381, 0.5
    %v4384 = vmul.f32 %v4382, 0.5
    %v4385 = vadd.f32 %v4383, 0.5
    %v4386 = vadd.f32 %v4384, 0.5
    %v4387 = vmul.f32 %v4352, 0.5
    %v4388 = vmul.f32 %v4356, 0.5
    %v4389 = vtanh.pop %v4387
    %v4390 = vtanh.pop %v4388
    %v4391 = vmul.f32 %v4389, 0.5
    %v4392 = vmul.f32 %v4390, 0.5
    %v4393 = vadd.f32 %v4391, 0.5
    %v4394 = vadd.f32 %v4392, 0.5
    %v4395 = vtanh.pop %v4353
    %v4396 = vtanh.pop %v4357
    %v4397 = vmul.f32 %v4354, 0.5
    %v4398 = vmul.f32 %v4358, 0.5
    %v4399 = vtanh.pop %v4397
    %v4400 = vtanh.pop %v4398
    %v4401 = vmul.f32 %v4399, 0.5
    %v4402 = vmul.f32 %v4400, 0.5
    %v4403 = vadd.f32 %v4401, 0.5
    %v4404 = vadd.f32 %v4402, 0.5
    %v4405 = vmul.f32 %v4393, %v4102
    %v4406 = vmul.f32 %v4394, %v4103
    %v4407 = vmul.f32 %v4385, %v4395
    %v4408 = vmul.f32 %v4386, %v4396
    %v4409 = vadd.f32 %v4405, %v4407
    %v4410 = vadd.f32 %v4406, %v4408
    %v4411 = vtanh.pop %v4409
    %v4412 = vtanh.pop %v4410
    %v4413 = vmul.f32 %v4403, %v4411
    %v4414 = vmul.f32 %v4404, %v4412
    %v4415 = vmul.f32 %v4371, 0.5
    %v4416 = vmul.f32 %v4375, 0.5
    %v4417 = vtanh.pop %v4415
    %v4418 = vtanh.pop %v4416
    %v4419 = vmul.f32 %v4417, 0.5
    %v4420 = vmul.f32 %v4418, 0.5
    %v4421 = vadd.f32 %v4419, 0.5
    %v4422 = vadd.f32 %v4420, 0.5
    %v4423 = vmul.f32 %v4372, 0.5
    %v4424 = vmul.f32 %v4376, 0.5
    %v4425 = vtanh.pop %v4423
    %v4426 = vtanh.pop %v4424
    %v4427 = vmul.f32 %v4425, 0.5
    %v4428 = vmul.f32 %v4426, 0.5
    %v4429 = vadd.f32 %v4427, 0.5
    %v4430 = vadd.f32 %v4428, 0.5
    %v4431 = vtanh.pop %v4373
    %v4432 = vtanh.pop %v4377
    %v4433 = vmul.f32 %v4374, 0.5
    %v4434 = vmul.f32 %v4378, 0.5
    %v4435 = vtanh.pop %v4433
    %v4436 = vtanh.pop %v4434
    %v4437 = vmul.f32 %v4435, 0.5
    %v4438 = vmul.f32 %v4436, 0.5
    %v4439 = vadd.f32 %v4437, 0.5
    %v4440 = vadd.f32 %v4438, 0.5
    %v4441 = vmul.f32 %v4429, %v4138
    %v4442 = vmul.f32 %v4430, %v4139
    %v4443 = vmul.f32 %v4421, %v4431
    %v4444 = vmul.f32 %v4422, %v4432
    %v4445 = vadd.f32 %v4441, %v4443
    %v4446 = vadd.f32 %v4442, %v4444
    %v4447 = vtanh.pop %v4445
    %v4448 = vtanh.pop %v4446
    %v4449 = vmul.f32 %v4439, %v4447
    %v4450 = vmul.f32 %v4440, %v4448
    %v4451 = vpack.c.bf16 %v4414, %v4413
    %v4453 = vunpack.c.l.b16 %v4451
    %v4454 = vunpack.c.h.b16 %v4451
    %v4455 = vpack.c.b16 %v4453, %v4453
    %v4456 = vpack.c.b16 %v4454, %v4454
    %s4459 = scalar_lea.vmem [#allocation4], 56
    %4460 = vst [vmem:[%s4459] sm:$0xf] %v4455
    %4461 = vst [vmem:[%s4459 + $0x4] sm:$0xf] %v4456
    %v4462 = vpack.c.bf16 %v4450, %v4449
    %v4464 = vunpack.c.l.b16 %v4462
    %v4465 = vunpack.c.h.b16 %v4462
    %v4466 = vpack.c.b16 %v4464, %v4464
    %v4467 = vpack.c.b16 %v4465, %v4465
    %4470 = vst [vmem:[#allocation5] sm:$0xf] %v4466
    %4471 = vst [vmem:[#allocation5 + $0x4] sm:$0xf] %v4467
    %v4472 = vld [vmem:[#allocation4] sm:$0xf]
    %v4473 = vld [vmem:[#allocation4 + $0x4] sm:$0xf]
    %v4474 = vld [vmem:[#allocation4 + $0x8] sm:$0xf]
    %v4475 = vld [vmem:[#allocation4 + $0xc] sm:$0xf]
    %v4476 = vld [vmem:[#allocation4 + $0x10] sm:$0xf]
    %v4477 = vld [vmem:[#allocation4 + $0x14] sm:$0xf]
    %v4478 = vld [vmem:[#allocation4 + $0x18] sm:$0xf]
    %v4479 = vld [vmem:[#allocation4 + $0x1c] sm:$0xf]
    %v4480 = vld [vmem:[#allocation4 + $0x20] sm:$0xf]
    %v4481 = vld [vmem:[#allocation4 + $0x24] sm:$0xf]
    %v4482 = vld [vmem:[#allocation4 + $0x28] sm:$0xf]
    %v4483 = vld [vmem:[#allocation4 + $0x2c] sm:$0xf]
    %v4484 = vld [vmem:[#allocation4 + $0x30] sm:$0xf]
    %v4485 = vld [vmem:[#allocation4 + $0x34] sm:$0xf]
    %v4486 = vld [vmem:[#allocation4 + $0x38] sm:$0xf]
    %v4487 = vld [vmem:[#allocation4 + $0x3c] sm:$0xf]
    %v4488 = vld [vmem:[#allocation5] sm:$0xf]
    %v4489 = vld [vmem:[#allocation5 + $0x4] sm:$0xf]
    %v4490 = vld [vmem:[#allocation5 + $0x8] sm:$0xf]
    %v4491 = vld [vmem:[#allocation5 + $0xc] sm:$0xf]
    %v4492 = vld [vmem:[#allocation5 + $0x10] sm:$0xf]
    %v4493 = vld [vmem:[#allocation5 + $0x14] sm:$0xf]
    %v4494 = vld [vmem:[#allocation5 + $0x18] sm:$0xf]
    %v4495 = vld [vmem:[#allocation5 + $0x1c] sm:$0xf]
    %v4496 = vld [vmem:[#allocation5 + $0x20] sm:$0xf]
    %v4497 = vld [vmem:[#allocation5 + $0x24] sm:$0xf]
    %v4498 = vld [vmem:[#allocation5 + $0x28] sm:$0xf]
    %v4499 = vld [vmem:[#allocation5 + $0x2c] sm:$0xf]
    %v4500 = vld [vmem:[#allocation5 + $0x30] sm:$0xf]
    %v4501 = vld [vmem:[#allocation5 + $0x34] sm:$0xf]
    %v4502 = vld [vmem:[#allocation5 + $0x38] sm:$0xf]
    %v4503 = vld [vmem:[#allocation5 + $0x3c] sm:$0xf]
    %v4504 = vld [vmem:[#allocation13] sm:$0xf]
    %v4505 = vld [vmem:[#allocation13 + $0x4] sm:$0xf]
    %v4506 = vld [vmem:[#allocation13 + $0x8] sm:$0xf]
    %v4507 = vld [vmem:[#allocation13 + $0xc] sm:$0xf]
    %v4508 = vld [vmem:[#allocation13 + $0x10] sm:$0xf]
    %v4509 = vld [vmem:[#allocation13 + $0x14] sm:$0xf]
    %v4510 = vld [vmem:[#allocation13 + $0x18] sm:$0xf]
    %v4511 = vld [vmem:[#allocation13 + $0x1c] sm:$0xf]
    %v4512 = vld [vmem:[#allocation13 + $0x20] sm:$0xf]
    %v4513 = vld [vmem:[#allocation13 + $0x24] sm:$0xf]
    %v4514 = vld [vmem:[#allocation13 + $0x28] sm:$0xf]
    %v4515 = vld [vmem:[#allocation13 + $0x2c] sm:$0xf]
    %v4516 = vld [vmem:[#allocation13 + $0x30] sm:$0xf]
    %v4517 = vld [vmem:[#allocation13 + $0x34] sm:$0xf]
    %v4518 = vld [vmem:[#allocation13 + $0x38] sm:$0xf]
    %v4519 = vld [vmem:[#allocation13 + $0x3c] sm:$0xf]
    %v4520 = vld [vmem:[#allocation14] sm:$0xf]
    %v4521 = vld [vmem:[#allocation14 + $0x4] sm:$0xf]
    %v4522 = vld [vmem:[#allocation14 + $0x8] sm:$0xf]
    %v4523 = vld [vmem:[#allocation14 + $0xc] sm:$0xf]
    %v4524 = vld [vmem:[#allocation14 + $0x10] sm:$0xf]
    %v4525 = vld [vmem:[#allocation14 + $0x14] sm:$0xf]
    %v4526 = vld [vmem:[#allocation14 + $0x18] sm:$0xf]
    %v4527 = vld [vmem:[#allocation14 + $0x1c] sm:$0xf]
    %v4528 = vld [vmem:[#allocation14 + $0x20] sm:$0xf]
    %v4529 = vld [vmem:[#allocation14 + $0x24] sm:$0xf]
    %v4530 = vld [vmem:[#allocation14 + $0x28] sm:$0xf]
    %v4531 = vld [vmem:[#allocation14 + $0x2c] sm:$0xf]
    %v4532 = vld [vmem:[#allocation14 + $0x30] sm:$0xf]
    %v4533 = vld [vmem:[#allocation14 + $0x34] sm:$0xf]
    %v4534 = vld [vmem:[#allocation14 + $0x38] sm:$0xf]
    %v4535 = vld [vmem:[#allocation14 + $0x3c] sm:$0xf]
    %v4552 = vunpack.c.l.b16 %v4488
    %v4553 = vunpack.c.l.b16 %v4489
    %v4554 = vunpack.c.l.b16 %v4490
    %v4555 = vunpack.c.l.b16 %v4491
    %v4556 = vunpack.c.l.b16 %v4492
    %v4557 = vunpack.c.l.b16 %v4493
    %v4558 = vunpack.c.l.b16 %v4494
    %v4559 = vunpack.c.l.b16 %v4495
    %v4560 = vunpack.c.l.b16 %v4496
    %v4561 = vunpack.c.l.b16 %v4497
    %v4562 = vunpack.c.l.b16 %v4498
    %v4563 = vunpack.c.l.b16 %v4499
    %v4564 = vunpack.c.l.b16 %v4500
    %v4565 = vunpack.c.l.b16 %v4501
    %v4566 = vunpack.c.l.b16 %v4502
    %v4567 = vunpack.c.l.b16 %v4503
    %v4568 = vpack.c.b16 %v4553, %v4552
    %v4569 = vpack.c.b16 %v4555, %v4554
    %v4570 = vpack.c.b16 %v4557, %v4556
    %v4571 = vpack.c.b16 %v4559, %v4558
    %v4572 = vpack.c.b16 %v4561, %v4560
    %v4573 = vpack.c.b16 %v4563, %v4562
    %v4574 = vpack.c.b16 %v4565, %v4564
    %v4575 = vpack.c.b16 %v4567, %v4566
    %v4600 = vunpack.c.l.b16 %v4520
    %v4601 = vunpack.c.l.b16 %v4521
    %v4602 = vunpack.c.l.b16 %v4522
    %v4603 = vunpack.c.l.b16 %v4523
    %v4604 = vunpack.c.l.b16 %v4524
    %v4605 = vunpack.c.l.b16 %v4525
    %v4606 = vunpack.c.l.b16 %v4526
    %v4607 = vunpack.c.l.b16 %v4527
    %v4608 = vunpack.c.l.b16 %v4528
    %v4609 = vunpack.c.l.b16 %v4529
    %v4610 = vunpack.c.l.b16 %v4530
    %v4611 = vunpack.c.l.b16 %v4531
    %v4612 = vunpack.c.l.b16 %v4532
    %v4613 = vunpack.c.l.b16 %v4533
    %v4614 = vunpack.c.l.b16 %v4534
    %v4615 = vunpack.c.l.b16 %v4535
    %v4616 = vpack.c.b16 %v4601, %v4600
    %v4617 = vpack.c.b16 %v4603, %v4602
    %v4618 = vpack.c.b16 %v4605, %v4604
    %v4619 = vpack.c.b16 %v4607, %v4606
    %v4620 = vpack.c.b16 %v4609, %v4608
    %v4621 = vpack.c.b16 %v4611, %v4610
    %v4622 = vpack.c.b16 %v4613, %v4612
    %v4623 = vpack.c.b16 %v4615, %v4614
    %4632 = vmatprep.subr.bf16.mxu0 0
    %4633 = vmatpush1.bf16.msra.mxu0 %v4623
    %4634 = vmatprep.subr.bf16.mxu0 0
    %4635 = vmatpush1.bf16.msra.mxu0 %v4622
    %4636 = vmatprep.subr.bf16.mxu0 0
    %4637 = vmatpush1.bf16.msra.mxu0 %v4621
    %4638 = vmatprep.subr.bf16.mxu0 0
    %4639 = vmatpush1.bf16.msra.mxu0 %v4620
    %4640 = vmatprep.subr.bf16.mxu0 0
    %4641 = vmatpush1.bf16.msra.mxu0 %v4619
    %4642 = vmatprep.subr.bf16.mxu0 0
    %4643 = vmatpush1.bf16.msra.mxu0 %v4618
    %4644 = vmatprep.subr.bf16.mxu0 0
    %4645 = vmatpush1.bf16.msra.mxu0 %v4617
    %4646 = vmatprep.subr.bf16.mxu0 0
    %4647 = vmatpush1.bf16.msra.mxu0 %v4616
    %4648 = vmatprep.subr.bf16.mxu0 0
    %4649 = vmatpush2.bf16.msra.mxu0 0
    %4650 = vmatprep.subr.bf16.mxu0 0
    %4651 = vmatpush2.bf16.msra.mxu0 0
    %4652 = vmatprep.subr.bf16.mxu0 0
    %4653 = vmatpush2.bf16.msra.mxu0 0
    %4654 = vmatprep.subr.bf16.mxu0 0
    %4655 = vmatpush2.bf16.msra.mxu0 0
    %4656 = vmatprep.subr.bf16.mxu0 0
    %4657 = vmatpush2.bf16.msra.mxu0 0
    %4658 = vmatprep.subr.bf16.mxu0 0
    %4659 = vmatpush2.bf16.msra.mxu0 0
    %4660 = vmatprep.subr.bf16.mxu0 0
    %4661 = vmatpush2.bf16.msra.mxu0 0
    %4662 = vmatprep.subr.bf16.mxu0 0
    %4663 = vmatpush2.bf16.msra.mxu0 0
    %4664 = vmatprep.mubr.bf16.mxu0 0
    %4665 = vmatmul.mubr.bf16.gmra.mxu0 %v4568
    %v4666 = vpop.f32.mrf.mxu0
    %v4667 = vadd.f32 0.0, %v4666
    %v4668 = vpop.f32.mrf.mxu0
    %v4669 = vpop.f32.mrf.mxu0
    %v4670 = vadd.f32 0.0, %v4669
    %v4671 = vpop.f32.mrf.mxu0
    %4672 = vmatprep.mubr.bf16.mxu0 0
    %4673 = vmatmul.mubr.bf16.gmra.mxu0 %v4569
    %v4674 = vpop.f32.mrf.mxu0
    %v4675 = vadd.f32 0.0, %v4674
    %v4676 = vpop.f32.mrf.mxu0
    %v4677 = vpop.f32.mrf.mxu0
    %v4678 = vadd.f32 0.0, %v4677
    %v4679 = vpop.f32.mrf.mxu0
    %4680 = vmatprep.mubr.bf16.mxu0 0
    %4681 = vmatmul.mubr.bf16.gmra.mxu0 %v4570
    %v4682 = vpop.f32.mrf.mxu0
    %v4683 = vadd.f32 0.0, %v4682
    %v4684 = vpop.f32.mrf.mxu0
    %v4685 = vpop.f32.mrf.mxu0
    %v4686 = vadd.f32 0.0, %v4685
    %v4687 = vpop.f32.mrf.mxu0
    %4688 = vmatprep.mubr.bf16.mxu0 0
    %4689 = vmatmul.mubr.bf16.gmra.mxu0 %v4571
    %v4690 = vpop.f32.mrf.mxu0
    %v4691 = vadd.f32 0.0, %v4690
    %v4692 = vpop.f32.mrf.mxu0
    %v4693 = vpop.f32.mrf.mxu0
    %v4694 = vadd.f32 0.0, %v4693
    %v4695 = vpop.f32.mrf.mxu0
    %4696 = vmatprep.mubr.bf16.mxu0 0
    %4697 = vmatmul.mubr.bf16.gmra.mxu0 %v4572
    %v4698 = vpop.f32.mrf.mxu0
    %v4699 = vadd.f32 0.0, %v4698
    %v4700 = vpop.f32.mrf.mxu0
    %v4701 = vpop.f32.mrf.mxu0
    %v4702 = vadd.f32 0.0, %v4701
    %v4703 = vpop.f32.mrf.mxu0
    %4704 = vmatprep.mubr.bf16.mxu0 0
    %4705 = vmatmul.mubr.bf16.gmra.mxu0 %v4573
    %v4706 = vpop.f32.mrf.mxu0
    %v4707 = vadd.f32 0.0, %v4706
    %v4708 = vpop.f32.mrf.mxu0
    %v4709 = vpop.f32.mrf.mxu0
    %v4710 = vadd.f32 0.0, %v4709
    %v4711 = vpop.f32.mrf.mxu0
    %4712 = vmatprep.mubr.bf16.mxu0 0
    %4713 = vmatmul.mubr.bf16.gmra.mxu0 %v4574
    %v4714 = vpop.f32.mrf.mxu0
    %v4715 = vadd.f32 0.0, %v4714
    %v4716 = vpop.f32.mrf.mxu0
    %v4717 = vpop.f32.mrf.mxu0
    %v4718 = vadd.f32 0.0, %v4717
    %v4719 = vpop.f32.mrf.mxu0
    %4720 = vmatprep.mubr.bf16.mxu0 0
    %4721 = vmatmul.mubr.bf16.gmra.mxu0 %v4575
    %v4722 = vpop.f32.mrf.mxu0
    %v4723 = vadd.f32 0.0, %v4722
    %v4724 = vpop.f32.mrf.mxu0
    %v4725 = vpop.f32.mrf.mxu0
    %v4726 = vadd.f32 0.0, %v4725
    %v4727 = vpop.f32.mrf.mxu0
    %4728 = vdwg.mxu0
    %v4745 = vunpack.c.l.b16 %v4472
    %v4746 = vunpack.c.l.b16 %v4473
    %v4747 = vunpack.c.l.b16 %v4474
    %v4748 = vunpack.c.l.b16 %v4475
    %v4749 = vunpack.c.l.b16 %v4476
    %v4750 = vunpack.c.l.b16 %v4477
    %v4751 = vunpack.c.l.b16 %v4478
    %v4752 = vunpack.c.l.b16 %v4479
    %v4753 = vunpack.c.l.b16 %v4480
    %v4754 = vunpack.c.l.b16 %v4481
    %v4755 = vunpack.c.l.b16 %v4482
    %v4756 = vunpack.c.l.b16 %v4483
    %v4757 = vunpack.c.l.b16 %v4484
    %v4758 = vunpack.c.l.b16 %v4485
    %v4759 = vunpack.c.l.b16 %v4486
    %v4760 = vunpack.c.l.b16 %v4487
    %v4761 = vpack.c.b16 %v4746, %v4745
    %v4762 = vpack.c.b16 %v4748, %v4747
    %v4763 = vpack.c.b16 %v4750, %v4749
    %v4764 = vpack.c.b16 %v4752, %v4751
    %v4765 = vpack.c.b16 %v4754, %v4753
    %v4766 = vpack.c.b16 %v4756, %v4755
    %v4767 = vpack.c.b16 %v4758, %v4757
    %v4768 = vpack.c.b16 %v4760, %v4759
    %v4793 = vunpack.c.l.b16 %v4504
    %v4794 = vunpack.c.l.b16 %v4505
    %v4795 = vunpack.c.l.b16 %v4506
    %v4796 = vunpack.c.l.b16 %v4507
    %v4797 = vunpack.c.l.b16 %v4508
    %v4798 = vunpack.c.l.b16 %v4509
    %v4799 = vunpack.c.l.b16 %v4510
    %v4800 = vunpack.c.l.b16 %v4511
    %v4801 = vunpack.c.l.b16 %v4512
    %v4802 = vunpack.c.l.b16 %v4513
    %v4803 = vunpack.c.l.b16 %v4514
    %v4804 = vunpack.c.l.b16 %v4515
    %v4805 = vunpack.c.l.b16 %v4516
    %v4806 = vunpack.c.l.b16 %v4517
    %v4807 = vunpack.c.l.b16 %v4518
    %v4808 = vunpack.c.l.b16 %v4519
    %v4809 = vpack.c.b16 %v4794, %v4793
    %v4810 = vpack.c.b16 %v4796, %v4795
    %v4811 = vpack.c.b16 %v4798, %v4797
    %v4812 = vpack.c.b16 %v4800, %v4799
    %v4813 = vpack.c.b16 %v4802, %v4801
    %v4814 = vpack.c.b16 %v4804, %v4803
    %v4815 = vpack.c.b16 %v4806, %v4805
    %v4816 = vpack.c.b16 %v4808, %v4807
    %4825 = vmatprep.subr.bf16.mxu0 0
    %4826 = vmatpush1.bf16.msra.mxu0 %v4816
    %4827 = vmatprep.subr.bf16.mxu0 0
    %4828 = vmatpush1.bf16.msra.mxu0 %v4815
    %4829 = vmatprep.subr.bf16.mxu0 0
    %4830 = vmatpush1.bf16.msra.mxu0 %v4814
    %4831 = vmatprep.subr.bf16.mxu0 0
    %4832 = vmatpush1.bf16.msra.mxu0 %v4813
    %4833 = vmatprep.subr.bf16.mxu0 0
    %4834 = vmatpush1.bf16.msra.mxu0 %v4812
    %4835 = vmatprep.subr.bf16.mxu0 0
    %4836 = vmatpush1.bf16.msra.mxu0 %v4811
    %4837 = vmatprep.subr.bf16.mxu0 0
    %4838 = vmatpush1.bf16.msra.mxu0 %v4810
    %4839 = vmatprep.subr.bf16.mxu0 0
    %4840 = vmatpush1.bf16.msra.mxu0 %v4809
    %4841 = vmatprep.subr.bf16.mxu0 0
    %4842 = vmatpush2.bf16.msra.mxu0 0
    %4843 = vmatprep.subr.bf16.mxu0 0
    %4844 = vmatpush2.bf16.msra.mxu0 0
    %4845 = vmatprep.subr.bf16.mxu0 0
    %4846 = vmatpush2.bf16.msra.mxu0 0
    %4847 = vmatprep.subr.bf16.mxu0 0
    %4848 = vmatpush2.bf16.msra.mxu0 0
    %4849 = vmatprep.subr.bf16.mxu0 0
    %4850 = vmatpush2.bf16.msra.mxu0 0
    %4851 = vmatprep.subr.bf16.mxu0 0
    %4852 = vmatpush2.bf16.msra.mxu0 0
    %4853 = vmatprep.subr.bf16.mxu0 0
    %4854 = vmatpush2.bf16.msra.mxu0 0
    %4855 = vmatprep.subr.bf16.mxu0 0
    %4856 = vmatpush2.bf16.msra.mxu0 0
    %4857 = vmatprep.mubr.bf16.mxu0 0
    %4858 = vmatmul.mubr.bf16.gmra.mxu0 %v4761
    %v4859 = vpop.f32.mrf.mxu0
    %v4860 = vadd.f32 %v4667, %v4859
    %v4861 = vpop.f32.mrf.mxu0
    %v4862 = vpop.f32.mrf.mxu0
    %v4863 = vadd.f32 %v4670, %v4862
    %v4864 = vpop.f32.mrf.mxu0
    %4865 = vmatprep.mubr.bf16.mxu0 0
    %4866 = vmatmul.mubr.bf16.gmra.mxu0 %v4762
    %v4867 = vpop.f32.mrf.mxu0
    %v4868 = vadd.f32 %v4675, %v4867
    %v4869 = vpop.f32.mrf.mxu0
    %v4870 = vpop.f32.mrf.mxu0
    %v4871 = vadd.f32 %v4678, %v4870
    %v4872 = vpop.f32.mrf.mxu0
    %4873 = vmatprep.mubr.bf16.mxu0 0
    %4874 = vmatmul.mubr.bf16.gmra.mxu0 %v4763
    %v4875 = vpop.f32.mrf.mxu0
    %v4876 = vadd.f32 %v4683, %v4875
    %v4877 = vpop.f32.mrf.mxu0
    %v4878 = vpop.f32.mrf.mxu0
    %v4879 = vadd.f32 %v4686, %v4878
    %v4880 = vpop.f32.mrf.mxu0
    %4881 = vmatprep.mubr.bf16.mxu0 0
    %4882 = vmatmul.mubr.bf16.gmra.mxu0 %v4764
    %v4883 = vpop.f32.mrf.mxu0
    %v4884 = vadd.f32 %v4691, %v4883
    %v4885 = vpop.f32.mrf.mxu0
    %v4886 = vpop.f32.mrf.mxu0
    %v4887 = vadd.f32 %v4694, %v4886
    %v4888 = vpop.f32.mrf.mxu0
    %4889 = vmatprep.mubr.bf16.mxu0 0
    %4890 = vmatmul.mubr.bf16.gmra.mxu0 %v4765
    %v4891 = vpop.f32.mrf.mxu0
    %v4892 = vadd.f32 %v4699, %v4891
    %v4893 = vpop.f32.mrf.mxu0
    %v4894 = vpop.f32.mrf.mxu0
    %v4895 = vadd.f32 %v4702, %v4894
    %v4896 = vpop.f32.mrf.mxu0
    %4897 = vmatprep.mubr.bf16.mxu0 0
    %4898 = vmatmul.mubr.bf16.gmra.mxu0 %v4766
    %v4899 = vpop.f32.mrf.mxu0
    %v4900 = vadd.f32 %v4707, %v4899
    %v4901 = vpop.f32.mrf.mxu0
    %v4902 = vpop.f32.mrf.mxu0
    %v4903 = vadd.f32 %v4710, %v4902
    %v4904 = vpop.f32.mrf.mxu0
    %4905 = vmatprep.mubr.bf16.mxu0 0
    %4906 = vmatmul.mubr.bf16.gmra.mxu0 %v4767
    %v4907 = vpop.f32.mrf.mxu0
    %v4908 = vadd.f32 %v4715, %v4907
    %v4909 = vpop.f32.mrf.mxu0
    %v4910 = vpop.f32.mrf.mxu0
    %v4911 = vadd.f32 %v4718, %v4910
    %v4912 = vpop.f32.mrf.mxu0
    %4913 = vmatprep.mubr.bf16.mxu0 0
    %4914 = vmatmul.mubr.bf16.gmra.mxu0 %v4768
    %v4915 = vpop.f32.mrf.mxu0
    %v4916 = vadd.f32 %v4723, %v4915
    %v4917 = vpop.f32.mrf.mxu0
    %v4918 = vpop.f32.mrf.mxu0
    %v4919 = vadd.f32 %v4726, %v4918
    %v4920 = vpop.f32.mrf.mxu0
    %4921 = vdwg.mxu0
    %v4922 = vld [vmem:[#allocation16] sm:$0xf]
    %v4923 = vld [vmem:[#allocation16 + $0x4] sm:$0xf]
    %v4924 = vld [vmem:[#allocation16 + $0x8] sm:$0x1]
    %v4928 = vunpack.c.l.b16 %v4922
    %v4929 = vunpack.c.l.b16 %v4923
    %v4930 = vunpack.c.l.b16 %v4924
    %v4931 = vpack.c.b16 %v4929, %v4928
    %v4932 = vpack.c.b16 %v4930, %v4930
    %v4935 = vsel %vm318, %v4932, 0
    %4937 = vmatprep.subr.bf16.mxu0 0
    %4938 = vmatpush1.bf16.msra.mxu0 0
    %4939 = vmatprep.subr.bf16.mxu0 0
    %4940 = vmatpush1.bf16.msra.mxu0 0
    %4941 = vmatprep.subr.bf16.mxu0 0
    %4942 = vmatpush1.bf16.msra.mxu0 0
    %4943 = vmatprep.subr.bf16.mxu0 0
    %4944 = vmatpush1.bf16.msra.mxu0 0
    %4945 = vmatprep.subr.bf16.mxu0 0
    %4946 = vmatpush1.bf16.msra.mxu0 0
    %4947 = vmatprep.subr.bf16.mxu0 0
    %4948 = vmatpush1.bf16.msra.mxu0 0
    %4949 = vmatprep.subr.bf16.mxu0 0
    %4950 = vmatpush1.bf16.msra.mxu0 %v4935
    %4951 = vmatprep.subr.bf16.mxu0 0
    %4952 = vmatpush1.bf16.msra.mxu0 %v4931
    %4953 = vmatprep.subr.bf16.mxu0 0
    %4954 = vmatpush2.bf16.msra.mxu0 0
    %4955 = vmatprep.subr.bf16.mxu0 0
    %4956 = vmatpush2.bf16.msra.mxu0 0
    %4957 = vmatprep.subr.bf16.mxu0 0
    %4958 = vmatpush2.bf16.msra.mxu0 0
    %4959 = vmatprep.subr.bf16.mxu0 0
    %4960 = vmatpush2.bf16.msra.mxu0 0
    %4961 = vmatprep.subr.bf16.mxu0 0
    %4962 = vmatpush2.bf16.msra.mxu0 0
    %4963 = vmatprep.subr.bf16.mxu0 0
    %4964 = vmatpush2.bf16.msra.mxu0 0
    %4965 = vmatprep.subr.bf16.mxu0 0
    %4966 = vmatpush2.bf16.msra.mxu0 0
    %4967 = vmatprep.subr.bf16.mxu0 0
    %4968 = vmatpush2.bf16.msra.mxu0 0
    %4969 = vmatprep.mubr.bf16.mxu0 0
    %4970 = vmatmul.mubr.bf16.gmra.mxu0 %v295
    %v4971 = vpop.f32.mrf.mxu0
    %v4972 = vadd.f32 0.0, %v4971
    %v4973 = vpop.f32.mrf.mxu0
    %v4974 = vpop.f32.mrf.mxu0
    %v4975 = vadd.f32 0.0, %v4974
    %v4976 = vpop.f32.mrf.mxu0
    %4977 = vmatprep.mubr.bf16.mxu0 0
    %4978 = vmatmul.mubr.bf16.gmra.mxu0 %v298
    %v4979 = vpop.f32.mrf.mxu0
    %v4980 = vadd.f32 0.0, %v4979
    %v4981 = vpop.f32.mrf.mxu0
    %v4982 = vpop.f32.mrf.mxu0
    %v4983 = vadd.f32 0.0, %v4982
    %v4984 = vpop.f32.mrf.mxu0
    %4985 = vmatprep.mubr.bf16.mxu0 0
    %4986 = vmatmul.mubr.bf16.gmra.mxu0 %v301
    %v4987 = vpop.f32.mrf.mxu0
    %v4988 = vadd.f32 0.0, %v4987
    %v4989 = vpop.f32.mrf.mxu0
    %v4990 = vpop.f32.mrf.mxu0
    %v4991 = vadd.f32 0.0, %v4990
    %v4992 = vpop.f32.mrf.mxu0
    %4993 = vmatprep.mubr.bf16.mxu0 0
    %4994 = vmatmul.mubr.bf16.gmra.mxu0 %v304
    %v4995 = vpop.f32.mrf.mxu0
    %v4996 = vadd.f32 0.0, %v4995
    %v4997 = vpop.f32.mrf.mxu0
    %v4998 = vpop.f32.mrf.mxu0
    %v4999 = vadd.f32 0.0, %v4998
    %v5000 = vpop.f32.mrf.mxu0
    %5001 = vmatprep.mubr.bf16.mxu0 0
    %5002 = vmatmul.mubr.bf16.gmra.mxu0 %v307
    %v5003 = vpop.f32.mrf.mxu0
    %v5004 = vadd.f32 0.0, %v5003
    %v5005 = vpop.f32.mrf.mxu0
    %v5006 = vpop.f32.mrf.mxu0
    %v5007 = vadd.f32 0.0, %v5006
    %v5008 = vpop.f32.mrf.mxu0
    %5009 = vmatprep.mubr.bf16.mxu0 0
    %5010 = vmatmul.mubr.bf16.gmra.mxu0 %v310
    %v5011 = vpop.f32.mrf.mxu0
    %v5012 = vadd.f32 0.0, %v5011
    %v5013 = vpop.f32.mrf.mxu0
    %v5014 = vpop.f32.mrf.mxu0
    %v5015 = vadd.f32 0.0, %v5014
    %v5016 = vpop.f32.mrf.mxu0
    %5017 = vmatprep.mubr.bf16.mxu0 0
    %5018 = vmatmul.mubr.bf16.gmra.mxu0 %v313
    %v5019 = vpop.f32.mrf.mxu0
    %v5020 = vadd.f32 0.0, %v5019
    %v5021 = vpop.f32.mrf.mxu0
    %v5022 = vpop.f32.mrf.mxu0
    %v5023 = vadd.f32 0.0, %v5022
    %v5024 = vpop.f32.mrf.mxu0
    %5025 = vmatprep.mubr.bf16.mxu0 0
    %5026 = vmatmul.mubr.bf16.gmra.mxu0 %v316
    %v5027 = vpop.f32.mrf.mxu0
    %v5028 = vadd.f32 0.0, %v5027
    %v5029 = vpop.f32.mrf.mxu0
    %v5030 = vpop.f32.mrf.mxu0
    %v5031 = vadd.f32 0.0, %v5030
    %v5032 = vpop.f32.mrf.mxu0
    %5033 = vdwg.mxu0
    %v5034 = vadd.f32 %v4860, %v4972
    %v5035 = vadd.f32 %v4863, %v4975
    %v5036 = vadd.f32 %v4868, %v4980
    %v5037 = vadd.f32 %v4871, %v4983
    %v5038 = vadd.f32 %v4876, %v4988
    %v5039 = vadd.f32 %v4879, %v4991
    %v5040 = vadd.f32 %v4884, %v4996
    %v5041 = vadd.f32 %v4887, %v4999
    %v5042 = vadd.f32 %v4892, %v5004
    %v5043 = vadd.f32 %v4895, %v5007
    %v5044 = vadd.f32 %v4900, %v5012
    %v5045 = vadd.f32 %v4903, %v5015
    %v5046 = vadd.f32 %v4908, %v5020
    %v5047 = vadd.f32 %v4911, %v5023
    %v5048 = vadd.f32 %v4916, %v5028
    %v5049 = vadd.f32 %v4919, %v5031
    %v5050 = vld [vmem:[%s7] sm:$0x1]
    %v5052 = vlaneseq
    %v5053 = vshrl.u32 %v5052, 7
    %v5054 = vsub.s32 0, %v5053
    %v5055 = vrot.slane %v5050, %v5054
    %v5057 = vadd.f32 %v5034, %v5055
    %v5058 = vadd.f32 %v5035, %v5055
    %v5059 = vadd.f32 %v5036, %v5055
    %v5060 = vadd.f32 %v5037, %v5055
    %v5061 = vadd.f32 %v5038, %v5055
    %v5062 = vadd.f32 %v5039, %v5055
    %v5063 = vadd.f32 %v5040, %v5055
    %v5064 = vadd.f32 %v5041, %v5055
    %v5065 = vadd.f32 %v5042, %v5055
    %v5066 = vadd.f32 %v5043, %v5055
    %v5067 = vadd.f32 %v5044, %v5055
    %v5068 = vadd.f32 %v5045, %v5055
    %v5069 = vadd.f32 %v5046, %v5055
    %v5070 = vadd.f32 %v5047, %v5055
    %v5071 = vadd.f32 %v5048, %v5055
    %v5072 = vadd.f32 %v5049, %v5055
    %5073 = vmax.xlane.f32.xlu0 %v5057
    %v5074 = vpop.xlane.xlu0 %5073
    %5075 = vmax.xlane.f32.xlu0 %v5058
    %v5076 = vpop.xlane.xlu0 %5075
    %5077 = vmax.xlane.f32.xlu0 %v5059
    %v5078 = vpop.xlane.xlu0 %5077
    %5079 = vmax.xlane.f32.xlu0 %v5060
    %v5080 = vpop.xlane.xlu0 %5079
    %5081 = vmax.xlane.f32.xlu0 %v5061
    %v5082 = vpop.xlane.xlu0 %5081
    %5083 = vmax.xlane.f32.xlu0 %v5062
    %v5084 = vpop.xlane.xlu0 %5083
    %5085 = vmax.xlane.f32.xlu0 %v5063
    %v5086 = vpop.xlane.xlu0 %5085
    %5087 = vmax.xlane.f32.xlu0 %v5064
    %v5088 = vpop.xlane.xlu0 %5087
    %5089 = vmax.xlane.f32.xlu0 %v5065
    %v5090 = vpop.xlane.xlu0 %5089
    %5091 = vmax.xlane.f32.xlu0 %v5066
    %v5092 = vpop.xlane.xlu0 %5091
    %5093 = vmax.xlane.f32.xlu0 %v5067
    %v5094 = vpop.xlane.xlu0 %5093
    %5095 = vmax.xlane.f32.xlu0 %v5068
    %v5096 = vpop.xlane.xlu0 %5095
    %5097 = vmax.xlane.f32.xlu0 %v5069
    %v5098 = vpop.xlane.xlu0 %5097
    %5099 = vmax.xlane.f32.xlu0 %v5070
    %v5100 = vpop.xlane.xlu0 %5099
    %5101 = vmax.xlane.f32.xlu0 %v5071
    %v5102 = vpop.xlane.xlu0 %5101
    %5103 = vmax.xlane.f32.xlu0 %v5072
    %v5104 = vpop.xlane.xlu0 %5103
    %v5105 = vlaneseq
    %v5106 = vand.u32 %v5105, 127
    %v5107 = vcvt.s32.f32 %v5106
    %vm5108 = vcmp.ge.f32.partialorder %v5057, %v5074
    %vm5109 = vcmp.ge.f32.partialorder %v5058, %v5076
    %vm5110 = vcmp.ge.f32.partialorder %v5059, %v5078
    %vm5111 = vcmp.ge.f32.partialorder %v5060, %v5080
    %vm5112 = vcmp.ge.f32.partialorder %v5061, %v5082
    %vm5113 = vcmp.ge.f32.partialorder %v5062, %v5084
    %vm5114 = vcmp.ge.f32.partialorder %v5063, %v5086
    %vm5115 = vcmp.ge.f32.partialorder %v5064, %v5088
    %vm5116 = vcmp.ge.f32.partialorder %v5065, %v5090
    %vm5117 = vcmp.ge.f32.partialorder %v5066, %v5092
    %vm5118 = vcmp.ge.f32.partialorder %v5067, %v5094
    %vm5119 = vcmp.ge.f32.partialorder %v5068, %v5096
    %vm5120 = vcmp.ge.f32.partialorder %v5069, %v5098
    %vm5121 = vcmp.ge.f32.partialorder %v5070, %v5100
    %vm5122 = vcmp.ge.f32.partialorder %v5071, %v5102
    %vm5123 = vcmp.ge.f32.partialorder %v5072, %v5104
    %v5124 = vsel %vm5108, %v5107, 128.0
    %v5125 = vsel %vm5109, %v5107, 128.0
    %v5126 = vsel %vm5110, %v5107, 128.0
    %v5127 = vsel %vm5111, %v5107, 128.0
    %v5128 = vsel %vm5112, %v5107, 128.0
    %v5129 = vsel %vm5113, %v5107, 128.0
    %v5130 = vsel %vm5114, %v5107, 128.0
    %v5131 = vsel %vm5115, %v5107, 128.0
    %v5132 = vsel %vm5116, %v5107, 128.0
    %v5133 = vsel %vm5117, %v5107, 128.0
    %v5134 = vsel %vm5118, %v5107, 128.0
    %v5135 = vsel %vm5119, %v5107, 128.0
    %v5136 = vsel %vm5120, %v5107, 128.0
    %v5137 = vsel %vm5121, %v5107, 128.0
    %v5138 = vsel %vm5122, %v5107, 128.0
    %v5139 = vsel %vm5123, %v5107, 128.0
    %5140 = vmin.xlane.f32.xlu0 %v5124
    %v5141 = vpop.xlane.xlu0 %5140
    %5142 = vmin.xlane.f32.xlu0 %v5125
    %v5143 = vpop.xlane.xlu0 %5142
    %5144 = vmin.xlane.f32.xlu0 %v5126
    %v5145 = vpop.xlane.xlu0 %5144
    %5146 = vmin.xlane.f32.xlu0 %v5127
    %v5147 = vpop.xlane.xlu0 %5146
    %5148 = vmin.xlane.f32.xlu0 %v5128
    %v5149 = vpop.xlane.xlu0 %5148
    %5150 = vmin.xlane.f32.xlu0 %v5129
    %v5151 = vpop.xlane.xlu0 %5150
    %5152 = vmin.xlane.f32.xlu0 %v5130
    %v5153 = vpop.xlane.xlu0 %5152
    %5154 = vmin.xlane.f32.xlu0 %v5131
    %v5155 = vpop.xlane.xlu0 %5154
    %5156 = vmin.xlane.f32.xlu0 %v5132
    %v5157 = vpop.xlane.xlu0 %5156
    %5158 = vmin.xlane.f32.xlu0 %v5133
    %v5159 = vpop.xlane.xlu0 %5158
    %5160 = vmin.xlane.f32.xlu0 %v5134
    %v5161 = vpop.xlane.xlu0 %5160
    %5162 = vmin.xlane.f32.xlu0 %v5135
    %v5163 = vpop.xlane.xlu0 %5162
    %5164 = vmin.xlane.f32.xlu0 %v5136
    %v5165 = vpop.xlane.xlu0 %5164
    %5166 = vmin.xlane.f32.xlu0 %v5137
    %v5167 = vpop.xlane.xlu0 %5166
    %5168 = vmin.xlane.f32.xlu0 %v5138
    %v5169 = vpop.xlane.xlu0 %5168
    %5170 = vmin.xlane.f32.xlu0 %v5139
    %v5171 = vpop.xlane.xlu0 %5170
    %v5172 = vmin.f32 %v5141, 4.0
    %v5173 = vmin.f32 %v5143, 4.0
    %v5174 = vmin.f32 %v5145, 4.0
    %v5175 = vmin.f32 %v5147, 4.0
    %v5176 = vmin.f32 %v5149, 4.0
    %v5177 = vmin.f32 %v5151, 4.0
    %v5178 = vmin.f32 %v5153, 4.0
    %v5179 = vmin.f32 %v5155, 4.0
    %v5180 = vmin.f32 %v5157, 4.0
    %v5181 = vmin.f32 %v5159, 4.0
    %v5182 = vmin.f32 %v5161, 4.0
    %v5183 = vmin.f32 %v5163, 4.0
    %v5184 = vmin.f32 %v5165, 4.0
    %v5185 = vmin.f32 %v5167, 4.0
    %v5186 = vmin.f32 %v5169, 4.0
    %v5187 = vmin.f32 %v5171, 4.0
    %v5204 = vlaneseq
    %v5205 = vshrl.u32 %v5204, 7
    %v5206 = vsub.s32 %v5106, %v5205
    %v5207 = vrot.slane %v5172, %v5206
    %v5208 = vadd.s32 %v5106, 4294967288
    %v5209 = vlaneseq
    %v5210 = vshrl.u32 %v5209, 7
    %v5211 = vsub.s32 %v5208, %v5210
    %v5212 = vrot.slane %v5173, %v5211
    %vm5213 = vcmask 130112
    %v5214 = vsel %vm5213, %v5212, %v5207
    %v5215 = vlaneseq
    %v5216 = vshrl.u32 %v5215, 7
    %v5217 = vsub.s32 %v5106, %v5216
    %v5218 = vrot.slane %v5174, %v5217
    %v5219 = vlaneseq
    %v5220 = vshrl.u32 %v5219, 7
    %v5221 = vsub.s32 %v5208, %v5220
    %v5222 = vrot.slane %v5175, %v5221
    %v5223 = vsel %vm5213, %v5222, %v5218
    %v5224 = vlaneseq
    %v5225 = vshrl.u32 %v5224, 7
    %v5226 = vsub.s32 %v5106, %v5225
    %v5227 = vrot.slane %v5176, %v5226
    %v5228 = vlaneseq
    %v5229 = vshrl.u32 %v5228, 7
    %v5230 = vsub.s32 %v5208, %v5229
    %v5231 = vrot.slane %v5177, %v5230
    %v5232 = vsel %vm5213, %v5231, %v5227
    %v5233 = vlaneseq
    %v5234 = vshrl.u32 %v5233, 7
    %v5235 = vsub.s32 %v5106, %v5234
    %v5236 = vrot.slane %v5178, %v5235
    %v5237 = vlaneseq
    %v5238 = vshrl.u32 %v5237, 7
    %v5239 = vsub.s32 %v5208, %v5238
    %v5240 = vrot.slane %v5179, %v5239
    %v5241 = vsel %vm5213, %v5240, %v5236
    %v5242 = vlaneseq
    %v5243 = vshrl.u32 %v5242, 7
    %v5244 = vsub.s32 %v5106, %v5243
    %v5245 = vrot.slane %v5180, %v5244
    %v5246 = vlaneseq
    %v5247 = vshrl.u32 %v5246, 7
    %v5248 = vsub.s32 %v5208, %v5247
    %v5249 = vrot.slane %v5181, %v5248
    %v5250 = vsel %vm5213, %v5249, %v5245
    %v5251 = vlaneseq
    %v5252 = vshrl.u32 %v5251, 7
    %v5253 = vsub.s32 %v5106, %v5252
    %v5254 = vrot.slane %v5182, %v5253
    %v5255 = vlaneseq
    %v5256 = vshrl.u32 %v5255, 7
    %v5257 = vsub.s32 %v5208, %v5256
    %v5258 = vrot.slane %v5183, %v5257
    %v5259 = vsel %vm5213, %v5258, %v5254
    %v5260 = vlaneseq
    %v5261 = vshrl.u32 %v5260, 7
    %v5262 = vsub.s32 %v5106, %v5261
    %v5263 = vrot.slane %v5184, %v5262
    %v5264 = vlaneseq
    %v5265 = vshrl.u32 %v5264, 7
    %v5266 = vsub.s32 %v5208, %v5265
    %v5267 = vrot.slane %v5185, %v5266
    %v5268 = vsel %vm5213, %v5267, %v5263
    %v5269 = vlaneseq
    %v5270 = vshrl.u32 %v5269, 7
    %v5271 = vsub.s32 %v5106, %v5270
    %v5272 = vrot.slane %v5186, %v5271
    %v5273 = vlaneseq
    %v5274 = vshrl.u32 %v5273, 7
    %v5275 = vsub.s32 %v5208, %v5274
    %v5276 = vrot.slane %v5187, %v5275
    %v5277 = vsel %vm5213, %v5276, %v5272
    %vm5278 = vcmask 1041409
    %v5279 = vsel %vm5278, %v5223, %v5214
    %vm5280 = vcmask 1042434
    %v5281 = vsel %vm5280, %v5232, %v5279
    %vm5282 = vcmask 1043459
    %v5283 = vsel %vm5282, %v5241, %v5281
    %vm5284 = vcmask 1044484
    %v5285 = vsel %vm5284, %v5250, %v5283
    %vm5286 = vcmask 1045509
    %v5287 = vsel %vm5286, %v5259, %v5285
    %vm5288 = vcmask 1046534
    %v5289 = vsel %vm5288, %v5268, %v5287
    %vm5290 = vcmask 1047559
    %v5291 = vsel %vm5290, %v5277, %v5289
    %5293 = vxpose.xlu0.b32.start [1/16] %v5291, 128
    %5294 = vxpose.xlu0.b32.cont [2/16] 0.0, 128
    %5295 = vxpose.xlu0.b32.cont [3/16] 0.0, 128
    %5296 = vxpose.xlu0.b32.cont [4/16] 0.0, 128
    %5297 = vxpose.xlu0.b32.cont [5/16] 0.0, 128
    %5298 = vxpose.xlu0.b32.cont [6/16] 0.0, 128
    %5299 = vxpose.xlu0.b32.cont [7/16] 0.0, 128
    %5300 = vxpose.xlu0.b32.cont [8/16] 0.0, 128
    %5301 = vxpose.xlu0.b32.cont [9/16] 0.0, 128
    %5302 = vxpose.xlu0.b32.cont [10/16] 0.0, 128
    %5303 = vxpose.xlu0.b32.cont [11/16] 0.0, 128
    %5304 = vxpose.xlu0.b32.cont [12/16] 0.0, 128
    %5305 = vxpose.xlu0.b32.cont [13/16] 0.0, 128
    %5306 = vxpose.xlu0.b32.cont [14/16] 0.0, 128
    %5307 = vxpose.xlu0.b32.cont [15/16] 0.0, 128
    %5308 = vxpose.xlu0.b32.end [16/16] 0.0, 128
    %v5309 = vpop.trf.xlu0
    %v5310 = vpop.trf.xlu0
    %v5311 = vpop.trf.xlu0
    %v5312 = vpop.trf.xlu0
    %v5313 = vpop.trf.xlu0
    %v5314 = vpop.trf.xlu0
    %v5315 = vpop.trf.xlu0
    %v5316 = vpop.trf.xlu0
    %v5317 = vpop.trf.xlu0
    %v5318 = vpop.trf.xlu0
    %v5319 = vpop.trf.xlu0
    %v5320 = vpop.trf.xlu0
    %v5321 = vpop.trf.xlu0
    %v5322 = vpop.trf.xlu0
    %v5323 = vpop.trf.xlu0
    %v5324 = vpop.trf.xlu0
    %v5325 = vcvt.f32.s32.to.zero.pseudo %v5309
    %v5326 = vcvt.f32.s32.to.zero.pseudo %v5310
    %vm5327 = vcmask 64512
    %5328 = vst.msk [vmem:[%s8] sm:$0xff] %vm5327, %v5325
    %5329 = vst.msk [vmem:[%s8 + $0x8] sm:$0xff] %vm5327, %v5326
    // Predicated region
    $region62: #{tpu_custom_call.1} parent=1 // pred_check
      _
    $region63: #{tpu_custom_call.1} parent=1 // pred_check_branch
      %5331 = sbr.rel (0) target = $region65
    $region64: #{tpu_custom_call.1} parent=1 // pred_region
      _
    $region65: #{tpu_custom_call.1} parent=1 // pred_fallthru
      _
    // Predicated region
    $region66: #{tpu_custom_call.1} parent=1 // pred_check
      _
    $region67: #{tpu_custom_call.1} parent=1 // pred_check_branch
      %5333 = sbr.rel (0) target = $region69
    $region68: #{tpu_custom_call.1} parent=1 // pred_region
      _
    $region69: #{tpu_custom_call.1} parent=1 // pred_fallthru
      _
    %5334 = vsyncpa [#allocation7], 1
    %5335 = vsyncpa [#allocation9], 1
    %5336 = vsyncpa [#allocation12], 1
    %5337 = vsyncpa [#allocation15], 1

</llo_original>
